<compile_context>
chip_gen: v7x
topology: tpu7x:2x2x1
jax: 0.10.0
libtpu: 0.0.40
codegen_flags: <defaults>
</compile_context>

<pallas_src>
import numpy as np
import jax
import jax.numpy as jnp
from jax.experimental import pallas as pl
from jax.experimental.pallas import tpu as pltpu

EPS = 1e-7            # epsilon from the PyTorch forward
L1_NORM_EPS = 1e-12   # F.normalize default eps
SCAL_LANES = 128      # lane-dense packed per-graph scalar output width
KL_LANE, POS_LANE, PRES_LANE = 0, 1, 2


def _sigmoid(x):
    # explicit form (exp lowers to the EUP); avoids relying on lax.logistic lowering
    return 1.0 / (1.0 + jnp.exp(-x))


def vgib_kernel(x_ref, adj_ref, mask_ref, gdiff_ref, unif_ref,
                w1_ref, b1_ref, w2d_ref, b2d_ref,
                gemb_ref, nemb_ref, scal_ref, act_ref):
    x = x_ref[...]                                   # (Gb, N, H) f32
    adj = adj_ref[...].astype(jnp.float32)           # (Gb, N, N); bf16 in HBM (0/1 exact)
    mask = mask_ref[...]                             # (Gb, N, 1) 1.0 real / 0.0 pad
    gdiff = gdiff_ref[...]                           # (Gb, N, 1) gumbel g0 - g1
    u = unif_ref[...]                                # (Gb, N, H) uniform [0,1)

    Gb, N, H = x.shape

    # ---- per-graph node statistics (torch.std_mean, unbiased) ----------------
    count = jnp.sum(mask, axis=1, keepdims=True)               # (Gb, 1, 1)
    count_safe = jnp.maximum(count, 1.0)                       # guard empty padded graphs
    xm = x * mask
    mean = jnp.sum(xm, axis=1, keepdims=True) / count_safe     # (Gb, 1, H)
    diff = (x - mean) * mask
    var = jnp.sum(diff * diff, axis=1, keepdims=True) / jnp.maximum(count - 1.0, 1.0)
    std = jnp.sqrt(var)                                         # (Gb, 1, H)

    # ---- fused MLP over all Gb*N node rows (one MXU tile per grid step) ------
    x2 = x.reshape(Gb * N, H)
    a1 = jnp.tanh(jnp.dot(x2, w1_ref[...], preferred_element_type=jnp.float32)
                  + b1_ref[...])                                # (Gb*N, H)
    # 2-class softmax(col0) == sigmoid(l0 - l1).  W2/b2 column differences are
    # precomputed on the host, so the logit difference is a lane reduction.
    dlogit = jnp.sum(a1 * w2d_ref[...], axis=1, keepdims=True) + b2d_ref[...]
    a0 = _sigmoid(dlogit).reshape(Gb, N, 1)                     # assignment[:, 0]
    a1c = 1.0 - a0                                              # assignment[:, 1]

    # F.gumbel_softmax(assignment, tau=1) with 2 classes == sigmoid of the
    # noisy probability difference (assignment acts as logits, as in PyTorch).
    lam_pos = _sigmoid(2.0 * a0 - 1.0 + gdiff)                  # (Gb, N, 1)
    lam_neg = 1.0 - lam_pos

    # ---- graph / noisy-graph pooling ------------------------------------------
    graph_feat = jnp.sum(xm, axis=1, keepdims=True)             # (Gb, 1, H)
    noisy_mean = lam_pos * x + lam_neg * mean                   # (Gb, N, H)
    noisy_std = lam_neg * std                                   # (Gb, N, H)
    noisy_feat = noisy_mean + u * noisy_std
    noisy_graph = jnp.sum(noisy_feat * mask, axis=1, keepdims=True)

    # ---- KL --------------------------------------------------------------------
    inv_denom = 1.0 / (std + EPS)                               # hoisted, reused
    inv_denom2 = inv_denom * inv_denom
    dmean = (noisy_mean - mean) * inv_denom
    term2 = jnp.sum(dmean * dmean * mask, axis=1, keepdims=True)        # (Gb, 1, H)
    kl_tensor = 0.5 * (noisy_std * noisy_std) * inv_denom2 + term2      # (Gb, N, H)
    kl_lane = jnp.sum(kl_tensor * mask, axis=2, keepdims=True)          # (Gb, N, 1)
    kl = jnp.sum(kl_lane, axis=1, keepdims=True) / (count_safe * float(H))  # (Gb,1,1)

    # ---- pos_penalty: diag(L1-normalize(assignment^T @ Adj @ assignment)) -----
    # One-hot relayout sends a sublane column (Gb,N,1) to a lane row (Gb,1,N)
    # with plain multiply + reduce (no transpose / degenerate matmul lowering).
    row_i = jax.lax.broadcasted_iota(jnp.int32, (1, N, N), 1)
    col_i = jax.lax.broadcasted_iota(jnp.int32, (1, N, N), 2)
    onehot = (row_i == col_i).astype(jnp.float32)               # (1, N, N)

    a0_row = jnp.sum(a0 * onehot, axis=1, keepdims=True)        # (Gb, 1, N)
    rowdeg = jnp.sum(adj, axis=2, keepdims=True)                # (Gb, N, 1) = Adj @ 1
    t0 = jnp.sum(adj * a0_row, axis=2, keepdims=True)           # (Gb, N, 1) = Adj @ a0
    t1 = rowdeg - t0                                            # Adj @ (1 - a0)
    e00 = jnp.sum(a0 * t0, axis=1, keepdims=True)               # (Gb, 1, 1)
    e01 = jnp.sum(a0 * t1, axis=1, keepdims=True)
    e10 = jnp.sum(a1c * t0, axis=1, keepdims=True)
    e11 = jnp.sum(a1c * t1, axis=1, keepdims=True)
    r0 = jnp.maximum(jnp.abs(e00) + jnp.abs(e01), L1_NORM_EPS)
    r1 = jnp.maximum(jnp.abs(e10) + jnp.abs(e11), L1_NORM_EPS)
    d0 = e00 / r0
    d1 = e11 / r1
    pos_pen = 0.5 * ((d0 - 1.0) ** 2 + (d1 - 1.0) ** 2)         # (Gb, 1, 1)

    # ---- preserve rate / active nodes ------------------------------------------
    real = mask > 0.0
    pres = (jnp.sum(jnp.where((a0 > 0.5) & real, 1.0, 0.0), axis=1, keepdims=True)
            / count_safe)                                       # (Gb, 1, 1)
    act_col = jnp.where((lam_pos > 0.5) & real, 1.0, 0.0)       # (Gb, N, 1)
    act_row = jnp.sum(act_col * onehot, axis=1, keepdims=True)  # (Gb, 1, N) lane-dense

    # ---- lane-dense writebacks ---------------------------------------------------
    gemb_ref[...] = graph_feat
    nemb_ref[...] = noisy_graph
    lane = jax.lax.broadcasted_iota(jnp.int32, (Gb, 1, SCAL_LANES), 2)
    scal_ref[...] = (jnp.where(lane == KL_LANE, kl, 0.0)
                     + jnp.where(lane == POS_LANE, pos_pen, 0.0)
                     + jnp.where(lane == PRES_LANE, pres, 0.0))
    act_ref[...] = (act_row > 0.5).astype(jnp.int32)


def variational_gib_forward(node_feature, adj, mask, w1, b1, w2, b2,
                            gumbel_noise, unif_noise, graphs_per_step=16):
    G, N, H = node_feature.shape
    Gb = int(max(1, min(graphs_per_step, G)))
    num_steps = (G + Gb - 1) // Gb
    G_pad = num_steps * Gb

    def pad_g(a):
        if G_pad == G:
            return a
        pad = [(0, G_pad - G)] + [(0, 0)] * (a.ndim - 1)
        return jnp.pad(a, pad)

    # Host-side prep (layout plumbing, not compute hoisting):
    x_p = pad_g(node_feature.astype(jnp.float32))
    adj_p = pad_g(adj.astype(jnp.bfloat16))                         # 0/1 exact in bf16
    mask_p = pad_g(mask.astype(jnp.float32))
    gdiff_p = pad_g((gumbel_noise[..., 0:1] - gumbel_noise[..., 1:2]).astype(jnp.float32))
    unif_p = pad_g(unif_noise.astype(jnp.float32))
    w1f = w1.astype(jnp.float32)
    b1f = b1.astype(jnp.float32)
    w2d = (w2[:, 0] - w2[:, 1]).astype(jnp.float32).reshape(1, H)   # (1, H)
    b2d = (b2[:, 0:1] - b2[:, 1:2]).astype(jnp.float32)             # (1, 1)

    out_shape = (
        jax.ShapeDtypeStruct((G_pad, 1, H), jnp.float32),           # graph embedding
        jax.ShapeDtypeStruct((G_pad, 1, H), jnp.float32),           # noisy embedding
        jax.ShapeDtypeStruct((G_pad, 1, SCAL_LANES), jnp.float32),  # packed kl/pos/pres
        jax.ShapeDtypeStruct((G_pad, 1, N), jnp.int32),             # active mask (lanes)
    )
    in_specs = [
        pl.BlockSpec((Gb, N, H), lambda i: (i, 0, 0)),   # node features
        pl.BlockSpec((Gb, N, N), lambda i: (i, 0, 0)),   # adjacency (bf16)
        pl.BlockSpec((Gb, N, 1), lambda i: (i, 0, 0)),   # node mask
        pl.BlockSpec((Gb, N, 1), lambda i: (i, 0, 0)),   # gumbel noise difference
        pl.BlockSpec((Gb, N, H), lambda i: (i, 0, 0)),   # uniform noise
        pl.BlockSpec((H, H), lambda i: (0, 0)),          # W1 (resident across steps)
        pl.BlockSpec((1, H), lambda i: (0, 0)),          # b1
        pl.BlockSpec((1, H), lambda i: (0, 0)),          # W2 column difference
        pl.BlockSpec((1, 1), lambda i: (0, 0)),          # b2 difference
    ]
    out_specs = (
        pl.BlockSpec((Gb, 1, H), lambda i: (i, 0, 0)),
        pl.BlockSpec((Gb, 1, H), lambda i: (i, 0, 0)),
        pl.BlockSpec((Gb, 1, SCAL_LANES), lambda i: (i, 0, 0)),
        pl.BlockSpec((Gb, 1, N), lambda i: (i, 0, 0)),
    )

    # Advisory cost estimate for XLA's scheduler.
    flops = G_pad * N * (2 * H * H + 2 * H + 6 * N) + 40 * G_pad * N * H
    transcendentals = G_pad * N * (H + 2) + G_pad * H
    in_bytes = sum(int(np.prod(a.shape)) * a.dtype.itemsize
                   for a in (x_p, adj_p, mask_p, gdiff_p, unif_p, w1f, b1f, w2d, b2d))
    out_bytes = G_pad * (2 * H + SCAL_LANES + N) * 4
    cost = pl.CostEstimate(flops=int(flops), transcendentals=int(transcendentals),
                           bytes_accessed=int(in_bytes + out_bytes))

    # Only raise the scoped-VMEM limit if the batched, double-buffered tiles need it.
    tile_bytes = (Gb * N * H * 4 * 2        # x + uniform noise
                  + Gb * N * N * 2          # bf16 adjacency
                  + Gb * N * 1 * 4 * 2      # mask + gumbel diff
                  + H * H * 4 + 2 * H * 4 + 4
                  + Gb * (2 * H + SCAL_LANES + N) * 4)
    per_step_bytes = 2 * tile_bytes          # double buffering
    cp_kwargs = dict(dimension_semantics=("parallel",))
    if per_step_bytes > 24 * 1024 * 1024:
        cp_kwargs["vmem_limit_bytes"] = min(int(per_step_bytes * 1.25), 100 * 1024 * 1024)

    gemb, nemb, scal, act = pl.pallas_call(
        vgib_kernel,
        out_shape=out_shape,
        grid=(num_steps,),
        in_specs=in_specs,
        out_specs=out_specs,
        compiler_params=pltpu.CompilerParams(**cp_kwargs),
        cost_estimate=cost,
    )(x_p, adj_p, mask_p, gdiff_p, unif_p, w1f, b1f, w2d, b2d)

    # Glue: drop padded graphs, reduce over graphs (matches max_id+1 divide).
    all_graph_embedding = gemb[:G, 0, :]
    all_noisy_embedding = nemb[:G, 0, :]
    kl_per_graph = scal[:G, 0, KL_LANE]
    pos_per_graph = scal[:G, 0, POS_LANE]
    pres_per_graph = scal[:G, 0, PRES_LANE]
    active_mask = act[:G, 0, :]
    all_kl_loss = jnp.mean(kl_per_graph)
    all_pos_penalty = jnp.mean(pos_per_graph)
    all_preserve_rate = jnp.mean(pres_per_graph)
    return ((all_graph_embedding, all_noisy_embedding, active_mask,
             all_pos_penalty, all_kl_loss, all_preserve_rate),
            (kl_per_graph, pos_per_graph, pres_per_graph))


def reference_forward(x, adj, mask, w1, b1, w2, b2, gn, un):
    """Pure-numpy reference mirroring the PyTorch forward (per-graph loop)."""
    G, N, H = x.shape
    gembs, nembs, actives, kls, poss, press = [], [], [], [], [], []
    a0_pad = np.full((G, N), 2.0, np.float32)
    lam_pad = np.full((G, N), 2.0, np.float32)
    for gi in range(G):
        n = int(mask[gi, :, 0].sum())
        xb = x[gi, :n]
        A = adj[gi, :n, :n]
        mean = xb.mean(0, keepdims=True)
        std = xb.std(0, ddof=1, keepdims=True)
        a1 = np.tanh(xb @ w1 + b1)
        logit = a1 @ w2 + b2
        e = np.exp(logit - logit.max(1, keepdims=True))
        assign = e / e.sum(1, keepdims=True)
        gl = assign + gn[gi, :n]
        eg = np.exp(gl - gl.max(1, keepdims=True))
        gum = eg / eg.sum(1, keepdims=True)
        lp, ln = gum[:, 0:1], gum[:, 1:2]
        a0_pad[gi, :n] = assign[:, 0]
        lam_pad[gi, :n] = gum[:, 0]
        gembs.append(xb.sum(0, keepdims=True))
        nm = lp * xb + ln * mean
        ns = ln * std
        nf = nm + un[gi, :n] * ns
        nembs.append(nf.sum(0, keepdims=True))
        denom = std + EPS
        kl_t = 0.5 * (ns ** 2 / denom ** 2) + (((nm - mean) / denom) ** 2).sum(0, keepdims=True)
        kls.append(kl_t.mean())
        new_adj = assign.T @ (A @ assign)
        rown = np.maximum(np.abs(new_adj).sum(1, keepdims=True), L1_NORM_EPS)
        diag = np.diag(new_adj / rown)
        poss.append(((diag - 1.0) ** 2).mean())
        press.append(float((assign[:, 0] > 0.5).sum()) / n)
        act = np.zeros((N,), np.int32)
        act[:n] = (gum[:, 0] > 0.5).astype(np.int32)
        actives.append(act)
    return (np.concatenate(gembs, 0), np.concatenate(nembs, 0), np.stack(actives, 0),
            np.array(kls, np.float32), np.array(poss, np.float32),
            np.array(press, np.float32), a0_pad, lam_pad)


if __name__ == "__main__":
    G, N, H = 32, 16, 32      # graphs, padded nodes per graph, hidden_dim
    Gb = 16                   # graphs per step -> 256 fused matmul rows, even grid
    key = jax.random.PRNGKey(0)
    ks = jax.random.split(key, 9)

    # fully_connected_1: H->H, fully_connected_2: H->2 (second_dense_neurons=2)
    w1 = jax.random.normal(ks[0], (H, H), jnp.float32) * 0.1
    b1 = jax.random.normal(ks[1], (1, H), jnp.float32) * 0.1
    w2 = jax.random.normal(ks[2], (H, 2), jnp.float32) * 0.1
    b2 = jax.random.normal(ks[3], (1, 2), jnp.float32) * 0.1

    # Node features stand in for atom_encoder + GIN-conv output (see TODO above).
    counts = jax.random.randint(ks[4], (G,), 2, N + 1)
    node_ids = jnp.arange(N)[None, :]
    mask = (node_ids < counts[:, None]).astype(jnp.float32)[:, :, None]    # (G,N,1)
    node_feature = jax.random.normal(ks[5], (G, N, H), jnp.float32) * mask

    # Random symmetric adjacency, zeroed on padded rows/cols.
    a = (jax.random.uniform(ks[6], (G, N, N)) < 0.4).astype(jnp.float32)
    adj = jnp.triu(a, 1)
    adj = adj + jnp.swapaxes(adj, 1, 2)
    adj = adj * mask * jnp.swapaxes(mask, 1, 2)

    # Host-side RNG replacing F.gumbel_softmax internal noise and torch.rand_like.
    gumbel_noise = jax.random.gumbel(ks[7], (G, N, 2), jnp.float32)
    unif_noise = jax.random.uniform(ks[8], (G, N, H), jnp.float32)

    outs, per_graph = variational_gib_forward(node_feature, adj, mask, w1, b1, w2, b2,
                                              gumbel_noise, unif_noise,
                                              graphs_per_step=Gb)
    outs = jax.block_until_ready(outs)
    per_graph = jax.block_until_ready(per_graph)
    gemb, nemb, active_mask, pos_pen, kl_loss, pres_rate = outs
    kl_g, pos_g, pres_g = per_graph

    ref = reference_forward(np.asarray(node_feature), np.asarray(adj), np.asarray(mask),
                            np.asarray(w1), np.asarray(b1), np.asarray(w2), np.asarray(b2),
                            np.asarray(gumbel_noise), np.asarray(unif_noise))
    ref_gemb, ref_nemb, ref_act, ref_kl, ref_pos, ref_pres, ref_a0, ref_lam = ref

    np.testing.assert_allclose(np.asarray(gemb), ref_gemb, rtol=1e-3, atol=1e-3)
    np.testing.assert_allclose(np.asarray(nemb), ref_nemb, rtol=1e-3, atol=2e-3)
    np.testing.assert_allclose(np.asarray(kl_g), ref_kl, rtol=2e-3, atol=2e-3)
    np.testing.assert_allclose(np.asarray(pos_g), ref_pos, rtol=2e-3, atol=2e-3)
    np.testing.assert_allclose(float(kl_loss), ref_kl.mean(), rtol=2e-3, atol=2e-3)
    np.testing.assert_allclose(float(pos_pen), ref_pos.mean(), rtol=2e-3, atol=2e-3)

    # Thresholded quantities: tolerate disagreement only where the reference
    # probability sits numerically on the 0.5 decision boundary.
    act_np = np.asarray(active_mask)
    boundary_lam = np.abs(ref_lam - 0.5) < 1e-4
    assert not np.any((act_np != ref_act) & ~boundary_lam), "active mask mismatch"

    counts_np = np.asarray(mask[:, :, 0].sum(axis=1))
    boundary_a0 = (np.abs(ref_a0 - 0.5) < 1e-4).sum(axis=1)
    pres_tol = boundary_a0 / np.maximum(counts_np, 1.0) + 1e-3
    assert np.all(np.abs(np.asarray(pres_g) - ref_pres) <= pres_tol), "preserve rate mismatch"
    assert abs(float(pres_rate) - float(ref_pres.mean())) <= float(pres_tol.mean()) + 1e-6

    # Glue: active_node_index as python lists of indices (matches .nonzero().tolist()).
    active_node_index = [list(np.nonzero(act_np[g])[0]) for g in range(G)]
    _ = active_node_index

    print("KERNEL_OK")
</pallas_src>

<mosaic_0001>
module attributes {stable_mosaic.version = 11 : i64} {
  func.func @vgib_kernel(%arg0: i32, %arg1: memref<16x16x32xf32, #tpu.memory_space<vmem>>, %arg2: memref<16x16x16xbf16, #tpu.memory_space<vmem>>, %arg3: memref<16x16x1xf32, #tpu.memory_space<vmem>>, %arg4: memref<16x16x1xf32, #tpu.memory_space<vmem>>, %arg5: memref<16x16x32xf32, #tpu.memory_space<vmem>>, %arg6: memref<32x32xf32, #tpu.memory_space<vmem>>, %arg7: memref<1x32xf32, #tpu.memory_space<vmem>>, %arg8: memref<1x32xf32, #tpu.memory_space<vmem>>, %arg9: memref<1x1xf32, #tpu.memory_space<vmem>>, %arg10: memref<16x1x32xf32, #tpu.memory_space<vmem>>, %arg11: memref<16x1x32xf32, #tpu.memory_space<vmem>>, %arg12: memref<16x1x128xf32, #tpu.memory_space<vmem>>, %arg13: memref<16x1x16xi32, #tpu.memory_space<vmem>>) attributes {dimension_semantics = [#tpu.dimension_semantics<parallel>], iteration_bounds = array<i64: 2>, scalar_prefetch = 0 : i64, scratch_operands = 0 : i64, tpu.core_type = #tpu.core_type<tc>, window_params = [{transform_indices = @transform_0, window_bounds = array<i64: 16, 16, 32>}, {transform_indices = @transform_1, window_bounds = array<i64: 16, 16, 16>}, {transform_indices = @transform_2, window_bounds = array<i64: 16, 16, 1>}, {transform_indices = @transform_3, window_bounds = array<i64: 16, 16, 1>}, {transform_indices = @transform_4, window_bounds = array<i64: 16, 16, 32>}, {pipeline_mode = #tpu.pipeline_mode<synchronous>, transform_indices = @transform_5, window_bounds = array<i64: 32, 32>}, {pipeline_mode = #tpu.pipeline_mode<synchronous>, transform_indices = @transform_6, window_bounds = array<i64: 1, 32>}, {pipeline_mode = #tpu.pipeline_mode<synchronous>, transform_indices = @transform_7, window_bounds = array<i64: 1, 32>}, {pipeline_mode = #tpu.pipeline_mode<synchronous>, transform_indices = @transform_8, window_bounds = array<i64: 1, 1>}, {transform_indices = @transform_9, window_bounds = array<i64: 16, 1, 32>}, {transform_indices = @transform_10, window_bounds = array<i64: 16, 1, 32>}, {transform_indices = @transform_11, window_bounds = array<i64: 16, 1, 128>}, {transform_indices = @transform_12, window_bounds = array<i64: 16, 1, 16>}]} {
    %c0 = arith.constant 0 : index
    %c0_0 = arith.constant 0 : index
    %c0_1 = arith.constant 0 : index
    %0 = vector.load %arg1[%c0, %c0_0, %c0_1] : memref<16x16x32xf32, #tpu.memory_space<vmem>>, vector<16x16x32xf32>
    %c0_2 = arith.constant 0 : index
    %c0_3 = arith.constant 0 : index
    %c0_4 = arith.constant 0 : index
    %1 = vector.load %arg2[%c0_2, %c0_3, %c0_4] : memref<16x16x16xbf16, #tpu.memory_space<vmem>>, vector<16x16x16xbf16>
    %2 = arith.extf %1 : vector<16x16x16xbf16> to vector<16x16x16xf32>
    %c0_5 = arith.constant 0 : index
    %c0_6 = arith.constant 0 : index
    %c0_7 = arith.constant 0 : index
    %3 = vector.load %arg3[%c0_5, %c0_6, %c0_7] : memref<16x16x1xf32, #tpu.memory_space<vmem>>, vector<16x16x1xf32>
    %c0_8 = arith.constant 0 : index
    %c0_9 = arith.constant 0 : index
    %c0_10 = arith.constant 0 : index
    %4 = vector.load %arg4[%c0_8, %c0_9, %c0_10] : memref<16x16x1xf32, #tpu.memory_space<vmem>>, vector<16x16x1xf32>
    %c0_11 = arith.constant 0 : index
    %c0_12 = arith.constant 0 : index
    %c0_13 = arith.constant 0 : index
    %5 = vector.load %arg5[%c0_11, %c0_12, %c0_13] : memref<16x16x32xf32, #tpu.memory_space<vmem>>, vector<16x16x32xf32>
    %cst = arith.constant dense<0.000000e+00> : vector<16x1xf32>
    %6 = vector.multi_reduction <add>, %3, %cst [1] : vector<16x16x1xf32> to vector<16x1xf32>
    %7 = vector.shape_cast %6 : vector<16x1xf32> to vector<16x1x1xf32>
    %cst_14 = arith.constant 1.000000e+00 : f32
    %8 = vector.broadcast %cst_14 : f32 to vector<16x1x1xf32>
    %9 = arith.maximumf %7, %8 : vector<16x1x1xf32>
    %10 = vector.broadcast %3 : vector<16x16x1xf32> to vector<16x16x32xf32>
    %11 = arith.mulf %0, %10 : vector<16x16x32xf32>
    %cst_15 = arith.constant dense<0.000000e+00> : vector<16x32xf32>
    %12 = vector.multi_reduction <add>, %11, %cst_15 [1] : vector<16x16x32xf32> to vector<16x32xf32>
    %13 = vector.shape_cast %12 : vector<16x32xf32> to vector<16x1x32xf32>
    %14 = vector.broadcast %9 : vector<16x1x1xf32> to vector<16x1x32xf32>
    %15 = arith.divf %13, %14 : vector<16x1x32xf32>
    %16 = vector.broadcast %15 : vector<16x1x32xf32> to vector<16x16x32xf32>
    %17 = arith.subf %0, %16 : vector<16x16x32xf32>
    %18 = vector.broadcast %3 : vector<16x16x1xf32> to vector<16x16x32xf32>
    %19 = arith.mulf %17, %18 : vector<16x16x32xf32>
    %20 = arith.mulf %19, %19 : vector<16x16x32xf32>
    %cst_16 = arith.constant dense<0.000000e+00> : vector<16x32xf32>
    %21 = vector.multi_reduction <add>, %20, %cst_16 [1] : vector<16x16x32xf32> to vector<16x32xf32>
    %22 = vector.shape_cast %21 : vector<16x32xf32> to vector<16x1x32xf32>
    %cst_17 = arith.constant 1.000000e+00 : f32
    %23 = vector.broadcast %cst_17 : f32 to vector<16x1x1xf32>
    %24 = arith.subf %7, %23 : vector<16x1x1xf32>
    %cst_18 = arith.constant 1.000000e+00 : f32
    %25 = vector.broadcast %cst_18 : f32 to vector<16x1x1xf32>
    %26 = arith.maximumf %24, %25 : vector<16x1x1xf32>
    %27 = vector.broadcast %26 : vector<16x1x1xf32> to vector<16x1x32xf32>
    %28 = arith.divf %22, %27 : vector<16x1x32xf32>
    %29 = math.sqrt %28 : vector<16x1x32xf32>
    %30 = vector.shape_cast %0 : vector<16x16x32xf32> to vector<256x32xf32>
    %c0_19 = arith.constant 0 : index
    %c0_20 = arith.constant 0 : index
    %31 = vector.load %arg6[%c0_19, %c0_20] : memref<32x32xf32, #tpu.memory_space<vmem>>, vector<32x32xf32>
    %cst_21 = arith.constant dense<0.000000e+00> : vector<256x32xf32>
    %32 = tpu.matmul %30, %31, %cst_21 {dimension_numbers = #tpu.dot_dimension_numbers<[1], [0], [0], [1], [0, 0, 1, 1], [], []>} : vector<256x32xf32>, vector<32x32xf32>, vector<256x32xf32> -> vector<256x32xf32>
    %c0_22 = arith.constant 0 : index
    %c0_23 = arith.constant 0 : index
    %33 = vector.load %arg7[%c0_22, %c0_23] : memref<1x32xf32, #tpu.memory_space<vmem>>, vector<1x32xf32>
    %34 = vector.broadcast %33 : vector<1x32xf32> to vector<256x32xf32>
    %35 = arith.addf %32, %34 : vector<256x32xf32>
    %36 = math.tanh %35 : vector<256x32xf32>
    %c0_24 = arith.constant 0 : index
    %c0_25 = arith.constant 0 : index
    %37 = vector.load %arg8[%c0_24, %c0_25] : memref<1x32xf32, #tpu.memory_space<vmem>>, vector<1x32xf32>
    %38 = vector.broadcast %37 : vector<1x32xf32> to vector<256x32xf32>
    %39 = arith.mulf %36, %38 : vector<256x32xf32>
    %cst_26 = arith.constant dense<0.000000e+00> : vector<256xf32>
    %40 = vector.multi_reduction <add>, %39, %cst_26 [1] : vector<256x32xf32> to vector<256xf32>
    %41 = vector.shape_cast %40 : vector<256xf32> to vector<256x1xf32>
    %c0_27 = arith.constant 0 : index
    %c0_28 = arith.constant 0 : index
    %42 = vector.load %arg9[%c0_27, %c0_28] : memref<1x1xf32, #tpu.memory_space<vmem>>, vector<1x1xf32>
    %43 = vector.broadcast %42 : vector<1x1xf32> to vector<256x1xf32>
    %44 = arith.addf %41, %43 : vector<256x1xf32>
    %cst_29 = arith.constant 0.000000e+00 : f32
    %45 = vector.broadcast %cst_29 : f32 to vector<256x1xf32>
    %46 = arith.subf %45, %44 : vector<256x1xf32>
    %47 = math.exp %46 : vector<256x1xf32>
    %cst_30 = arith.constant 1.000000e+00 : f32
    %48 = vector.broadcast %cst_30 : f32 to vector<256x1xf32>
    %49 = arith.addf %48, %47 : vector<256x1xf32>
    %cst_31 = arith.constant 1.000000e+00 : f32
    %50 = vector.broadcast %cst_31 : f32 to vector<256x1xf32>
    %51 = arith.divf %50, %49 : vector<256x1xf32>
    %52 = vector.shape_cast %51 : vector<256x1xf32> to vector<16x16x1xf32>
    %cst_32 = arith.constant 1.000000e+00 : f32
    %53 = vector.broadcast %cst_32 : f32 to vector<16x16x1xf32>
    %54 = arith.subf %53, %52 : vector<16x16x1xf32>
    %cst_33 = arith.constant 2.000000e+00 : f32
    %55 = vector.broadcast %cst_33 : f32 to vector<16x16x1xf32>
    %56 = arith.mulf %55, %52 : vector<16x16x1xf32>
    %cst_34 = arith.constant 1.000000e+00 : f32
    %57 = vector.broadcast %cst_34 : f32 to vector<16x16x1xf32>
    %58 = arith.subf %56, %57 : vector<16x16x1xf32>
    %59 = arith.addf %58, %4 : vector<16x16x1xf32>
    %cst_35 = arith.constant 0.000000e+00 : f32
    %60 = vector.broadcast %cst_35 : f32 to vector<16x16x1xf32>
    %61 = arith.subf %60, %59 : vector<16x16x1xf32>
    %62 = math.exp %61 : vector<16x16x1xf32>
    %cst_36 = arith.constant 1.000000e+00 : f32
    %63 = vector.broadcast %cst_36 : f32 to vector<16x16x1xf32>
    %64 = arith.addf %63, %62 : vector<16x16x1xf32>
    %cst_37 = arith.constant 1.000000e+00 : f32
    %65 = vector.broadcast %cst_37 : f32 to vector<16x16x1xf32>
    %66 = arith.divf %65, %64 : vector<16x16x1xf32>
    %cst_38 = arith.constant 1.000000e+00 : f32
    %67 = vector.broadcast %cst_38 : f32 to vector<16x16x1xf32>
    %68 = arith.subf %67, %66 : vector<16x16x1xf32>
    %cst_39 = arith.constant dense<0.000000e+00> : vector<16x32xf32>
    %69 = vector.multi_reduction <add>, %11, %cst_39 [1] : vector<16x16x32xf32> to vector<16x32xf32>
    %70 = vector.shape_cast %69 : vector<16x32xf32> to vector<16x1x32xf32>
    %71 = vector.broadcast %66 : vector<16x16x1xf32> to vector<16x16x32xf32>
    %72 = arith.mulf %71, %0 : vector<16x16x32xf32>
    %73 = vector.broadcast %68 : vector<16x16x1xf32> to vector<16x16x32xf32>
    %74 = vector.broadcast %15 : vector<16x1x32xf32> to vector<16x16x32xf32>
    %75 = arith.mulf %73, %74 : vector<16x16x32xf32>
    %76 = arith.addf %72, %75 : vector<16x16x32xf32>
    %77 = vector.broadcast %68 : vector<16x16x1xf32> to vector<16x16x32xf32>
    %78 = vector.broadcast %29 : vector<16x1x32xf32> to vector<16x16x32xf32>
    %79 = arith.mulf %77, %78 : vector<16x16x32xf32>
    %80 = arith.mulf %5, %79 : vector<16x16x32xf32>
    %81 = arith.addf %76, %80 : vector<16x16x32xf32>
    %82 = vector.broadcast %3 : vector<16x16x1xf32> to vector<16x16x32xf32>
    %83 = arith.mulf %81, %82 : vector<16x16x32xf32>
    %cst_40 = arith.constant dense<0.000000e+00> : vector<16x32xf32>
    %84 = vector.multi_reduction <add>, %83, %cst_40 [1] : vector<16x16x32xf32> to vector<16x32xf32>
    %85 = vector.shape_cast %84 : vector<16x32xf32> to vector<16x1x32xf32>
    %cst_41 = arith.constant 1.000000e-07 : f32
    %86 = vector.broadcast %cst_41 : f32 to vector<16x1x32xf32>
    %87 = arith.addf %29, %86 : vector<16x1x32xf32>
    %cst_42 = arith.constant 1.000000e+00 : f32
    %88 = vector.broadcast %cst_42 : f32 to vector<16x1x32xf32>
    %89 = arith.divf %88, %87 : vector<16x1x32xf32>
    %90 = arith.mulf %89, %89 : vector<16x1x32xf32>
    %91 = vector.broadcast %15 : vector<16x1x32xf32> to vector<16x16x32xf32>
    %92 = arith.subf %76, %91 : vector<16x16x32xf32>
    %93 = vector.broadcast %89 : vector<16x1x32xf32> to vector<16x16x32xf32>
    %94 = arith.mulf %92, %93 : vector<16x16x32xf32>
    %95 = arith.mulf %94, %94 : vector<16x16x32xf32>
    %96 = vector.broadcast %3 : vector<16x16x1xf32> to vector<16x16x32xf32>
    %97 = arith.mulf %95, %96 : vector<16x16x32xf32>
    %cst_43 = arith.constant dense<0.000000e+00> : vector<16x32xf32>
    %98 = vector.multi_reduction <add>, %97, %cst_43 [1] : vector<16x16x32xf32> to vector<16x32xf32>
    %99 = vector.shape_cast %98 : vector<16x32xf32> to vector<16x1x32xf32>
    %100 = arith.mulf %79, %79 : vector<16x16x32xf32>
    %cst_44 = arith.constant 5.000000e-01 : f32
    %101 = vector.broadcast %cst_44 : f32 to vector<16x16x32xf32>
    %102 = arith.mulf %101, %100 : vector<16x16x32xf32>
    %103 = vector.broadcast %90 : vector<16x1x32xf32> to vector<16x16x32xf32>
    %104 = arith.mulf %102, %103 : vector<16x16x32xf32>
    %105 = vector.broadcast %99 : vector<16x1x32xf32> to vector<16x16x32xf32>
    %106 = arith.addf %104, %105 : vector<16x16x32xf32>
    %107 = vector.broadcast %3 : vector<16x16x1xf32> to vector<16x16x32xf32>
    %108 = arith.mulf %106, %107 : vector<16x16x32xf32>
    %cst_45 = arith.constant dense<0.000000e+00> : vector<16x16xf32>
    %109 = vector.multi_reduction <add>, %108, %cst_45 [2] : vector<16x16x32xf32> to vector<16x16xf32>
    %110 = vector.shape_cast %109 : vector<16x16xf32> to vector<16x16x1xf32>
    %cst_46 = arith.constant dense<0.000000e+00> : vector<16x1xf32>
    %111 = vector.multi_reduction <add>, %110, %cst_46 [1] : vector<16x16x1xf32> to vector<16x1xf32>
    %112 = vector.shape_cast %111 : vector<16x1xf32> to vector<16x1x1xf32>
    %cst_47 = arith.constant 3.200000e+01 : f32
    %113 = vector.broadcast %cst_47 : f32 to vector<16x1x1xf32>
    %114 = arith.mulf %9, %113 : vector<16x1x1xf32>
    %115 = arith.divf %112, %114 : vector<16x1x1xf32>
    %116 = tpu.iota {dimensions = array<i32: 1>} : vector<1x16x16xi32>
    %117 = tpu.iota {dimensions = array<i32: 2>} : vector<1x16x16xi32>
    %118 = arith.cmpi eq, %116, %117 : vector<1x16x16xi32>
    %119 = arith.extui %118 : vector<1x16x16xi1> to vector<1x16x16xi32>
    %120 = arith.sitofp %119 : vector<1x16x16xi32> to vector<1x16x16xf32>
    %121 = vector.broadcast %52 : vector<16x16x1xf32> to vector<16x16x16xf32>
    %122 = vector.broadcast %120 : vector<1x16x16xf32> to vector<16x16x16xf32>
    %123 = arith.mulf %121, %122 : vector<16x16x16xf32>
    %cst_48 = arith.constant dense<0.000000e+00> : vector<16x16xf32>
    %124 = vector.multi_reduction <add>, %123, %cst_48 [1] : vector<16x16x16xf32> to vector<16x16xf32>
    %125 = vector.shape_cast %124 : vector<16x16xf32> to vector<16x1x16xf32>
    %cst_49 = arith.constant dense<0.000000e+00> : vector<16x16xf32>
    %126 = vector.multi_reduction <add>, %2, %cst_49 [2] : vector<16x16x16xf32> to vector<16x16xf32>
    %127 = vector.shape_cast %126 : vector<16x16xf32> to vector<16x16x1xf32>
    %128 = vector.broadcast %125 : vector<16x1x16xf32> to vector<16x16x16xf32>
    %129 = arith.mulf %2, %128 : vector<16x16x16xf32>
    %cst_50 = arith.constant dense<0.000000e+00> : vector<16x16xf32>
    %130 = vector.multi_reduction <add>, %129, %cst_50 [2] : vector<16x16x16xf32> to vector<16x16xf32>
    %131 = vector.shape_cast %130 : vector<16x16xf32> to vector<16x16x1xf32>
    %132 = arith.subf %127, %131 : vector<16x16x1xf32>
    %133 = arith.mulf %52, %131 : vector<16x16x1xf32>
    %cst_51 = arith.constant dense<0.000000e+00> : vector<16x1xf32>
    %134 = vector.multi_reduction <add>, %133, %cst_51 [1] : vector<16x16x1xf32> to vector<16x1xf32>
    %135 = vector.shape_cast %134 : vector<16x1xf32> to vector<16x1x1xf32>
    %136 = arith.mulf %52, %132 : vector<16x16x1xf32>
    %cst_52 = arith.constant dense<0.000000e+00> : vector<16x1xf32>
    %137 = vector.multi_reduction <add>, %136, %cst_52 [1] : vector<16x16x1xf32> to vector<16x1xf32>
    %138 = vector.shape_cast %137 : vector<16x1xf32> to vector<16x1x1xf32>
    %139 = arith.mulf %54, %131 : vector<16x16x1xf32>
    %cst_53 = arith.constant dense<0.000000e+00> : vector<16x1xf32>
    %140 = vector.multi_reduction <add>, %139, %cst_53 [1] : vector<16x16x1xf32> to vector<16x1xf32>
    %141 = vector.shape_cast %140 : vector<16x1xf32> to vector<16x1x1xf32>
    %142 = arith.mulf %54, %132 : vector<16x16x1xf32>
    %cst_54 = arith.constant dense<0.000000e+00> : vector<16x1xf32>
    %143 = vector.multi_reduction <add>, %142, %cst_54 [1] : vector<16x16x1xf32> to vector<16x1xf32>
    %144 = vector.shape_cast %143 : vector<16x1xf32> to vector<16x1x1xf32>
    %145 = math.absf %135 : vector<16x1x1xf32>
    %146 = math.absf %138 : vector<16x1x1xf32>
    %147 = arith.addf %145, %146 : vector<16x1x1xf32>
    %cst_55 = arith.constant 9.99999996E-13 : f32
    %148 = vector.broadcast %cst_55 : f32 to vector<16x1x1xf32>
    %149 = arith.maximumf %147, %148 : vector<16x1x1xf32>
    %150 = math.absf %141 : vector<16x1x1xf32>
    %151 = math.absf %144 : vector<16x1x1xf32>
    %152 = arith.addf %150, %151 : vector<16x1x1xf32>
    %cst_56 = arith.constant 9.99999996E-13 : f32
    %153 = vector.broadcast %cst_56 : f32 to vector<16x1x1xf32>
    %154 = arith.maximumf %152, %153 : vector<16x1x1xf32>
    %155 = arith.divf %135, %149 : vector<16x1x1xf32>
    %156 = arith.divf %144, %154 : vector<16x1x1xf32>
    %cst_57 = arith.constant 1.000000e+00 : f32
    %157 = vector.broadcast %cst_57 : f32 to vector<16x1x1xf32>
    %158 = arith.subf %155, %157 : vector<16x1x1xf32>
    %159 = arith.mulf %158, %158 : vector<16x1x1xf32>
    %cst_58 = arith.constant 1.000000e+00 : f32
    %160 = vector.broadcast %cst_58 : f32 to vector<16x1x1xf32>
    %161 = arith.subf %156, %160 : vector<16x1x1xf32>
    %162 = arith.mulf %161, %161 : vector<16x1x1xf32>
    %163 = arith.addf %159, %162 : vector<16x1x1xf32>
    %cst_59 = arith.constant 5.000000e-01 : f32
    %164 = vector.broadcast %cst_59 : f32 to vector<16x1x1xf32>
    %165 = arith.mulf %164, %163 : vector<16x1x1xf32>
    %cst_60 = arith.constant 0.000000e+00 : f32
    %166 = vector.broadcast %cst_60 : f32 to vector<16x16x1xf32>
    %167 = arith.cmpf ogt, %3, %166 : vector<16x16x1xf32>
    %cst_61 = arith.constant 5.000000e-01 : f32
    %168 = vector.broadcast %cst_61 : f32 to vector<16x16x1xf32>
    %169 = arith.cmpf ogt, %52, %168 : vector<16x16x1xf32>
    %170 = arith.andi %169, %167 : vector<16x16x1xi1>
    %cst_62 = arith.constant 1.000000e+00 : f32
    %cst_63 = arith.constant 0.000000e+00 : f32
    %171 = vector.broadcast %cst_62 : f32 to vector<16x16x1xf32>
    %172 = vector.broadcast %cst_63 : f32 to vector<16x16x1xf32>
    %173 = arith.select %170, %171, %172 : vector<16x16x1xi1>, vector<16x16x1xf32>
    %cst_64 = arith.constant dense<0.000000e+00> : vector<16x1xf32>
    %174 = vector.multi_reduction <add>, %173, %cst_64 [1] : vector<16x16x1xf32> to vector<16x1xf32>
    %175 = vector.shape_cast %174 : vector<16x1xf32> to vector<16x1x1xf32>
    %176 = arith.divf %175, %9 : vector<16x1x1xf32>
    %cst_65 = arith.constant 5.000000e-01 : f32
    %177 = vector.broadcast %cst_65 : f32 to vector<16x16x1xf32>
    %178 = arith.cmpf ogt, %66, %177 : vector<16x16x1xf32>
    %179 = arith.andi %178, %167 : vector<16x16x1xi1>
    %cst_66 = arith.constant 1.000000e+00 : f32
    %cst_67 = arith.constant 0.000000e+00 : f32
    %180 = vector.broadcast %cst_66 : f32 to vector<16x16x1xf32>
    %181 = vector.broadcast %cst_67 : f32 to vector<16x16x1xf32>
    %182 = arith.select %179, %180, %181 : vector<16x16x1xi1>, vector<16x16x1xf32>
    %183 = vector.broadcast %182 : vector<16x16x1xf32> to vector<16x16x16xf32>
    %184 = vector.broadcast %120 : vector<1x16x16xf32> to vector<16x16x16xf32>
    %185 = arith.mulf %183, %184 : vector<16x16x16xf32>
    %cst_68 = arith.constant dense<0.000000e+00> : vector<16x16xf32>
    %186 = vector.multi_reduction <add>, %185, %cst_68 [1] : vector<16x16x16xf32> to vector<16x16xf32>
    %187 = vector.shape_cast %186 : vector<16x16xf32> to vector<16x1x16xf32>
    %c0_69 = arith.constant 0 : index
    %c0_70 = arith.constant 0 : index
    %c0_71 = arith.constant 0 : index
    %188 = vector.load %arg10[%c0_69, %c0_70, %c0_71] : memref<16x1x32xf32, #tpu.memory_space<vmem>>, vector<16x1x32xf32>
    tpu.vector_store %arg10[%c0_69, %c0_70, %c0_71], %70 {strides = array<i32>} : memref<16x1x32xf32, #tpu.memory_space<vmem>>, vector<16x1x32xf32>,
    %c0_72 = arith.constant 0 : index
    %c0_73 = arith.constant 0 : index
    %c0_74 = arith.constant 0 : index
    %189 = vector.load %arg11[%c0_72, %c0_73, %c0_74] : memref<16x1x32xf32, #tpu.memory_space<vmem>>, vector<16x1x32xf32>
    tpu.vector_store %arg11[%c0_72, %c0_73, %c0_74], %85 {strides = array<i32>} : memref<16x1x32xf32, #tpu.memory_space<vmem>>, vector<16x1x32xf32>,
    %190 = tpu.iota {dimensions = array<i32: 2>} : vector<16x1x128xi32>
    %c0_i32 = arith.constant 0 : i32
    %191 = vector.broadcast %c0_i32 : i32 to vector<16x1x128xi32>
    %192 = arith.cmpi eq, %190, %191 : vector<16x1x128xi32>
    %cst_75 = arith.constant 0.000000e+00 : f32
    %193 = vector.shape_cast %115 : vector<16x1x1xf32> to vector<16x1x1xf32>
    %194 = vector.broadcast %193 : vector<16x1x1xf32> to vector<16x1x128xf32>
    %195 = vector.broadcast %cst_75 : f32 to vector<16x1x128xf32>
    %196 = arith.select %192, %194, %195 : vector<16x1x128xi1>, vector<16x1x128xf32>
    %c1_i32 = arith.constant 1 : i32
    %197 = vector.broadcast %c1_i32 : i32 to vector<16x1x128xi32>
    %198 = arith.cmpi eq, %190, %197 : vector<16x1x128xi32>
    %cst_76 = arith.constant 0.000000e+00 : f32
    %199 = vector.shape_cast %165 : vector<16x1x1xf32> to vector<16x1x1xf32>
    %200 = vector.broadcast %199 : vector<16x1x1xf32> to vector<16x1x128xf32>
    %201 = vector.broadcast %cst_76 : f32 to vector<16x1x128xf32>
    %202 = arith.select %198, %200, %201 : vector<16x1x128xi1>, vector<16x1x128xf32>
    %203 = arith.addf %196, %202 : vector<16x1x128xf32>
    %c2_i32 = arith.constant 2 : i32
    %204 = vector.broadcast %c2_i32 : i32 to vector<16x1x128xi32>
    %205 = arith.cmpi eq, %190, %204 : vector<16x1x128xi32>
    %cst_77 = arith.constant 0.000000e+00 : f32
    %206 = vector.shape_cast %176 : vector<16x1x1xf32> to vector<16x1x1xf32>
    %207 = vector.broadcast %206 : vector<16x1x1xf32> to vector<16x1x128xf32>
    %208 = vector.broadcast %cst_77 : f32 to vector<16x1x128xf32>
    %209 = arith.select %205, %207, %208 : vector<16x1x128xi1>, vector<16x1x128xf32>
    %210 = arith.addf %203, %209 : vector<16x1x128xf32>
    %c0_78 = arith.constant 0 : index
    %c0_79 = arith.constant 0 : index
    %c0_80 = arith.constant 0 : index
    %211 = vector.load %arg12[%c0_78, %c0_79, %c0_80] : memref<16x1x128xf32, #tpu.memory_space<vmem>>, vector<16x1x128xf32>
    tpu.vector_store %arg12[%c0_78, %c0_79, %c0_80], %210 {strides = array<i32>} : memref<16x1x128xf32, #tpu.memory_space<vmem>>, vector<16x1x128xf32>,
    %cst_81 = arith.constant 5.000000e-01 : f32
    %212 = vector.broadcast %cst_81 : f32 to vector<16x1x16xf32>
    %213 = arith.cmpf ogt, %187, %212 : vector<16x1x16xf32>
    %214 = arith.extui %213 : vector<16x1x16xi1> to vector<16x1x16xi32>
    %c0_82 = arith.constant 0 : index
    %c0_83 = arith.constant 0 : index
    %c0_84 = arith.constant 0 : index
    %215 = vector.load %arg13[%c0_82, %c0_83, %c0_84] : memref<16x1x16xi32, #tpu.memory_space<vmem>>, vector<16x1x16xi32>
    tpu.vector_store %arg13[%c0_82, %c0_83, %c0_84], %214 {strides = array<i32>} : memref<16x1x16xi32, #tpu.memory_space<vmem>>, vector<16x1x16xi32>,
    return
  }
  func.func @transform_0(%arg0: i32) -> (i32, i32, i32) {
    %c0_i32 = arith.constant 0 : i32
    %c0_i32_0 = arith.constant 0 : i32
    %c0_i32_1 = arith.constant 0 : i32
    return %arg0, %c0_i32, %c0_i32_0 : i32, i32, i32
  }
  func.func @transform_1(%arg0: i32) -> (i32, i32, i32) {
    %c0_i32 = arith.constant 0 : i32
    %c0_i32_0 = arith.constant 0 : i32
    %c0_i32_1 = arith.constant 0 : i32
    return %arg0, %c0_i32, %c0_i32_0 : i32, i32, i32
  }
  func.func @transform_2(%arg0: i32) -> (i32, i32, i32) {
    %c0_i32 = arith.constant 0 : i32
    %c0_i32_0 = arith.constant 0 : i32
    %c0_i32_1 = arith.constant 0 : i32
    return %arg0, %c0_i32, %c0_i32_0 : i32, i32, i32
  }
  func.func @transform_3(%arg0: i32) -> (i32, i32, i32) {
    %c0_i32 = arith.constant 0 : i32
    %c0_i32_0 = arith.constant 0 : i32
    %c0_i32_1 = arith.constant 0 : i32
    return %arg0, %c0_i32, %c0_i32_0 : i32, i32, i32
  }
  func.func @transform_4(%arg0: i32) -> (i32, i32, i32) {
    %c0_i32 = arith.constant 0 : i32
    %c0_i32_0 = arith.constant 0 : i32
    %c0_i32_1 = arith.constant 0 : i32
    return %arg0, %c0_i32, %c0_i32_0 : i32, i32, i32
  }
  func.func @transform_5(%arg0: i32) -> (i32, i32) {
    %c0_i32 = arith.constant 0 : i32
    %c0_i32_0 = arith.constant 0 : i32
    %c0_i32_1 = arith.constant 0 : i32
    return %c0_i32, %c0_i32_0 : i32, i32
  }
  func.func @transform_6(%arg0: i32) -> (i32, i32) {
    %c0_i32 = arith.constant 0 : i32
    %c0_i32_0 = arith.constant 0 : i32
    %c0_i32_1 = arith.constant 0 : i32
    return %c0_i32, %c0_i32_0 : i32, i32
  }
  func.func @transform_7(%arg0: i32) -> (i32, i32) {
    %c0_i32 = arith.constant 0 : i32
    %c0_i32_0 = arith.constant 0 : i32
    %c0_i32_1 = arith.constant 0 : i32
    return %c0_i32, %c0_i32_0 : i32, i32
  }
  func.func @transform_8(%arg0: i32) -> (i32, i32) {
    %c0_i32 = arith.constant 0 : i32
    %c0_i32_0 = arith.constant 0 : i32
    %c0_i32_1 = arith.constant 0 : i32
    return %c0_i32, %c0_i32_0 : i32, i32
  }
  func.func @transform_9(%arg0: i32) -> (i32, i32, i32) {
    %c0_i32 = arith.constant 0 : i32
    %c0_i32_0 = arith.constant 0 : i32
    %c0_i32_1 = arith.constant 0 : i32
    return %arg0, %c0_i32, %c0_i32_0 : i32, i32, i32
  }
  func.func @transform_10(%arg0: i32) -> (i32, i32, i32) {
    %c0_i32 = arith.constant 0 : i32
    %c0_i32_0 = arith.constant 0 : i32
    %c0_i32_1 = arith.constant 0 : i32
    return %arg0, %c0_i32, %c0_i32_0 : i32, i32, i32
  }
  func.func @transform_11(%arg0: i32) -> (i32, i32, i32) {
    %c0_i32 = arith.constant 0 : i32
    %c0_i32_0 = arith.constant 0 : i32
    %c0_i32_1 = arith.constant 0 : i32
    return %arg0, %c0_i32, %c0_i32_0 : i32, i32, i32
  }
  func.func @transform_12(%arg0: i32) -> (i32, i32, i32) {
    %c0_i32 = arith.constant 0 : i32
    %c0_i32_0 = arith.constant 0 : i32
    %c0_i32_1 = arith.constant 0 : i32
    return %arg0, %c0_i32, %c0_i32_0 : i32, i32, i32
  }
}

</mosaic_0001>

<llo_original>
// kernel: tpu_custom_call.1
$region0: #{tpu_custom_call.1}
  #allocation0 [shape = 'u32[]', space=smem, size = 0x4, offset = 0x4, fixed_abs, tag = 'smem constant byte address 0x4 - core index']
  #allocation1 [shape = 'u32[144,128]{1,0:T(1,128)}', space=vmem, size = 0x12000, scoped, tag = 'internal scratch']
  #allocation2 [shape = 'f32[1,1]{1,0:T(1,128)S(1)}', space=vmem, size = 0x200, scoped, tag = 'scoped memory for tpu_custom_call.1']
  %s0 = inlined_call_operand.vmem [shape: f32[32,16,32], index: 0, kind: input, shape index: {}]
  %s1 = inlined_call_operand.vmem [shape: bf16[32,16,16], index: 1, kind: input, shape index: {}]
  %s2 = inlined_call_operand.vmem [shape: f32[32,16,1], index: 2, kind: input, shape index: {}]
  %s3 = inlined_call_operand.vmem [shape: f32[32,16,1], index: 3, kind: input, shape index: {}]
  %s4 = inlined_call_operand.vmem [shape: f32[32,16,32], index: 4, kind: input, shape index: {}]
  %s5 = inlined_call_operand.vmem [shape: f32[32,32], index: 5, kind: input, shape index: {}]
  %s6 = inlined_call_operand.vmem [shape: f32[1,32], index: 6, kind: input, shape index: {}]
  %s7 = inlined_call_operand.vmem [shape: f32[1,32], index: 7, kind: input, shape index: {}]
  %s8 = inlined_call_operand.<no memory space> [shape: f32[1,1], index: 8, kind: input, shape index: {}]
  %s9 = inlined_call_operand.hbm [shape: f32[32,1,32], index: 9, kind: output, shape index: {0}]
  %s10 = inlined_call_operand.hbm [shape: f32[32,1,32], index: 10, kind: output, shape index: {1}]
  %s11 = inlined_call_operand.hbm [shape: f32[32,1,128], index: 11, kind: output, shape index: {2}]
  %s12 = inlined_call_operand.vmem [shape: s32[32,1,16], index: 12, kind: output, shape index: {3}]
  %13 = xla_tuple %s9, %s10, %s11, %s12
  %s14 = sld [smem:[#allocation0]]
  $region93: #{tpu_custom_call.1} parent=0
    _
  %s16 = ssub.s32 1, %s14
  %s17 = scalar_select 0, %s16, %s14
  %v18 = vstv %s8
  %19 = vst [vmem:[#allocation2] sm:$0x1] %v18
  $region1: #{tpu_custom_call.1} parent=0
    #allocation3 [shape = 'u8[16384]{0}', space=vmem, size = 0x4000, scoped, tag = 'output window, operand 0']
    #allocation4 [shape = 's32[2]{0}', space=sflag, size = 0x8, scoped, tag = 'scoped memory for tpu_custom_call.1']
    #allocation5 [shape = 'u8[16384]{0}', space=vmem, size = 0x4000, scoped, tag = 'output window, operand 1']
    #allocation6 [shape = 's32[2]{0}', space=sflag, size = 0x8, scoped, tag = 'scoped memory for tpu_custom_call.1']
    #allocation7 [shape = 'u8[16384]{0}', space=vmem, size = 0x4000, scoped, tag = 'output window, operand 2']
    %20 = vsyncpa [#allocation4], 0
    %s21 = scalar_lea.sflag [#allocation4], 1
    %22 = vsyncpa %s21, 0
    %23 = vsyncpa [#allocation6], 0
    %s24 = scalar_lea.sflag [#allocation6], 1
    %25 = vsyncpa %s24, 0
    loop: start=0, step=1, limit=4
    $region2: #{tpu_custom_call.1} parent=1 // loop_pre_header
      _
    $region3: #{tpu_custom_call.1} parent=1 // loop_header
      %s27 = sphi 0, %s31
      %p28 = scmp.ge.s32.totalorder %s27, 4
      %s37 = sphi 0, %s39
      %s40 = sphi 0, %s37
      %s41 = sphi 0, %s40
      %s57 = sphi 0, %s41
      %s63 = sphi 0, %s65
      %s66 = sphi 0, %s63
      %s67 = sphi 0, %s66
      %s83 = sphi 0, %s67
      %s89 = sphi 0, %s91
      %s92 = sphi 0, %s89
      %s93 = sphi 0, %s92
      %s109 = sphi 0, %s93
      %s115 = sphi 0, %s117
      %s118 = sphi 0, %s115
      %s119 = sphi 0, %s118
      %s135 = sphi 0, %s119
      %s141 = sphi 0, %s143
      %s144 = sphi 0, %s141
      %s145 = sphi 0, %s144
      %s161 = sphi 0, %s145
      %s165 = sphi 0, %s165
      %s167 = sphi 0, %s165
      %s168 = sphi 0, %s167
      %s182 = sphi 0, %s168
      %s186 = sphi 0, %s186
      %s188 = sphi 0, %s186
      %s189 = sphi 0, %s188
      %s203 = sphi 0, %s189
      %s207 = sphi 0, %s207
      %s209 = sphi 0, %s207
      %s210 = sphi 0, %s209
      %s224 = sphi 0, %s210
      %s228 = sphi 0, %s228
      %s230 = sphi 0, %s228
      %s231 = sphi 0, %s230
      %s245 = sphi 0, %s231
      %s251 = sphi 0, %s253
      %s254 = sphi 0, %s251
      %s255 = sphi 0, %s254
      %s271 = sphi 0, %s255
      %s277 = sphi 0, %s279
      %s280 = sphi 0, %s277
      %s281 = sphi 0, %s280
      %s297 = sphi 0, %s281
      %s303 = sphi 0, %s305
      %s306 = sphi 0, %s303
      %s307 = sphi 0, %s306
      %s323 = sphi 0, %s307
      %s329 = sphi 0, %s331
      %s332 = sphi 0, %s329
      %s333 = sphi 0, %s332
      %s349 = sphi 0, %s333
    $region4: #{tpu_custom_call.1} parent=1 // loop_header_branch
      %30 = sbr.rel (%p28) target = $region8
    $region5: #{tpu_custom_call.1} parent=1 // loop_body
      %s32 = ssub.s32 %s27, 1
      %s33 = ssub.s32 %s27, 2
      %s34 = sadd.s32 %s27, 1
      %s35 = ssub.s32 %s27, %s34
      %p36 = scmp.eq.s32.totalorder %s35, 0
      %s38 = sadd.s32 %s37, 1
      %s39 = scalar_select %p36, %s37, %s38
      %p42 = pneg %p36
      %p43 = scmp.eq.s32.totalorder %s27, 1
      %p44 = por %p42, %p43
      %p45 = scmp.ne.s32.totalorder %s37, %s40
      %p46 = scmp.eq.s32.totalorder %s27, 0
      %p47 = por %p45, %p46
      %p48 = scmp.ne.s32.totalorder %s37, %s40
      %p49 = scmp.eq.s32.totalorder %s32, 1
      %p50 = por %p48, %p49
      %p51 = scmp.ne.s32.totalorder %s40, %s41
      %p52 = scmp.eq.s32.totalorder %s32, 0
      %p53 = por %p51, %p52
      %p54 = scmp.ne.s32.totalorder %s40, %s41
      %p55 = scmp.eq.s32.totalorder %s33, 1
      %p56 = por %p54, %p55
      %p58 = scmp.ne.s32.totalorder %s41, %s57
      %p59 = scmp.eq.s32.totalorder %s33, 0
      %p60 = por %p58, %p59
      %s61 = ssub.s32 %s27, %s34
      %p62 = scmp.eq.s32.totalorder %s61, 0
      %s64 = sadd.s32 %s63, 1
      %s65 = scalar_select %p62, %s63, %s64
      %p68 = pneg %p62
      %p69 = scmp.eq.s32.totalorder %s27, 1
      %p70 = por %p68, %p69
      %p71 = scmp.ne.s32.totalorder %s63, %s66
      %p72 = scmp.eq.s32.totalorder %s27, 0
      %p73 = por %p71, %p72
      %p74 = scmp.ne.s32.totalorder %s63, %s66
      %p75 = scmp.eq.s32.totalorder %s32, 1
      %p76 = por %p74, %p75
      %p77 = scmp.ne.s32.totalorder %s66, %s67
      %p78 = scmp.eq.s32.totalorder %s32, 0
      %p79 = por %p77, %p78
      %p80 = scmp.ne.s32.totalorder %s66, %s67
      %p81 = scmp.eq.s32.totalorder %s33, 1
      %p82 = por %p80, %p81
      %p84 = scmp.ne.s32.totalorder %s67, %s83
      %p85 = scmp.eq.s32.totalorder %s33, 0
      %p86 = por %p84, %p85
      %s87 = ssub.s32 %s27, %s34
      %p88 = scmp.eq.s32.totalorder %s87, 0
      %s90 = sadd.s32 %s89, 1
      %s91 = scalar_select %p88, %s89, %s90
      %p94 = pneg %p88
      %p95 = scmp.eq.s32.totalorder %s27, 1
      %p96 = por %p94, %p95
      %p97 = scmp.ne.s32.totalorder %s89, %s92
      %p98 = scmp.eq.s32.totalorder %s27, 0
      %p99 = por %p97, %p98
      %p100 = scmp.ne.s32.totalorder %s89, %s92
      %p101 = scmp.eq.s32.totalorder %s32, 1
      %p102 = por %p100, %p101
      %p103 = scmp.ne.s32.totalorder %s92, %s93
      %p104 = scmp.eq.s32.totalorder %s32, 0
      %p105 = por %p103, %p104
      %p106 = scmp.ne.s32.totalorder %s92, %s93
      %p107 = scmp.eq.s32.totalorder %s33, 1
      %p108 = por %p106, %p107
      %p110 = scmp.ne.s32.totalorder %s93, %s109
      %p111 = scmp.eq.s32.totalorder %s33, 0
      %p112 = por %p110, %p111
      %s113 = ssub.s32 %s27, %s34
      %p114 = scmp.eq.s32.totalorder %s113, 0
      %s116 = sadd.s32 %s115, 1
      %s117 = scalar_select %p114, %s115, %s116
      %p120 = pneg %p114
      %p121 = scmp.eq.s32.totalorder %s27, 1
      %p122 = por %p120, %p121
      %p123 = scmp.ne.s32.totalorder %s115, %s118
      %p124 = scmp.eq.s32.totalorder %s27, 0
      %p125 = por %p123, %p124
      %p126 = scmp.ne.s32.totalorder %s115, %s118
      %p127 = scmp.eq.s32.totalorder %s32, 1
      %p128 = por %p126, %p127
      %p129 = scmp.ne.s32.totalorder %s118, %s119
      %p130 = scmp.eq.s32.totalorder %s32, 0
      %p131 = por %p129, %p130
      %p132 = scmp.ne.s32.totalorder %s118, %s119
      %p133 = scmp.eq.s32.totalorder %s33, 1
      %p134 = por %p132, %p133
      %p136 = scmp.ne.s32.totalorder %s119, %s135
      %p137 = scmp.eq.s32.totalorder %s33, 0
      %p138 = por %p136, %p137
      %s139 = ssub.s32 %s27, %s34
      %p140 = scmp.eq.s32.totalorder %s139, 0
      %s142 = sadd.s32 %s141, 1
      %s143 = scalar_select %p140, %s141, %s142
      %p146 = pneg %p140
      %p147 = scmp.eq.s32.totalorder %s27, 1
      %p148 = por %p146, %p147
      %p149 = scmp.ne.s32.totalorder %s141, %s144
      %p150 = scmp.eq.s32.totalorder %s27, 0
      %p151 = por %p149, %p150
      %p152 = scmp.ne.s32.totalorder %s141, %s144
      %p153 = scmp.eq.s32.totalorder %s32, 1
      %p154 = por %p152, %p153
      %p155 = scmp.ne.s32.totalorder %s144, %s145
      %p156 = scmp.eq.s32.totalorder %s32, 0
      %p157 = por %p155, %p156
      %p158 = scmp.ne.s32.totalorder %s144, %s145
      %p159 = scmp.eq.s32.totalorder %s33, 1
      %p160 = por %p158, %p159
      %p162 = scmp.ne.s32.totalorder %s145, %s161
      %p163 = scmp.eq.s32.totalorder %s33, 0
      %p164 = por %p162, %p163
      %s166 = sadd.s32 %s165, 1
      %p169 = scmp.eq.s32.totalorder %s27, 1
      %p170 = scmp.ne.s32.totalorder %s165, %s167
      %p171 = scmp.eq.s32.totalorder %s27, 0
      %p172 = por %p170, %p171
      %p173 = scmp.ne.s32.totalorder %s165, %s167
      %p174 = scmp.eq.s32.totalorder %s32, 1
      %p175 = por %p173, %p174
      %p176 = scmp.ne.s32.totalorder %s167, %s168
      %p177 = scmp.eq.s32.totalorder %s32, 0
      %p178 = por %p176, %p177
      %p179 = scmp.ne.s32.totalorder %s167, %s168
      %p180 = scmp.eq.s32.totalorder %s33, 1
      %p181 = por %p179, %p180
      %p183 = scmp.ne.s32.totalorder %s168, %s182
      %p184 = scmp.eq.s32.totalorder %s33, 0
      %p185 = por %p183, %p184
      %s187 = sadd.s32 %s186, 1
      %p190 = scmp.eq.s32.totalorder %s27, 1
      %p191 = scmp.ne.s32.totalorder %s186, %s188
      %p192 = scmp.eq.s32.totalorder %s27, 0
      %p193 = por %p191, %p192
      %p194 = scmp.ne.s32.totalorder %s186, %s188
      %p195 = scmp.eq.s32.totalorder %s32, 1
      %p196 = por %p194, %p195
      %p197 = scmp.ne.s32.totalorder %s188, %s189
      %p198 = scmp.eq.s32.totalorder %s32, 0
      %p199 = por %p197, %p198
      %p200 = scmp.ne.s32.totalorder %s188, %s189
      %p201 = scmp.eq.s32.totalorder %s33, 1
      %p202 = por %p200, %p201
      %p204 = scmp.ne.s32.totalorder %s189, %s203
      %p205 = scmp.eq.s32.totalorder %s33, 0
      %p206 = por %p204, %p205
      %s208 = sadd.s32 %s207, 1
      %p211 = scmp.eq.s32.totalorder %s27, 1
      %p212 = scmp.ne.s32.totalorder %s207, %s209
      %p213 = scmp.eq.s32.totalorder %s27, 0
      %p214 = por %p212, %p213
      %p215 = scmp.ne.s32.totalorder %s207, %s209
      %p216 = scmp.eq.s32.totalorder %s32, 1
      %p217 = por %p215, %p216
      %p218 = scmp.ne.s32.totalorder %s209, %s210
      %p219 = scmp.eq.s32.totalorder %s32, 0
      %p220 = por %p218, %p219
      %p221 = scmp.ne.s32.totalorder %s209, %s210
      %p222 = scmp.eq.s32.totalorder %s33, 1
      %p223 = por %p221, %p222
      %p225 = scmp.ne.s32.totalorder %s210, %s224
      %p226 = scmp.eq.s32.totalorder %s33, 0
      %p227 = por %p225, %p226
      %s229 = sadd.s32 %s228, 1
      %p232 = scmp.eq.s32.totalorder %s27, 1
      %p233 = scmp.ne.s32.totalorder %s228, %s230
      %p234 = scmp.eq.s32.totalorder %s27, 0
      %p235 = por %p233, %p234
      %p236 = scmp.ne.s32.totalorder %s228, %s230
      %p237 = scmp.eq.s32.totalorder %s32, 1
      %p238 = por %p236, %p237
      %p239 = scmp.ne.s32.totalorder %s230, %s231
      %p240 = scmp.eq.s32.totalorder %s32, 0
      %p241 = por %p239, %p240
      %p242 = scmp.ne.s32.totalorder %s230, %s231
      %p243 = scmp.eq.s32.totalorder %s33, 1
      %p244 = por %p242, %p243
      %p246 = scmp.ne.s32.totalorder %s231, %s245
      %p247 = scmp.eq.s32.totalorder %s33, 0
      %p248 = por %p246, %p247
      %s249 = ssub.s32 %s27, %s34
      %p250 = scmp.eq.s32.totalorder %s249, 0
      %s252 = sadd.s32 %s251, 1
      %s253 = scalar_select %p250, %s251, %s252
      %p256 = pneg %p250
      %p257 = scmp.eq.s32.totalorder %s27, 1
      %p258 = por %p256, %p257
      %p259 = scmp.ne.s32.totalorder %s251, %s254
      %p260 = scmp.eq.s32.totalorder %s27, 0
      %p261 = por %p259, %p260
      %p262 = scmp.ne.s32.totalorder %s251, %s254
      %p263 = scmp.eq.s32.totalorder %s32, 1
      %p264 = por %p262, %p263
      %p265 = scmp.ne.s32.totalorder %s254, %s255
      %p266 = scmp.eq.s32.totalorder %s32, 0
      %p267 = por %p265, %p266
      %p268 = scmp.ne.s32.totalorder %s254, %s255
      %p269 = scmp.eq.s32.totalorder %s33, 1
      %p270 = por %p268, %p269
      %p272 = scmp.ne.s32.totalorder %s255, %s271
      %p273 = scmp.eq.s32.totalorder %s33, 0
      %p274 = por %p272, %p273
      %s275 = ssub.s32 %s27, %s34
      %p276 = scmp.eq.s32.totalorder %s275, 0
      %s278 = sadd.s32 %s277, 1
      %s279 = scalar_select %p276, %s277, %s278
      %p282 = pneg %p276
      %p283 = scmp.eq.s32.totalorder %s27, 1
      %p284 = por %p282, %p283
      %p285 = scmp.ne.s32.totalorder %s277, %s280
      %p286 = scmp.eq.s32.totalorder %s27, 0
      %p287 = por %p285, %p286
      %p288 = scmp.ne.s32.totalorder %s277, %s280
      %p289 = scmp.eq.s32.totalorder %s32, 1
      %p290 = por %p288, %p289
      %p291 = scmp.ne.s32.totalorder %s280, %s281
      %p292 = scmp.eq.s32.totalorder %s32, 0
      %p293 = por %p291, %p292
      %p294 = scmp.ne.s32.totalorder %s280, %s281
      %p295 = scmp.eq.s32.totalorder %s33, 1
      %p296 = por %p294, %p295
      %p298 = scmp.ne.s32.totalorder %s281, %s297
      %p299 = scmp.eq.s32.totalorder %s33, 0
      %p300 = por %p298, %p299
      %s301 = ssub.s32 %s27, %s34
      %p302 = scmp.eq.s32.totalorder %s301, 0
      %s304 = sadd.s32 %s303, 1
      %s305 = scalar_select %p302, %s303, %s304
      %p308 = pneg %p302
      %p309 = scmp.eq.s32.totalorder %s27, 1
      %p310 = por %p308, %p309
      %p311 = scmp.ne.s32.totalorder %s303, %s306
      %p312 = scmp.eq.s32.totalorder %s27, 0
      %p313 = por %p311, %p312
      %p314 = scmp.ne.s32.totalorder %s303, %s306
      %p315 = scmp.eq.s32.totalorder %s32, 1
      %p316 = por %p314, %p315
      %p317 = scmp.ne.s32.totalorder %s306, %s307
      %p318 = scmp.eq.s32.totalorder %s32, 0
      %p319 = por %p317, %p318
      %p320 = scmp.ne.s32.totalorder %s306, %s307
      %p321 = scmp.eq.s32.totalorder %s33, 1
      %p322 = por %p320, %p321
      %p324 = scmp.ne.s32.totalorder %s307, %s323
      %p325 = scmp.eq.s32.totalorder %s33, 0
      %p326 = por %p324, %p325
      %s327 = ssub.s32 %s27, %s34
      %p328 = scmp.eq.s32.totalorder %s327, 0
      %s330 = sadd.s32 %s329, 1
      %s331 = scalar_select %p328, %s329, %s330
      %p334 = pneg %p328
      %p335 = scmp.eq.s32.totalorder %s27, 1
      %p336 = por %p334, %p335
      %p337 = scmp.ne.s32.totalorder %s329, %s332
      %p338 = scmp.eq.s32.totalorder %s27, 0
      %p339 = por %p337, %p338
      %p340 = scmp.ne.s32.totalorder %s329, %s332
      %p341 = scmp.eq.s32.totalorder %s32, 1
      %p342 = por %p340, %p341
      %p343 = scmp.ne.s32.totalorder %s332, %s333
      %p344 = scmp.eq.s32.totalorder %s32, 0
      %p345 = por %p343, %p344
      %p346 = scmp.ne.s32.totalorder %s332, %s333
      %p347 = scmp.eq.s32.totalorder %s33, 1
      %p348 = por %p346, %p347
      %p350 = scmp.ne.s32.totalorder %s333, %s349
      %p351 = scmp.eq.s32.totalorder %s33, 0
      %p352 = por %p350, %p351
      %p353 = scmp.le.s32.totalorder 1, %s27
      %p354 = scmp.lt.s32.totalorder %s27, 3
      %p355 = pnand %p353, %p354
      %p356 = pneg %p355
      // Predicated region
      $region9: #{tpu_custom_call.1} parent=5 // pred_check
        _
      $region10: #{tpu_custom_call.1} parent=5 // pred_check_branch
        %358 = sbr.rel (%p355) target = $region12
      $region11: #{tpu_custom_call.1} parent=5 // pred_region
        %s359 = ssub.s32 %s27, 1
        // Predicated region
        $region13: #{tpu_custom_call.1} parent=11 // pred_check
          %p360 = pneg %p178
        $region14: #{tpu_custom_call.1} parent=11 // pred_check_branch
          %362 = sbr.rel (%p360) target = $region16
        $region15: #{tpu_custom_call.1} parent=11 // pred_region
          _
        $region16: #{tpu_custom_call.1} parent=11 // pred_fallthru
          _
        // Predicated region
        $region17: #{tpu_custom_call.1} parent=11 // pred_check
          %p363 = pneg %p199
        $region18: #{tpu_custom_call.1} parent=11 // pred_check_branch
          %365 = sbr.rel (%p363) target = $region20
        $region19: #{tpu_custom_call.1} parent=11 // pred_region
          _
        $region20: #{tpu_custom_call.1} parent=11 // pred_fallthru
          _
        // Predicated region
        $region21: #{tpu_custom_call.1} parent=11 // pred_check
          %p366 = pneg %p220
        $region22: #{tpu_custom_call.1} parent=11 // pred_check_branch
          %368 = sbr.rel (%p366) target = $region24
        $region23: #{tpu_custom_call.1} parent=11 // pred_region
          _
        $region24: #{tpu_custom_call.1} parent=11 // pred_fallthru
          _
        // Predicated region
        $region25: #{tpu_custom_call.1} parent=11 // pred_check
          %p369 = pneg %p241
        $region26: #{tpu_custom_call.1} parent=11 // pred_check_branch
          %371 = sbr.rel (%p369) target = $region28
        $region27: #{tpu_custom_call.1} parent=11 // pred_region
          _
        $region28: #{tpu_custom_call.1} parent=11 // pred_fallthru
          _
      $region12: #{tpu_custom_call.1} parent=5 // pred_fallthru
        _
      %p372 = scmp.lt.s32.totalorder %s27, 2
      // Predicated region
      $region29: #{tpu_custom_call.1} parent=5 // pred_check
        %p373 = pneg %p372
      $region30: #{tpu_custom_call.1} parent=5 // pred_check_branch
        %375 = sbr.rel (%p373) target = $region32
      $region31: #{tpu_custom_call.1} parent=5 // pred_region
        // Predicated region
        $region33: #{tpu_custom_call.1} parent=31 // pred_check
          %p376 = pneg %p47
        $region34: #{tpu_custom_call.1} parent=31 // pred_check_branch
          %378 = sbr.rel (%p376) target = $region36
        $region35: #{tpu_custom_call.1} parent=31 // pred_region
          %s379 = smul.u32 16, %s27
          %p380 = scmp.lt.s32.totalorder %s379, 31
          %s381 = scalar_select %p380, %s379, 31
          %s382 = smul.addr %s381, 2
          %s383 = smul.addr %s382, 8
          %s384 = scalar_lea.vmem %s0, %s383
          %s385 = smul.u32 16, %s27
        $region36: #{tpu_custom_call.1} parent=31 // pred_fallthru
          _
        // Predicated region
        $region37: #{tpu_custom_call.1} parent=31 // pred_check
          %p386 = pneg %p73
        $region38: #{tpu_custom_call.1} parent=31 // pred_check_branch
          %388 = sbr.rel (%p386) target = $region40
        $region39: #{tpu_custom_call.1} parent=31 // pred_region
          %s389 = smul.u32 16, %s27
          %p390 = scmp.lt.s32.totalorder %s389, 31
          %s391 = scalar_select %p390, %s389, 31
          %s392 = smul.addr %s391, 2
          %s393 = smul.addr %s392, 4
          %s394 = scalar_lea.vmem %s1, %s393
          %s395 = smul.u32 16, %s27
        $region40: #{tpu_custom_call.1} parent=31 // pred_fallthru
          _
        // Predicated region
        $region41: #{tpu_custom_call.1} parent=31 // pred_check
          %p396 = pneg %p99
        $region42: #{tpu_custom_call.1} parent=31 // pred_check_branch
          %398 = sbr.rel (%p396) target = $region44
        $region43: #{tpu_custom_call.1} parent=31 // pred_region
          %s399 = smul.u32 16, %s27
          %p400 = scmp.lt.s32.totalorder %s399, 31
          %s401 = scalar_select %p400, %s399, 31
          %s402 = smul.addr %s401, 2
          %s403 = smul.addr %s402, 8
          %s404 = scalar_lea.vmem %s2, %s403
          %s405 = smul.u32 16, %s27
        $region44: #{tpu_custom_call.1} parent=31 // pred_fallthru
          _
        // Predicated region
        $region45: #{tpu_custom_call.1} parent=31 // pred_check
          %p406 = pneg %p125
        $region46: #{tpu_custom_call.1} parent=31 // pred_check_branch
          %408 = sbr.rel (%p406) target = $region48
        $region47: #{tpu_custom_call.1} parent=31 // pred_region
          %s409 = smul.u32 16, %s27
          %p410 = scmp.lt.s32.totalorder %s409, 31
          %s411 = scalar_select %p410, %s409, 31
          %s412 = smul.addr %s411, 2
          %s413 = smul.addr %s412, 8
          %s414 = scalar_lea.vmem %s3, %s413
          %s415 = smul.u32 16, %s27
        $region48: #{tpu_custom_call.1} parent=31 // pred_fallthru
          _
        // Predicated region
        $region49: #{tpu_custom_call.1} parent=31 // pred_check
          %p416 = pneg %p151
        $region50: #{tpu_custom_call.1} parent=31 // pred_check_branch
          %418 = sbr.rel (%p416) target = $region52
        $region51: #{tpu_custom_call.1} parent=31 // pred_region
          %s419 = smul.u32 16, %s27
          %p420 = scmp.lt.s32.totalorder %s419, 31
          %s421 = scalar_select %p420, %s419, 31
          %s422 = smul.addr %s421, 2
          %s423 = smul.addr %s422, 8
          %s424 = scalar_lea.vmem %s4, %s423
          %s425 = smul.u32 16, %s27
        $region52: #{tpu_custom_call.1} parent=31 // pred_fallthru
          _
      $region32: #{tpu_custom_call.1} parent=5 // pred_fallthru
        _
      %p426 = scmp.le.s32.totalorder 1, %s27
      %p427 = scmp.lt.s32.totalorder %s27, 3
      %p428 = pnand %p426, %p427
      %p429 = pneg %p428
      // Predicated region
      $region53: #{tpu_custom_call.1} parent=5 // pred_check
        _
      $region54: #{tpu_custom_call.1} parent=5 // pred_check_branch
        %431 = sbr.rel (%p428) target = $region56
      $region55: #{tpu_custom_call.1} parent=5 // pred_region
        %s432 = ssub.s32 %s27, 1
        %s433 = smul.u32 16, %s32
        %p434 = scmp.lt.s32.totalorder %s433, 31
        %s435 = scalar_select %p434, %s433, 31
        %s436 = smul.addr %s435, 2
        %s437 = smul.addr %s436, 8
        %s438 = scalar_lea.vmem %s0, %s437
        %p439 = pneg %p53
        %p440 = pneg %p50
        %s441 = smul.u32 16, %s32
        %p442 = scmp.lt.s32.totalorder %s441, 31
        %s443 = scalar_select %p442, %s441, 31
        %s444 = smul.addr %s443, 2
        %s445 = smul.addr %s444, 4
        %s446 = scalar_lea.vmem %s1, %s445
        %p447 = pneg %p79
        %p448 = pneg %p76
        %s449 = smul.u32 16, %s32
        %p450 = scmp.lt.s32.totalorder %s449, 31
        %s451 = scalar_select %p450, %s449, 31
        %s452 = smul.addr %s451, 2
        %s453 = smul.addr %s452, 8
        %s454 = scalar_lea.vmem %s2, %s453
        %p455 = pneg %p105
        %p456 = pneg %p102
        %s457 = smul.u32 16, %s32
        %p458 = scmp.lt.s32.totalorder %s457, 31
        %s459 = scalar_select %p458, %s457, 31
        %s460 = smul.addr %s459, 2
        %s461 = smul.addr %s460, 8
        %s462 = scalar_lea.vmem %s3, %s461
        %p463 = pneg %p131
        %p464 = pneg %p128
        %s465 = smul.u32 16, %s32
        %p466 = scmp.lt.s32.totalorder %s465, 31
        %s467 = scalar_select %p466, %s465, 31
        %s468 = smul.addr %s467, 2
        %s469 = smul.addr %s468, 8
        %s470 = scalar_lea.vmem %s4, %s469
        %p471 = pneg %p157
        %p472 = pneg %p154
        %p473 = pneg %p178
        %p474 = pneg %p175
        %p475 = pneg %p199
        %p476 = pneg %p196
        %p477 = pneg %p220
        %p478 = pneg %p217
        %p479 = pneg %p241
        %p480 = pneg %p238
        %p481 = pneg %p267
        %p482 = pneg %p264
        %s483 = sand.u32 %s254, 1
        %s484 = scalar_lea.sflag [#allocation4], %s483
        %s485 = sand.u32 %s254, 1
        %s486 = smul.addr %s485, 16
        %s487 = scalar_lea.vmem [#allocation3], %s486
        %p488 = pneg %p293
        %p489 = pneg %p290
        %s490 = sand.u32 %s32, 1
        %s491 = scalar_lea.sflag [#allocation6], %s490
        %s492 = sand.u32 %s280, 1
        %s493 = smul.addr %s492, 16
        %s494 = scalar_lea.vmem [#allocation5], %s493
        %p495 = pneg %p319
        %p496 = pneg %p316
        %s497 = sand.u32 %s32, 1
        %s498 = scalar_lea.sflag [#allocation6], %s497
        %s499 = sand.u32 %s306, 1
        %s500 = smul.addr %s499, 16
        %s501 = scalar_lea.vmem [#allocation7], %s500
        %p502 = pneg %p345
        %p503 = pneg %p342
        %s504 = smul.u32 16, %s32
        %p505 = scmp.lt.s32.totalorder %s504, 31
        %s506 = scalar_select %p505, %s504, 31
        %s507 = scalar_lea.vmem %s12, %s506
        %s508 = smul.u32 16, %s32
        %p509 = scmp.lt.s32.totalorder %s508, 31
        %s510 = scalar_select %p509, %s508, 31
        %s511 = smul.addr %s510, 2
        %s512 = smul.addr %s511, 8
        %s513 = scalar_lea.vmem %s0, %s512
        %s514 = smul.u32 16, %s32
        %s515 = smul.u32 16, %s32
        %p516 = scmp.lt.s32.totalorder %s515, 31
        %s517 = scalar_select %p516, %s515, 31
        %s518 = smul.addr %s517, 2
        %s519 = smul.addr %s518, 4
        %s520 = scalar_lea.vmem %s1, %s519
        %s521 = smul.u32 16, %s32
        %s522 = smul.u32 16, %s32
        %p523 = scmp.lt.s32.totalorder %s522, 31
        %s524 = scalar_select %p523, %s522, 31
        %s525 = smul.addr %s524, 2
        %s526 = smul.addr %s525, 8
        %s527 = scalar_lea.vmem %s2, %s526
        %s528 = smul.u32 16, %s32
        %s529 = smul.u32 16, %s32
        %p530 = scmp.lt.s32.totalorder %s529, 31
        %s531 = scalar_select %p530, %s529, 31
        %s532 = smul.addr %s531, 2
        %s533 = smul.addr %s532, 8
        %s534 = scalar_lea.vmem %s3, %s533
        %s535 = smul.u32 16, %s32
        %s536 = smul.u32 16, %s32
        %p537 = scmp.lt.s32.totalorder %s536, 31
        %s538 = scalar_select %p537, %s536, 31
        %s539 = smul.addr %s538, 2
        %s540 = smul.addr %s539, 8
        %s541 = scalar_lea.vmem %s4, %s540
        %s542 = smul.u32 16, %s32
        %s543 = smul.u32 16, %s32
        %s544 = smul.u32 16, %s32
        %s545 = smul.u32 16, %s32
        %s546 = smul.u32 16, %s32
        %p547 = scmp.lt.s32.totalorder %s546, 31
        %s548 = scalar_select %p547, %s546, 31
        %s549 = scalar_lea.vmem %s12, %s548
        %s550 = smul.u32 16, %s32
        %v551 = vld [vmem:[%s513] sm:$0xff]
        %v552 = vld [vmem:[%s513 + $0x8] sm:$0xff]
        %v553 = vld [vmem:[%s513 + $0x10] sm:$0xff]
        %v554 = vld [vmem:[%s513 + $0x18] sm:$0xff]
        %v555 = vld [vmem:[%s513 + $0x20] sm:$0xff]
        %v556 = vld [vmem:[%s513 + $0x28] sm:$0xff]
        %v557 = vld [vmem:[%s513 + $0x30] sm:$0xff]
        %v558 = vld [vmem:[%s513 + $0x38] sm:$0xff]
        %v559 = vld [vmem:[%s513 + $0x40] sm:$0xff]
        %v560 = vld [vmem:[%s513 + $0x48] sm:$0xff]
        %v561 = vld [vmem:[%s513 + $0x50] sm:$0xff]
        %v562 = vld [vmem:[%s513 + $0x58] sm:$0xff]
        %v563 = vld [vmem:[%s513 + $0x60] sm:$0xff]
        %v564 = vld [vmem:[%s513 + $0x68] sm:$0xff]
        %v565 = vld [vmem:[%s513 + $0x70] sm:$0xff]
        %v566 = vld [vmem:[%s513 + $0x78] sm:$0xff]
        %v567 = vld [vmem:[%s513 + $0x80] sm:$0xff]
        %v568 = vld [vmem:[%s513 + $0x88] sm:$0xff]
        %v569 = vld [vmem:[%s513 + $0x90] sm:$0xff]
        %v570 = vld [vmem:[%s513 + $0x98] sm:$0xff]
        %v571 = vld [vmem:[%s513 + $0xa0] sm:$0xff]
        %v572 = vld [vmem:[%s513 + $0xa8] sm:$0xff]
        %v573 = vld [vmem:[%s513 + $0xb0] sm:$0xff]
        %v574 = vld [vmem:[%s513 + $0xb8] sm:$0xff]
        %v575 = vld [vmem:[%s513 + $0xc0] sm:$0xff]
        %v576 = vld [vmem:[%s513 + $0xc8] sm:$0xff]
        %v577 = vld [vmem:[%s513 + $0xd0] sm:$0xff]
        %v578 = vld [vmem:[%s513 + $0xd8] sm:$0xff]
        %v579 = vld [vmem:[%s513 + $0xe0] sm:$0xff]
        %v580 = vld [vmem:[%s513 + $0xe8] sm:$0xff]
        %v581 = vld [vmem:[%s513 + $0xf0] sm:$0xff]
        %v582 = vld [vmem:[%s513 + $0xf8] sm:$0xff]
        %v583 = vld [vmem:[%s520] sm:$0xf]
        %v584 = vld [vmem:[%s520 + $0x4] sm:$0xf]
        %v585 = vld [vmem:[%s520 + $0x8] sm:$0xf]
        %v586 = vld [vmem:[%s520 + $0xc] sm:$0xf]
        %v587 = vld [vmem:[%s520 + $0x10] sm:$0xf]
        %v588 = vld [vmem:[%s520 + $0x14] sm:$0xf]
        %v589 = vld [vmem:[%s520 + $0x18] sm:$0xf]
        %v590 = vld [vmem:[%s520 + $0x1c] sm:$0xf]
        %v591 = vld [vmem:[%s520 + $0x20] sm:$0xf]
        %v592 = vld [vmem:[%s520 + $0x24] sm:$0xf]
        %v593 = vld [vmem:[%s520 + $0x28] sm:$0xf]
        %v594 = vld [vmem:[%s520 + $0x2c] sm:$0xf]
        %v595 = vld [vmem:[%s520 + $0x30] sm:$0xf]
        %v596 = vld [vmem:[%s520 + $0x34] sm:$0xf]
        %v597 = vld [vmem:[%s520 + $0x38] sm:$0xf]
        %v598 = vld [vmem:[%s520 + $0x3c] sm:$0xf]
        %v599 = vld [vmem:[%s520 + $0x40] sm:$0xf]
        %v600 = vld [vmem:[%s520 + $0x44] sm:$0xf]
        %v601 = vld [vmem:[%s520 + $0x48] sm:$0xf]
        %v602 = vld [vmem:[%s520 + $0x4c] sm:$0xf]
        %v603 = vld [vmem:[%s520 + $0x50] sm:$0xf]
        %v604 = vld [vmem:[%s520 + $0x54] sm:$0xf]
        %v605 = vld [vmem:[%s520 + $0x58] sm:$0xf]
        %v606 = vld [vmem:[%s520 + $0x5c] sm:$0xf]
        %v607 = vld [vmem:[%s520 + $0x60] sm:$0xf]
        %v608 = vld [vmem:[%s520 + $0x64] sm:$0xf]
        %v609 = vld [vmem:[%s520 + $0x68] sm:$0xf]
        %v610 = vld [vmem:[%s520 + $0x6c] sm:$0xf]
        %v611 = vld [vmem:[%s520 + $0x70] sm:$0xf]
        %v612 = vld [vmem:[%s520 + $0x74] sm:$0xf]
        %v613 = vld [vmem:[%s520 + $0x78] sm:$0xf]
        %v614 = vld [vmem:[%s520 + $0x7c] sm:$0xf]
        %v615 = vunpack.c.l.bf16 %v583
        %v616 = vunpack.c.l.bf16 %v584
        %v617 = vunpack.c.l.bf16 %v585
        %v618 = vunpack.c.l.bf16 %v586
        %v619 = vunpack.c.l.bf16 %v587
        %v620 = vunpack.c.l.bf16 %v588
        %v621 = vunpack.c.l.bf16 %v589
        %v622 = vunpack.c.l.bf16 %v590
        %v623 = vunpack.c.l.bf16 %v591
        %v624 = vunpack.c.l.bf16 %v592
        %v625 = vunpack.c.l.bf16 %v593
        %v626 = vunpack.c.l.bf16 %v594
        %v627 = vunpack.c.l.bf16 %v595
        %v628 = vunpack.c.l.bf16 %v596
        %v629 = vunpack.c.l.bf16 %v597
        %v630 = vunpack.c.l.bf16 %v598
        %v631 = vunpack.c.l.bf16 %v599
        %v632 = vunpack.c.l.bf16 %v600
        %v633 = vunpack.c.l.bf16 %v601
        %v634 = vunpack.c.l.bf16 %v602
        %v635 = vunpack.c.l.bf16 %v603
        %v636 = vunpack.c.l.bf16 %v604
        %v637 = vunpack.c.l.bf16 %v605
        %v638 = vunpack.c.l.bf16 %v606
        %v639 = vunpack.c.l.bf16 %v607
        %v640 = vunpack.c.l.bf16 %v608
        %v641 = vunpack.c.l.bf16 %v609
        %v642 = vunpack.c.l.bf16 %v610
        %v643 = vunpack.c.l.bf16 %v611
        %v644 = vunpack.c.l.bf16 %v612
        %v645 = vunpack.c.l.bf16 %v613
        %v646 = vunpack.c.l.bf16 %v614
        %v647 = vld [vmem:[%s527] sm:$0xff]
        %v648 = vld [vmem:[%s527 + $0x8] sm:$0xff]
        %v649 = vld [vmem:[%s527 + $0x10] sm:$0xff]
        %v650 = vld [vmem:[%s527 + $0x18] sm:$0xff]
        %v651 = vld [vmem:[%s527 + $0x20] sm:$0xff]
        %v652 = vld [vmem:[%s527 + $0x28] sm:$0xff]
        %v653 = vld [vmem:[%s527 + $0x30] sm:$0xff]
        %v654 = vld [vmem:[%s527 + $0x38] sm:$0xff]
        %v655 = vld [vmem:[%s527 + $0x40] sm:$0xff]
        %v656 = vld [vmem:[%s527 + $0x48] sm:$0xff]
        %v657 = vld [vmem:[%s527 + $0x50] sm:$0xff]
        %v658 = vld [vmem:[%s527 + $0x58] sm:$0xff]
        %v659 = vld [vmem:[%s527 + $0x60] sm:$0xff]
        %v660 = vld [vmem:[%s527 + $0x68] sm:$0xff]
        %v661 = vld [vmem:[%s527 + $0x70] sm:$0xff]
        %v662 = vld [vmem:[%s527 + $0x78] sm:$0xff]
        %v663 = vld [vmem:[%s527 + $0x80] sm:$0xff]
        %v664 = vld [vmem:[%s527 + $0x88] sm:$0xff]
        %v665 = vld [vmem:[%s527 + $0x90] sm:$0xff]
        %v666 = vld [vmem:[%s527 + $0x98] sm:$0xff]
        %v667 = vld [vmem:[%s527 + $0xa0] sm:$0xff]
        %v668 = vld [vmem:[%s527 + $0xa8] sm:$0xff]
        %v669 = vld [vmem:[%s527 + $0xb0] sm:$0xff]
        %v670 = vld [vmem:[%s527 + $0xb8] sm:$0xff]
        %v671 = vld [vmem:[%s527 + $0xc0] sm:$0xff]
        %v672 = vld [vmem:[%s527 + $0xc8] sm:$0xff]
        %v673 = vld [vmem:[%s527 + $0xd0] sm:$0xff]
        %v674 = vld [vmem:[%s527 + $0xd8] sm:$0xff]
        %v675 = vld [vmem:[%s527 + $0xe0] sm:$0xff]
        %v676 = vld [vmem:[%s527 + $0xe8] sm:$0xff]
        %v677 = vld [vmem:[%s527 + $0xf0] sm:$0xff]
        %v678 = vld [vmem:[%s527 + $0xf8] sm:$0xff]
        %v679 = vld [vmem:[%s534] sm:$0xff]
        %v680 = vld [vmem:[%s534 + $0x8] sm:$0xff]
        %v681 = vld [vmem:[%s534 + $0x10] sm:$0xff]
        %v682 = vld [vmem:[%s534 + $0x18] sm:$0xff]
        %v683 = vld [vmem:[%s534 + $0x20] sm:$0xff]
        %v684 = vld [vmem:[%s534 + $0x28] sm:$0xff]
        %v685 = vld [vmem:[%s534 + $0x30] sm:$0xff]
        %v686 = vld [vmem:[%s534 + $0x38] sm:$0xff]
        %v687 = vld [vmem:[%s534 + $0x40] sm:$0xff]
        %v688 = vld [vmem:[%s534 + $0x48] sm:$0xff]
        %v689 = vld [vmem:[%s534 + $0x50] sm:$0xff]
        %v690 = vld [vmem:[%s534 + $0x58] sm:$0xff]
        %v691 = vld [vmem:[%s534 + $0x60] sm:$0xff]
        %v692 = vld [vmem:[%s534 + $0x68] sm:$0xff]
        %v693 = vld [vmem:[%s534 + $0x70] sm:$0xff]
        %v694 = vld [vmem:[%s534 + $0x78] sm:$0xff]
        %v695 = vld [vmem:[%s534 + $0x80] sm:$0xff]
        %v696 = vld [vmem:[%s534 + $0x88] sm:$0xff]
        %v697 = vld [vmem:[%s534 + $0x90] sm:$0xff]
        %v698 = vld [vmem:[%s534 + $0x98] sm:$0xff]
        %v699 = vld [vmem:[%s534 + $0xa0] sm:$0xff]
        %v700 = vld [vmem:[%s534 + $0xa8] sm:$0xff]
        %v701 = vld [vmem:[%s534 + $0xb0] sm:$0xff]
        %v702 = vld [vmem:[%s534 + $0xb8] sm:$0xff]
        %v703 = vld [vmem:[%s534 + $0xc0] sm:$0xff]
        %v704 = vld [vmem:[%s534 + $0xc8] sm:$0xff]
        %v705 = vld [vmem:[%s534 + $0xd0] sm:$0xff]
        %v706 = vld [vmem:[%s534 + $0xd8] sm:$0xff]
        %v707 = vld [vmem:[%s534 + $0xe0] sm:$0xff]
        %v708 = vld [vmem:[%s534 + $0xe8] sm:$0xff]
        %v709 = vld [vmem:[%s534 + $0xf0] sm:$0xff]
        %v710 = vld [vmem:[%s534 + $0xf8] sm:$0xff]
        %v711 = vld [vmem:[%s541] sm:$0xff]
        %v712 = vld [vmem:[%s541 + $0x8] sm:$0xff]
        %v713 = vld [vmem:[%s541 + $0x10] sm:$0xff]
        %v714 = vld [vmem:[%s541 + $0x18] sm:$0xff]
        %v715 = vld [vmem:[%s541 + $0x20] sm:$0xff]
        %v716 = vld [vmem:[%s541 + $0x28] sm:$0xff]
        %v717 = vld [vmem:[%s541 + $0x30] sm:$0xff]
        %v718 = vld [vmem:[%s541 + $0x38] sm:$0xff]
        %v719 = vld [vmem:[%s541 + $0x40] sm:$0xff]
        %v720 = vld [vmem:[%s541 + $0x48] sm:$0xff]
        %v721 = vld [vmem:[%s541 + $0x50] sm:$0xff]
        %v722 = vld [vmem:[%s541 + $0x58] sm:$0xff]
        %v723 = vld [vmem:[%s541 + $0x60] sm:$0xff]
        %v724 = vld [vmem:[%s541 + $0x68] sm:$0xff]
        %v725 = vld [vmem:[%s541 + $0x70] sm:$0xff]
        %v726 = vld [vmem:[%s541 + $0x78] sm:$0xff]
        %v727 = vld [vmem:[%s541 + $0x80] sm:$0xff]
        %v728 = vld [vmem:[%s541 + $0x88] sm:$0xff]
        %v729 = vld [vmem:[%s541 + $0x90] sm:$0xff]
        %v730 = vld [vmem:[%s541 + $0x98] sm:$0xff]
        %v731 = vld [vmem:[%s541 + $0xa0] sm:$0xff]
        %v732 = vld [vmem:[%s541 + $0xa8] sm:$0xff]
        %v733 = vld [vmem:[%s541 + $0xb0] sm:$0xff]
        %v734 = vld [vmem:[%s541 + $0xb8] sm:$0xff]
        %v735 = vld [vmem:[%s541 + $0xc0] sm:$0xff]
        %v736 = vld [vmem:[%s541 + $0xc8] sm:$0xff]
        %v737 = vld [vmem:[%s541 + $0xd0] sm:$0xff]
        %v738 = vld [vmem:[%s541 + $0xd8] sm:$0xff]
        %v739 = vld [vmem:[%s541 + $0xe0] sm:$0xff]
        %v740 = vld [vmem:[%s541 + $0xe8] sm:$0xff]
        %v741 = vld [vmem:[%s541 + $0xf0] sm:$0xff]
        %v742 = vld [vmem:[%s541 + $0xf8] sm:$0xff]
        %vm743 = vcmask 7168
        %v744 = vsel %vm743, %v647, 0.0
        %v745 = vsel %vm743, %v648, 0.0
        %v746 = vadd.f32 %v744, %v745
        %v747 = vrot.slane %v746, 4
        %v748 = vadd.f32 %v746, %v747
        %v749 = vrot.slane %v748, 2
        %v750 = vadd.f32 %v748, %v749
        %v751 = vrot.slane %v750, 1
        %v752 = vadd.f32 %v750, %v751
        %v753 = vsel %vm743, %v649, 0.0
        %v754 = vsel %vm743, %v650, 0.0
        %v755 = vadd.f32 %v753, %v754
        %v756 = vrot.slane %v755, 4
        %v757 = vadd.f32 %v755, %v756
        %v758 = vrot.slane %v757, 2
        %v759 = vadd.f32 %v757, %v758
        %v760 = vrot.slane %v759, 1
        %v761 = vadd.f32 %v759, %v760
        %v762 = vsel %vm743, %v651, 0.0
        %v763 = vsel %vm743, %v652, 0.0
        %v764 = vadd.f32 %v762, %v763
        %v765 = vrot.slane %v764, 4
        %v766 = vadd.f32 %v764, %v765
        %v767 = vrot.slane %v766, 2
        %v768 = vadd.f32 %v766, %v767
        %v769 = vrot.slane %v768, 1
        %v770 = vadd.f32 %v768, %v769
        %v771 = vsel %vm743, %v653, 0.0
        %v772 = vsel %vm743, %v654, 0.0
        %v773 = vadd.f32 %v771, %v772
        %v774 = vrot.slane %v773, 4
        %v775 = vadd.f32 %v773, %v774
        %v776 = vrot.slane %v775, 2
        %v777 = vadd.f32 %v775, %v776
        %v778 = vrot.slane %v777, 1
        %v779 = vadd.f32 %v777, %v778
        %v780 = vsel %vm743, %v655, 0.0
        %v781 = vsel %vm743, %v656, 0.0
        %v782 = vadd.f32 %v780, %v781
        %v783 = vrot.slane %v782, 4
        %v784 = vadd.f32 %v782, %v783
        %v785 = vrot.slane %v784, 2
        %v786 = vadd.f32 %v784, %v785
        %v787 = vrot.slane %v786, 1
        %v788 = vadd.f32 %v786, %v787
        %v789 = vsel %vm743, %v657, 0.0
        %v790 = vsel %vm743, %v658, 0.0
        %v791 = vadd.f32 %v789, %v790
        %v792 = vrot.slane %v791, 4
        %v793 = vadd.f32 %v791, %v792
        %v794 = vrot.slane %v793, 2
        %v795 = vadd.f32 %v793, %v794
        %v796 = vrot.slane %v795, 1
        %v797 = vadd.f32 %v795, %v796
        %v798 = vsel %vm743, %v659, 0.0
        %v799 = vsel %vm743, %v660, 0.0
        %v800 = vadd.f32 %v798, %v799
        %v801 = vrot.slane %v800, 4
        %v802 = vadd.f32 %v800, %v801
        %v803 = vrot.slane %v802, 2
        %v804 = vadd.f32 %v802, %v803
        %v805 = vrot.slane %v804, 1
        %v806 = vadd.f32 %v804, %v805
        %v807 = vsel %vm743, %v661, 0.0
        %v808 = vsel %vm743, %v662, 0.0
        %v809 = vadd.f32 %v807, %v808
        %v810 = vrot.slane %v809, 4
        %v811 = vadd.f32 %v809, %v810
        %v812 = vrot.slane %v811, 2
        %v813 = vadd.f32 %v811, %v812
        %v814 = vrot.slane %v813, 1
        %v815 = vadd.f32 %v813, %v814
        %v816 = vsel %vm743, %v663, 0.0
        %v817 = vsel %vm743, %v664, 0.0
        %v818 = vadd.f32 %v816, %v817
        %v819 = vrot.slane %v818, 4
        %v820 = vadd.f32 %v818, %v819
        %v821 = vrot.slane %v820, 2
        %v822 = vadd.f32 %v820, %v821
        %v823 = vrot.slane %v822, 1
        %v824 = vadd.f32 %v822, %v823
        %v825 = vsel %vm743, %v665, 0.0
        %v826 = vsel %vm743, %v666, 0.0
        %v827 = vadd.f32 %v825, %v826
        %v828 = vrot.slane %v827, 4
        %v829 = vadd.f32 %v827, %v828
        %v830 = vrot.slane %v829, 2
        %v831 = vadd.f32 %v829, %v830
        %v832 = vrot.slane %v831, 1
        %v833 = vadd.f32 %v831, %v832
        %v834 = vsel %vm743, %v667, 0.0
        %v835 = vsel %vm743, %v668, 0.0
        %v836 = vadd.f32 %v834, %v835
        %v837 = vrot.slane %v836, 4
        %v838 = vadd.f32 %v836, %v837
        %v839 = vrot.slane %v838, 2
        %v840 = vadd.f32 %v838, %v839
        %v841 = vrot.slane %v840, 1
        %v842 = vadd.f32 %v840, %v841
        %v843 = vsel %vm743, %v669, 0.0
        %v844 = vsel %vm743, %v670, 0.0
        %v845 = vadd.f32 %v843, %v844
        %v846 = vrot.slane %v845, 4
        %v847 = vadd.f32 %v845, %v846
        %v848 = vrot.slane %v847, 2
        %v849 = vadd.f32 %v847, %v848
        %v850 = vrot.slane %v849, 1
        %v851 = vadd.f32 %v849, %v850
        %v852 = vsel %vm743, %v671, 0.0
        %v853 = vsel %vm743, %v672, 0.0
        %v854 = vadd.f32 %v852, %v853
        %v855 = vrot.slane %v854, 4
        %v856 = vadd.f32 %v854, %v855
        %v857 = vrot.slane %v856, 2
        %v858 = vadd.f32 %v856, %v857
        %v859 = vrot.slane %v858, 1
        %v860 = vadd.f32 %v858, %v859
        %v861 = vsel %vm743, %v673, 0.0
        %v862 = vsel %vm743, %v674, 0.0
        %v863 = vadd.f32 %v861, %v862
        %v864 = vrot.slane %v863, 4
        %v865 = vadd.f32 %v863, %v864
        %v866 = vrot.slane %v865, 2
        %v867 = vadd.f32 %v865, %v866
        %v868 = vrot.slane %v867, 1
        %v869 = vadd.f32 %v867, %v868
        %v870 = vsel %vm743, %v675, 0.0
        %v871 = vsel %vm743, %v676, 0.0
        %v872 = vadd.f32 %v870, %v871
        %v873 = vrot.slane %v872, 4
        %v874 = vadd.f32 %v872, %v873
        %v875 = vrot.slane %v874, 2
        %v876 = vadd.f32 %v874, %v875
        %v877 = vrot.slane %v876, 1
        %v878 = vadd.f32 %v876, %v877
        %v879 = vsel %vm743, %v677, 0.0
        %v880 = vsel %vm743, %v678, 0.0
        %v881 = vadd.f32 %v879, %v880
        %v882 = vrot.slane %v881, 4
        %v883 = vadd.f32 %v881, %v882
        %v884 = vrot.slane %v883, 2
        %v885 = vadd.f32 %v883, %v884
        %v886 = vrot.slane %v885, 1
        %v887 = vadd.f32 %v885, %v886
        %v888 = vmax.f32 %v752, 1.0
        %v889 = vmax.f32 %v761, 1.0
        %v890 = vmax.f32 %v770, 1.0
        %v891 = vmax.f32 %v779, 1.0
        %v892 = vmax.f32 %v788, 1.0
        %v893 = vmax.f32 %v797, 1.0
        %v894 = vmax.f32 %v806, 1.0
        %v895 = vmax.f32 %v815, 1.0
        %v896 = vmax.f32 %v824, 1.0
        %v897 = vmax.f32 %v833, 1.0
        %v898 = vmax.f32 %v842, 1.0
        %v899 = vmax.f32 %v851, 1.0
        %v900 = vmax.f32 %v860, 1.0
        %v901 = vmax.f32 %v869, 1.0
        %v902 = vmax.f32 %v878, 1.0
        %v903 = vmax.f32 %v887, 1.0
        %905 = vset.pattern.permute.xlu0 0
        %906 = vperm.xlu0 %905, %v647
        %v907 = vpop.permute.xlu0 %906
        %910 = vset.pattern.permute.xlu0 0
        %911 = vperm.xlu0 %910, %v648
        %v912 = vpop.permute.xlu0 %911
        %915 = vset.pattern.permute.xlu0 0
        %916 = vperm.xlu0 %915, %v649
        %v917 = vpop.permute.xlu0 %916
        %920 = vset.pattern.permute.xlu0 0
        %921 = vperm.xlu0 %920, %v650
        %v922 = vpop.permute.xlu0 %921
        %925 = vset.pattern.permute.xlu0 0
        %926 = vperm.xlu0 %925, %v651
        %v927 = vpop.permute.xlu0 %926
        %930 = vset.pattern.permute.xlu0 0
        %931 = vperm.xlu0 %930, %v652
        %v932 = vpop.permute.xlu0 %931
        %935 = vset.pattern.permute.xlu0 0
        %936 = vperm.xlu0 %935, %v653
        %v937 = vpop.permute.xlu0 %936
        %940 = vset.pattern.permute.xlu0 0
        %941 = vperm.xlu0 %940, %v654
        %v942 = vpop.permute.xlu0 %941
        %945 = vset.pattern.permute.xlu0 0
        %946 = vperm.xlu0 %945, %v655
        %v947 = vpop.permute.xlu0 %946
        %950 = vset.pattern.permute.xlu0 0
        %951 = vperm.xlu0 %950, %v656
        %v952 = vpop.permute.xlu0 %951
        %955 = vset.pattern.permute.xlu0 0
        %956 = vperm.xlu0 %955, %v657
        %v957 = vpop.permute.xlu0 %956
        %960 = vset.pattern.permute.xlu0 0
        %961 = vperm.xlu0 %960, %v658
        %v962 = vpop.permute.xlu0 %961
        %965 = vset.pattern.permute.xlu0 0
        %966 = vperm.xlu0 %965, %v659
        %v967 = vpop.permute.xlu0 %966
        %970 = vset.pattern.permute.xlu0 0
        %971 = vperm.xlu0 %970, %v660
        %v972 = vpop.permute.xlu0 %971
        %975 = vset.pattern.permute.xlu0 0
        %976 = vperm.xlu0 %975, %v661
        %v977 = vpop.permute.xlu0 %976
        %980 = vset.pattern.permute.xlu0 0
        %981 = vperm.xlu0 %980, %v662
        %v982 = vpop.permute.xlu0 %981
        %985 = vset.pattern.permute.xlu0 0
        %986 = vperm.xlu0 %985, %v663
        %v987 = vpop.permute.xlu0 %986
        %990 = vset.pattern.permute.xlu0 0
        %991 = vperm.xlu0 %990, %v664
        %v992 = vpop.permute.xlu0 %991
        %995 = vset.pattern.permute.xlu0 0
        %996 = vperm.xlu0 %995, %v665
        %v997 = vpop.permute.xlu0 %996
        %1000 = vset.pattern.permute.xlu0 0
        %1001 = vperm.xlu0 %1000, %v666
        %v1002 = vpop.permute.xlu0 %1001
        %1005 = vset.pattern.permute.xlu0 0
        %1006 = vperm.xlu0 %1005, %v667
        %v1007 = vpop.permute.xlu0 %1006
        %1010 = vset.pattern.permute.xlu0 0
        %1011 = vperm.xlu0 %1010, %v668
        %v1012 = vpop.permute.xlu0 %1011
        %1015 = vset.pattern.permute.xlu0 0
        %1016 = vperm.xlu0 %1015, %v669
        %v1017 = vpop.permute.xlu0 %1016
        %1020 = vset.pattern.permute.xlu0 0
        %1021 = vperm.xlu0 %1020, %v670
        %v1022 = vpop.permute.xlu0 %1021
        %1025 = vset.pattern.permute.xlu0 0
        %1026 = vperm.xlu0 %1025, %v671
        %v1027 = vpop.permute.xlu0 %1026
        %1030 = vset.pattern.permute.xlu0 0
        %1031 = vperm.xlu0 %1030, %v672
        %v1032 = vpop.permute.xlu0 %1031
        %1035 = vset.pattern.permute.xlu0 0
        %1036 = vperm.xlu0 %1035, %v673
        %v1037 = vpop.permute.xlu0 %1036
        %1040 = vset.pattern.permute.xlu0 0
        %1041 = vperm.xlu0 %1040, %v674
        %v1042 = vpop.permute.xlu0 %1041
        %1045 = vset.pattern.permute.xlu0 0
        %1046 = vperm.xlu0 %1045, %v675
        %v1047 = vpop.permute.xlu0 %1046
        %1050 = vset.pattern.permute.xlu0 0
        %1051 = vperm.xlu0 %1050, %v676
        %v1052 = vpop.permute.xlu0 %1051
        %1055 = vset.pattern.permute.xlu0 0
        %1056 = vperm.xlu0 %1055, %v677
        %v1057 = vpop.permute.xlu0 %1056
        %1060 = vset.pattern.permute.xlu0 0
        %1061 = vperm.xlu0 %1060, %v678
        %v1062 = vpop.permute.xlu0 %1061
        %v1064 = vmul.f32 %v551, %v907
        %v1065 = vmul.f32 %v552, %v912
        %v1066 = vmul.f32 %v553, %v917
        %v1067 = vmul.f32 %v554, %v922
        %v1068 = vmul.f32 %v555, %v927
        %v1069 = vmul.f32 %v556, %v932
        %v1070 = vmul.f32 %v557, %v937
        %v1071 = vmul.f32 %v558, %v942
        %v1072 = vmul.f32 %v559, %v947
        %v1073 = vmul.f32 %v560, %v952
        %v1074 = vmul.f32 %v561, %v957
        %v1075 = vmul.f32 %v562, %v962
        %v1076 = vmul.f32 %v563, %v967
        %v1077 = vmul.f32 %v564, %v972
        %v1078 = vmul.f32 %v565, %v977
        %v1079 = vmul.f32 %v566, %v982
        %v1080 = vmul.f32 %v567, %v987
        %v1081 = vmul.f32 %v568, %v992
        %v1082 = vmul.f32 %v569, %v997
        %v1083 = vmul.f32 %v570, %v1002
        %v1084 = vmul.f32 %v571, %v1007
        %v1085 = vmul.f32 %v572, %v1012
        %v1086 = vmul.f32 %v573, %v1017
        %v1087 = vmul.f32 %v574, %v1022
        %v1088 = vmul.f32 %v575, %v1027
        %v1089 = vmul.f32 %v576, %v1032
        %v1090 = vmul.f32 %v577, %v1037
        %v1091 = vmul.f32 %v578, %v1042
        %v1092 = vmul.f32 %v579, %v1047
        %v1093 = vmul.f32 %v580, %v1052
        %v1094 = vmul.f32 %v581, %v1057
        %v1095 = vmul.f32 %v582, %v1062
        %vm1096 = vcmask 261120
        %v1097 = vsel %vm1096, %v1064, 0.0
        %v1098 = vsel %vm1096, %v1065, 0.0
        %v1099 = vadd.f32 %v1097, %v1098
        %v1100 = vrot.slane %v1099, 4
        %v1101 = vadd.f32 %v1099, %v1100
        %v1102 = vrot.slane %v1101, 2
        %v1103 = vadd.f32 %v1101, %v1102
        %v1104 = vrot.slane %v1103, 1
        %v1105 = vadd.f32 %v1103, %v1104
        %v1106 = vsel %vm1096, %v1066, 0.0
        %v1107 = vsel %vm1096, %v1067, 0.0
        %v1108 = vadd.f32 %v1106, %v1107
        %v1109 = vrot.slane %v1108, 4
        %v1110 = vadd.f32 %v1108, %v1109
        %v1111 = vrot.slane %v1110, 2
        %v1112 = vadd.f32 %v1110, %v1111
        %v1113 = vrot.slane %v1112, 1
        %v1114 = vadd.f32 %v1112, %v1113
        %v1115 = vsel %vm1096, %v1068, 0.0
        %v1116 = vsel %vm1096, %v1069, 0.0
        %v1117 = vadd.f32 %v1115, %v1116
        %v1118 = vrot.slane %v1117, 4
        %v1119 = vadd.f32 %v1117, %v1118
        %v1120 = vrot.slane %v1119, 2
        %v1121 = vadd.f32 %v1119, %v1120
        %v1122 = vrot.slane %v1121, 1
        %v1123 = vadd.f32 %v1121, %v1122
        %v1124 = vsel %vm1096, %v1070, 0.0
        %v1125 = vsel %vm1096, %v1071, 0.0
        %v1126 = vadd.f32 %v1124, %v1125
        %v1127 = vrot.slane %v1126, 4
        %v1128 = vadd.f32 %v1126, %v1127
        %v1129 = vrot.slane %v1128, 2
        %v1130 = vadd.f32 %v1128, %v1129
        %v1131 = vrot.slane %v1130, 1
        %v1132 = vadd.f32 %v1130, %v1131
        %v1133 = vsel %vm1096, %v1072, 0.0
        %v1134 = vsel %vm1096, %v1073, 0.0
        %v1135 = vadd.f32 %v1133, %v1134
        %v1136 = vrot.slane %v1135, 4
        %v1137 = vadd.f32 %v1135, %v1136
        %v1138 = vrot.slane %v1137, 2
        %v1139 = vadd.f32 %v1137, %v1138
        %v1140 = vrot.slane %v1139, 1
        %v1141 = vadd.f32 %v1139, %v1140
        %v1142 = vsel %vm1096, %v1074, 0.0
        %v1143 = vsel %vm1096, %v1075, 0.0
        %v1144 = vadd.f32 %v1142, %v1143
        %v1145 = vrot.slane %v1144, 4
        %v1146 = vadd.f32 %v1144, %v1145
        %v1147 = vrot.slane %v1146, 2
        %v1148 = vadd.f32 %v1146, %v1147
        %v1149 = vrot.slane %v1148, 1
        %v1150 = vadd.f32 %v1148, %v1149
        %v1151 = vsel %vm1096, %v1076, 0.0
        %v1152 = vsel %vm1096, %v1077, 0.0
        %v1153 = vadd.f32 %v1151, %v1152
        %v1154 = vrot.slane %v1153, 4
        %v1155 = vadd.f32 %v1153, %v1154
        %v1156 = vrot.slane %v1155, 2
        %v1157 = vadd.f32 %v1155, %v1156
        %v1158 = vrot.slane %v1157, 1
        %v1159 = vadd.f32 %v1157, %v1158
        %v1160 = vsel %vm1096, %v1078, 0.0
        %v1161 = vsel %vm1096, %v1079, 0.0
        %v1162 = vadd.f32 %v1160, %v1161
        %v1163 = vrot.slane %v1162, 4
        %v1164 = vadd.f32 %v1162, %v1163
        %v1165 = vrot.slane %v1164, 2
        %v1166 = vadd.f32 %v1164, %v1165
        %v1167 = vrot.slane %v1166, 1
        %v1168 = vadd.f32 %v1166, %v1167
        %v1169 = vsel %vm1096, %v1080, 0.0
        %v1170 = vsel %vm1096, %v1081, 0.0
        %v1171 = vadd.f32 %v1169, %v1170
        %v1172 = vrot.slane %v1171, 4
        %v1173 = vadd.f32 %v1171, %v1172
        %v1174 = vrot.slane %v1173, 2
        %v1175 = vadd.f32 %v1173, %v1174
        %v1176 = vrot.slane %v1175, 1
        %v1177 = vadd.f32 %v1175, %v1176
        %v1178 = vsel %vm1096, %v1082, 0.0
        %v1179 = vsel %vm1096, %v1083, 0.0
        %v1180 = vadd.f32 %v1178, %v1179
        %v1181 = vrot.slane %v1180, 4
        %v1182 = vadd.f32 %v1180, %v1181
        %v1183 = vrot.slane %v1182, 2
        %v1184 = vadd.f32 %v1182, %v1183
        %v1185 = vrot.slane %v1184, 1
        %v1186 = vadd.f32 %v1184, %v1185
        %v1187 = vsel %vm1096, %v1084, 0.0
        %v1188 = vsel %vm1096, %v1085, 0.0
        %v1189 = vadd.f32 %v1187, %v1188
        %v1190 = vrot.slane %v1189, 4
        %v1191 = vadd.f32 %v1189, %v1190
        %v1192 = vrot.slane %v1191, 2
        %v1193 = vadd.f32 %v1191, %v1192
        %v1194 = vrot.slane %v1193, 1
        %v1195 = vadd.f32 %v1193, %v1194
        %v1196 = vsel %vm1096, %v1086, 0.0
        %v1197 = vsel %vm1096, %v1087, 0.0
        %v1198 = vadd.f32 %v1196, %v1197
        %v1199 = vrot.slane %v1198, 4
        %v1200 = vadd.f32 %v1198, %v1199
        %v1201 = vrot.slane %v1200, 2
        %v1202 = vadd.f32 %v1200, %v1201
        %v1203 = vrot.slane %v1202, 1
        %v1204 = vadd.f32 %v1202, %v1203
        %v1205 = vsel %vm1096, %v1088, 0.0
        %v1206 = vsel %vm1096, %v1089, 0.0
        %v1207 = vadd.f32 %v1205, %v1206
        %v1208 = vrot.slane %v1207, 4
        %v1209 = vadd.f32 %v1207, %v1208
        %v1210 = vrot.slane %v1209, 2
        %v1211 = vadd.f32 %v1209, %v1210
        %v1212 = vrot.slane %v1211, 1
        %v1213 = vadd.f32 %v1211, %v1212
        %v1214 = vsel %vm1096, %v1090, 0.0
        %v1215 = vsel %vm1096, %v1091, 0.0
        %v1216 = vadd.f32 %v1214, %v1215
        %v1217 = vrot.slane %v1216, 4
        %v1218 = vadd.f32 %v1216, %v1217
        %v1219 = vrot.slane %v1218, 2
        %v1220 = vadd.f32 %v1218, %v1219
        %v1221 = vrot.slane %v1220, 1
        %v1222 = vadd.f32 %v1220, %v1221
        %v1223 = vsel %vm1096, %v1092, 0.0
        %v1224 = vsel %vm1096, %v1093, 0.0
        %v1225 = vadd.f32 %v1223, %v1224
        %v1226 = vrot.slane %v1225, 4
        %v1227 = vadd.f32 %v1225, %v1226
        %v1228 = vrot.slane %v1227, 2
        %v1229 = vadd.f32 %v1227, %v1228
        %v1230 = vrot.slane %v1229, 1
        %v1231 = vadd.f32 %v1229, %v1230
        %v1232 = vsel %vm1096, %v1094, 0.0
        %v1233 = vsel %vm1096, %v1095, 0.0
        %v1234 = vadd.f32 %v1232, %v1233
        %v1235 = vrot.slane %v1234, 4
        %v1236 = vadd.f32 %v1234, %v1235
        %v1237 = vrot.slane %v1236, 2
        %v1238 = vadd.f32 %v1236, %v1237
        %v1239 = vrot.slane %v1238, 1
        %v1240 = vadd.f32 %v1238, %v1239
        %1242 = vset.pattern.permute.xlu0 0
        %1243 = vperm.xlu0 %1242, %v888
        %v1244 = vpop.permute.xlu0 %1243
        %1247 = vset.pattern.permute.xlu0 0
        %1248 = vperm.xlu0 %1247, %v889
        %v1249 = vpop.permute.xlu0 %1248
        %1252 = vset.pattern.permute.xlu0 0
        %1253 = vperm.xlu0 %1252, %v890
        %v1254 = vpop.permute.xlu0 %1253
        %1257 = vset.pattern.permute.xlu0 0
        %1258 = vperm.xlu0 %1257, %v891
        %v1259 = vpop.permute.xlu0 %1258
        %1262 = vset.pattern.permute.xlu0 0
        %1263 = vperm.xlu0 %1262, %v892
        %v1264 = vpop.permute.xlu0 %1263
        %1267 = vset.pattern.permute.xlu0 0
        %1268 = vperm.xlu0 %1267, %v893
        %v1269 = vpop.permute.xlu0 %1268
        %1272 = vset.pattern.permute.xlu0 0
        %1273 = vperm.xlu0 %1272, %v894
        %v1274 = vpop.permute.xlu0 %1273
        %1277 = vset.pattern.permute.xlu0 0
        %1278 = vperm.xlu0 %1277, %v895
        %v1279 = vpop.permute.xlu0 %1278
        %1282 = vset.pattern.permute.xlu0 0
        %1283 = vperm.xlu0 %1282, %v896
        %v1284 = vpop.permute.xlu0 %1283
        %1287 = vset.pattern.permute.xlu0 0
        %1288 = vperm.xlu0 %1287, %v897
        %v1289 = vpop.permute.xlu0 %1288
        %1292 = vset.pattern.permute.xlu0 0
        %1293 = vperm.xlu0 %1292, %v898
        %v1294 = vpop.permute.xlu0 %1293
        %1297 = vset.pattern.permute.xlu0 0
        %1298 = vperm.xlu0 %1297, %v899
        %v1299 = vpop.permute.xlu0 %1298
        %1302 = vset.pattern.permute.xlu0 0
        %1303 = vperm.xlu0 %1302, %v900
        %v1304 = vpop.permute.xlu0 %1303
        %1307 = vset.pattern.permute.xlu0 0
        %1308 = vperm.xlu0 %1307, %v901
        %v1309 = vpop.permute.xlu0 %1308
        %1312 = vset.pattern.permute.xlu0 0
        %1313 = vperm.xlu0 %1312, %v902
        %v1314 = vpop.permute.xlu0 %1313
        %1317 = vset.pattern.permute.xlu0 0
        %1318 = vperm.xlu0 %1317, %v903
        %v1319 = vpop.permute.xlu0 %1318
        %v1321 = vrcp.pop %v1244
        %v1322 = vmul.f32 %v1105, %v1321
        %v1323 = vrcp.pop %v1249
        %v1324 = vmul.f32 %v1114, %v1323
        %v1325 = vrcp.pop %v1254
        %v1326 = vmul.f32 %v1123, %v1325
        %v1327 = vrcp.pop %v1259
        %v1328 = vmul.f32 %v1132, %v1327
        %v1329 = vrcp.pop %v1264
        %v1330 = vmul.f32 %v1141, %v1329
        %v1331 = vrcp.pop %v1269
        %v1332 = vmul.f32 %v1150, %v1331
        %v1333 = vrcp.pop %v1274
        %v1334 = vmul.f32 %v1159, %v1333
        %v1335 = vrcp.pop %v1279
        %v1336 = vmul.f32 %v1168, %v1335
        %v1337 = vrcp.pop %v1284
        %v1338 = vmul.f32 %v1177, %v1337
        %v1339 = vrcp.pop %v1289
        %v1340 = vmul.f32 %v1186, %v1339
        %v1341 = vrcp.pop %v1294
        %v1342 = vmul.f32 %v1195, %v1341
        %v1343 = vrcp.pop %v1299
        %v1344 = vmul.f32 %v1204, %v1343
        %v1345 = vrcp.pop %v1304
        %v1346 = vmul.f32 %v1213, %v1345
        %v1347 = vrcp.pop %v1309
        %v1348 = vmul.f32 %v1222, %v1347
        %v1349 = vrcp.pop %v1314
        %v1350 = vmul.f32 %v1231, %v1349
        %v1351 = vrcp.pop %v1319
        %v1352 = vmul.f32 %v1240, %v1351
        %v1353 = vsub.f32 %v551, %v1322
        %v1354 = vsub.f32 %v552, %v1322
        %v1355 = vsub.f32 %v553, %v1324
        %v1356 = vsub.f32 %v554, %v1324
        %v1357 = vsub.f32 %v555, %v1326
        %v1358 = vsub.f32 %v556, %v1326
        %v1359 = vsub.f32 %v557, %v1328
        %v1360 = vsub.f32 %v558, %v1328
        %v1361 = vsub.f32 %v559, %v1330
        %v1362 = vsub.f32 %v560, %v1330
        %v1363 = vsub.f32 %v561, %v1332
        %v1364 = vsub.f32 %v562, %v1332
        %v1365 = vsub.f32 %v563, %v1334
        %v1366 = vsub.f32 %v564, %v1334
        %v1367 = vsub.f32 %v565, %v1336
        %v1368 = vsub.f32 %v566, %v1336
        %v1369 = vsub.f32 %v567, %v1338
        %v1370 = vsub.f32 %v568, %v1338
        %v1371 = vsub.f32 %v569, %v1340
        %v1372 = vsub.f32 %v570, %v1340
        %v1373 = vsub.f32 %v571, %v1342
        %v1374 = vsub.f32 %v572, %v1342
        %v1375 = vsub.f32 %v573, %v1344
        %v1376 = vsub.f32 %v574, %v1344
        %v1377 = vsub.f32 %v575, %v1346
        %v1378 = vsub.f32 %v576, %v1346
        %v1379 = vsub.f32 %v577, %v1348
        %v1380 = vsub.f32 %v578, %v1348
        %v1381 = vsub.f32 %v579, %v1350
        %v1382 = vsub.f32 %v580, %v1350
        %v1383 = vsub.f32 %v581, %v1352
        %v1384 = vsub.f32 %v582, %v1352
        %v1385 = vmul.f32 %v1353, %v907
        %v1386 = vmul.f32 %v1354, %v912
        %v1387 = vmul.f32 %v1355, %v917
        %v1388 = vmul.f32 %v1356, %v922
        %v1389 = vmul.f32 %v1357, %v927
        %v1390 = vmul.f32 %v1358, %v932
        %v1391 = vmul.f32 %v1359, %v937
        %v1392 = vmul.f32 %v1360, %v942
        %v1393 = vmul.f32 %v1361, %v947
        %v1394 = vmul.f32 %v1362, %v952
        %v1395 = vmul.f32 %v1363, %v957
        %v1396 = vmul.f32 %v1364, %v962
        %v1397 = vmul.f32 %v1365, %v967
        %v1398 = vmul.f32 %v1366, %v972
        %v1399 = vmul.f32 %v1367, %v977
        %v1400 = vmul.f32 %v1368, %v982
        %v1401 = vmul.f32 %v1369, %v987
        %v1402 = vmul.f32 %v1370, %v992
        %v1403 = vmul.f32 %v1371, %v997
        %v1404 = vmul.f32 %v1372, %v1002
        %v1405 = vmul.f32 %v1373, %v1007
        %v1406 = vmul.f32 %v1374, %v1012
        %v1407 = vmul.f32 %v1375, %v1017
        %v1408 = vmul.f32 %v1376, %v1022
        %v1409 = vmul.f32 %v1377, %v1027
        %v1410 = vmul.f32 %v1378, %v1032
        %v1411 = vmul.f32 %v1379, %v1037
        %v1412 = vmul.f32 %v1380, %v1042
        %v1413 = vmul.f32 %v1381, %v1047
        %v1414 = vmul.f32 %v1382, %v1052
        %v1415 = vmul.f32 %v1383, %v1057
        %v1416 = vmul.f32 %v1384, %v1062
        %v1417 = vmul.f32 %v1385, %v1385
        %v1418 = vmul.f32 %v1386, %v1386
        %v1419 = vmul.f32 %v1387, %v1387
        %v1420 = vmul.f32 %v1388, %v1388
        %v1421 = vmul.f32 %v1389, %v1389
        %v1422 = vmul.f32 %v1390, %v1390
        %v1423 = vmul.f32 %v1391, %v1391
        %v1424 = vmul.f32 %v1392, %v1392
        %v1425 = vmul.f32 %v1393, %v1393
        %v1426 = vmul.f32 %v1394, %v1394
        %v1427 = vmul.f32 %v1395, %v1395
        %v1428 = vmul.f32 %v1396, %v1396
        %v1429 = vmul.f32 %v1397, %v1397
        %v1430 = vmul.f32 %v1398, %v1398
        %v1431 = vmul.f32 %v1399, %v1399
        %v1432 = vmul.f32 %v1400, %v1400
        %v1433 = vmul.f32 %v1401, %v1401
        %v1434 = vmul.f32 %v1402, %v1402
        %v1435 = vmul.f32 %v1403, %v1403
        %v1436 = vmul.f32 %v1404, %v1404
        %v1437 = vmul.f32 %v1405, %v1405
        %v1438 = vmul.f32 %v1406, %v1406
        %v1439 = vmul.f32 %v1407, %v1407
        %v1440 = vmul.f32 %v1408, %v1408
        %v1441 = vmul.f32 %v1409, %v1409
        %v1442 = vmul.f32 %v1410, %v1410
        %v1443 = vmul.f32 %v1411, %v1411
        %v1444 = vmul.f32 %v1412, %v1412
        %v1445 = vmul.f32 %v1413, %v1413
        %v1446 = vmul.f32 %v1414, %v1414
        %v1447 = vmul.f32 %v1415, %v1415
        %v1448 = vmul.f32 %v1416, %v1416
        %v1449 = vsel %vm1096, %v1417, 0.0
        %v1450 = vsel %vm1096, %v1418, 0.0
        %v1451 = vadd.f32 %v1449, %v1450
        %v1452 = vrot.slane %v1451, 4
        %v1453 = vadd.f32 %v1451, %v1452
        %v1454 = vrot.slane %v1453, 2
        %v1455 = vadd.f32 %v1453, %v1454
        %v1456 = vrot.slane %v1455, 1
        %v1457 = vadd.f32 %v1455, %v1456
        %v1458 = vsel %vm1096, %v1419, 0.0
        %v1459 = vsel %vm1096, %v1420, 0.0
        %v1460 = vadd.f32 %v1458, %v1459
        %v1461 = vrot.slane %v1460, 4
        %v1462 = vadd.f32 %v1460, %v1461
        %v1463 = vrot.slane %v1462, 2
        %v1464 = vadd.f32 %v1462, %v1463
        %v1465 = vrot.slane %v1464, 1
        %v1466 = vadd.f32 %v1464, %v1465
        %v1467 = vsel %vm1096, %v1421, 0.0
        %v1468 = vsel %vm1096, %v1422, 0.0
        %v1469 = vadd.f32 %v1467, %v1468
        %v1470 = vrot.slane %v1469, 4
        %v1471 = vadd.f32 %v1469, %v1470
        %v1472 = vrot.slane %v1471, 2
        %v1473 = vadd.f32 %v1471, %v1472
        %v1474 = vrot.slane %v1473, 1
        %v1475 = vadd.f32 %v1473, %v1474
        %v1476 = vsel %vm1096, %v1423, 0.0
        %v1477 = vsel %vm1096, %v1424, 0.0
        %v1478 = vadd.f32 %v1476, %v1477
        %v1479 = vrot.slane %v1478, 4
        %v1480 = vadd.f32 %v1478, %v1479
        %v1481 = vrot.slane %v1480, 2
        %v1482 = vadd.f32 %v1480, %v1481
        %v1483 = vrot.slane %v1482, 1
        %v1484 = vadd.f32 %v1482, %v1483
        %v1485 = vsel %vm1096, %v1425, 0.0
        %v1486 = vsel %vm1096, %v1426, 0.0
        %v1487 = vadd.f32 %v1485, %v1486
        %v1488 = vrot.slane %v1487, 4
        %v1489 = vadd.f32 %v1487, %v1488
        %v1490 = vrot.slane %v1489, 2
        %v1491 = vadd.f32 %v1489, %v1490
        %v1492 = vrot.slane %v1491, 1
        %v1493 = vadd.f32 %v1491, %v1492
        %v1494 = vsel %vm1096, %v1427, 0.0
        %v1495 = vsel %vm1096, %v1428, 0.0
        %v1496 = vadd.f32 %v1494, %v1495
        %v1497 = vrot.slane %v1496, 4
        %v1498 = vadd.f32 %v1496, %v1497
        %v1499 = vrot.slane %v1498, 2
        %v1500 = vadd.f32 %v1498, %v1499
        %v1501 = vrot.slane %v1500, 1
        %v1502 = vadd.f32 %v1500, %v1501
        %v1503 = vsel %vm1096, %v1429, 0.0
        %v1504 = vsel %vm1096, %v1430, 0.0
        %v1505 = vadd.f32 %v1503, %v1504
        %v1506 = vrot.slane %v1505, 4
        %v1507 = vadd.f32 %v1505, %v1506
        %v1508 = vrot.slane %v1507, 2
        %v1509 = vadd.f32 %v1507, %v1508
        %v1510 = vrot.slane %v1509, 1
        %v1511 = vadd.f32 %v1509, %v1510
        %v1512 = vsel %vm1096, %v1431, 0.0
        %v1513 = vsel %vm1096, %v1432, 0.0
        %v1514 = vadd.f32 %v1512, %v1513
        %v1515 = vrot.slane %v1514, 4
        %v1516 = vadd.f32 %v1514, %v1515
        %v1517 = vrot.slane %v1516, 2
        %v1518 = vadd.f32 %v1516, %v1517
        %v1519 = vrot.slane %v1518, 1
        %v1520 = vadd.f32 %v1518, %v1519
        %v1521 = vsel %vm1096, %v1433, 0.0
        %v1522 = vsel %vm1096, %v1434, 0.0
        %v1523 = vadd.f32 %v1521, %v1522
        %v1524 = vrot.slane %v1523, 4
        %v1525 = vadd.f32 %v1523, %v1524
        %v1526 = vrot.slane %v1525, 2
        %v1527 = vadd.f32 %v1525, %v1526
        %v1528 = vrot.slane %v1527, 1
        %v1529 = vadd.f32 %v1527, %v1528
        %v1530 = vsel %vm1096, %v1435, 0.0
        %v1531 = vsel %vm1096, %v1436, 0.0
        %v1532 = vadd.f32 %v1530, %v1531
        %v1533 = vrot.slane %v1532, 4
        %v1534 = vadd.f32 %v1532, %v1533
        %v1535 = vrot.slane %v1534, 2
        %v1536 = vadd.f32 %v1534, %v1535
        %v1537 = vrot.slane %v1536, 1
        %v1538 = vadd.f32 %v1536, %v1537
        %v1539 = vsel %vm1096, %v1437, 0.0
        %v1540 = vsel %vm1096, %v1438, 0.0
        %v1541 = vadd.f32 %v1539, %v1540
        %v1542 = vrot.slane %v1541, 4
        %v1543 = vadd.f32 %v1541, %v1542
        %v1544 = vrot.slane %v1543, 2
        %v1545 = vadd.f32 %v1543, %v1544
        %v1546 = vrot.slane %v1545, 1
        %v1547 = vadd.f32 %v1545, %v1546
        %v1548 = vsel %vm1096, %v1439, 0.0
        %v1549 = vsel %vm1096, %v1440, 0.0
        %v1550 = vadd.f32 %v1548, %v1549
        %v1551 = vrot.slane %v1550, 4
        %v1552 = vadd.f32 %v1550, %v1551
        %v1553 = vrot.slane %v1552, 2
        %v1554 = vadd.f32 %v1552, %v1553
        %v1555 = vrot.slane %v1554, 1
        %v1556 = vadd.f32 %v1554, %v1555
        %v1557 = vsel %vm1096, %v1441, 0.0
        %v1558 = vsel %vm1096, %v1442, 0.0
        %v1559 = vadd.f32 %v1557, %v1558
        %v1560 = vrot.slane %v1559, 4
        %v1561 = vadd.f32 %v1559, %v1560
        %v1562 = vrot.slane %v1561, 2
        %v1563 = vadd.f32 %v1561, %v1562
        %v1564 = vrot.slane %v1563, 1
        %v1565 = vadd.f32 %v1563, %v1564
        %v1566 = vsel %vm1096, %v1443, 0.0
        %v1567 = vsel %vm1096, %v1444, 0.0
        %v1568 = vadd.f32 %v1566, %v1567
        %v1569 = vrot.slane %v1568, 4
        %v1570 = vadd.f32 %v1568, %v1569
        %v1571 = vrot.slane %v1570, 2
        %v1572 = vadd.f32 %v1570, %v1571
        %v1573 = vrot.slane %v1572, 1
        %v1574 = vadd.f32 %v1572, %v1573
        %v1575 = vsel %vm1096, %v1445, 0.0
        %v1576 = vsel %vm1096, %v1446, 0.0
        %v1577 = vadd.f32 %v1575, %v1576
        %v1578 = vrot.slane %v1577, 4
        %v1579 = vadd.f32 %v1577, %v1578
        %v1580 = vrot.slane %v1579, 2
        %v1581 = vadd.f32 %v1579, %v1580
        %v1582 = vrot.slane %v1581, 1
        %v1583 = vadd.f32 %v1581, %v1582
        %v1584 = vsel %vm1096, %v1447, 0.0
        %v1585 = vsel %vm1096, %v1448, 0.0
        %v1586 = vadd.f32 %v1584, %v1585
        %v1587 = vrot.slane %v1586, 4
        %v1588 = vadd.f32 %v1586, %v1587
        %v1589 = vrot.slane %v1588, 2
        %v1590 = vadd.f32 %v1588, %v1589
        %v1591 = vrot.slane %v1590, 1
        %v1592 = vadd.f32 %v1590, %v1591
        %v1593 = vsub.f32 %v752, 1.0
        %v1594 = vsub.f32 %v761, 1.0
        %v1595 = vsub.f32 %v770, 1.0
        %v1596 = vsub.f32 %v779, 1.0
        %v1597 = vsub.f32 %v788, 1.0
        %v1598 = vsub.f32 %v797, 1.0
        %v1599 = vsub.f32 %v806, 1.0
        %v1600 = vsub.f32 %v815, 1.0
        %v1601 = vsub.f32 %v824, 1.0
        %v1602 = vsub.f32 %v833, 1.0
        %v1603 = vsub.f32 %v842, 1.0
        %v1604 = vsub.f32 %v851, 1.0
        %v1605 = vsub.f32 %v860, 1.0
        %v1606 = vsub.f32 %v869, 1.0
        %v1607 = vsub.f32 %v878, 1.0
        %v1608 = vsub.f32 %v887, 1.0
        %v1609 = vmax.f32 %v1593, 1.0
        %v1610 = vmax.f32 %v1594, 1.0
        %v1611 = vmax.f32 %v1595, 1.0
        %v1612 = vmax.f32 %v1596, 1.0
        %v1613 = vmax.f32 %v1597, 1.0
        %v1614 = vmax.f32 %v1598, 1.0
        %v1615 = vmax.f32 %v1599, 1.0
        %v1616 = vmax.f32 %v1600, 1.0
        %v1617 = vmax.f32 %v1601, 1.0
        %v1618 = vmax.f32 %v1602, 1.0
        %v1619 = vmax.f32 %v1603, 1.0
        %v1620 = vmax.f32 %v1604, 1.0
        %v1621 = vmax.f32 %v1605, 1.0
        %v1622 = vmax.f32 %v1606, 1.0
        %v1623 = vmax.f32 %v1607, 1.0
        %v1624 = vmax.f32 %v1608, 1.0
        %1626 = vset.pattern.permute.xlu0 0
        %1627 = vperm.xlu0 %1626, %v1609
        %v1628 = vpop.permute.xlu0 %1627
        %1631 = vset.pattern.permute.xlu0 0
        %1632 = vperm.xlu0 %1631, %v1610
        %v1633 = vpop.permute.xlu0 %1632
        %1636 = vset.pattern.permute.xlu0 0
        %1637 = vperm.xlu0 %1636, %v1611
        %v1638 = vpop.permute.xlu0 %1637
        %1641 = vset.pattern.permute.xlu0 0
        %1642 = vperm.xlu0 %1641, %v1612
        %v1643 = vpop.permute.xlu0 %1642
        %1646 = vset.pattern.permute.xlu0 0
        %1647 = vperm.xlu0 %1646, %v1613
        %v1648 = vpop.permute.xlu0 %1647
        %1651 = vset.pattern.permute.xlu0 0
        %1652 = vperm.xlu0 %1651, %v1614
        %v1653 = vpop.permute.xlu0 %1652
        %1656 = vset.pattern.permute.xlu0 0
        %1657 = vperm.xlu0 %1656, %v1615
        %v1658 = vpop.permute.xlu0 %1657
        %1661 = vset.pattern.permute.xlu0 0
        %1662 = vperm.xlu0 %1661, %v1616
        %v1663 = vpop.permute.xlu0 %1662
        %1666 = vset.pattern.permute.xlu0 0
        %1667 = vperm.xlu0 %1666, %v1617
        %v1668 = vpop.permute.xlu0 %1667
        %1671 = vset.pattern.permute.xlu0 0
        %1672 = vperm.xlu0 %1671, %v1618
        %v1673 = vpop.permute.xlu0 %1672
        %1676 = vset.pattern.permute.xlu0 0
        %1677 = vperm.xlu0 %1676, %v1619
        %v1678 = vpop.permute.xlu0 %1677
        %1681 = vset.pattern.permute.xlu0 0
        %1682 = vperm.xlu0 %1681, %v1620
        %v1683 = vpop.permute.xlu0 %1682
        %1686 = vset.pattern.permute.xlu0 0
        %1687 = vperm.xlu0 %1686, %v1621
        %v1688 = vpop.permute.xlu0 %1687
        %1691 = vset.pattern.permute.xlu0 0
        %1692 = vperm.xlu0 %1691, %v1622
        %v1693 = vpop.permute.xlu0 %1692
        %1696 = vset.pattern.permute.xlu0 0
        %1697 = vperm.xlu0 %1696, %v1623
        %v1698 = vpop.permute.xlu0 %1697
        %1701 = vset.pattern.permute.xlu0 0
        %1702 = vperm.xlu0 %1701, %v1624
        %v1703 = vpop.permute.xlu0 %1702
        %v1705 = vrcp.pop %v1628
        %v1706 = vmul.f32 %v1457, %v1705
        %v1707 = vrcp.pop %v1633
        %v1708 = vmul.f32 %v1466, %v1707
        %v1709 = vrcp.pop %v1638
        %v1710 = vmul.f32 %v1475, %v1709
        %v1711 = vrcp.pop %v1643
        %v1712 = vmul.f32 %v1484, %v1711
        %v1713 = vrcp.pop %v1648
        %v1714 = vmul.f32 %v1493, %v1713
        %v1715 = vrcp.pop %v1653
        %v1716 = vmul.f32 %v1502, %v1715
        %v1717 = vrcp.pop %v1658
        %v1718 = vmul.f32 %v1511, %v1717
        %v1719 = vrcp.pop %v1663
        %v1720 = vmul.f32 %v1520, %v1719
        %v1721 = vrcp.pop %v1668
        %v1722 = vmul.f32 %v1529, %v1721
        %v1723 = vrcp.pop %v1673
        %v1724 = vmul.f32 %v1538, %v1723
        %v1725 = vrcp.pop %v1678
        %v1726 = vmul.f32 %v1547, %v1725
        %v1727 = vrcp.pop %v1683
        %v1728 = vmul.f32 %v1556, %v1727
        %v1729 = vrcp.pop %v1688
        %v1730 = vmul.f32 %v1565, %v1729
        %v1731 = vrcp.pop %v1693
        %v1732 = vmul.f32 %v1574, %v1731
        %v1733 = vrcp.pop %v1698
        %v1734 = vmul.f32 %v1583, %v1733
        %v1735 = vrcp.pop %v1703
        %v1736 = vmul.f32 %v1592, %v1735
        %v1737 = vrsqrt.pop %v1706
        %v1738 = vmul.f32 %v1706, %v1737
        %vm1739 = vcmp.eq.f32.partialorder %v1706, inf
        %v1740 = vsel %vm1739, %v1706, %v1738
        %vm1741 = vcmp.eq.f32.partialorder %v1706, 0.0
        %v1742 = vand.u32 %v1706, 2147483648
        %v1743 = vsel %vm1741, %v1742, %v1740
        %v1744 = vrsqrt.pop %v1708
        %v1745 = vmul.f32 %v1708, %v1744
        %vm1746 = vcmp.eq.f32.partialorder %v1708, inf
        %v1747 = vsel %vm1746, %v1708, %v1745
        %vm1748 = vcmp.eq.f32.partialorder %v1708, 0.0
        %v1749 = vand.u32 %v1708, 2147483648
        %v1750 = vsel %vm1748, %v1749, %v1747
        %v1751 = vrsqrt.pop %v1710
        %v1752 = vmul.f32 %v1710, %v1751
        %vm1753 = vcmp.eq.f32.partialorder %v1710, inf
        %v1754 = vsel %vm1753, %v1710, %v1752
        %vm1755 = vcmp.eq.f32.partialorder %v1710, 0.0
        %v1756 = vand.u32 %v1710, 2147483648
        %v1757 = vsel %vm1755, %v1756, %v1754
        %v1758 = vrsqrt.pop %v1712
        %v1759 = vmul.f32 %v1712, %v1758
        %vm1760 = vcmp.eq.f32.partialorder %v1712, inf
        %v1761 = vsel %vm1760, %v1712, %v1759
        %vm1762 = vcmp.eq.f32.partialorder %v1712, 0.0
        %v1763 = vand.u32 %v1712, 2147483648
        %v1764 = vsel %vm1762, %v1763, %v1761
        %v1765 = vrsqrt.pop %v1714
        %v1766 = vmul.f32 %v1714, %v1765
        %vm1767 = vcmp.eq.f32.partialorder %v1714, inf
        %v1768 = vsel %vm1767, %v1714, %v1766
        %vm1769 = vcmp.eq.f32.partialorder %v1714, 0.0
        %v1770 = vand.u32 %v1714, 2147483648
        %v1771 = vsel %vm1769, %v1770, %v1768
        %v1772 = vrsqrt.pop %v1716
        %v1773 = vmul.f32 %v1716, %v1772
        %vm1774 = vcmp.eq.f32.partialorder %v1716, inf
        %v1775 = vsel %vm1774, %v1716, %v1773
        %vm1776 = vcmp.eq.f32.partialorder %v1716, 0.0
        %v1777 = vand.u32 %v1716, 2147483648
        %v1778 = vsel %vm1776, %v1777, %v1775
        %v1779 = vrsqrt.pop %v1718
        %v1780 = vmul.f32 %v1718, %v1779
        %vm1781 = vcmp.eq.f32.partialorder %v1718, inf
        %v1782 = vsel %vm1781, %v1718, %v1780
        %vm1783 = vcmp.eq.f32.partialorder %v1718, 0.0
        %v1784 = vand.u32 %v1718, 2147483648
        %v1785 = vsel %vm1783, %v1784, %v1782
        %v1786 = vrsqrt.pop %v1720
        %v1787 = vmul.f32 %v1720, %v1786
        %vm1788 = vcmp.eq.f32.partialorder %v1720, inf
        %v1789 = vsel %vm1788, %v1720, %v1787
        %vm1790 = vcmp.eq.f32.partialorder %v1720, 0.0
        %v1791 = vand.u32 %v1720, 2147483648
        %v1792 = vsel %vm1790, %v1791, %v1789
        %v1793 = vrsqrt.pop %v1722
        %v1794 = vmul.f32 %v1722, %v1793
        %vm1795 = vcmp.eq.f32.partialorder %v1722, inf
        %v1796 = vsel %vm1795, %v1722, %v1794
        %vm1797 = vcmp.eq.f32.partialorder %v1722, 0.0
        %v1798 = vand.u32 %v1722, 2147483648
        %v1799 = vsel %vm1797, %v1798, %v1796
        %v1800 = vrsqrt.pop %v1724
        %v1801 = vmul.f32 %v1724, %v1800
        %vm1802 = vcmp.eq.f32.partialorder %v1724, inf
        %v1803 = vsel %vm1802, %v1724, %v1801
        %vm1804 = vcmp.eq.f32.partialorder %v1724, 0.0
        %v1805 = vand.u32 %v1724, 2147483648
        %v1806 = vsel %vm1804, %v1805, %v1803
        %v1807 = vrsqrt.pop %v1726
        %v1808 = vmul.f32 %v1726, %v1807
        %vm1809 = vcmp.eq.f32.partialorder %v1726, inf
        %v1810 = vsel %vm1809, %v1726, %v1808
        %vm1811 = vcmp.eq.f32.partialorder %v1726, 0.0
        %v1812 = vand.u32 %v1726, 2147483648
        %v1813 = vsel %vm1811, %v1812, %v1810
        %v1814 = vrsqrt.pop %v1728
        %v1815 = vmul.f32 %v1728, %v1814
        %vm1816 = vcmp.eq.f32.partialorder %v1728, inf
        %v1817 = vsel %vm1816, %v1728, %v1815
        %vm1818 = vcmp.eq.f32.partialorder %v1728, 0.0
        %v1819 = vand.u32 %v1728, 2147483648
        %v1820 = vsel %vm1818, %v1819, %v1817
        %v1821 = vrsqrt.pop %v1730
        %v1822 = vmul.f32 %v1730, %v1821
        %vm1823 = vcmp.eq.f32.partialorder %v1730, inf
        %v1824 = vsel %vm1823, %v1730, %v1822
        %vm1825 = vcmp.eq.f32.partialorder %v1730, 0.0
        %v1826 = vand.u32 %v1730, 2147483648
        %v1827 = vsel %vm1825, %v1826, %v1824
        %v1828 = vrsqrt.pop %v1732
        %v1829 = vmul.f32 %v1732, %v1828
        %vm1830 = vcmp.eq.f32.partialorder %v1732, inf
        %v1831 = vsel %vm1830, %v1732, %v1829
        %vm1832 = vcmp.eq.f32.partialorder %v1732, 0.0
        %v1833 = vand.u32 %v1732, 2147483648
        %v1834 = vsel %vm1832, %v1833, %v1831
        %v1835 = vrsqrt.pop %v1734
        %v1836 = vmul.f32 %v1734, %v1835
        %vm1837 = vcmp.eq.f32.partialorder %v1734, inf
        %v1838 = vsel %vm1837, %v1734, %v1836
        %vm1839 = vcmp.eq.f32.partialorder %v1734, 0.0
        %v1840 = vand.u32 %v1734, 2147483648
        %v1841 = vsel %vm1839, %v1840, %v1838
        %v1842 = vrsqrt.pop %v1736
        %v1843 = vmul.f32 %v1736, %v1842
        %vm1844 = vcmp.eq.f32.partialorder %v1736, inf
        %v1845 = vsel %vm1844, %v1736, %v1843
        %vm1846 = vcmp.eq.f32.partialorder %v1736, 0.0
        %v1847 = vand.u32 %v1736, 2147483648
        %v1848 = vsel %vm1846, %v1847, %v1845
        %v1849 = vld [vmem:[%s5] sm:$0xff]
        %v1850 = vld [vmem:[%s5 + $0x8] sm:$0xff]
        %v1851 = vld [vmem:[%s5 + $0x10] sm:$0xff]
        %v1852 = vld [vmem:[%s5 + $0x18] sm:$0xff]
        %v1853 = vld [vmem:[%s6] sm:$0x1]
        %v1855 = vlaneseq
        %v1856 = vshrl.u32 %v1855, 7
        %v1857 = vsub.s32 0, %v1856
        %v1858 = vrot.slane %v1853, %v1857
        %v1861 = vsel %vm1096, %v551, 0
        %v1864 = vsel %vm1096, %v552, 0
        %v1867 = vsel %vm1096, %v553, 0
        %v1870 = vsel %vm1096, %v554, 0
        %v1873 = vsel %vm1096, %v555, 0
        %v1876 = vsel %vm1096, %v556, 0
        %v1879 = vsel %vm1096, %v557, 0
        %v1882 = vsel %vm1096, %v558, 0
        %v1885 = vsel %vm1096, %v559, 0
        %v1888 = vsel %vm1096, %v560, 0
        %v1891 = vsel %vm1096, %v561, 0
        %v1894 = vsel %vm1096, %v562, 0
        %v1897 = vsel %vm1096, %v563, 0
        %v1900 = vsel %vm1096, %v564, 0
        %v1903 = vsel %vm1096, %v565, 0
        %v1906 = vsel %vm1096, %v566, 0
        %v1909 = vsel %vm1096, %v567, 0
        %v1912 = vsel %vm1096, %v568, 0
        %v1915 = vsel %vm1096, %v569, 0
        %v1918 = vsel %vm1096, %v570, 0
        %v1921 = vsel %vm1096, %v571, 0
        %v1924 = vsel %vm1096, %v572, 0
        %v1927 = vsel %vm1096, %v573, 0
        %v1930 = vsel %vm1096, %v574, 0
        %v1933 = vsel %vm1096, %v575, 0
        %v1936 = vsel %vm1096, %v576, 0
        %v1939 = vsel %vm1096, %v577, 0
        %v1942 = vsel %vm1096, %v578, 0
        %v1945 = vsel %vm1096, %v579, 0
        %v1948 = vsel %vm1096, %v580, 0
        %v1951 = vsel %vm1096, %v581, 0
        %v1954 = vsel %vm1096, %v582, 0
        %1956 = vmatprep.subr.mxu0 0.0
        %1957 = vmatpush1.msra.mxu0 %v1849
        %1958 = vmatprep.subr.mxu0 0.0
        %1959 = vmatpush1.msra.mxu0 %v1850
        %1960 = vmatprep.subr.mxu0 0.0
        %1961 = vmatpush1.msra.mxu0 %v1851
        %1962 = vmatprep.subr.mxu0 0.0
        %1963 = vmatpush1.msra.mxu0 %v1852
        %1964 = vmatprep.subr.mxu0 0.0
        %1965 = vmatpush1.msra.mxu0 0.0
        %1966 = vmatprep.subr.mxu0 0.0
        %1967 = vmatpush1.msra.mxu0 0.0
        %1968 = vmatprep.subr.mxu0 0.0
        %1969 = vmatpush1.msra.mxu0 0.0
        %1970 = vmatprep.subr.mxu0 0.0
        %1971 = vmatpush1.msra.mxu0 0.0
        %1972 = vmatprep.subr.mxu0 0.0
        %1973 = vmatpush1.msra.mxu0 0.0
        %1974 = vmatprep.subr.mxu0 0.0
        %1975 = vmatpush1.msra.mxu0 0.0
        %1976 = vmatprep.subr.mxu0 0.0
        %1977 = vmatpush1.msra.mxu0 0.0
        %1978 = vmatprep.subr.mxu0 0.0
        %1979 = vmatpush1.msra.mxu0 0.0
        %1980 = vmatprep.subr.mxu0 0.0
        %1981 = vmatpush1.msra.mxu0 0.0
        %1982 = vmatprep.subr.mxu0 0.0
        %1983 = vmatpush1.msra.mxu0 0.0
        %1984 = vmatprep.subr.mxu0 0.0
        %1985 = vmatpush1.msra.mxu0 0.0
        %1986 = vmatprep.subr.mxu0 0.0
        %1987 = vmatpush1.msra.mxu0 0.0
        %1988 = vmatprep.subr.mxu0 0.0
        %1989 = vmatpush1.msra.mxu0 0.0
        %1990 = vmatprep.subr.mxu0 0.0
        %1991 = vmatpush1.msra.mxu0 0.0
        %1992 = vmatprep.subr.mxu0 0.0
        %1993 = vmatpush1.msra.mxu0 0.0
        %1994 = vmatprep.subr.mxu0 0.0
        %1995 = vmatpush1.msra.mxu0 0.0
        %1996 = vmatprep.subr.mxu0 0.0
        %1997 = vmatpush1.msra.mxu0 0.0
        %1998 = vmatprep.subr.mxu0 0.0
        %1999 = vmatpush1.msra.mxu0 0.0
        %2000 = vmatprep.subr.mxu0 0.0
        %2001 = vmatpush1.msra.mxu0 0.0
        %2002 = vmatprep.subr.mxu0 0.0
        %2003 = vmatpush1.msra.mxu0 0.0
        %2004 = vmatprep.subr.mxu0 0.0
        %2005 = vmatpush1.msra.mxu0 0.0
        %2006 = vmatprep.subr.mxu0 0.0
        %2007 = vmatpush1.msra.mxu0 0.0
        %2008 = vmatprep.subr.mxu0 0.0
        %2009 = vmatpush1.msra.mxu0 0.0
        %2010 = vmatprep.subr.mxu0 0.0
        %2011 = vmatpush1.msra.mxu0 0.0
        %2012 = vmatprep.subr.mxu0 0.0
        %2013 = vmatpush1.msra.mxu0 0.0
        %2014 = vmatprep.subr.mxu0 0.0
        %2015 = vmatpush1.msra.mxu0 0.0
        %2016 = vmatprep.subr.mxu0 0.0
        %2017 = vmatpush1.msra.mxu0 0.0
        %2018 = vmatprep.subr.mxu0 0.0
        %2019 = vmatpush1.msra.mxu0 0.0
        %2020 = vmatprep.mubr.f32.mxu0 0.0
        %2021 = vmatmul.mubr.f32.gmra.mrb[0].mxu0 %v1861
        %v2022 = vpop.f32.mrb[0].mxu0
        %v2023 = vadd.f32 %v1858, %v2022
        %v2024 = vpop.f32.mrb[0].mxu0
        %2025 = vmatprep.mubr.f32.mxu0 0.0
        %2026 = vmatmul.mubr.f32.gmra.mrb[0].mxu0 %v1864
        %v2027 = vpop.f32.mrb[0].mxu0
        %v2028 = vadd.f32 %v1858, %v2027
        %v2029 = vpop.f32.mrb[0].mxu0
        %2030 = vmatprep.mubr.f32.mxu0 0.0
        %2031 = vmatmul.mubr.f32.gmra.mrb[0].mxu0 %v1867
        %v2032 = vpop.f32.mrb[0].mxu0
        %v2033 = vadd.f32 %v1858, %v2032
        %v2034 = vpop.f32.mrb[0].mxu0
        %2035 = vmatprep.mubr.f32.mxu0 0.0
        %2036 = vmatmul.mubr.f32.gmra.mrb[0].mxu0 %v1870
        %v2037 = vpop.f32.mrb[0].mxu0
        %v2038 = vadd.f32 %v1858, %v2037
        %v2039 = vpop.f32.mrb[0].mxu0
        %2040 = vmatprep.mubr.f32.mxu0 0.0
        %2041 = vmatmul.mubr.f32.gmra.mrb[0].mxu0 %v1873
        %v2042 = vpop.f32.mrb[0].mxu0
        %v2043 = vadd.f32 %v1858, %v2042
        %v2044 = vpop.f32.mrb[0].mxu0
        %2045 = vmatprep.mubr.f32.mxu0 0.0
        %2046 = vmatmul.mubr.f32.gmra.mrb[0].mxu0 %v1876
        %v2047 = vpop.f32.mrb[0].mxu0
        %v2048 = vadd.f32 %v1858, %v2047
        %v2049 = vpop.f32.mrb[0].mxu0
        %2050 = vmatprep.mubr.f32.mxu0 0.0
        %2051 = vmatmul.mubr.f32.gmra.mrb[0].mxu0 %v1879
        %v2052 = vpop.f32.mrb[0].mxu0
        %v2053 = vadd.f32 %v1858, %v2052
        %v2054 = vpop.f32.mrb[0].mxu0
        %2055 = vmatprep.mubr.f32.mxu0 0.0
        %2056 = vmatmul.mubr.f32.gmra.mrb[0].mxu0 %v1882
        %v2057 = vpop.f32.mrb[0].mxu0
        %v2058 = vadd.f32 %v1858, %v2057
        %v2059 = vpop.f32.mrb[0].mxu0
        %2060 = vmatprep.mubr.f32.mxu0 0.0
        %2061 = vmatmul.mubr.f32.gmra.mrb[0].mxu0 %v1885
        %v2062 = vpop.f32.mrb[0].mxu0
        %v2063 = vadd.f32 %v1858, %v2062
        %v2064 = vpop.f32.mrb[0].mxu0
        %2065 = vmatprep.mubr.f32.mxu0 0.0
        %2066 = vmatmul.mubr.f32.gmra.mrb[0].mxu0 %v1888
        %v2067 = vpop.f32.mrb[0].mxu0
        %v2068 = vadd.f32 %v1858, %v2067
        %v2069 = vpop.f32.mrb[0].mxu0
        %2070 = vmatprep.mubr.f32.mxu0 0.0
        %2071 = vmatmul.mubr.f32.gmra.mrb[0].mxu0 %v1891
        %v2072 = vpop.f32.mrb[0].mxu0
        %v2073 = vadd.f32 %v1858, %v2072
        %v2074 = vpop.f32.mrb[0].mxu0
        %2075 = vmatprep.mubr.f32.mxu0 0.0
        %2076 = vmatmul.mubr.f32.gmra.mrb[0].mxu0 %v1894
        %v2077 = vpop.f32.mrb[0].mxu0
        %v2078 = vadd.f32 %v1858, %v2077
        %v2079 = vpop.f32.mrb[0].mxu0
        %2080 = vmatprep.mubr.f32.mxu0 0.0
        %2081 = vmatmul.mubr.f32.gmra.mrb[0].mxu0 %v1897
        %v2082 = vpop.f32.mrb[0].mxu0
        %v2083 = vadd.f32 %v1858, %v2082
        %v2084 = vpop.f32.mrb[0].mxu0
        %2085 = vmatprep.mubr.f32.mxu0 0.0
        %2086 = vmatmul.mubr.f32.gmra.mrb[0].mxu0 %v1900
        %v2087 = vpop.f32.mrb[0].mxu0
        %v2088 = vadd.f32 %v1858, %v2087
        %v2089 = vpop.f32.mrb[0].mxu0
        %2090 = vmatprep.mubr.f32.mxu0 0.0
        %2091 = vmatmul.mubr.f32.gmra.mrb[0].mxu0 %v1903
        %v2092 = vpop.f32.mrb[0].mxu0
        %v2093 = vadd.f32 %v1858, %v2092
        %v2094 = vpop.f32.mrb[0].mxu0
        %2095 = vmatprep.mubr.f32.mxu0 0.0
        %2096 = vmatmul.mubr.f32.gmra.mrb[0].mxu0 %v1906
        %v2097 = vpop.f32.mrb[0].mxu0
        %v2098 = vadd.f32 %v1858, %v2097
        %v2099 = vpop.f32.mrb[0].mxu0
        %2100 = vmatprep.mubr.f32.mxu0 0.0
        %2101 = vmatmul.mubr.f32.gmra.mrb[0].mxu0 %v1909
        %v2102 = vpop.f32.mrb[0].mxu0
        %v2103 = vadd.f32 %v1858, %v2102
        %v2104 = vpop.f32.mrb[0].mxu0
        %2105 = vmatprep.mubr.f32.mxu0 0.0
        %2106 = vmatmul.mubr.f32.gmra.mrb[0].mxu0 %v1912
        %v2107 = vpop.f32.mrb[0].mxu0
        %v2108 = vadd.f32 %v1858, %v2107
        %v2109 = vpop.f32.mrb[0].mxu0
        %2110 = vmatprep.mubr.f32.mxu0 0.0
        %2111 = vmatmul.mubr.f32.gmra.mrb[0].mxu0 %v1915
        %v2112 = vpop.f32.mrb[0].mxu0
        %v2113 = vadd.f32 %v1858, %v2112
        %v2114 = vpop.f32.mrb[0].mxu0
        %2115 = vmatprep.mubr.f32.mxu0 0.0
        %2116 = vmatmul.mubr.f32.gmra.mrb[0].mxu0 %v1918
        %v2117 = vpop.f32.mrb[0].mxu0
        %v2118 = vadd.f32 %v1858, %v2117
        %v2119 = vpop.f32.mrb[0].mxu0
        %2120 = vmatprep.mubr.f32.mxu0 0.0
        %2121 = vmatmul.mubr.f32.gmra.mrb[0].mxu0 %v1921
        %v2122 = vpop.f32.mrb[0].mxu0
        %v2123 = vadd.f32 %v1858, %v2122
        %v2124 = vpop.f32.mrb[0].mxu0
        %2125 = vmatprep.mubr.f32.mxu0 0.0
        %2126 = vmatmul.mubr.f32.gmra.mrb[0].mxu0 %v1924
        %v2127 = vpop.f32.mrb[0].mxu0
        %v2128 = vadd.f32 %v1858, %v2127
        %v2129 = vpop.f32.mrb[0].mxu0
        %2130 = vmatprep.mubr.f32.mxu0 0.0
        %2131 = vmatmul.mubr.f32.gmra.mrb[0].mxu0 %v1927
        %v2132 = vpop.f32.mrb[0].mxu0
        %v2133 = vadd.f32 %v1858, %v2132
        %v2134 = vpop.f32.mrb[0].mxu0
        %2135 = vmatprep.mubr.f32.mxu0 0.0
        %2136 = vmatmul.mubr.f32.gmra.mrb[0].mxu0 %v1930
        %v2137 = vpop.f32.mrb[0].mxu0
        %v2138 = vadd.f32 %v1858, %v2137
        %v2139 = vpop.f32.mrb[0].mxu0
        %2140 = vmatprep.mubr.f32.mxu0 0.0
        %2141 = vmatmul.mubr.f32.gmra.mrb[0].mxu0 %v1933
        %v2142 = vpop.f32.mrb[0].mxu0
        %v2143 = vadd.f32 %v1858, %v2142
        %v2144 = vpop.f32.mrb[0].mxu0
        %2145 = vmatprep.mubr.f32.mxu0 0.0
        %2146 = vmatmul.mubr.f32.gmra.mrb[0].mxu0 %v1936
        %v2147 = vpop.f32.mrb[0].mxu0
        %v2148 = vadd.f32 %v1858, %v2147
        %v2149 = vpop.f32.mrb[0].mxu0
        %2150 = vmatprep.mubr.f32.mxu0 0.0
        %2151 = vmatmul.mubr.f32.gmra.mrb[0].mxu0 %v1939
        %v2152 = vpop.f32.mrb[0].mxu0
        %v2153 = vadd.f32 %v1858, %v2152
        %v2154 = vpop.f32.mrb[0].mxu0
        %2155 = vmatprep.mubr.f32.mxu0 0.0
        %2156 = vmatmul.mubr.f32.gmra.mrb[0].mxu0 %v1942
        %v2157 = vpop.f32.mrb[0].mxu0
        %v2158 = vadd.f32 %v1858, %v2157
        %v2159 = vpop.f32.mrb[0].mxu0
        %2160 = vmatprep.mubr.f32.mxu0 0.0
        %2161 = vmatmul.mubr.f32.gmra.mrb[0].mxu0 %v1945
        %v2162 = vpop.f32.mrb[0].mxu0
        %v2163 = vadd.f32 %v1858, %v2162
        %v2164 = vpop.f32.mrb[0].mxu0
        %2165 = vmatprep.mubr.f32.mxu0 0.0
        %2166 = vmatmul.mubr.f32.gmra.mrb[0].mxu0 %v1948
        %v2167 = vpop.f32.mrb[0].mxu0
        %v2168 = vadd.f32 %v1858, %v2167
        %v2169 = vpop.f32.mrb[0].mxu0
        %2170 = vmatprep.mubr.f32.mxu0 0.0
        %2171 = vmatmul.mubr.f32.gmra.mrb[0].mxu0 %v1951
        %v2172 = vpop.f32.mrb[0].mxu0
        %v2173 = vadd.f32 %v1858, %v2172
        %v2174 = vpop.f32.mrb[0].mxu0
        %2175 = vmatprep.mubr.f32.mxu0 0.0
        %2176 = vmatmul.mubr.f32.gmra.mrb[0].mxu0 %v1954
        %v2177 = vpop.f32.mrb[0].mxu0
        %v2178 = vadd.f32 %v1858, %v2177
        %v2179 = vpop.f32.mrb[0].mxu0
        %2180 = vdwg.mxu0
        %v2181 = vtanh.pop %v2023
        %v2182 = vtanh.pop %v2028
        %v2183 = vtanh.pop %v2033
        %v2184 = vtanh.pop %v2038
        %v2185 = vtanh.pop %v2043
        %v2186 = vtanh.pop %v2048
        %v2187 = vtanh.pop %v2053
        %v2188 = vtanh.pop %v2058
        %v2189 = vtanh.pop %v2063
        %v2190 = vtanh.pop %v2068
        %v2191 = vtanh.pop %v2073
        %v2192 = vtanh.pop %v2078
        %v2193 = vtanh.pop %v2083
        %v2194 = vtanh.pop %v2088
        %v2195 = vtanh.pop %v2093
        %v2196 = vtanh.pop %v2098
        %v2197 = vtanh.pop %v2103
        %v2198 = vtanh.pop %v2108
        %v2199 = vtanh.pop %v2113
        %v2200 = vtanh.pop %v2118
        %v2201 = vtanh.pop %v2123
        %v2202 = vtanh.pop %v2128
        %v2203 = vtanh.pop %v2133
        %v2204 = vtanh.pop %v2138
        %v2205 = vtanh.pop %v2143
        %v2206 = vtanh.pop %v2148
        %v2207 = vtanh.pop %v2153
        %v2208 = vtanh.pop %v2158
        %v2209 = vtanh.pop %v2163
        %v2210 = vtanh.pop %v2168
        %v2211 = vtanh.pop %v2173
        %v2212 = vtanh.pop %v2178
        %v2213 = vld [vmem:[%s7] sm:$0x1]
        %v2215 = vlaneseq
        %v2216 = vshrl.u32 %v2215, 7
        %v2217 = vsub.s32 0, %v2216
        %v2218 = vrot.slane %v2213, %v2217
        %v2220 = vmul.f32 %v2181, %v2218
        %v2221 = vmul.f32 %v2182, %v2218
        %v2222 = vmul.f32 %v2183, %v2218
        %v2223 = vmul.f32 %v2184, %v2218
        %v2224 = vmul.f32 %v2185, %v2218
        %v2225 = vmul.f32 %v2186, %v2218
        %v2226 = vmul.f32 %v2187, %v2218
        %v2227 = vmul.f32 %v2188, %v2218
        %v2228 = vmul.f32 %v2189, %v2218
        %v2229 = vmul.f32 %v2190, %v2218
        %v2230 = vmul.f32 %v2191, %v2218
        %v2231 = vmul.f32 %v2192, %v2218
        %v2232 = vmul.f32 %v2193, %v2218
        %v2233 = vmul.f32 %v2194, %v2218
        %v2234 = vmul.f32 %v2195, %v2218
        %v2235 = vmul.f32 %v2196, %v2218
        %v2236 = vmul.f32 %v2197, %v2218
        %v2237 = vmul.f32 %v2198, %v2218
        %v2238 = vmul.f32 %v2199, %v2218
        %v2239 = vmul.f32 %v2200, %v2218
        %v2240 = vmul.f32 %v2201, %v2218
        %v2241 = vmul.f32 %v2202, %v2218
        %v2242 = vmul.f32 %v2203, %v2218
        %v2243 = vmul.f32 %v2204, %v2218
        %v2244 = vmul.f32 %v2205, %v2218
        %v2245 = vmul.f32 %v2206, %v2218
        %v2246 = vmul.f32 %v2207, %v2218
        %v2247 = vmul.f32 %v2208, %v2218
        %v2248 = vmul.f32 %v2209, %v2218
        %v2249 = vmul.f32 %v2210, %v2218
        %v2250 = vmul.f32 %v2211, %v2218
        %v2251 = vmul.f32 %v2212, %v2218
        %v2252 = vsel %vm1096, %v2220, 0.0
        %2253 = vadd.xlane.f32.xlu0 %v2252
        %v2254 = vpop.xlane.xlu0 %2253
        %v2255 = vsel %vm1096, %v2221, 0.0
        %2256 = vadd.xlane.f32.xlu0 %v2255
        %v2257 = vpop.xlane.xlu0 %2256
        %v2258 = vsel %vm1096, %v2222, 0.0
        %2259 = vadd.xlane.f32.xlu0 %v2258
        %v2260 = vpop.xlane.xlu0 %2259
        %v2261 = vsel %vm1096, %v2223, 0.0
        %2262 = vadd.xlane.f32.xlu0 %v2261
        %v2263 = vpop.xlane.xlu0 %2262
        %v2264 = vsel %vm1096, %v2224, 0.0
        %2265 = vadd.xlane.f32.xlu0 %v2264
        %v2266 = vpop.xlane.xlu0 %2265
        %v2267 = vsel %vm1096, %v2225, 0.0
        %2268 = vadd.xlane.f32.xlu0 %v2267
        %v2269 = vpop.xlane.xlu0 %2268
        %v2270 = vsel %vm1096, %v2226, 0.0
        %2271 = vadd.xlane.f32.xlu0 %v2270
        %v2272 = vpop.xlane.xlu0 %2271
        %v2273 = vsel %vm1096, %v2227, 0.0
        %2274 = vadd.xlane.f32.xlu0 %v2273
        %v2275 = vpop.xlane.xlu0 %2274
        %v2276 = vsel %vm1096, %v2228, 0.0
        %2277 = vadd.xlane.f32.xlu0 %v2276
        %v2278 = vpop.xlane.xlu0 %2277
        %v2279 = vsel %vm1096, %v2229, 0.0
        %2280 = vadd.xlane.f32.xlu0 %v2279
        %v2281 = vpop.xlane.xlu0 %2280
        %v2282 = vsel %vm1096, %v2230, 0.0
        %2283 = vadd.xlane.f32.xlu0 %v2282
        %v2284 = vpop.xlane.xlu0 %2283
        %v2285 = vsel %vm1096, %v2231, 0.0
        %2286 = vadd.xlane.f32.xlu0 %v2285
        %v2287 = vpop.xlane.xlu0 %2286
        %v2288 = vsel %vm1096, %v2232, 0.0
        %2289 = vadd.xlane.f32.xlu0 %v2288
        %v2290 = vpop.xlane.xlu0 %2289
        %v2291 = vsel %vm1096, %v2233, 0.0
        %2292 = vadd.xlane.f32.xlu0 %v2291
        %v2293 = vpop.xlane.xlu0 %2292
        %v2294 = vsel %vm1096, %v2234, 0.0
        %2295 = vadd.xlane.f32.xlu0 %v2294
        %v2296 = vpop.xlane.xlu0 %2295
        %v2297 = vsel %vm1096, %v2235, 0.0
        %2298 = vadd.xlane.f32.xlu0 %v2297
        %v2299 = vpop.xlane.xlu0 %2298
        %v2300 = vsel %vm1096, %v2236, 0.0
        %2301 = vadd.xlane.f32.xlu0 %v2300
        %v2302 = vpop.xlane.xlu0 %2301
        %v2303 = vsel %vm1096, %v2237, 0.0
        %2304 = vadd.xlane.f32.xlu0 %v2303
        %v2305 = vpop.xlane.xlu0 %2304
        %v2306 = vsel %vm1096, %v2238, 0.0
        %2307 = vadd.xlane.f32.xlu0 %v2306
        %v2308 = vpop.xlane.xlu0 %2307
        %v2309 = vsel %vm1096, %v2239, 0.0
        %2310 = vadd.xlane.f32.xlu0 %v2309
        %v2311 = vpop.xlane.xlu0 %2310
        %v2312 = vsel %vm1096, %v2240, 0.0
        %2313 = vadd.xlane.f32.xlu0 %v2312
        %v2314 = vpop.xlane.xlu0 %2313
        %v2315 = vsel %vm1096, %v2241, 0.0
        %2316 = vadd.xlane.f32.xlu0 %v2315
        %v2317 = vpop.xlane.xlu0 %2316
        %v2318 = vsel %vm1096, %v2242, 0.0
        %2319 = vadd.xlane.f32.xlu0 %v2318
        %v2320 = vpop.xlane.xlu0 %2319
        %v2321 = vsel %vm1096, %v2243, 0.0
        %2322 = vadd.xlane.f32.xlu0 %v2321
        %v2323 = vpop.xlane.xlu0 %2322
        %v2324 = vsel %vm1096, %v2244, 0.0
        %2325 = vadd.xlane.f32.xlu0 %v2324
        %v2326 = vpop.xlane.xlu0 %2325
        %v2327 = vsel %vm1096, %v2245, 0.0
        %2328 = vadd.xlane.f32.xlu0 %v2327
        %v2329 = vpop.xlane.xlu0 %2328
        %v2330 = vsel %vm1096, %v2246, 0.0
        %2331 = vadd.xlane.f32.xlu0 %v2330
        %v2332 = vpop.xlane.xlu0 %2331
        %v2333 = vsel %vm1096, %v2247, 0.0
        %2334 = vadd.xlane.f32.xlu0 %v2333
        %v2335 = vpop.xlane.xlu0 %2334
        %v2336 = vsel %vm1096, %v2248, 0.0
        %2337 = vadd.xlane.f32.xlu0 %v2336
        %v2338 = vpop.xlane.xlu0 %2337
        %v2339 = vsel %vm1096, %v2249, 0.0
        %2340 = vadd.xlane.f32.xlu0 %v2339
        %v2341 = vpop.xlane.xlu0 %2340
        %v2342 = vsel %vm1096, %v2250, 0.0
        %2343 = vadd.xlane.f32.xlu0 %v2342
        %v2344 = vpop.xlane.xlu0 %2343
        %v2345 = vsel %vm1096, %v2251, 0.0
        %2346 = vadd.xlane.f32.xlu0 %v2345
        %v2347 = vpop.xlane.xlu0 %2346
        %v2348 = vld [vmem:[#allocation2] sm:$0x1]
        %v2350 = vlaneseq
        %v2351 = vshrl.u32 %v2350, 7
        %v2352 = vsub.s32 0, %v2351
        %v2353 = vrot.slane %v2348, %v2352
        %v2355 = vadd.f32 %v2254, %v2353
        %v2356 = vadd.f32 %v2257, %v2353
        %v2357 = vadd.f32 %v2260, %v2353
        %v2358 = vadd.f32 %v2263, %v2353
        %v2359 = vadd.f32 %v2266, %v2353
        %v2360 = vadd.f32 %v2269, %v2353
        %v2361 = vadd.f32 %v2272, %v2353
        %v2362 = vadd.f32 %v2275, %v2353
        %v2363 = vadd.f32 %v2278, %v2353
        %v2364 = vadd.f32 %v2281, %v2353
        %v2365 = vadd.f32 %v2284, %v2353
        %v2366 = vadd.f32 %v2287, %v2353
        %v2367 = vadd.f32 %v2290, %v2353
        %v2368 = vadd.f32 %v2293, %v2353
        %v2369 = vadd.f32 %v2296, %v2353
        %v2370 = vadd.f32 %v2299, %v2353
        %v2371 = vadd.f32 %v2302, %v2353
        %v2372 = vadd.f32 %v2305, %v2353
        %v2373 = vadd.f32 %v2308, %v2353
        %v2374 = vadd.f32 %v2311, %v2353
        %v2375 = vadd.f32 %v2314, %v2353
        %v2376 = vadd.f32 %v2317, %v2353
        %v2377 = vadd.f32 %v2320, %v2353
        %v2378 = vadd.f32 %v2323, %v2353
        %v2379 = vadd.f32 %v2326, %v2353
        %v2380 = vadd.f32 %v2329, %v2353
        %v2381 = vadd.f32 %v2332, %v2353
        %v2382 = vadd.f32 %v2335, %v2353
        %v2383 = vadd.f32 %v2338, %v2353
        %v2384 = vadd.f32 %v2341, %v2353
        %v2385 = vadd.f32 %v2344, %v2353
        %v2386 = vadd.f32 %v2347, %v2353
        %v2387 = vsub.f32 0.0, %v2355
        %v2388 = vsub.f32 0.0, %v2356
        %v2389 = vsub.f32 0.0, %v2357
        %v2390 = vsub.f32 0.0, %v2358
        %v2391 = vsub.f32 0.0, %v2359
        %v2392 = vsub.f32 0.0, %v2360
        %v2393 = vsub.f32 0.0, %v2361
        %v2394 = vsub.f32 0.0, %v2362
        %v2395 = vsub.f32 0.0, %v2363
        %v2396 = vsub.f32 0.0, %v2364
        %v2397 = vsub.f32 0.0, %v2365
        %v2398 = vsub.f32 0.0, %v2366
        %v2399 = vsub.f32 0.0, %v2367
        %v2400 = vsub.f32 0.0, %v2368
        %v2401 = vsub.f32 0.0, %v2369
        %v2402 = vsub.f32 0.0, %v2370
        %v2403 = vsub.f32 0.0, %v2371
        %v2404 = vsub.f32 0.0, %v2372
        %v2405 = vsub.f32 0.0, %v2373
        %v2406 = vsub.f32 0.0, %v2374
        %v2407 = vsub.f32 0.0, %v2375
        %v2408 = vsub.f32 0.0, %v2376
        %v2409 = vsub.f32 0.0, %v2377
        %v2410 = vsub.f32 0.0, %v2378
        %v2411 = vsub.f32 0.0, %v2379
        %v2412 = vsub.f32 0.0, %v2380
        %v2413 = vsub.f32 0.0, %v2381
        %v2414 = vsub.f32 0.0, %v2382
        %v2415 = vsub.f32 0.0, %v2383
        %v2416 = vsub.f32 0.0, %v2384
        %v2417 = vsub.f32 0.0, %v2385
        %v2418 = vsub.f32 0.0, %v2386
        %v2419 = vmul.f32 %v2387, 1.442695
        %v2420 = vpow.pop %v2419
        %v2421 = vmul.f32 %v2388, 1.442695
        %v2422 = vpow.pop %v2421
        %v2423 = vmul.f32 %v2389, 1.442695
        %v2424 = vpow.pop %v2423
        %v2425 = vmul.f32 %v2390, 1.442695
        %v2426 = vpow.pop %v2425
        %v2427 = vmul.f32 %v2391, 1.442695
        %v2428 = vpow.pop %v2427
        %v2429 = vmul.f32 %v2392, 1.442695
        %v2430 = vpow.pop %v2429
        %v2431 = vmul.f32 %v2393, 1.442695
        %v2432 = vpow.pop %v2431
        %v2433 = vmul.f32 %v2394, 1.442695
        %v2434 = vpow.pop %v2433
        %v2435 = vmul.f32 %v2395, 1.442695
        %v2436 = vpow.pop %v2435
        %v2437 = vmul.f32 %v2396, 1.442695
        %v2438 = vpow.pop %v2437
        %v2439 = vmul.f32 %v2397, 1.442695
        %v2440 = vpow.pop %v2439
        %v2441 = vmul.f32 %v2398, 1.442695
        %v2442 = vpow.pop %v2441
        %v2443 = vmul.f32 %v2399, 1.442695
        %v2444 = vpow.pop %v2443
        %v2445 = vmul.f32 %v2400, 1.442695
        %v2446 = vpow.pop %v2445
        %v2447 = vmul.f32 %v2401, 1.442695
        %v2448 = vpow.pop %v2447
        %v2449 = vmul.f32 %v2402, 1.442695
        %v2450 = vpow.pop %v2449
        %v2451 = vmul.f32 %v2403, 1.442695
        %v2452 = vpow.pop %v2451
        %v2453 = vmul.f32 %v2404, 1.442695
        %v2454 = vpow.pop %v2453
        %v2455 = vmul.f32 %v2405, 1.442695
        %v2456 = vpow.pop %v2455
        %v2457 = vmul.f32 %v2406, 1.442695
        %v2458 = vpow.pop %v2457
        %v2459 = vmul.f32 %v2407, 1.442695
        %v2460 = vpow.pop %v2459
        %v2461 = vmul.f32 %v2408, 1.442695
        %v2462 = vpow.pop %v2461
        %v2463 = vmul.f32 %v2409, 1.442695
        %v2464 = vpow.pop %v2463
        %v2465 = vmul.f32 %v2410, 1.442695
        %v2466 = vpow.pop %v2465
        %v2467 = vmul.f32 %v2411, 1.442695
        %v2468 = vpow.pop %v2467
        %v2469 = vmul.f32 %v2412, 1.442695
        %v2470 = vpow.pop %v2469
        %v2471 = vmul.f32 %v2413, 1.442695
        %v2472 = vpow.pop %v2471
        %v2473 = vmul.f32 %v2414, 1.442695
        %v2474 = vpow.pop %v2473
        %v2475 = vmul.f32 %v2415, 1.442695
        %v2476 = vpow.pop %v2475
        %v2477 = vmul.f32 %v2416, 1.442695
        %v2478 = vpow.pop %v2477
        %v2479 = vmul.f32 %v2417, 1.442695
        %v2480 = vpow.pop %v2479
        %v2481 = vmul.f32 %v2418, 1.442695
        %v2482 = vpow.pop %v2481
        %v2483 = vadd.f32 %v2420, 1.0
        %v2484 = vadd.f32 %v2422, 1.0
        %v2485 = vadd.f32 %v2424, 1.0
        %v2486 = vadd.f32 %v2426, 1.0
        %v2487 = vadd.f32 %v2428, 1.0
        %v2488 = vadd.f32 %v2430, 1.0
        %v2489 = vadd.f32 %v2432, 1.0
        %v2490 = vadd.f32 %v2434, 1.0
        %v2491 = vadd.f32 %v2436, 1.0
        %v2492 = vadd.f32 %v2438, 1.0
        %v2493 = vadd.f32 %v2440, 1.0
        %v2494 = vadd.f32 %v2442, 1.0
        %v2495 = vadd.f32 %v2444, 1.0
        %v2496 = vadd.f32 %v2446, 1.0
        %v2497 = vadd.f32 %v2448, 1.0
        %v2498 = vadd.f32 %v2450, 1.0
        %v2499 = vadd.f32 %v2452, 1.0
        %v2500 = vadd.f32 %v2454, 1.0
        %v2501 = vadd.f32 %v2456, 1.0
        %v2502 = vadd.f32 %v2458, 1.0
        %v2503 = vadd.f32 %v2460, 1.0
        %v2504 = vadd.f32 %v2462, 1.0
        %v2505 = vadd.f32 %v2464, 1.0
        %v2506 = vadd.f32 %v2466, 1.0
        %v2507 = vadd.f32 %v2468, 1.0
        %v2508 = vadd.f32 %v2470, 1.0
        %v2509 = vadd.f32 %v2472, 1.0
        %v2510 = vadd.f32 %v2474, 1.0
        %v2511 = vadd.f32 %v2476, 1.0
        %v2512 = vadd.f32 %v2478, 1.0
        %v2513 = vadd.f32 %v2480, 1.0
        %v2514 = vadd.f32 %v2482, 1.0
        %v2515 = vrcp.pop %v2483
        %v2516 = vmul.f32 1.0, %v2515
        %v2517 = vrcp.pop %v2484
        %v2518 = vmul.f32 1.0, %v2517
        %v2519 = vrcp.pop %v2485
        %v2520 = vmul.f32 1.0, %v2519
        %v2521 = vrcp.pop %v2486
        %v2522 = vmul.f32 1.0, %v2521
        %v2523 = vrcp.pop %v2487
        %v2524 = vmul.f32 1.0, %v2523
        %v2525 = vrcp.pop %v2488
        %v2526 = vmul.f32 1.0, %v2525
        %v2527 = vrcp.pop %v2489
        %v2528 = vmul.f32 1.0, %v2527
        %v2529 = vrcp.pop %v2490
        %v2530 = vmul.f32 1.0, %v2529
        %v2531 = vrcp.pop %v2491
        %v2532 = vmul.f32 1.0, %v2531
        %v2533 = vrcp.pop %v2492
        %v2534 = vmul.f32 1.0, %v2533
        %v2535 = vrcp.pop %v2493
        %v2536 = vmul.f32 1.0, %v2535
        %v2537 = vrcp.pop %v2494
        %v2538 = vmul.f32 1.0, %v2537
        %v2539 = vrcp.pop %v2495
        %v2540 = vmul.f32 1.0, %v2539
        %v2541 = vrcp.pop %v2496
        %v2542 = vmul.f32 1.0, %v2541
        %v2543 = vrcp.pop %v2497
        %v2544 = vmul.f32 1.0, %v2543
        %v2545 = vrcp.pop %v2498
        %v2546 = vmul.f32 1.0, %v2545
        %v2547 = vrcp.pop %v2499
        %v2548 = vmul.f32 1.0, %v2547
        %v2549 = vrcp.pop %v2500
        %v2550 = vmul.f32 1.0, %v2549
        %v2551 = vrcp.pop %v2501
        %v2552 = vmul.f32 1.0, %v2551
        %v2553 = vrcp.pop %v2502
        %v2554 = vmul.f32 1.0, %v2553
        %v2555 = vrcp.pop %v2503
        %v2556 = vmul.f32 1.0, %v2555
        %v2557 = vrcp.pop %v2504
        %v2558 = vmul.f32 1.0, %v2557
        %v2559 = vrcp.pop %v2505
        %v2560 = vmul.f32 1.0, %v2559
        %v2561 = vrcp.pop %v2506
        %v2562 = vmul.f32 1.0, %v2561
        %v2563 = vrcp.pop %v2507
        %v2564 = vmul.f32 1.0, %v2563
        %v2565 = vrcp.pop %v2508
        %v2566 = vmul.f32 1.0, %v2565
        %v2567 = vrcp.pop %v2509
        %v2568 = vmul.f32 1.0, %v2567
        %v2569 = vrcp.pop %v2510
        %v2570 = vmul.f32 1.0, %v2569
        %v2571 = vrcp.pop %v2511
        %v2572 = vmul.f32 1.0, %v2571
        %v2573 = vrcp.pop %v2512
        %v2574 = vmul.f32 1.0, %v2573
        %v2575 = vrcp.pop %v2513
        %v2576 = vmul.f32 1.0, %v2575
        %v2577 = vrcp.pop %v2514
        %v2578 = vmul.f32 1.0, %v2577
        %v2579 = vsub.f32 1.0, %v2516
        %v2580 = vsub.f32 1.0, %v2518
        %v2581 = vsub.f32 1.0, %v2520
        %v2582 = vsub.f32 1.0, %v2522
        %v2583 = vsub.f32 1.0, %v2524
        %v2584 = vsub.f32 1.0, %v2526
        %v2585 = vsub.f32 1.0, %v2528
        %v2586 = vsub.f32 1.0, %v2530
        %v2587 = vsub.f32 1.0, %v2532
        %v2588 = vsub.f32 1.0, %v2534
        %v2589 = vsub.f32 1.0, %v2536
        %v2590 = vsub.f32 1.0, %v2538
        %v2591 = vsub.f32 1.0, %v2540
        %v2592 = vsub.f32 1.0, %v2542
        %v2593 = vsub.f32 1.0, %v2544
        %v2594 = vsub.f32 1.0, %v2546
        %v2595 = vsub.f32 1.0, %v2548
        %v2596 = vsub.f32 1.0, %v2550
        %v2597 = vsub.f32 1.0, %v2552
        %v2598 = vsub.f32 1.0, %v2554
        %v2599 = vsub.f32 1.0, %v2556
        %v2600 = vsub.f32 1.0, %v2558
        %v2601 = vsub.f32 1.0, %v2560
        %v2602 = vsub.f32 1.0, %v2562
        %v2603 = vsub.f32 1.0, %v2564
        %v2604 = vsub.f32 1.0, %v2566
        %v2605 = vsub.f32 1.0, %v2568
        %v2606 = vsub.f32 1.0, %v2570
        %v2607 = vsub.f32 1.0, %v2572
        %v2608 = vsub.f32 1.0, %v2574
        %v2609 = vsub.f32 1.0, %v2576
        %v2610 = vsub.f32 1.0, %v2578
        %v2611 = vmul.f32 %v2516, 2.0
        %v2612 = vmul.f32 %v2518, 2.0
        %v2613 = vmul.f32 %v2520, 2.0
        %v2614 = vmul.f32 %v2522, 2.0
        %v2615 = vmul.f32 %v2524, 2.0
        %v2616 = vmul.f32 %v2526, 2.0
        %v2617 = vmul.f32 %v2528, 2.0
        %v2618 = vmul.f32 %v2530, 2.0
        %v2619 = vmul.f32 %v2532, 2.0
        %v2620 = vmul.f32 %v2534, 2.0
        %v2621 = vmul.f32 %v2536, 2.0
        %v2622 = vmul.f32 %v2538, 2.0
        %v2623 = vmul.f32 %v2540, 2.0
        %v2624 = vmul.f32 %v2542, 2.0
        %v2625 = vmul.f32 %v2544, 2.0
        %v2626 = vmul.f32 %v2546, 2.0
        %v2627 = vmul.f32 %v2548, 2.0
        %v2628 = vmul.f32 %v2550, 2.0
        %v2629 = vmul.f32 %v2552, 2.0
        %v2630 = vmul.f32 %v2554, 2.0
        %v2631 = vmul.f32 %v2556, 2.0
        %v2632 = vmul.f32 %v2558, 2.0
        %v2633 = vmul.f32 %v2560, 2.0
        %v2634 = vmul.f32 %v2562, 2.0
        %v2635 = vmul.f32 %v2564, 2.0
        %v2636 = vmul.f32 %v2566, 2.0
        %v2637 = vmul.f32 %v2568, 2.0
        %v2638 = vmul.f32 %v2570, 2.0
        %v2639 = vmul.f32 %v2572, 2.0
        %v2640 = vmul.f32 %v2574, 2.0
        %v2641 = vmul.f32 %v2576, 2.0
        %v2642 = vmul.f32 %v2578, 2.0
        %v2643 = vsub.f32 %v2611, 1.0
        %v2644 = vsub.f32 %v2612, 1.0
        %v2645 = vsub.f32 %v2613, 1.0
        %v2646 = vsub.f32 %v2614, 1.0
        %v2647 = vsub.f32 %v2615, 1.0
        %v2648 = vsub.f32 %v2616, 1.0
        %v2649 = vsub.f32 %v2617, 1.0
        %v2650 = vsub.f32 %v2618, 1.0
        %v2651 = vsub.f32 %v2619, 1.0
        %v2652 = vsub.f32 %v2620, 1.0
        %v2653 = vsub.f32 %v2621, 1.0
        %v2654 = vsub.f32 %v2622, 1.0
        %v2655 = vsub.f32 %v2623, 1.0
        %v2656 = vsub.f32 %v2624, 1.0
        %v2657 = vsub.f32 %v2625, 1.0
        %v2658 = vsub.f32 %v2626, 1.0
        %v2659 = vsub.f32 %v2627, 1.0
        %v2660 = vsub.f32 %v2628, 1.0
        %v2661 = vsub.f32 %v2629, 1.0
        %v2662 = vsub.f32 %v2630, 1.0
        %v2663 = vsub.f32 %v2631, 1.0
        %v2664 = vsub.f32 %v2632, 1.0
        %v2665 = vsub.f32 %v2633, 1.0
        %v2666 = vsub.f32 %v2634, 1.0
        %v2667 = vsub.f32 %v2635, 1.0
        %v2668 = vsub.f32 %v2636, 1.0
        %v2669 = vsub.f32 %v2637, 1.0
        %v2670 = vsub.f32 %v2638, 1.0
        %v2671 = vsub.f32 %v2639, 1.0
        %v2672 = vsub.f32 %v2640, 1.0
        %v2673 = vsub.f32 %v2641, 1.0
        %v2674 = vsub.f32 %v2642, 1.0
        %v2675 = vadd.f32 %v2643, %v679
        %v2676 = vadd.f32 %v2644, %v680
        %v2677 = vadd.f32 %v2645, %v681
        %v2678 = vadd.f32 %v2646, %v682
        %v2679 = vadd.f32 %v2647, %v683
        %v2680 = vadd.f32 %v2648, %v684
        %v2681 = vadd.f32 %v2649, %v685
        %v2682 = vadd.f32 %v2650, %v686
        %v2683 = vadd.f32 %v2651, %v687
        %v2684 = vadd.f32 %v2652, %v688
        %v2685 = vadd.f32 %v2653, %v689
        %v2686 = vadd.f32 %v2654, %v690
        %v2687 = vadd.f32 %v2655, %v691
        %v2688 = vadd.f32 %v2656, %v692
        %v2689 = vadd.f32 %v2657, %v693
        %v2690 = vadd.f32 %v2658, %v694
        %v2691 = vadd.f32 %v2659, %v695
        %v2692 = vadd.f32 %v2660, %v696
        %v2693 = vadd.f32 %v2661, %v697
        %v2694 = vadd.f32 %v2662, %v698
        %v2695 = vadd.f32 %v2663, %v699
        %v2696 = vadd.f32 %v2664, %v700
        %v2697 = vadd.f32 %v2665, %v701
        %v2698 = vadd.f32 %v2666, %v702
        %v2699 = vadd.f32 %v2667, %v703
        %v2700 = vadd.f32 %v2668, %v704
        %v2701 = vadd.f32 %v2669, %v705
        %v2702 = vadd.f32 %v2670, %v706
        %v2703 = vadd.f32 %v2671, %v707
        %v2704 = vadd.f32 %v2672, %v708
        %v2705 = vadd.f32 %v2673, %v709
        %v2706 = vadd.f32 %v2674, %v710
        %v2707 = vsub.f32 0.0, %v2675
        %v2708 = vsub.f32 0.0, %v2676
        %v2709 = vsub.f32 0.0, %v2677
        %v2710 = vsub.f32 0.0, %v2678
        %v2711 = vsub.f32 0.0, %v2679
        %v2712 = vsub.f32 0.0, %v2680
        %v2713 = vsub.f32 0.0, %v2681
        %v2714 = vsub.f32 0.0, %v2682
        %v2715 = vsub.f32 0.0, %v2683
        %v2716 = vsub.f32 0.0, %v2684
        %v2717 = vsub.f32 0.0, %v2685
        %v2718 = vsub.f32 0.0, %v2686
        %v2719 = vsub.f32 0.0, %v2687
        %v2720 = vsub.f32 0.0, %v2688
        %v2721 = vsub.f32 0.0, %v2689
        %v2722 = vsub.f32 0.0, %v2690
        %v2723 = vsub.f32 0.0, %v2691
        %v2724 = vsub.f32 0.0, %v2692
        %v2725 = vsub.f32 0.0, %v2693
        %v2726 = vsub.f32 0.0, %v2694
        %v2727 = vsub.f32 0.0, %v2695
        %v2728 = vsub.f32 0.0, %v2696
        %v2729 = vsub.f32 0.0, %v2697
        %v2730 = vsub.f32 0.0, %v2698
        %v2731 = vsub.f32 0.0, %v2699
        %v2732 = vsub.f32 0.0, %v2700
        %v2733 = vsub.f32 0.0, %v2701
        %v2734 = vsub.f32 0.0, %v2702
        %v2735 = vsub.f32 0.0, %v2703
        %v2736 = vsub.f32 0.0, %v2704
        %v2737 = vsub.f32 0.0, %v2705
        %v2738 = vsub.f32 0.0, %v2706
        %v2739 = vmul.f32 %v2707, 1.442695
        %v2740 = vpow.pop %v2739
        %v2741 = vmul.f32 %v2708, 1.442695
        %v2742 = vpow.pop %v2741
        %v2743 = vmul.f32 %v2709, 1.442695
        %v2744 = vpow.pop %v2743
        %v2745 = vmul.f32 %v2710, 1.442695
        %v2746 = vpow.pop %v2745
        %v2747 = vmul.f32 %v2711, 1.442695
        %v2748 = vpow.pop %v2747
        %v2749 = vmul.f32 %v2712, 1.442695
        %v2750 = vpow.pop %v2749
        %v2751 = vmul.f32 %v2713, 1.442695
        %v2752 = vpow.pop %v2751
        %v2753 = vmul.f32 %v2714, 1.442695
        %v2754 = vpow.pop %v2753
        %v2755 = vmul.f32 %v2715, 1.442695
        %v2756 = vpow.pop %v2755
        %v2757 = vmul.f32 %v2716, 1.442695
        %v2758 = vpow.pop %v2757
        %v2759 = vmul.f32 %v2717, 1.442695
        %v2760 = vpow.pop %v2759
        %v2761 = vmul.f32 %v2718, 1.442695
        %v2762 = vpow.pop %v2761
        %v2763 = vmul.f32 %v2719, 1.442695
        %v2764 = vpow.pop %v2763
        %v2765 = vmul.f32 %v2720, 1.442695
        %v2766 = vpow.pop %v2765
        %v2767 = vmul.f32 %v2721, 1.442695
        %v2768 = vpow.pop %v2767
        %v2769 = vmul.f32 %v2722, 1.442695
        %v2770 = vpow.pop %v2769
        %v2771 = vmul.f32 %v2723, 1.442695
        %v2772 = vpow.pop %v2771
        %v2773 = vmul.f32 %v2724, 1.442695
        %v2774 = vpow.pop %v2773
        %v2775 = vmul.f32 %v2725, 1.442695
        %v2776 = vpow.pop %v2775
        %v2777 = vmul.f32 %v2726, 1.442695
        %v2778 = vpow.pop %v2777
        %v2779 = vmul.f32 %v2727, 1.442695
        %v2780 = vpow.pop %v2779
        %v2781 = vmul.f32 %v2728, 1.442695
        %v2782 = vpow.pop %v2781
        %v2783 = vmul.f32 %v2729, 1.442695
        %v2784 = vpow.pop %v2783
        %v2785 = vmul.f32 %v2730, 1.442695
        %v2786 = vpow.pop %v2785
        %v2787 = vmul.f32 %v2731, 1.442695
        %v2788 = vpow.pop %v2787
        %v2789 = vmul.f32 %v2732, 1.442695
        %v2790 = vpow.pop %v2789
        %v2791 = vmul.f32 %v2733, 1.442695
        %v2792 = vpow.pop %v2791
        %v2793 = vmul.f32 %v2734, 1.442695
        %v2794 = vpow.pop %v2793
        %v2795 = vmul.f32 %v2735, 1.442695
        %v2796 = vpow.pop %v2795
        %v2797 = vmul.f32 %v2736, 1.442695
        %v2798 = vpow.pop %v2797
        %v2799 = vmul.f32 %v2737, 1.442695
        %v2800 = vpow.pop %v2799
        %v2801 = vmul.f32 %v2738, 1.442695
        %v2802 = vpow.pop %v2801
        %v2803 = vadd.f32 %v2740, 1.0
        %v2804 = vadd.f32 %v2742, 1.0
        %v2805 = vadd.f32 %v2744, 1.0
        %v2806 = vadd.f32 %v2746, 1.0
        %v2807 = vadd.f32 %v2748, 1.0
        %v2808 = vadd.f32 %v2750, 1.0
        %v2809 = vadd.f32 %v2752, 1.0
        %v2810 = vadd.f32 %v2754, 1.0
        %v2811 = vadd.f32 %v2756, 1.0
        %v2812 = vadd.f32 %v2758, 1.0
        %v2813 = vadd.f32 %v2760, 1.0
        %v2814 = vadd.f32 %v2762, 1.0
        %v2815 = vadd.f32 %v2764, 1.0
        %v2816 = vadd.f32 %v2766, 1.0
        %v2817 = vadd.f32 %v2768, 1.0
        %v2818 = vadd.f32 %v2770, 1.0
        %v2819 = vadd.f32 %v2772, 1.0
        %v2820 = vadd.f32 %v2774, 1.0
        %v2821 = vadd.f32 %v2776, 1.0
        %v2822 = vadd.f32 %v2778, 1.0
        %v2823 = vadd.f32 %v2780, 1.0
        %v2824 = vadd.f32 %v2782, 1.0
        %v2825 = vadd.f32 %v2784, 1.0
        %v2826 = vadd.f32 %v2786, 1.0
        %v2827 = vadd.f32 %v2788, 1.0
        %v2828 = vadd.f32 %v2790, 1.0
        %v2829 = vadd.f32 %v2792, 1.0
        %v2830 = vadd.f32 %v2794, 1.0
        %v2831 = vadd.f32 %v2796, 1.0
        %v2832 = vadd.f32 %v2798, 1.0
        %v2833 = vadd.f32 %v2800, 1.0
        %v2834 = vadd.f32 %v2802, 1.0
        %v2835 = vrcp.pop %v2803
        %v2836 = vmul.f32 1.0, %v2835
        %v2837 = vrcp.pop %v2804
        %v2838 = vmul.f32 1.0, %v2837
        %v2839 = vrcp.pop %v2805
        %v2840 = vmul.f32 1.0, %v2839
        %v2841 = vrcp.pop %v2806
        %v2842 = vmul.f32 1.0, %v2841
        %v2843 = vrcp.pop %v2807
        %v2844 = vmul.f32 1.0, %v2843
        %v2845 = vrcp.pop %v2808
        %v2846 = vmul.f32 1.0, %v2845
        %v2847 = vrcp.pop %v2809
        %v2848 = vmul.f32 1.0, %v2847
        %v2849 = vrcp.pop %v2810
        %v2850 = vmul.f32 1.0, %v2849
        %v2851 = vrcp.pop %v2811
        %v2852 = vmul.f32 1.0, %v2851
        %v2853 = vrcp.pop %v2812
        %v2854 = vmul.f32 1.0, %v2853
        %v2855 = vrcp.pop %v2813
        %v2856 = vmul.f32 1.0, %v2855
        %v2857 = vrcp.pop %v2814
        %v2858 = vmul.f32 1.0, %v2857
        %v2859 = vrcp.pop %v2815
        %v2860 = vmul.f32 1.0, %v2859
        %v2861 = vrcp.pop %v2816
        %v2862 = vmul.f32 1.0, %v2861
        %v2863 = vrcp.pop %v2817
        %v2864 = vmul.f32 1.0, %v2863
        %v2865 = vrcp.pop %v2818
        %v2866 = vmul.f32 1.0, %v2865
        %v2867 = vrcp.pop %v2819
        %v2868 = vmul.f32 1.0, %v2867
        %v2869 = vrcp.pop %v2820
        %v2870 = vmul.f32 1.0, %v2869
        %v2871 = vrcp.pop %v2821
        %v2872 = vmul.f32 1.0, %v2871
        %v2873 = vrcp.pop %v2822
        %v2874 = vmul.f32 1.0, %v2873
        %v2875 = vrcp.pop %v2823
        %v2876 = vmul.f32 1.0, %v2875
        %v2877 = vrcp.pop %v2824
        %v2878 = vmul.f32 1.0, %v2877
        %v2879 = vrcp.pop %v2825
        %v2880 = vmul.f32 1.0, %v2879
        %v2881 = vrcp.pop %v2826
        %v2882 = vmul.f32 1.0, %v2881
        %v2883 = vrcp.pop %v2827
        %v2884 = vmul.f32 1.0, %v2883
        %v2885 = vrcp.pop %v2828
        %v2886 = vmul.f32 1.0, %v2885
        %v2887 = vrcp.pop %v2829
        %v2888 = vmul.f32 1.0, %v2887
        %v2889 = vrcp.pop %v2830
        %v2890 = vmul.f32 1.0, %v2889
        %v2891 = vrcp.pop %v2831
        %v2892 = vmul.f32 1.0, %v2891
        %v2893 = vrcp.pop %v2832
        %v2894 = vmul.f32 1.0, %v2893
        %v2895 = vrcp.pop %v2833
        %v2896 = vmul.f32 1.0, %v2895
        %v2897 = vrcp.pop %v2834
        %v2898 = vmul.f32 1.0, %v2897
        %v2899 = vsub.f32 1.0, %v2836
        %v2900 = vsub.f32 1.0, %v2838
        %v2901 = vsub.f32 1.0, %v2840
        %v2902 = vsub.f32 1.0, %v2842
        %v2903 = vsub.f32 1.0, %v2844
        %v2904 = vsub.f32 1.0, %v2846
        %v2905 = vsub.f32 1.0, %v2848
        %v2906 = vsub.f32 1.0, %v2850
        %v2907 = vsub.f32 1.0, %v2852
        %v2908 = vsub.f32 1.0, %v2854
        %v2909 = vsub.f32 1.0, %v2856
        %v2910 = vsub.f32 1.0, %v2858
        %v2911 = vsub.f32 1.0, %v2860
        %v2912 = vsub.f32 1.0, %v2862
        %v2913 = vsub.f32 1.0, %v2864
        %v2914 = vsub.f32 1.0, %v2866
        %v2915 = vsub.f32 1.0, %v2868
        %v2916 = vsub.f32 1.0, %v2870
        %v2917 = vsub.f32 1.0, %v2872
        %v2918 = vsub.f32 1.0, %v2874
        %v2919 = vsub.f32 1.0, %v2876
        %v2920 = vsub.f32 1.0, %v2878
        %v2921 = vsub.f32 1.0, %v2880
        %v2922 = vsub.f32 1.0, %v2882
        %v2923 = vsub.f32 1.0, %v2884
        %v2924 = vsub.f32 1.0, %v2886
        %v2925 = vsub.f32 1.0, %v2888
        %v2926 = vsub.f32 1.0, %v2890
        %v2927 = vsub.f32 1.0, %v2892
        %v2928 = vsub.f32 1.0, %v2894
        %v2929 = vsub.f32 1.0, %v2896
        %v2930 = vsub.f32 1.0, %v2898
        %2932 = vset.pattern.permute.xlu0 0
        %2933 = vperm.xlu0 %2932, %v2836
        %v2934 = vpop.permute.xlu0 %2933
        %2937 = vset.pattern.permute.xlu0 0
        %2938 = vperm.xlu0 %2937, %v2838
        %v2939 = vpop.permute.xlu0 %2938
        %2942 = vset.pattern.permute.xlu0 0
        %2943 = vperm.xlu0 %2942, %v2840
        %v2944 = vpop.permute.xlu0 %2943
        %2947 = vset.pattern.permute.xlu0 0
        %2948 = vperm.xlu0 %2947, %v2842
        %v2949 = vpop.permute.xlu0 %2948
        %2952 = vset.pattern.permute.xlu0 0
        %2953 = vperm.xlu0 %2952, %v2844
        %v2954 = vpop.permute.xlu0 %2953
        %2957 = vset.pattern.permute.xlu0 0
        %2958 = vperm.xlu0 %2957, %v2846
        %v2959 = vpop.permute.xlu0 %2958
        %2962 = vset.pattern.permute.xlu0 0
        %2963 = vperm.xlu0 %2962, %v2848
        %v2964 = vpop.permute.xlu0 %2963
        %2967 = vset.pattern.permute.xlu0 0
        %2968 = vperm.xlu0 %2967, %v2850
        %v2969 = vpop.permute.xlu0 %2968
        %2972 = vset.pattern.permute.xlu0 0
        %2973 = vperm.xlu0 %2972, %v2852
        %v2974 = vpop.permute.xlu0 %2973
        %2977 = vset.pattern.permute.xlu0 0
        %2978 = vperm.xlu0 %2977, %v2854
        %v2979 = vpop.permute.xlu0 %2978
        %2982 = vset.pattern.permute.xlu0 0
        %2983 = vperm.xlu0 %2982, %v2856
        %v2984 = vpop.permute.xlu0 %2983
        %2987 = vset.pattern.permute.xlu0 0
        %2988 = vperm.xlu0 %2987, %v2858
        %v2989 = vpop.permute.xlu0 %2988
        %2992 = vset.pattern.permute.xlu0 0
        %2993 = vperm.xlu0 %2992, %v2860
        %v2994 = vpop.permute.xlu0 %2993
        %2997 = vset.pattern.permute.xlu0 0
        %2998 = vperm.xlu0 %2997, %v2862
        %v2999 = vpop.permute.xlu0 %2998
        %3002 = vset.pattern.permute.xlu0 0
        %3003 = vperm.xlu0 %3002, %v2864
        %v3004 = vpop.permute.xlu0 %3003
        %3007 = vset.pattern.permute.xlu0 0
        %3008 = vperm.xlu0 %3007, %v2866
        %v3009 = vpop.permute.xlu0 %3008
        %3012 = vset.pattern.permute.xlu0 0
        %3013 = vperm.xlu0 %3012, %v2868
        %v3014 = vpop.permute.xlu0 %3013
        %3017 = vset.pattern.permute.xlu0 0
        %3018 = vperm.xlu0 %3017, %v2870
        %v3019 = vpop.permute.xlu0 %3018
        %3022 = vset.pattern.permute.xlu0 0
        %3023 = vperm.xlu0 %3022, %v2872
        %v3024 = vpop.permute.xlu0 %3023
        %3027 = vset.pattern.permute.xlu0 0
        %3028 = vperm.xlu0 %3027, %v2874
        %v3029 = vpop.permute.xlu0 %3028
        %3032 = vset.pattern.permute.xlu0 0
        %3033 = vperm.xlu0 %3032, %v2876
        %v3034 = vpop.permute.xlu0 %3033
        %3037 = vset.pattern.permute.xlu0 0
        %3038 = vperm.xlu0 %3037, %v2878
        %v3039 = vpop.permute.xlu0 %3038
        %3042 = vset.pattern.permute.xlu0 0
        %3043 = vperm.xlu0 %3042, %v2880
        %v3044 = vpop.permute.xlu0 %3043
        %3047 = vset.pattern.permute.xlu0 0
        %3048 = vperm.xlu0 %3047, %v2882
        %v3049 = vpop.permute.xlu0 %3048
        %3052 = vset.pattern.permute.xlu0 0
        %3053 = vperm.xlu0 %3052, %v2884
        %v3054 = vpop.permute.xlu0 %3053
        %3057 = vset.pattern.permute.xlu0 0
        %3058 = vperm.xlu0 %3057, %v2886
        %v3059 = vpop.permute.xlu0 %3058
        %3062 = vset.pattern.permute.xlu0 0
        %3063 = vperm.xlu0 %3062, %v2888
        %v3064 = vpop.permute.xlu0 %3063
        %3067 = vset.pattern.permute.xlu0 0
        %3068 = vperm.xlu0 %3067, %v2890
        %v3069 = vpop.permute.xlu0 %3068
        %3072 = vset.pattern.permute.xlu0 0
        %3073 = vperm.xlu0 %3072, %v2892
        %v3074 = vpop.permute.xlu0 %3073
        %3077 = vset.pattern.permute.xlu0 0
        %3078 = vperm.xlu0 %3077, %v2894
        %v3079 = vpop.permute.xlu0 %3078
        %3082 = vset.pattern.permute.xlu0 0
        %3083 = vperm.xlu0 %3082, %v2896
        %v3084 = vpop.permute.xlu0 %3083
        %3087 = vset.pattern.permute.xlu0 0
        %3088 = vperm.xlu0 %3087, %v2898
        %v3089 = vpop.permute.xlu0 %3088
        %v3091 = vmul.f32 %v2934, %v551
        %v3092 = vmul.f32 %v2939, %v552
        %v3093 = vmul.f32 %v2944, %v553
        %v3094 = vmul.f32 %v2949, %v554
        %v3095 = vmul.f32 %v2954, %v555
        %v3096 = vmul.f32 %v2959, %v556
        %v3097 = vmul.f32 %v2964, %v557
        %v3098 = vmul.f32 %v2969, %v558
        %v3099 = vmul.f32 %v2974, %v559
        %v3100 = vmul.f32 %v2979, %v560
        %v3101 = vmul.f32 %v2984, %v561
        %v3102 = vmul.f32 %v2989, %v562
        %v3103 = vmul.f32 %v2994, %v563
        %v3104 = vmul.f32 %v2999, %v564
        %v3105 = vmul.f32 %v3004, %v565
        %v3106 = vmul.f32 %v3009, %v566
        %v3107 = vmul.f32 %v3014, %v567
        %v3108 = vmul.f32 %v3019, %v568
        %v3109 = vmul.f32 %v3024, %v569
        %v3110 = vmul.f32 %v3029, %v570
        %v3111 = vmul.f32 %v3034, %v571
        %v3112 = vmul.f32 %v3039, %v572
        %v3113 = vmul.f32 %v3044, %v573
        %v3114 = vmul.f32 %v3049, %v574
        %v3115 = vmul.f32 %v3054, %v575
        %v3116 = vmul.f32 %v3059, %v576
        %v3117 = vmul.f32 %v3064, %v577
        %v3118 = vmul.f32 %v3069, %v578
        %v3119 = vmul.f32 %v3074, %v579
        %v3120 = vmul.f32 %v3079, %v580
        %v3121 = vmul.f32 %v3084, %v581
        %v3122 = vmul.f32 %v3089, %v582
        %3124 = vset.pattern.permute.xlu0 0
        %3125 = vperm.xlu0 %3124, %v2899
        %v3126 = vpop.permute.xlu0 %3125
        %3129 = vset.pattern.permute.xlu0 0
        %3130 = vperm.xlu0 %3129, %v2900
        %v3131 = vpop.permute.xlu0 %3130
        %3134 = vset.pattern.permute.xlu0 0
        %3135 = vperm.xlu0 %3134, %v2901
        %v3136 = vpop.permute.xlu0 %3135
        %3139 = vset.pattern.permute.xlu0 0
        %3140 = vperm.xlu0 %3139, %v2902
        %v3141 = vpop.permute.xlu0 %3140
        %3144 = vset.pattern.permute.xlu0 0
        %3145 = vperm.xlu0 %3144, %v2903
        %v3146 = vpop.permute.xlu0 %3145
        %3149 = vset.pattern.permute.xlu0 0
        %3150 = vperm.xlu0 %3149, %v2904
        %v3151 = vpop.permute.xlu0 %3150
        %3154 = vset.pattern.permute.xlu0 0
        %3155 = vperm.xlu0 %3154, %v2905
        %v3156 = vpop.permute.xlu0 %3155
        %3159 = vset.pattern.permute.xlu0 0
        %3160 = vperm.xlu0 %3159, %v2906
        %v3161 = vpop.permute.xlu0 %3160
        %3164 = vset.pattern.permute.xlu0 0
        %3165 = vperm.xlu0 %3164, %v2907
        %v3166 = vpop.permute.xlu0 %3165
        %3169 = vset.pattern.permute.xlu0 0
        %3170 = vperm.xlu0 %3169, %v2908
        %v3171 = vpop.permute.xlu0 %3170
        %3174 = vset.pattern.permute.xlu0 0
        %3175 = vperm.xlu0 %3174, %v2909
        %v3176 = vpop.permute.xlu0 %3175
        %3179 = vset.pattern.permute.xlu0 0
        %3180 = vperm.xlu0 %3179, %v2910
        %v3181 = vpop.permute.xlu0 %3180
        %3184 = vset.pattern.permute.xlu0 0
        %3185 = vperm.xlu0 %3184, %v2911
        %v3186 = vpop.permute.xlu0 %3185
        %3189 = vset.pattern.permute.xlu0 0
        %3190 = vperm.xlu0 %3189, %v2912
        %v3191 = vpop.permute.xlu0 %3190
        %3194 = vset.pattern.permute.xlu0 0
        %3195 = vperm.xlu0 %3194, %v2913
        %v3196 = vpop.permute.xlu0 %3195
        %3199 = vset.pattern.permute.xlu0 0
        %3200 = vperm.xlu0 %3199, %v2914
        %v3201 = vpop.permute.xlu0 %3200
        %3204 = vset.pattern.permute.xlu0 0
        %3205 = vperm.xlu0 %3204, %v2915
        %v3206 = vpop.permute.xlu0 %3205
        %3209 = vset.pattern.permute.xlu0 0
        %3210 = vperm.xlu0 %3209, %v2916
        %v3211 = vpop.permute.xlu0 %3210
        %3214 = vset.pattern.permute.xlu0 0
        %3215 = vperm.xlu0 %3214, %v2917
        %v3216 = vpop.permute.xlu0 %3215
        %3219 = vset.pattern.permute.xlu0 0
        %3220 = vperm.xlu0 %3219, %v2918
        %v3221 = vpop.permute.xlu0 %3220
        %3224 = vset.pattern.permute.xlu0 0
        %3225 = vperm.xlu0 %3224, %v2919
        %v3226 = vpop.permute.xlu0 %3225
        %3229 = vset.pattern.permute.xlu0 0
        %3230 = vperm.xlu0 %3229, %v2920
        %v3231 = vpop.permute.xlu0 %3230
        %3234 = vset.pattern.permute.xlu0 0
        %3235 = vperm.xlu0 %3234, %v2921
        %v3236 = vpop.permute.xlu0 %3235
        %3239 = vset.pattern.permute.xlu0 0
        %3240 = vperm.xlu0 %3239, %v2922
        %v3241 = vpop.permute.xlu0 %3240
        %3244 = vset.pattern.permute.xlu0 0
        %3245 = vperm.xlu0 %3244, %v2923
        %v3246 = vpop.permute.xlu0 %3245
        %3249 = vset.pattern.permute.xlu0 0
        %3250 = vperm.xlu0 %3249, %v2924
        %v3251 = vpop.permute.xlu0 %3250
        %3254 = vset.pattern.permute.xlu0 0
        %3255 = vperm.xlu0 %3254, %v2925
        %v3256 = vpop.permute.xlu0 %3255
        %3259 = vset.pattern.permute.xlu0 0
        %3260 = vperm.xlu0 %3259, %v2926
        %v3261 = vpop.permute.xlu0 %3260
        %3264 = vset.pattern.permute.xlu0 0
        %3265 = vperm.xlu0 %3264, %v2927
        %v3266 = vpop.permute.xlu0 %3265
        %3269 = vset.pattern.permute.xlu0 0
        %3270 = vperm.xlu0 %3269, %v2928
        %v3271 = vpop.permute.xlu0 %3270
        %3274 = vset.pattern.permute.xlu0 0
        %3275 = vperm.xlu0 %3274, %v2929
        %v3276 = vpop.permute.xlu0 %3275
        %3279 = vset.pattern.permute.xlu0 0
        %3280 = vperm.xlu0 %3279, %v2930
        %v3281 = vpop.permute.xlu0 %3280
        %v3283 = vmul.f32 %v3126, %v1322
        %v3284 = vmul.f32 %v3131, %v1322
        %v3285 = vmul.f32 %v3136, %v1324
        %v3286 = vmul.f32 %v3141, %v1324
        %v3287 = vmul.f32 %v3146, %v1326
        %v3288 = vmul.f32 %v3151, %v1326
        %v3289 = vmul.f32 %v3156, %v1328
        %v3290 = vmul.f32 %v3161, %v1328
        %v3291 = vmul.f32 %v3166, %v1330
        %v3292 = vmul.f32 %v3171, %v1330
        %v3293 = vmul.f32 %v3176, %v1332
        %v3294 = vmul.f32 %v3181, %v1332
        %v3295 = vmul.f32 %v3186, %v1334
        %v3296 = vmul.f32 %v3191, %v1334
        %v3297 = vmul.f32 %v3196, %v1336
        %v3298 = vmul.f32 %v3201, %v1336
        %v3299 = vmul.f32 %v3206, %v1338
        %v3300 = vmul.f32 %v3211, %v1338
        %v3301 = vmul.f32 %v3216, %v1340
        %v3302 = vmul.f32 %v3221, %v1340
        %v3303 = vmul.f32 %v3226, %v1342
        %v3304 = vmul.f32 %v3231, %v1342
        %v3305 = vmul.f32 %v3236, %v1344
        %v3306 = vmul.f32 %v3241, %v1344
        %v3307 = vmul.f32 %v3246, %v1346
        %v3308 = vmul.f32 %v3251, %v1346
        %v3309 = vmul.f32 %v3256, %v1348
        %v3310 = vmul.f32 %v3261, %v1348
        %v3311 = vmul.f32 %v3266, %v1350
        %v3312 = vmul.f32 %v3271, %v1350
        %v3313 = vmul.f32 %v3276, %v1352
        %v3314 = vmul.f32 %v3281, %v1352
        %v3315 = vadd.f32 %v3091, %v3283
        %v3316 = vadd.f32 %v3092, %v3284
        %v3317 = vadd.f32 %v3093, %v3285
        %v3318 = vadd.f32 %v3094, %v3286
        %v3319 = vadd.f32 %v3095, %v3287
        %v3320 = vadd.f32 %v3096, %v3288
        %v3321 = vadd.f32 %v3097, %v3289
        %v3322 = vadd.f32 %v3098, %v3290
        %v3323 = vadd.f32 %v3099, %v3291
        %v3324 = vadd.f32 %v3100, %v3292
        %v3325 = vadd.f32 %v3101, %v3293
        %v3326 = vadd.f32 %v3102, %v3294
        %v3327 = vadd.f32 %v3103, %v3295
        %v3328 = vadd.f32 %v3104, %v3296
        %v3329 = vadd.f32 %v3105, %v3297
        %v3330 = vadd.f32 %v3106, %v3298
        %v3331 = vadd.f32 %v3107, %v3299
        %v3332 = vadd.f32 %v3108, %v3300
        %v3333 = vadd.f32 %v3109, %v3301
        %v3334 = vadd.f32 %v3110, %v3302
        %v3335 = vadd.f32 %v3111, %v3303
        %v3336 = vadd.f32 %v3112, %v3304
        %v3337 = vadd.f32 %v3113, %v3305
        %v3338 = vadd.f32 %v3114, %v3306
        %v3339 = vadd.f32 %v3115, %v3307
        %v3340 = vadd.f32 %v3116, %v3308
        %v3341 = vadd.f32 %v3117, %v3309
        %v3342 = vadd.f32 %v3118, %v3310
        %v3343 = vadd.f32 %v3119, %v3311
        %v3344 = vadd.f32 %v3120, %v3312
        %v3345 = vadd.f32 %v3121, %v3313
        %v3346 = vadd.f32 %v3122, %v3314
        %v3347 = vmul.f32 %v3126, %v1743
        %v3348 = vmul.f32 %v3131, %v1743
        %v3349 = vmul.f32 %v3136, %v1750
        %v3350 = vmul.f32 %v3141, %v1750
        %v3351 = vmul.f32 %v3146, %v1757
        %v3352 = vmul.f32 %v3151, %v1757
        %v3353 = vmul.f32 %v3156, %v1764
        %v3354 = vmul.f32 %v3161, %v1764
        %v3355 = vmul.f32 %v3166, %v1771
        %v3356 = vmul.f32 %v3171, %v1771
        %v3357 = vmul.f32 %v3176, %v1778
        %v3358 = vmul.f32 %v3181, %v1778
        %v3359 = vmul.f32 %v3186, %v1785
        %v3360 = vmul.f32 %v3191, %v1785
        %v3361 = vmul.f32 %v3196, %v1792
        %v3362 = vmul.f32 %v3201, %v1792
        %v3363 = vmul.f32 %v3206, %v1799
        %v3364 = vmul.f32 %v3211, %v1799
        %v3365 = vmul.f32 %v3216, %v1806
        %v3366 = vmul.f32 %v3221, %v1806
        %v3367 = vmul.f32 %v3226, %v1813
        %v3368 = vmul.f32 %v3231, %v1813
        %v3369 = vmul.f32 %v3236, %v1820
        %v3370 = vmul.f32 %v3241, %v1820
        %v3371 = vmul.f32 %v3246, %v1827
        %v3372 = vmul.f32 %v3251, %v1827
        %v3373 = vmul.f32 %v3256, %v1834
        %v3374 = vmul.f32 %v3261, %v1834
        %v3375 = vmul.f32 %v3266, %v1841
        %v3376 = vmul.f32 %v3271, %v1841
        %v3377 = vmul.f32 %v3276, %v1848
        %v3378 = vmul.f32 %v3281, %v1848
        %v3379 = vmul.f32 %v711, %v3347
        %v3380 = vmul.f32 %v712, %v3348
        %v3381 = vmul.f32 %v713, %v3349
        %v3382 = vmul.f32 %v714, %v3350
        %v3383 = vmul.f32 %v715, %v3351
        %v3384 = vmul.f32 %v716, %v3352
        %v3385 = vmul.f32 %v717, %v3353
        %v3386 = vmul.f32 %v718, %v3354
        %v3387 = vmul.f32 %v719, %v3355
        %v3388 = vmul.f32 %v720, %v3356
        %v3389 = vmul.f32 %v721, %v3357
        %v3390 = vmul.f32 %v722, %v3358
        %v3391 = vmul.f32 %v723, %v3359
        %v3392 = vmul.f32 %v724, %v3360
        %v3393 = vmul.f32 %v725, %v3361
        %v3394 = vmul.f32 %v726, %v3362
        %v3395 = vmul.f32 %v727, %v3363
        %v3396 = vmul.f32 %v728, %v3364
        %v3397 = vmul.f32 %v729, %v3365
        %v3398 = vmul.f32 %v730, %v3366
        %v3399 = vmul.f32 %v731, %v3367
        %v3400 = vmul.f32 %v732, %v3368
        %v3401 = vmul.f32 %v733, %v3369
        %v3402 = vmul.f32 %v734, %v3370
        %v3403 = vmul.f32 %v735, %v3371
        %v3404 = vmul.f32 %v736, %v3372
        %v3405 = vmul.f32 %v737, %v3373
        %v3406 = vmul.f32 %v738, %v3374
        %v3407 = vmul.f32 %v739, %v3375
        %v3408 = vmul.f32 %v740, %v3376
        %v3409 = vmul.f32 %v741, %v3377
        %v3410 = vmul.f32 %v742, %v3378
        %v3411 = vadd.f32 %v3315, %v3379
        %v3412 = vadd.f32 %v3316, %v3380
        %v3413 = vadd.f32 %v3317, %v3381
        %v3414 = vadd.f32 %v3318, %v3382
        %v3415 = vadd.f32 %v3319, %v3383
        %v3416 = vadd.f32 %v3320, %v3384
        %v3417 = vadd.f32 %v3321, %v3385
        %v3418 = vadd.f32 %v3322, %v3386
        %v3419 = vadd.f32 %v3323, %v3387
        %v3420 = vadd.f32 %v3324, %v3388
        %v3421 = vadd.f32 %v3325, %v3389
        %v3422 = vadd.f32 %v3326, %v3390
        %v3423 = vadd.f32 %v3327, %v3391
        %v3424 = vadd.f32 %v3328, %v3392
        %v3425 = vadd.f32 %v3329, %v3393
        %v3426 = vadd.f32 %v3330, %v3394
        %v3427 = vadd.f32 %v3331, %v3395
        %v3428 = vadd.f32 %v3332, %v3396
        %v3429 = vadd.f32 %v3333, %v3397
        %v3430 = vadd.f32 %v3334, %v3398
        %v3431 = vadd.f32 %v3335, %v3399
        %v3432 = vadd.f32 %v3336, %v3400
        %v3433 = vadd.f32 %v3337, %v3401
        %v3434 = vadd.f32 %v3338, %v3402
        %v3435 = vadd.f32 %v3339, %v3403
        %v3436 = vadd.f32 %v3340, %v3404
        %v3437 = vadd.f32 %v3341, %v3405
        %v3438 = vadd.f32 %v3342, %v3406
        %v3439 = vadd.f32 %v3343, %v3407
        %v3440 = vadd.f32 %v3344, %v3408
        %v3441 = vadd.f32 %v3345, %v3409
        %v3442 = vadd.f32 %v3346, %v3410
        %v3443 = vmul.f32 %v3411, %v907
        %v3444 = vmul.f32 %v3412, %v912
        %v3445 = vmul.f32 %v3413, %v917
        %v3446 = vmul.f32 %v3414, %v922
        %v3447 = vmul.f32 %v3415, %v927
        %v3448 = vmul.f32 %v3416, %v932
        %v3449 = vmul.f32 %v3417, %v937
        %v3450 = vmul.f32 %v3418, %v942
        %v3451 = vmul.f32 %v3419, %v947
        %v3452 = vmul.f32 %v3420, %v952
        %v3453 = vmul.f32 %v3421, %v957
        %v3454 = vmul.f32 %v3422, %v962
        %v3455 = vmul.f32 %v3423, %v967
        %v3456 = vmul.f32 %v3424, %v972
        %v3457 = vmul.f32 %v3425, %v977
        %v3458 = vmul.f32 %v3426, %v982
        %v3459 = vmul.f32 %v3427, %v987
        %v3460 = vmul.f32 %v3428, %v992
        %v3461 = vmul.f32 %v3429, %v997
        %v3462 = vmul.f32 %v3430, %v1002
        %v3463 = vmul.f32 %v3431, %v1007
        %v3464 = vmul.f32 %v3432, %v1012
        %v3465 = vmul.f32 %v3433, %v1017
        %v3466 = vmul.f32 %v3434, %v1022
        %v3467 = vmul.f32 %v3435, %v1027
        %v3468 = vmul.f32 %v3436, %v1032
        %v3469 = vmul.f32 %v3437, %v1037
        %v3470 = vmul.f32 %v3438, %v1042
        %v3471 = vmul.f32 %v3439, %v1047
        %v3472 = vmul.f32 %v3440, %v1052
        %v3473 = vmul.f32 %v3441, %v1057
        %v3474 = vmul.f32 %v3442, %v1062
        %v3475 = vsel %vm1096, %v3443, 0.0
        %v3476 = vsel %vm1096, %v3444, 0.0
        %v3477 = vadd.f32 %v3475, %v3476
        %v3478 = vrot.slane %v3477, 4
        %v3479 = vadd.f32 %v3477, %v3478
        %v3480 = vrot.slane %v3479, 2
        %v3481 = vadd.f32 %v3479, %v3480
        %v3482 = vrot.slane %v3481, 1
        %v3483 = vadd.f32 %v3481, %v3482
        %v3484 = vsel %vm1096, %v3445, 0.0
        %v3485 = vsel %vm1096, %v3446, 0.0
        %v3486 = vadd.f32 %v3484, %v3485
        %v3487 = vrot.slane %v3486, 4
        %v3488 = vadd.f32 %v3486, %v3487
        %v3489 = vrot.slane %v3488, 2
        %v3490 = vadd.f32 %v3488, %v3489
        %v3491 = vrot.slane %v3490, 1
        %v3492 = vadd.f32 %v3490, %v3491
        %v3493 = vsel %vm1096, %v3447, 0.0
        %v3494 = vsel %vm1096, %v3448, 0.0
        %v3495 = vadd.f32 %v3493, %v3494
        %v3496 = vrot.slane %v3495, 4
        %v3497 = vadd.f32 %v3495, %v3496
        %v3498 = vrot.slane %v3497, 2
        %v3499 = vadd.f32 %v3497, %v3498
        %v3500 = vrot.slane %v3499, 1
        %v3501 = vadd.f32 %v3499, %v3500
        %v3502 = vsel %vm1096, %v3449, 0.0
        %v3503 = vsel %vm1096, %v3450, 0.0
        %v3504 = vadd.f32 %v3502, %v3503
        %v3505 = vrot.slane %v3504, 4
        %v3506 = vadd.f32 %v3504, %v3505
        %v3507 = vrot.slane %v3506, 2
        %v3508 = vadd.f32 %v3506, %v3507
        %v3509 = vrot.slane %v3508, 1
        %v3510 = vadd.f32 %v3508, %v3509
        %v3511 = vsel %vm1096, %v3451, 0.0
        %v3512 = vsel %vm1096, %v3452, 0.0
        %v3513 = vadd.f32 %v3511, %v3512
        %v3514 = vrot.slane %v3513, 4
        %v3515 = vadd.f32 %v3513, %v3514
        %v3516 = vrot.slane %v3515, 2
        %v3517 = vadd.f32 %v3515, %v3516
        %v3518 = vrot.slane %v3517, 1
        %v3519 = vadd.f32 %v3517, %v3518
        %v3520 = vsel %vm1096, %v3453, 0.0
        %v3521 = vsel %vm1096, %v3454, 0.0
        %v3522 = vadd.f32 %v3520, %v3521
        %v3523 = vrot.slane %v3522, 4
        %v3524 = vadd.f32 %v3522, %v3523
        %v3525 = vrot.slane %v3524, 2
        %v3526 = vadd.f32 %v3524, %v3525
        %v3527 = vrot.slane %v3526, 1
        %v3528 = vadd.f32 %v3526, %v3527
        %v3529 = vsel %vm1096, %v3455, 0.0
        %v3530 = vsel %vm1096, %v3456, 0.0
        %v3531 = vadd.f32 %v3529, %v3530
        %v3532 = vrot.slane %v3531, 4
        %v3533 = vadd.f32 %v3531, %v3532
        %v3534 = vrot.slane %v3533, 2
        %v3535 = vadd.f32 %v3533, %v3534
        %v3536 = vrot.slane %v3535, 1
        %v3537 = vadd.f32 %v3535, %v3536
        %v3538 = vsel %vm1096, %v3457, 0.0
        %v3539 = vsel %vm1096, %v3458, 0.0
        %v3540 = vadd.f32 %v3538, %v3539
        %v3541 = vrot.slane %v3540, 4
        %v3542 = vadd.f32 %v3540, %v3541
        %v3543 = vrot.slane %v3542, 2
        %v3544 = vadd.f32 %v3542, %v3543
        %v3545 = vrot.slane %v3544, 1
        %v3546 = vadd.f32 %v3544, %v3545
        %v3547 = vsel %vm1096, %v3459, 0.0
        %v3548 = vsel %vm1096, %v3460, 0.0
        %v3549 = vadd.f32 %v3547, %v3548
        %v3550 = vrot.slane %v3549, 4
        %v3551 = vadd.f32 %v3549, %v3550
        %v3552 = vrot.slane %v3551, 2
        %v3553 = vadd.f32 %v3551, %v3552
        %v3554 = vrot.slane %v3553, 1
        %v3555 = vadd.f32 %v3553, %v3554
        %v3556 = vsel %vm1096, %v3461, 0.0
        %v3557 = vsel %vm1096, %v3462, 0.0
        %v3558 = vadd.f32 %v3556, %v3557
        %v3559 = vrot.slane %v3558, 4
        %v3560 = vadd.f32 %v3558, %v3559
        %v3561 = vrot.slane %v3560, 2
        %v3562 = vadd.f32 %v3560, %v3561
        %v3563 = vrot.slane %v3562, 1
        %v3564 = vadd.f32 %v3562, %v3563
        %v3565 = vsel %vm1096, %v3463, 0.0
        %v3566 = vsel %vm1096, %v3464, 0.0
        %v3567 = vadd.f32 %v3565, %v3566
        %v3568 = vrot.slane %v3567, 4
        %v3569 = vadd.f32 %v3567, %v3568
        %v3570 = vrot.slane %v3569, 2
        %v3571 = vadd.f32 %v3569, %v3570
        %v3572 = vrot.slane %v3571, 1
        %v3573 = vadd.f32 %v3571, %v3572
        %v3574 = vsel %vm1096, %v3465, 0.0
        %v3575 = vsel %vm1096, %v3466, 0.0
        %v3576 = vadd.f32 %v3574, %v3575
        %v3577 = vrot.slane %v3576, 4
        %v3578 = vadd.f32 %v3576, %v3577
        %v3579 = vrot.slane %v3578, 2
        %v3580 = vadd.f32 %v3578, %v3579
        %v3581 = vrot.slane %v3580, 1
        %v3582 = vadd.f32 %v3580, %v3581
        %v3583 = vsel %vm1096, %v3467, 0.0
        %v3584 = vsel %vm1096, %v3468, 0.0
        %v3585 = vadd.f32 %v3583, %v3584
        %v3586 = vrot.slane %v3585, 4
        %v3587 = vadd.f32 %v3585, %v3586
        %v3588 = vrot.slane %v3587, 2
        %v3589 = vadd.f32 %v3587, %v3588
        %v3590 = vrot.slane %v3589, 1
        %v3591 = vadd.f32 %v3589, %v3590
        %v3592 = vsel %vm1096, %v3469, 0.0
        %v3593 = vsel %vm1096, %v3470, 0.0
        %v3594 = vadd.f32 %v3592, %v3593
        %v3595 = vrot.slane %v3594, 4
        %v3596 = vadd.f32 %v3594, %v3595
        %v3597 = vrot.slane %v3596, 2
        %v3598 = vadd.f32 %v3596, %v3597
        %v3599 = vrot.slane %v3598, 1
        %v3600 = vadd.f32 %v3598, %v3599
        %v3601 = vsel %vm1096, %v3471, 0.0
        %v3602 = vsel %vm1096, %v3472, 0.0
        %v3603 = vadd.f32 %v3601, %v3602
        %v3604 = vrot.slane %v3603, 4
        %v3605 = vadd.f32 %v3603, %v3604
        %v3606 = vrot.slane %v3605, 2
        %v3607 = vadd.f32 %v3605, %v3606
        %v3608 = vrot.slane %v3607, 1
        %v3609 = vadd.f32 %v3607, %v3608
        %v3610 = vsel %vm1096, %v3473, 0.0
        %v3611 = vsel %vm1096, %v3474, 0.0
        %v3612 = vadd.f32 %v3610, %v3611
        %v3613 = vrot.slane %v3612, 4
        %v3614 = vadd.f32 %v3612, %v3613
        %v3615 = vrot.slane %v3614, 2
        %v3616 = vadd.f32 %v3614, %v3615
        %v3617 = vrot.slane %v3616, 1
        %v3618 = vadd.f32 %v3616, %v3617
        %v3619 = vadd.f32 %v1743, 1e-07
        %v3620 = vadd.f32 %v1750, 1e-07
        %v3621 = vadd.f32 %v1757, 1e-07
        %v3622 = vadd.f32 %v1764, 1e-07
        %v3623 = vadd.f32 %v1771, 1e-07
        %v3624 = vadd.f32 %v1778, 1e-07
        %v3625 = vadd.f32 %v1785, 1e-07
        %v3626 = vadd.f32 %v1792, 1e-07
        %v3627 = vadd.f32 %v1799, 1e-07
        %v3628 = vadd.f32 %v1806, 1e-07
        %v3629 = vadd.f32 %v1813, 1e-07
        %v3630 = vadd.f32 %v1820, 1e-07
        %v3631 = vadd.f32 %v1827, 1e-07
        %v3632 = vadd.f32 %v1834, 1e-07
        %v3633 = vadd.f32 %v1841, 1e-07
        %v3634 = vadd.f32 %v1848, 1e-07
        %v3635 = vrcp.pop %v3619
        %v3636 = vmul.f32 1.0, %v3635
        %v3637 = vrcp.pop %v3620
        %v3638 = vmul.f32 1.0, %v3637
        %v3639 = vrcp.pop %v3621
        %v3640 = vmul.f32 1.0, %v3639
        %v3641 = vrcp.pop %v3622
        %v3642 = vmul.f32 1.0, %v3641
        %v3643 = vrcp.pop %v3623
        %v3644 = vmul.f32 1.0, %v3643
        %v3645 = vrcp.pop %v3624
        %v3646 = vmul.f32 1.0, %v3645
        %v3647 = vrcp.pop %v3625
        %v3648 = vmul.f32 1.0, %v3647
        %v3649 = vrcp.pop %v3626
        %v3650 = vmul.f32 1.0, %v3649
        %v3651 = vrcp.pop %v3627
        %v3652 = vmul.f32 1.0, %v3651
        %v3653 = vrcp.pop %v3628
        %v3654 = vmul.f32 1.0, %v3653
        %v3655 = vrcp.pop %v3629
        %v3656 = vmul.f32 1.0, %v3655
        %v3657 = vrcp.pop %v3630
        %v3658 = vmul.f32 1.0, %v3657
        %v3659 = vrcp.pop %v3631
        %v3660 = vmul.f32 1.0, %v3659
        %v3661 = vrcp.pop %v3632
        %v3662 = vmul.f32 1.0, %v3661
        %v3663 = vrcp.pop %v3633
        %v3664 = vmul.f32 1.0, %v3663
        %v3665 = vrcp.pop %v3634
        %v3666 = vmul.f32 1.0, %v3665
        %v3667 = vmul.f32 %v3636, %v3636
        %v3668 = vmul.f32 %v3638, %v3638
        %v3669 = vmul.f32 %v3640, %v3640
        %v3670 = vmul.f32 %v3642, %v3642
        %v3671 = vmul.f32 %v3644, %v3644
        %v3672 = vmul.f32 %v3646, %v3646
        %v3673 = vmul.f32 %v3648, %v3648
        %v3674 = vmul.f32 %v3650, %v3650
        %v3675 = vmul.f32 %v3652, %v3652
        %v3676 = vmul.f32 %v3654, %v3654
        %v3677 = vmul.f32 %v3656, %v3656
        %v3678 = vmul.f32 %v3658, %v3658
        %v3679 = vmul.f32 %v3660, %v3660
        %v3680 = vmul.f32 %v3662, %v3662
        %v3681 = vmul.f32 %v3664, %v3664
        %v3682 = vmul.f32 %v3666, %v3666
        %v3683 = vsub.f32 %v3315, %v1322
        %v3684 = vsub.f32 %v3316, %v1322
        %v3685 = vsub.f32 %v3317, %v1324
        %v3686 = vsub.f32 %v3318, %v1324
        %v3687 = vsub.f32 %v3319, %v1326
        %v3688 = vsub.f32 %v3320, %v1326
        %v3689 = vsub.f32 %v3321, %v1328
        %v3690 = vsub.f32 %v3322, %v1328
        %v3691 = vsub.f32 %v3323, %v1330
        %v3692 = vsub.f32 %v3324, %v1330
        %v3693 = vsub.f32 %v3325, %v1332
        %v3694 = vsub.f32 %v3326, %v1332
        %v3695 = vsub.f32 %v3327, %v1334
        %v3696 = vsub.f32 %v3328, %v1334
        %v3697 = vsub.f32 %v3329, %v1336
        %v3698 = vsub.f32 %v3330, %v1336
        %v3699 = vsub.f32 %v3331, %v1338
        %v3700 = vsub.f32 %v3332, %v1338
        %v3701 = vsub.f32 %v3333, %v1340
        %v3702 = vsub.f32 %v3334, %v1340
        %v3703 = vsub.f32 %v3335, %v1342
        %v3704 = vsub.f32 %v3336, %v1342
        %v3705 = vsub.f32 %v3337, %v1344
        %v3706 = vsub.f32 %v3338, %v1344
        %v3707 = vsub.f32 %v3339, %v1346
        %v3708 = vsub.f32 %v3340, %v1346
        %v3709 = vsub.f32 %v3341, %v1348
        %v3710 = vsub.f32 %v3342, %v1348
        %v3711 = vsub.f32 %v3343, %v1350
        %v3712 = vsub.f32 %v3344, %v1350
        %v3713 = vsub.f32 %v3345, %v1352
        %v3714 = vsub.f32 %v3346, %v1352
        %v3715 = vmul.f32 %v3683, %v3636
        %v3716 = vmul.f32 %v3684, %v3636
        %v3717 = vmul.f32 %v3685, %v3638
        %v3718 = vmul.f32 %v3686, %v3638
        %v3719 = vmul.f32 %v3687, %v3640
        %v3720 = vmul.f32 %v3688, %v3640
        %v3721 = vmul.f32 %v3689, %v3642
        %v3722 = vmul.f32 %v3690, %v3642
        %v3723 = vmul.f32 %v3691, %v3644
        %v3724 = vmul.f32 %v3692, %v3644
        %v3725 = vmul.f32 %v3693, %v3646
        %v3726 = vmul.f32 %v3694, %v3646
        %v3727 = vmul.f32 %v3695, %v3648
        %v3728 = vmul.f32 %v3696, %v3648
        %v3729 = vmul.f32 %v3697, %v3650
        %v3730 = vmul.f32 %v3698, %v3650
        %v3731 = vmul.f32 %v3699, %v3652
        %v3732 = vmul.f32 %v3700, %v3652
        %v3733 = vmul.f32 %v3701, %v3654
        %v3734 = vmul.f32 %v3702, %v3654
        %v3735 = vmul.f32 %v3703, %v3656
        %v3736 = vmul.f32 %v3704, %v3656
        %v3737 = vmul.f32 %v3705, %v3658
        %v3738 = vmul.f32 %v3706, %v3658
        %v3739 = vmul.f32 %v3707, %v3660
        %v3740 = vmul.f32 %v3708, %v3660
        %v3741 = vmul.f32 %v3709, %v3662
        %v3742 = vmul.f32 %v3710, %v3662
        %v3743 = vmul.f32 %v3711, %v3664
        %v3744 = vmul.f32 %v3712, %v3664
        %v3745 = vmul.f32 %v3713, %v3666
        %v3746 = vmul.f32 %v3714, %v3666
        %v3747 = vmul.f32 %v3715, %v3715
        %v3748 = vmul.f32 %v3716, %v3716
        %v3749 = vmul.f32 %v3717, %v3717
        %v3750 = vmul.f32 %v3718, %v3718
        %v3751 = vmul.f32 %v3719, %v3719
        %v3752 = vmul.f32 %v3720, %v3720
        %v3753 = vmul.f32 %v3721, %v3721
        %v3754 = vmul.f32 %v3722, %v3722
        %v3755 = vmul.f32 %v3723, %v3723
        %v3756 = vmul.f32 %v3724, %v3724
        %v3757 = vmul.f32 %v3725, %v3725
        %v3758 = vmul.f32 %v3726, %v3726
        %v3759 = vmul.f32 %v3727, %v3727
        %v3760 = vmul.f32 %v3728, %v3728
        %v3761 = vmul.f32 %v3729, %v3729
        %v3762 = vmul.f32 %v3730, %v3730
        %v3763 = vmul.f32 %v3731, %v3731
        %v3764 = vmul.f32 %v3732, %v3732
        %v3765 = vmul.f32 %v3733, %v3733
        %v3766 = vmul.f32 %v3734, %v3734
        %v3767 = vmul.f32 %v3735, %v3735
        %v3768 = vmul.f32 %v3736, %v3736
        %v3769 = vmul.f32 %v3737, %v3737
        %v3770 = vmul.f32 %v3738, %v3738
        %v3771 = vmul.f32 %v3739, %v3739
        %v3772 = vmul.f32 %v3740, %v3740
        %v3773 = vmul.f32 %v3741, %v3741
        %v3774 = vmul.f32 %v3742, %v3742
        %v3775 = vmul.f32 %v3743, %v3743
        %v3776 = vmul.f32 %v3744, %v3744
        %v3777 = vmul.f32 %v3745, %v3745
        %v3778 = vmul.f32 %v3746, %v3746
        %v3779 = vmul.f32 %v3747, %v907
        %v3780 = vmul.f32 %v3748, %v912
        %v3781 = vmul.f32 %v3749, %v917
        %v3782 = vmul.f32 %v3750, %v922
        %v3783 = vmul.f32 %v3751, %v927
        %v3784 = vmul.f32 %v3752, %v932
        %v3785 = vmul.f32 %v3753, %v937
        %v3786 = vmul.f32 %v3754, %v942
        %v3787 = vmul.f32 %v3755, %v947
        %v3788 = vmul.f32 %v3756, %v952
        %v3789 = vmul.f32 %v3757, %v957
        %v3790 = vmul.f32 %v3758, %v962
        %v3791 = vmul.f32 %v3759, %v967
        %v3792 = vmul.f32 %v3760, %v972
        %v3793 = vmul.f32 %v3761, %v977
        %v3794 = vmul.f32 %v3762, %v982
        %v3795 = vmul.f32 %v3763, %v987
        %v3796 = vmul.f32 %v3764, %v992
        %v3797 = vmul.f32 %v3765, %v997
        %v3798 = vmul.f32 %v3766, %v1002
        %v3799 = vmul.f32 %v3767, %v1007
        %v3800 = vmul.f32 %v3768, %v1012
        %v3801 = vmul.f32 %v3769, %v1017
        %v3802 = vmul.f32 %v3770, %v1022
        %v3803 = vmul.f32 %v3771, %v1027
        %v3804 = vmul.f32 %v3772, %v1032
        %v3805 = vmul.f32 %v3773, %v1037
        %v3806 = vmul.f32 %v3774, %v1042
        %v3807 = vmul.f32 %v3775, %v1047
        %v3808 = vmul.f32 %v3776, %v1052
        %v3809 = vmul.f32 %v3777, %v1057
        %v3810 = vmul.f32 %v3778, %v1062
        %v3811 = vsel %vm1096, %v3779, 0.0
        %v3812 = vsel %vm1096, %v3780, 0.0
        %v3813 = vadd.f32 %v3811, %v3812
        %v3814 = vrot.slane %v3813, 4
        %v3815 = vadd.f32 %v3813, %v3814
        %v3816 = vrot.slane %v3815, 2
        %v3817 = vadd.f32 %v3815, %v3816
        %v3818 = vrot.slane %v3817, 1
        %v3819 = vadd.f32 %v3817, %v3818
        %v3820 = vsel %vm1096, %v3781, 0.0
        %v3821 = vsel %vm1096, %v3782, 0.0
        %v3822 = vadd.f32 %v3820, %v3821
        %v3823 = vrot.slane %v3822, 4
        %v3824 = vadd.f32 %v3822, %v3823
        %v3825 = vrot.slane %v3824, 2
        %v3826 = vadd.f32 %v3824, %v3825
        %v3827 = vrot.slane %v3826, 1
        %v3828 = vadd.f32 %v3826, %v3827
        %v3829 = vsel %vm1096, %v3783, 0.0
        %v3830 = vsel %vm1096, %v3784, 0.0
        %v3831 = vadd.f32 %v3829, %v3830
        %v3832 = vrot.slane %v3831, 4
        %v3833 = vadd.f32 %v3831, %v3832
        %v3834 = vrot.slane %v3833, 2
        %v3835 = vadd.f32 %v3833, %v3834
        %v3836 = vrot.slane %v3835, 1
        %v3837 = vadd.f32 %v3835, %v3836
        %v3838 = vsel %vm1096, %v3785, 0.0
        %v3839 = vsel %vm1096, %v3786, 0.0
        %v3840 = vadd.f32 %v3838, %v3839
        %v3841 = vrot.slane %v3840, 4
        %v3842 = vadd.f32 %v3840, %v3841
        %v3843 = vrot.slane %v3842, 2
        %v3844 = vadd.f32 %v3842, %v3843
        %v3845 = vrot.slane %v3844, 1
        %v3846 = vadd.f32 %v3844, %v3845
        %v3847 = vsel %vm1096, %v3787, 0.0
        %v3848 = vsel %vm1096, %v3788, 0.0
        %v3849 = vadd.f32 %v3847, %v3848
        %v3850 = vrot.slane %v3849, 4
        %v3851 = vadd.f32 %v3849, %v3850
        %v3852 = vrot.slane %v3851, 2
        %v3853 = vadd.f32 %v3851, %v3852
        %v3854 = vrot.slane %v3853, 1
        %v3855 = vadd.f32 %v3853, %v3854
        %v3856 = vsel %vm1096, %v3789, 0.0
        %v3857 = vsel %vm1096, %v3790, 0.0
        %v3858 = vadd.f32 %v3856, %v3857
        %v3859 = vrot.slane %v3858, 4
        %v3860 = vadd.f32 %v3858, %v3859
        %v3861 = vrot.slane %v3860, 2
        %v3862 = vadd.f32 %v3860, %v3861
        %v3863 = vrot.slane %v3862, 1
        %v3864 = vadd.f32 %v3862, %v3863
        %v3865 = vsel %vm1096, %v3791, 0.0
        %v3866 = vsel %vm1096, %v3792, 0.0
        %v3867 = vadd.f32 %v3865, %v3866
        %v3868 = vrot.slane %v3867, 4
        %v3869 = vadd.f32 %v3867, %v3868
        %v3870 = vrot.slane %v3869, 2
        %v3871 = vadd.f32 %v3869, %v3870
        %v3872 = vrot.slane %v3871, 1
        %v3873 = vadd.f32 %v3871, %v3872
        %v3874 = vsel %vm1096, %v3793, 0.0
        %v3875 = vsel %vm1096, %v3794, 0.0
        %v3876 = vadd.f32 %v3874, %v3875
        %v3877 = vrot.slane %v3876, 4
        %v3878 = vadd.f32 %v3876, %v3877
        %v3879 = vrot.slane %v3878, 2
        %v3880 = vadd.f32 %v3878, %v3879
        %v3881 = vrot.slane %v3880, 1
        %v3882 = vadd.f32 %v3880, %v3881
        %v3883 = vsel %vm1096, %v3795, 0.0
        %v3884 = vsel %vm1096, %v3796, 0.0
        %v3885 = vadd.f32 %v3883, %v3884
        %v3886 = vrot.slane %v3885, 4
        %v3887 = vadd.f32 %v3885, %v3886
        %v3888 = vrot.slane %v3887, 2
        %v3889 = vadd.f32 %v3887, %v3888
        %v3890 = vrot.slane %v3889, 1
        %v3891 = vadd.f32 %v3889, %v3890
        %v3892 = vsel %vm1096, %v3797, 0.0
        %v3893 = vsel %vm1096, %v3798, 0.0
        %v3894 = vadd.f32 %v3892, %v3893
        %v3895 = vrot.slane %v3894, 4
        %v3896 = vadd.f32 %v3894, %v3895
        %v3897 = vrot.slane %v3896, 2
        %v3898 = vadd.f32 %v3896, %v3897
        %v3899 = vrot.slane %v3898, 1
        %v3900 = vadd.f32 %v3898, %v3899
        %v3901 = vsel %vm1096, %v3799, 0.0
        %v3902 = vsel %vm1096, %v3800, 0.0
        %v3903 = vadd.f32 %v3901, %v3902
        %v3904 = vrot.slane %v3903, 4
        %v3905 = vadd.f32 %v3903, %v3904
        %v3906 = vrot.slane %v3905, 2
        %v3907 = vadd.f32 %v3905, %v3906
        %v3908 = vrot.slane %v3907, 1
        %v3909 = vadd.f32 %v3907, %v3908
        %v3910 = vsel %vm1096, %v3801, 0.0
        %v3911 = vsel %vm1096, %v3802, 0.0
        %v3912 = vadd.f32 %v3910, %v3911
        %v3913 = vrot.slane %v3912, 4
        %v3914 = vadd.f32 %v3912, %v3913
        %v3915 = vrot.slane %v3914, 2
        %v3916 = vadd.f32 %v3914, %v3915
        %v3917 = vrot.slane %v3916, 1
        %v3918 = vadd.f32 %v3916, %v3917
        %v3919 = vsel %vm1096, %v3803, 0.0
        %v3920 = vsel %vm1096, %v3804, 0.0
        %v3921 = vadd.f32 %v3919, %v3920
        %v3922 = vrot.slane %v3921, 4
        %v3923 = vadd.f32 %v3921, %v3922
        %v3924 = vrot.slane %v3923, 2
        %v3925 = vadd.f32 %v3923, %v3924
        %v3926 = vrot.slane %v3925, 1
        %v3927 = vadd.f32 %v3925, %v3926
        %v3928 = vsel %vm1096, %v3805, 0.0
        %v3929 = vsel %vm1096, %v3806, 0.0
        %v3930 = vadd.f32 %v3928, %v3929
        %v3931 = vrot.slane %v3930, 4
        %v3932 = vadd.f32 %v3930, %v3931
        %v3933 = vrot.slane %v3932, 2
        %v3934 = vadd.f32 %v3932, %v3933
        %v3935 = vrot.slane %v3934, 1
        %v3936 = vadd.f32 %v3934, %v3935
        %v3937 = vsel %vm1096, %v3807, 0.0
        %v3938 = vsel %vm1096, %v3808, 0.0
        %v3939 = vadd.f32 %v3937, %v3938
        %v3940 = vrot.slane %v3939, 4
        %v3941 = vadd.f32 %v3939, %v3940
        %v3942 = vrot.slane %v3941, 2
        %v3943 = vadd.f32 %v3941, %v3942
        %v3944 = vrot.slane %v3943, 1
        %v3945 = vadd.f32 %v3943, %v3944
        %v3946 = vsel %vm1096, %v3809, 0.0
        %v3947 = vsel %vm1096, %v3810, 0.0
        %v3948 = vadd.f32 %v3946, %v3947
        %v3949 = vrot.slane %v3948, 4
        %v3950 = vadd.f32 %v3948, %v3949
        %v3951 = vrot.slane %v3950, 2
        %v3952 = vadd.f32 %v3950, %v3951
        %v3953 = vrot.slane %v3952, 1
        %v3954 = vadd.f32 %v3952, %v3953
        %v3955 = vmul.f32 %v3347, %v3347
        %v3956 = vmul.f32 %v3348, %v3348
        %v3957 = vmul.f32 %v3349, %v3349
        %v3958 = vmul.f32 %v3350, %v3350
        %v3959 = vmul.f32 %v3351, %v3351
        %v3960 = vmul.f32 %v3352, %v3352
        %v3961 = vmul.f32 %v3353, %v3353
        %v3962 = vmul.f32 %v3354, %v3354
        %v3963 = vmul.f32 %v3355, %v3355
        %v3964 = vmul.f32 %v3356, %v3356
        %v3965 = vmul.f32 %v3357, %v3357
        %v3966 = vmul.f32 %v3358, %v3358
        %v3967 = vmul.f32 %v3359, %v3359
        %v3968 = vmul.f32 %v3360, %v3360
        %v3969 = vmul.f32 %v3361, %v3361
        %v3970 = vmul.f32 %v3362, %v3362
        %v3971 = vmul.f32 %v3363, %v3363
        %v3972 = vmul.f32 %v3364, %v3364
        %v3973 = vmul.f32 %v3365, %v3365
        %v3974 = vmul.f32 %v3366, %v3366
        %v3975 = vmul.f32 %v3367, %v3367
        %v3976 = vmul.f32 %v3368, %v3368
        %v3977 = vmul.f32 %v3369, %v3369
        %v3978 = vmul.f32 %v3370, %v3370
        %v3979 = vmul.f32 %v3371, %v3371
        %v3980 = vmul.f32 %v3372, %v3372
        %v3981 = vmul.f32 %v3373, %v3373
        %v3982 = vmul.f32 %v3374, %v3374
        %v3983 = vmul.f32 %v3375, %v3375
        %v3984 = vmul.f32 %v3376, %v3376
        %v3985 = vmul.f32 %v3377, %v3377
        %v3986 = vmul.f32 %v3378, %v3378
        %v3987 = vmul.f32 %v3955, 0.5
        %v3988 = vmul.f32 %v3956, 0.5
        %v3989 = vmul.f32 %v3957, 0.5
        %v3990 = vmul.f32 %v3958, 0.5
        %v3991 = vmul.f32 %v3959, 0.5
        %v3992 = vmul.f32 %v3960, 0.5
        %v3993 = vmul.f32 %v3961, 0.5
        %v3994 = vmul.f32 %v3962, 0.5
        %v3995 = vmul.f32 %v3963, 0.5
        %v3996 = vmul.f32 %v3964, 0.5
        %v3997 = vmul.f32 %v3965, 0.5
        %v3998 = vmul.f32 %v3966, 0.5
        %v3999 = vmul.f32 %v3967, 0.5
        %v4000 = vmul.f32 %v3968, 0.5
        %v4001 = vmul.f32 %v3969, 0.5
        %v4002 = vmul.f32 %v3970, 0.5
        %v4003 = vmul.f32 %v3971, 0.5
        %v4004 = vmul.f32 %v3972, 0.5
        %v4005 = vmul.f32 %v3973, 0.5
        %v4006 = vmul.f32 %v3974, 0.5
        %v4007 = vmul.f32 %v3975, 0.5
        %v4008 = vmul.f32 %v3976, 0.5
        %v4009 = vmul.f32 %v3977, 0.5
        %v4010 = vmul.f32 %v3978, 0.5
        %v4011 = vmul.f32 %v3979, 0.5
        %v4012 = vmul.f32 %v3980, 0.5
        %v4013 = vmul.f32 %v3981, 0.5
        %v4014 = vmul.f32 %v3982, 0.5
        %v4015 = vmul.f32 %v3983, 0.5
        %v4016 = vmul.f32 %v3984, 0.5
        %v4017 = vmul.f32 %v3985, 0.5
        %v4018 = vmul.f32 %v3986, 0.5
        %v4019 = vmul.f32 %v3987, %v3667
        %v4020 = vmul.f32 %v3988, %v3667
        %v4021 = vmul.f32 %v3989, %v3668
        %v4022 = vmul.f32 %v3990, %v3668
        %v4023 = vmul.f32 %v3991, %v3669
        %v4024 = vmul.f32 %v3992, %v3669
        %v4025 = vmul.f32 %v3993, %v3670
        %v4026 = vmul.f32 %v3994, %v3670
        %v4027 = vmul.f32 %v3995, %v3671
        %v4028 = vmul.f32 %v3996, %v3671
        %v4029 = vmul.f32 %v3997, %v3672
        %v4030 = vmul.f32 %v3998, %v3672
        %v4031 = vmul.f32 %v3999, %v3673
        %v4032 = vmul.f32 %v4000, %v3673
        %v4033 = vmul.f32 %v4001, %v3674
        %v4034 = vmul.f32 %v4002, %v3674
        %v4035 = vmul.f32 %v4003, %v3675
        %v4036 = vmul.f32 %v4004, %v3675
        %v4037 = vmul.f32 %v4005, %v3676
        %v4038 = vmul.f32 %v4006, %v3676
        %v4039 = vmul.f32 %v4007, %v3677
        %v4040 = vmul.f32 %v4008, %v3677
        %v4041 = vmul.f32 %v4009, %v3678
        %v4042 = vmul.f32 %v4010, %v3678
        %v4043 = vmul.f32 %v4011, %v3679
        %v4044 = vmul.f32 %v4012, %v3679
        %v4045 = vmul.f32 %v4013, %v3680
        %v4046 = vmul.f32 %v4014, %v3680
        %v4047 = vmul.f32 %v4015, %v3681
        %v4048 = vmul.f32 %v4016, %v3681
        %v4049 = vmul.f32 %v4017, %v3682
        %v4050 = vmul.f32 %v4018, %v3682
        %v4051 = vadd.f32 %v4019, %v3819
        %v4052 = vadd.f32 %v4020, %v3819
        %v4053 = vadd.f32 %v4021, %v3828
        %v4054 = vadd.f32 %v4022, %v3828
        %v4055 = vadd.f32 %v4023, %v3837
        %v4056 = vadd.f32 %v4024, %v3837
        %v4057 = vadd.f32 %v4025, %v3846
        %v4058 = vadd.f32 %v4026, %v3846
        %v4059 = vadd.f32 %v4027, %v3855
        %v4060 = vadd.f32 %v4028, %v3855
        %v4061 = vadd.f32 %v4029, %v3864
        %v4062 = vadd.f32 %v4030, %v3864
        %v4063 = vadd.f32 %v4031, %v3873
        %v4064 = vadd.f32 %v4032, %v3873
        %v4065 = vadd.f32 %v4033, %v3882
        %v4066 = vadd.f32 %v4034, %v3882
        %v4067 = vadd.f32 %v4035, %v3891
        %v4068 = vadd.f32 %v4036, %v3891
        %v4069 = vadd.f32 %v4037, %v3900
        %v4070 = vadd.f32 %v4038, %v3900
        %v4071 = vadd.f32 %v4039, %v3909
        %v4072 = vadd.f32 %v4040, %v3909
        %v4073 = vadd.f32 %v4041, %v3918
        %v4074 = vadd.f32 %v4042, %v3918
        %v4075 = vadd.f32 %v4043, %v3927
        %v4076 = vadd.f32 %v4044, %v3927
        %v4077 = vadd.f32 %v4045, %v3936
        %v4078 = vadd.f32 %v4046, %v3936
        %v4079 = vadd.f32 %v4047, %v3945
        %v4080 = vadd.f32 %v4048, %v3945
        %v4081 = vadd.f32 %v4049, %v3954
        %v4082 = vadd.f32 %v4050, %v3954
        %v4083 = vmul.f32 %v4051, %v907
        %v4084 = vmul.f32 %v4052, %v912
        %v4085 = vmul.f32 %v4053, %v917
        %v4086 = vmul.f32 %v4054, %v922
        %v4087 = vmul.f32 %v4055, %v927
        %v4088 = vmul.f32 %v4056, %v932
        %v4089 = vmul.f32 %v4057, %v937
        %v4090 = vmul.f32 %v4058, %v942
        %v4091 = vmul.f32 %v4059, %v947
        %v4092 = vmul.f32 %v4060, %v952
        %v4093 = vmul.f32 %v4061, %v957
        %v4094 = vmul.f32 %v4062, %v962
        %v4095 = vmul.f32 %v4063, %v967
        %v4096 = vmul.f32 %v4064, %v972
        %v4097 = vmul.f32 %v4065, %v977
        %v4098 = vmul.f32 %v4066, %v982
        %v4099 = vmul.f32 %v4067, %v987
        %v4100 = vmul.f32 %v4068, %v992
        %v4101 = vmul.f32 %v4069, %v997
        %v4102 = vmul.f32 %v4070, %v1002
        %v4103 = vmul.f32 %v4071, %v1007
        %v4104 = vmul.f32 %v4072, %v1012
        %v4105 = vmul.f32 %v4073, %v1017
        %v4106 = vmul.f32 %v4074, %v1022
        %v4107 = vmul.f32 %v4075, %v1027
        %v4108 = vmul.f32 %v4076, %v1032
        %v4109 = vmul.f32 %v4077, %v1037
        %v4110 = vmul.f32 %v4078, %v1042
        %v4111 = vmul.f32 %v4079, %v1047
        %v4112 = vmul.f32 %v4080, %v1052
        %v4113 = vmul.f32 %v4081, %v1057
        %v4114 = vmul.f32 %v4082, %v1062
        %v4115 = vsel %vm1096, %v4083, 0.0
        %4116 = vadd.xlane.f32.xlu0 %v4115
        %v4117 = vpop.xlane.xlu0 %4116
        %v4118 = vsel %vm1096, %v4084, 0.0
        %4119 = vadd.xlane.f32.xlu0 %v4118
        %v4120 = vpop.xlane.xlu0 %4119
        %v4121 = vsel %vm1096, %v4085, 0.0
        %4122 = vadd.xlane.f32.xlu0 %v4121
        %v4123 = vpop.xlane.xlu0 %4122
        %v4124 = vsel %vm1096, %v4086, 0.0
        %4125 = vadd.xlane.f32.xlu0 %v4124
        %v4126 = vpop.xlane.xlu0 %4125
        %v4127 = vsel %vm1096, %v4087, 0.0
        %4128 = vadd.xlane.f32.xlu0 %v4127
        %v4129 = vpop.xlane.xlu0 %4128
        %v4130 = vsel %vm1096, %v4088, 0.0
        %4131 = vadd.xlane.f32.xlu0 %v4130
        %v4132 = vpop.xlane.xlu0 %4131
        %v4133 = vsel %vm1096, %v4089, 0.0
        %4134 = vadd.xlane.f32.xlu0 %v4133
        %v4135 = vpop.xlane.xlu0 %4134
        %v4136 = vsel %vm1096, %v4090, 0.0
        %4137 = vadd.xlane.f32.xlu0 %v4136
        %v4138 = vpop.xlane.xlu0 %4137
        %v4139 = vsel %vm1096, %v4091, 0.0
        %4140 = vadd.xlane.f32.xlu0 %v4139
        %v4141 = vpop.xlane.xlu0 %4140
        %v4142 = vsel %vm1096, %v4092, 0.0
        %4143 = vadd.xlane.f32.xlu0 %v4142
        %v4144 = vpop.xlane.xlu0 %4143
        %v4145 = vsel %vm1096, %v4093, 0.0
        %4146 = vadd.xlane.f32.xlu0 %v4145
        %v4147 = vpop.xlane.xlu0 %4146
        %v4148 = vsel %vm1096, %v4094, 0.0
        %4149 = vadd.xlane.f32.xlu0 %v4148
        %v4150 = vpop.xlane.xlu0 %4149
        %v4151 = vsel %vm1096, %v4095, 0.0
        %4152 = vadd.xlane.f32.xlu0 %v4151
        %v4153 = vpop.xlane.xlu0 %4152
        %v4154 = vsel %vm1096, %v4096, 0.0
        %4155 = vadd.xlane.f32.xlu0 %v4154
        %v4156 = vpop.xlane.xlu0 %4155
        %v4157 = vsel %vm1096, %v4097, 0.0
        %4158 = vadd.xlane.f32.xlu0 %v4157
        %v4159 = vpop.xlane.xlu0 %4158
        %v4160 = vsel %vm1096, %v4098, 0.0
        %4161 = vadd.xlane.f32.xlu0 %v4160
        %v4162 = vpop.xlane.xlu0 %4161
        %v4163 = vsel %vm1096, %v4099, 0.0
        %4164 = vadd.xlane.f32.xlu0 %v4163
        %v4165 = vpop.xlane.xlu0 %4164
        %v4166 = vsel %vm1096, %v4100, 0.0
        %4167 = vadd.xlane.f32.xlu0 %v4166
        %v4168 = vpop.xlane.xlu0 %4167
        %v4169 = vsel %vm1096, %v4101, 0.0
        %4170 = vadd.xlane.f32.xlu0 %v4169
        %v4171 = vpop.xlane.xlu0 %4170
        %v4172 = vsel %vm1096, %v4102, 0.0
        %4173 = vadd.xlane.f32.xlu0 %v4172
        %v4174 = vpop.xlane.xlu0 %4173
        %v4175 = vsel %vm1096, %v4103, 0.0
        %4176 = vadd.xlane.f32.xlu0 %v4175
        %v4177 = vpop.xlane.xlu0 %4176
        %v4178 = vsel %vm1096, %v4104, 0.0
        %4179 = vadd.xlane.f32.xlu0 %v4178
        %v4180 = vpop.xlane.xlu0 %4179
        %v4181 = vsel %vm1096, %v4105, 0.0
        %4182 = vadd.xlane.f32.xlu0 %v4181
        %v4183 = vpop.xlane.xlu0 %4182
        %v4184 = vsel %vm1096, %v4106, 0.0
        %4185 = vadd.xlane.f32.xlu0 %v4184
        %v4186 = vpop.xlane.xlu0 %4185
        %v4187 = vsel %vm1096, %v4107, 0.0
        %4188 = vadd.xlane.f32.xlu0 %v4187
        %v4189 = vpop.xlane.xlu0 %4188
        %v4190 = vsel %vm1096, %v4108, 0.0
        %4191 = vadd.xlane.f32.xlu0 %v4190
        %v4192 = vpop.xlane.xlu0 %4191
        %v4193 = vsel %vm1096, %v4109, 0.0
        %4194 = vadd.xlane.f32.xlu0 %v4193
        %v4195 = vpop.xlane.xlu0 %4194
        %v4196 = vsel %vm1096, %v4110, 0.0
        %4197 = vadd.xlane.f32.xlu0 %v4196
        %v4198 = vpop.xlane.xlu0 %4197
        %v4199 = vsel %vm1096, %v4111, 0.0
        %4200 = vadd.xlane.f32.xlu0 %v4199
        %v4201 = vpop.xlane.xlu0 %4200
        %v4202 = vsel %vm1096, %v4112, 0.0
        %4203 = vadd.xlane.f32.xlu0 %v4202
        %v4204 = vpop.xlane.xlu0 %4203
        %v4205 = vsel %vm1096, %v4113, 0.0
        %4206 = vadd.xlane.f32.xlu0 %v4205
        %v4207 = vpop.xlane.xlu0 %4206
        %v4208 = vsel %vm1096, %v4114, 0.0
        %4209 = vadd.xlane.f32.xlu0 %v4208
        %v4210 = vpop.xlane.xlu0 %4209
        %v4211 = vadd.f32 %v4117, %v4120
        %v4212 = vrot.slane %v4211, 4
        %v4213 = vadd.f32 %v4211, %v4212
        %v4214 = vrot.slane %v4213, 2
        %v4215 = vadd.f32 %v4213, %v4214
        %v4216 = vrot.slane %v4215, 1
        %v4217 = vadd.f32 %v4215, %v4216
        %v4218 = vadd.f32 %v4123, %v4126
        %v4219 = vrot.slane %v4218, 4
        %v4220 = vadd.f32 %v4218, %v4219
        %v4221 = vrot.slane %v4220, 2
        %v4222 = vadd.f32 %v4220, %v4221
        %v4223 = vrot.slane %v4222, 1
        %v4224 = vadd.f32 %v4222, %v4223
        %v4225 = vadd.f32 %v4129, %v4132
        %v4226 = vrot.slane %v4225, 4
        %v4227 = vadd.f32 %v4225, %v4226
        %v4228 = vrot.slane %v4227, 2
        %v4229 = vadd.f32 %v4227, %v4228
        %v4230 = vrot.slane %v4229, 1
        %v4231 = vadd.f32 %v4229, %v4230
        %v4232 = vadd.f32 %v4135, %v4138
        %v4233 = vrot.slane %v4232, 4
        %v4234 = vadd.f32 %v4232, %v4233
        %v4235 = vrot.slane %v4234, 2
        %v4236 = vadd.f32 %v4234, %v4235
        %v4237 = vrot.slane %v4236, 1
        %v4238 = vadd.f32 %v4236, %v4237
        %v4239 = vadd.f32 %v4141, %v4144
        %v4240 = vrot.slane %v4239, 4
        %v4241 = vadd.f32 %v4239, %v4240
        %v4242 = vrot.slane %v4241, 2
        %v4243 = vadd.f32 %v4241, %v4242
        %v4244 = vrot.slane %v4243, 1
        %v4245 = vadd.f32 %v4243, %v4244
        %v4246 = vadd.f32 %v4147, %v4150
        %v4247 = vrot.slane %v4246, 4
        %v4248 = vadd.f32 %v4246, %v4247
        %v4249 = vrot.slane %v4248, 2
        %v4250 = vadd.f32 %v4248, %v4249
        %v4251 = vrot.slane %v4250, 1
        %v4252 = vadd.f32 %v4250, %v4251
        %v4253 = vadd.f32 %v4153, %v4156
        %v4254 = vrot.slane %v4253, 4
        %v4255 = vadd.f32 %v4253, %v4254
        %v4256 = vrot.slane %v4255, 2
        %v4257 = vadd.f32 %v4255, %v4256
        %v4258 = vrot.slane %v4257, 1
        %v4259 = vadd.f32 %v4257, %v4258
        %v4260 = vadd.f32 %v4159, %v4162
        %v4261 = vrot.slane %v4260, 4
        %v4262 = vadd.f32 %v4260, %v4261
        %v4263 = vrot.slane %v4262, 2
        %v4264 = vadd.f32 %v4262, %v4263
        %v4265 = vrot.slane %v4264, 1
        %v4266 = vadd.f32 %v4264, %v4265
        %v4267 = vadd.f32 %v4165, %v4168
        %v4268 = vrot.slane %v4267, 4
        %v4269 = vadd.f32 %v4267, %v4268
        %v4270 = vrot.slane %v4269, 2
        %v4271 = vadd.f32 %v4269, %v4270
        %v4272 = vrot.slane %v4271, 1
        %v4273 = vadd.f32 %v4271, %v4272
        %v4274 = vadd.f32 %v4171, %v4174
        %v4275 = vrot.slane %v4274, 4
        %v4276 = vadd.f32 %v4274, %v4275
        %v4277 = vrot.slane %v4276, 2
        %v4278 = vadd.f32 %v4276, %v4277
        %v4279 = vrot.slane %v4278, 1
        %v4280 = vadd.f32 %v4278, %v4279
        %v4281 = vadd.f32 %v4177, %v4180
        %v4282 = vrot.slane %v4281, 4
        %v4283 = vadd.f32 %v4281, %v4282
        %v4284 = vrot.slane %v4283, 2
        %v4285 = vadd.f32 %v4283, %v4284
        %v4286 = vrot.slane %v4285, 1
        %v4287 = vadd.f32 %v4285, %v4286
        %v4288 = vadd.f32 %v4183, %v4186
        %v4289 = vrot.slane %v4288, 4
        %v4290 = vadd.f32 %v4288, %v4289
        %v4291 = vrot.slane %v4290, 2
        %v4292 = vadd.f32 %v4290, %v4291
        %v4293 = vrot.slane %v4292, 1
        %v4294 = vadd.f32 %v4292, %v4293
        %v4295 = vadd.f32 %v4189, %v4192
        %v4296 = vrot.slane %v4295, 4
        %v4297 = vadd.f32 %v4295, %v4296
        %v4298 = vrot.slane %v4297, 2
        %v4299 = vadd.f32 %v4297, %v4298
        %v4300 = vrot.slane %v4299, 1
        %v4301 = vadd.f32 %v4299, %v4300
        %v4302 = vadd.f32 %v4195, %v4198
        %v4303 = vrot.slane %v4302, 4
        %v4304 = vadd.f32 %v4302, %v4303
        %v4305 = vrot.slane %v4304, 2
        %v4306 = vadd.f32 %v4304, %v4305
        %v4307 = vrot.slane %v4306, 1
        %v4308 = vadd.f32 %v4306, %v4307
        %v4309 = vadd.f32 %v4201, %v4204
        %v4310 = vrot.slane %v4309, 4
        %v4311 = vadd.f32 %v4309, %v4310
        %v4312 = vrot.slane %v4311, 2
        %v4313 = vadd.f32 %v4311, %v4312
        %v4314 = vrot.slane %v4313, 1
        %v4315 = vadd.f32 %v4313, %v4314
        %v4316 = vadd.f32 %v4207, %v4210
        %v4317 = vrot.slane %v4316, 4
        %v4318 = vadd.f32 %v4316, %v4317
        %v4319 = vrot.slane %v4318, 2
        %v4320 = vadd.f32 %v4318, %v4319
        %v4321 = vrot.slane %v4320, 1
        %v4322 = vadd.f32 %v4320, %v4321
        %v4323 = vmul.f32 %v888, 32.0
        %v4324 = vmul.f32 %v889, 32.0
        %v4325 = vmul.f32 %v890, 32.0
        %v4326 = vmul.f32 %v891, 32.0
        %v4327 = vmul.f32 %v892, 32.0
        %v4328 = vmul.f32 %v893, 32.0
        %v4329 = vmul.f32 %v894, 32.0
        %v4330 = vmul.f32 %v895, 32.0
        %v4331 = vmul.f32 %v896, 32.0
        %v4332 = vmul.f32 %v897, 32.0
        %v4333 = vmul.f32 %v898, 32.0
        %v4334 = vmul.f32 %v899, 32.0
        %v4335 = vmul.f32 %v900, 32.0
        %v4336 = vmul.f32 %v901, 32.0
        %v4337 = vmul.f32 %v902, 32.0
        %v4338 = vmul.f32 %v903, 32.0
        %v4339 = vrcp.pop %v4323
        %v4340 = vmul.f32 %v4217, %v4339
        %v4341 = vrcp.pop %v4324
        %v4342 = vmul.f32 %v4224, %v4341
        %v4343 = vrcp.pop %v4325
        %v4344 = vmul.f32 %v4231, %v4343
        %v4345 = vrcp.pop %v4326
        %v4346 = vmul.f32 %v4238, %v4345
        %v4347 = vrcp.pop %v4327
        %v4348 = vmul.f32 %v4245, %v4347
        %v4349 = vrcp.pop %v4328
        %v4350 = vmul.f32 %v4252, %v4349
        %v4351 = vrcp.pop %v4329
        %v4352 = vmul.f32 %v4259, %v4351
        %v4353 = vrcp.pop %v4330
        %v4354 = vmul.f32 %v4266, %v4353
        %v4355 = vrcp.pop %v4331
        %v4356 = vmul.f32 %v4273, %v4355
        %v4357 = vrcp.pop %v4332
        %v4358 = vmul.f32 %v4280, %v4357
        %v4359 = vrcp.pop %v4333
        %v4360 = vmul.f32 %v4287, %v4359
        %v4361 = vrcp.pop %v4334
        %v4362 = vmul.f32 %v4294, %v4361
        %v4363 = vrcp.pop %v4335
        %v4364 = vmul.f32 %v4301, %v4363
        %v4365 = vrcp.pop %v4336
        %v4366 = vmul.f32 %v4308, %v4365
        %v4367 = vrcp.pop %v4337
        %v4368 = vmul.f32 %v4315, %v4367
        %v4369 = vrcp.pop %v4338
        %v4370 = vmul.f32 %v4322, %v4369
        %v4371 = vlaneseq
        %v4372 = vshrl.u32 %v4371, 7
        %v4373 = vadd.s32 %v4372, 8
        %v4374 = vlaneseq
        %v4375 = vand.u32 %v4374, 127
        %vm4376 = vcmp.eq.s32.totalorder %v4372, %v4375
        %vm4377 = vcmp.eq.s32.totalorder %v4373, %v4375
        %v4378 = vsel %vm4376, 1, 0
        %v4379 = vsel %vm4377, 1, 0
        %v4380 = vcvt.s32.f32 %v4378
        %v4381 = vcvt.s32.f32 %v4379
        %4383 = vset.pattern.permute.xlu0 0
        %4384 = vperm.xlu0 %4383, %v2516
        %v4385 = vpop.permute.xlu0 %4384
        %4388 = vset.pattern.permute.xlu0 0
        %4389 = vperm.xlu0 %4388, %v2518
        %v4390 = vpop.permute.xlu0 %4389
        %4393 = vset.pattern.permute.xlu0 0
        %4394 = vperm.xlu0 %4393, %v2520
        %v4395 = vpop.permute.xlu0 %4394
        %4398 = vset.pattern.permute.xlu0 0
        %4399 = vperm.xlu0 %4398, %v2522
        %v4400 = vpop.permute.xlu0 %4399
        %4403 = vset.pattern.permute.xlu0 0
        %4404 = vperm.xlu0 %4403, %v2524
        %v4405 = vpop.permute.xlu0 %4404
        %4408 = vset.pattern.permute.xlu0 0
        %4409 = vperm.xlu0 %4408, %v2526
        %v4410 = vpop.permute.xlu0 %4409
        %4413 = vset.pattern.permute.xlu0 0
        %4414 = vperm.xlu0 %4413, %v2528
        %v4415 = vpop.permute.xlu0 %4414
        %4418 = vset.pattern.permute.xlu0 0
        %4419 = vperm.xlu0 %4418, %v2530
        %v4420 = vpop.permute.xlu0 %4419
        %4423 = vset.pattern.permute.xlu0 0
        %4424 = vperm.xlu0 %4423, %v2532
        %v4425 = vpop.permute.xlu0 %4424
        %4428 = vset.pattern.permute.xlu0 0
        %4429 = vperm.xlu0 %4428, %v2534
        %v4430 = vpop.permute.xlu0 %4429
        %4433 = vset.pattern.permute.xlu0 0
        %4434 = vperm.xlu0 %4433, %v2536
        %v4435 = vpop.permute.xlu0 %4434
        %4438 = vset.pattern.permute.xlu0 0
        %4439 = vperm.xlu0 %4438, %v2538
        %v4440 = vpop.permute.xlu0 %4439
        %4443 = vset.pattern.permute.xlu0 0
        %4444 = vperm.xlu0 %4443, %v2540
        %v4445 = vpop.permute.xlu0 %4444
        %4448 = vset.pattern.permute.xlu0 0
        %4449 = vperm.xlu0 %4448, %v2542
        %v4450 = vpop.permute.xlu0 %4449
        %4453 = vset.pattern.permute.xlu0 0
        %4454 = vperm.xlu0 %4453, %v2544
        %v4455 = vpop.permute.xlu0 %4454
        %4458 = vset.pattern.permute.xlu0 0
        %4459 = vperm.xlu0 %4458, %v2546
        %v4460 = vpop.permute.xlu0 %4459
        %4463 = vset.pattern.permute.xlu0 0
        %4464 = vperm.xlu0 %4463, %v2548
        %v4465 = vpop.permute.xlu0 %4464
        %4468 = vset.pattern.permute.xlu0 0
        %4469 = vperm.xlu0 %4468, %v2550
        %v4470 = vpop.permute.xlu0 %4469
        %4473 = vset.pattern.permute.xlu0 0
        %4474 = vperm.xlu0 %4473, %v2552
        %v4475 = vpop.permute.xlu0 %4474
        %4478 = vset.pattern.permute.xlu0 0
        %4479 = vperm.xlu0 %4478, %v2554
        %v4480 = vpop.permute.xlu0 %4479
        %4483 = vset.pattern.permute.xlu0 0
        %4484 = vperm.xlu0 %4483, %v2556
        %v4485 = vpop.permute.xlu0 %4484
        %4488 = vset.pattern.permute.xlu0 0
        %4489 = vperm.xlu0 %4488, %v2558
        %v4490 = vpop.permute.xlu0 %4489
        %4493 = vset.pattern.permute.xlu0 0
        %4494 = vperm.xlu0 %4493, %v2560
        %v4495 = vpop.permute.xlu0 %4494
        %4498 = vset.pattern.permute.xlu0 0
        %4499 = vperm.xlu0 %4498, %v2562
        %v4500 = vpop.permute.xlu0 %4499
        %4503 = vset.pattern.permute.xlu0 0
        %4504 = vperm.xlu0 %4503, %v2564
        %v4505 = vpop.permute.xlu0 %4504
        %4508 = vset.pattern.permute.xlu0 0
        %4509 = vperm.xlu0 %4508, %v2566
        %v4510 = vpop.permute.xlu0 %4509
        %4513 = vset.pattern.permute.xlu0 0
        %4514 = vperm.xlu0 %4513, %v2568
        %v4515 = vpop.permute.xlu0 %4514
        %4518 = vset.pattern.permute.xlu0 0
        %4519 = vperm.xlu0 %4518, %v2570
        %v4520 = vpop.permute.xlu0 %4519
        %4523 = vset.pattern.permute.xlu0 0
        %4524 = vperm.xlu0 %4523, %v2572
        %v4525 = vpop.permute.xlu0 %4524
        %4528 = vset.pattern.permute.xlu0 0
        %4529 = vperm.xlu0 %4528, %v2574
        %v4530 = vpop.permute.xlu0 %4529
        %4533 = vset.pattern.permute.xlu0 0
        %4534 = vperm.xlu0 %4533, %v2576
        %v4535 = vpop.permute.xlu0 %4534
        %4538 = vset.pattern.permute.xlu0 0
        %4539 = vperm.xlu0 %4538, %v2578
        %v4540 = vpop.permute.xlu0 %4539
        %v4542 = vmul.f32 %v4385, %v4380
        %v4543 = vmul.f32 %v4390, %v4381
        %v4544 = vmul.f32 %v4395, %v4380
        %v4545 = vmul.f32 %v4400, %v4381
        %v4546 = vmul.f32 %v4405, %v4380
        %v4547 = vmul.f32 %v4410, %v4381
        %v4548 = vmul.f32 %v4415, %v4380
        %v4549 = vmul.f32 %v4420, %v4381
        %v4550 = vmul.f32 %v4425, %v4380
        %v4551 = vmul.f32 %v4430, %v4381
        %v4552 = vmul.f32 %v4435, %v4380
        %v4553 = vmul.f32 %v4440, %v4381
        %v4554 = vmul.f32 %v4445, %v4380
        %v4555 = vmul.f32 %v4450, %v4381
        %v4556 = vmul.f32 %v4455, %v4380
        %v4557 = vmul.f32 %v4460, %v4381
        %v4558 = vmul.f32 %v4465, %v4380
        %v4559 = vmul.f32 %v4470, %v4381
        %v4560 = vmul.f32 %v4475, %v4380
        %v4561 = vmul.f32 %v4480, %v4381
        %v4562 = vmul.f32 %v4485, %v4380
        %v4563 = vmul.f32 %v4490, %v4381
        %v4564 = vmul.f32 %v4495, %v4380
        %v4565 = vmul.f32 %v4500, %v4381
        %v4566 = vmul.f32 %v4505, %v4380
        %v4567 = vmul.f32 %v4510, %v4381
        %v4568 = vmul.f32 %v4515, %v4380
        %v4569 = vmul.f32 %v4520, %v4381
        %v4570 = vmul.f32 %v4525, %v4380
        %v4571 = vmul.f32 %v4530, %v4381
        %v4572 = vmul.f32 %v4535, %v4380
        %v4573 = vmul.f32 %v4540, %v4381
        %vm4574 = vcmask 130048
        %v4575 = vsel %vm4574, %v4542, 0.0
        %v4576 = vsel %vm4574, %v4543, 0.0
        %v4577 = vadd.f32 %v4575, %v4576
        %v4578 = vrot.slane %v4577, 4
        %v4579 = vadd.f32 %v4577, %v4578
        %v4580 = vrot.slane %v4579, 2
        %v4581 = vadd.f32 %v4579, %v4580
        %v4582 = vrot.slane %v4581, 1
        %v4583 = vadd.f32 %v4581, %v4582
        %v4584 = vsel %vm4574, %v4544, 0.0
        %v4585 = vsel %vm4574, %v4545, 0.0
        %v4586 = vadd.f32 %v4584, %v4585
        %v4587 = vrot.slane %v4586, 4
        %v4588 = vadd.f32 %v4586, %v4587
        %v4589 = vrot.slane %v4588, 2
        %v4590 = vadd.f32 %v4588, %v4589
        %v4591 = vrot.slane %v4590, 1
        %v4592 = vadd.f32 %v4590, %v4591
        %v4593 = vsel %vm4574, %v4546, 0.0
        %v4594 = vsel %vm4574, %v4547, 0.0
        %v4595 = vadd.f32 %v4593, %v4594
        %v4596 = vrot.slane %v4595, 4
        %v4597 = vadd.f32 %v4595, %v4596
        %v4598 = vrot.slane %v4597, 2
        %v4599 = vadd.f32 %v4597, %v4598
        %v4600 = vrot.slane %v4599, 1
        %v4601 = vadd.f32 %v4599, %v4600
        %v4602 = vsel %vm4574, %v4548, 0.0
        %v4603 = vsel %vm4574, %v4549, 0.0
        %v4604 = vadd.f32 %v4602, %v4603
        %v4605 = vrot.slane %v4604, 4
        %v4606 = vadd.f32 %v4604, %v4605
        %v4607 = vrot.slane %v4606, 2
        %v4608 = vadd.f32 %v4606, %v4607
        %v4609 = vrot.slane %v4608, 1
        %v4610 = vadd.f32 %v4608, %v4609
        %v4611 = vsel %vm4574, %v4550, 0.0
        %v4612 = vsel %vm4574, %v4551, 0.0
        %v4613 = vadd.f32 %v4611, %v4612
        %v4614 = vrot.slane %v4613, 4
        %v4615 = vadd.f32 %v4613, %v4614
        %v4616 = vrot.slane %v4615, 2
        %v4617 = vadd.f32 %v4615, %v4616
        %v4618 = vrot.slane %v4617, 1
        %v4619 = vadd.f32 %v4617, %v4618
        %v4620 = vsel %vm4574, %v4552, 0.0
        %v4621 = vsel %vm4574, %v4553, 0.0
        %v4622 = vadd.f32 %v4620, %v4621
        %v4623 = vrot.slane %v4622, 4
        %v4624 = vadd.f32 %v4622, %v4623
        %v4625 = vrot.slane %v4624, 2
        %v4626 = vadd.f32 %v4624, %v4625
        %v4627 = vrot.slane %v4626, 1
        %v4628 = vadd.f32 %v4626, %v4627
        %v4629 = vsel %vm4574, %v4554, 0.0
        %v4630 = vsel %vm4574, %v4555, 0.0
        %v4631 = vadd.f32 %v4629, %v4630
        %v4632 = vrot.slane %v4631, 4
        %v4633 = vadd.f32 %v4631, %v4632
        %v4634 = vrot.slane %v4633, 2
        %v4635 = vadd.f32 %v4633, %v4634
        %v4636 = vrot.slane %v4635, 1
        %v4637 = vadd.f32 %v4635, %v4636
        %v4638 = vsel %vm4574, %v4556, 0.0
        %v4639 = vsel %vm4574, %v4557, 0.0
        %v4640 = vadd.f32 %v4638, %v4639
        %v4641 = vrot.slane %v4640, 4
        %v4642 = vadd.f32 %v4640, %v4641
        %v4643 = vrot.slane %v4642, 2
        %v4644 = vadd.f32 %v4642, %v4643
        %v4645 = vrot.slane %v4644, 1
        %v4646 = vadd.f32 %v4644, %v4645
        %v4647 = vsel %vm4574, %v4558, 0.0
        %v4648 = vsel %vm4574, %v4559, 0.0
        %v4649 = vadd.f32 %v4647, %v4648
        %v4650 = vrot.slane %v4649, 4
        %v4651 = vadd.f32 %v4649, %v4650
        %v4652 = vrot.slane %v4651, 2
        %v4653 = vadd.f32 %v4651, %v4652
        %v4654 = vrot.slane %v4653, 1
        %v4655 = vadd.f32 %v4653, %v4654
        %v4656 = vsel %vm4574, %v4560, 0.0
        %v4657 = vsel %vm4574, %v4561, 0.0
        %v4658 = vadd.f32 %v4656, %v4657
        %v4659 = vrot.slane %v4658, 4
        %v4660 = vadd.f32 %v4658, %v4659
        %v4661 = vrot.slane %v4660, 2
        %v4662 = vadd.f32 %v4660, %v4661
        %v4663 = vrot.slane %v4662, 1
        %v4664 = vadd.f32 %v4662, %v4663
        %v4665 = vsel %vm4574, %v4562, 0.0
        %v4666 = vsel %vm4574, %v4563, 0.0
        %v4667 = vadd.f32 %v4665, %v4666
        %v4668 = vrot.slane %v4667, 4
        %v4669 = vadd.f32 %v4667, %v4668
        %v4670 = vrot.slane %v4669, 2
        %v4671 = vadd.f32 %v4669, %v4670
        %v4672 = vrot.slane %v4671, 1
        %v4673 = vadd.f32 %v4671, %v4672
        %v4674 = vsel %vm4574, %v4564, 0.0
        %v4675 = vsel %vm4574, %v4565, 0.0
        %v4676 = vadd.f32 %v4674, %v4675
        %v4677 = vrot.slane %v4676, 4
        %v4678 = vadd.f32 %v4676, %v4677
        %v4679 = vrot.slane %v4678, 2
        %v4680 = vadd.f32 %v4678, %v4679
        %v4681 = vrot.slane %v4680, 1
        %v4682 = vadd.f32 %v4680, %v4681
        %v4683 = vsel %vm4574, %v4566, 0.0
        %v4684 = vsel %vm4574, %v4567, 0.0
        %v4685 = vadd.f32 %v4683, %v4684
        %v4686 = vrot.slane %v4685, 4
        %v4687 = vadd.f32 %v4685, %v4686
        %v4688 = vrot.slane %v4687, 2
        %v4689 = vadd.f32 %v4687, %v4688
        %v4690 = vrot.slane %v4689, 1
        %v4691 = vadd.f32 %v4689, %v4690
        %v4692 = vsel %vm4574, %v4568, 0.0
        %v4693 = vsel %vm4574, %v4569, 0.0
        %v4694 = vadd.f32 %v4692, %v4693
        %v4695 = vrot.slane %v4694, 4
        %v4696 = vadd.f32 %v4694, %v4695
        %v4697 = vrot.slane %v4696, 2
        %v4698 = vadd.f32 %v4696, %v4697
        %v4699 = vrot.slane %v4698, 1
        %v4700 = vadd.f32 %v4698, %v4699
        %v4701 = vsel %vm4574, %v4570, 0.0
        %v4702 = vsel %vm4574, %v4571, 0.0
        %v4703 = vadd.f32 %v4701, %v4702
        %v4704 = vrot.slane %v4703, 4
        %v4705 = vadd.f32 %v4703, %v4704
        %v4706 = vrot.slane %v4705, 2
        %v4707 = vadd.f32 %v4705, %v4706
        %v4708 = vrot.slane %v4707, 1
        %v4709 = vadd.f32 %v4707, %v4708
        %v4710 = vsel %vm4574, %v4572, 0.0
        %v4711 = vsel %vm4574, %v4573, 0.0
        %v4712 = vadd.f32 %v4710, %v4711
        %v4713 = vrot.slane %v4712, 4
        %v4714 = vadd.f32 %v4712, %v4713
        %v4715 = vrot.slane %v4714, 2
        %v4716 = vadd.f32 %v4714, %v4715
        %v4717 = vrot.slane %v4716, 1
        %v4718 = vadd.f32 %v4716, %v4717
        %v4719 = vsel %vm4574, %v615, 0.0
        %4720 = vadd.xlane.f32.xlu0 %v4719
        %v4721 = vpop.xlane.xlu0 %4720
        %v4722 = vsel %vm4574, %v616, 0.0
        %4723 = vadd.xlane.f32.xlu0 %v4722
        %v4724 = vpop.xlane.xlu0 %4723
        %v4725 = vsel %vm4574, %v617, 0.0
        %4726 = vadd.xlane.f32.xlu0 %v4725
        %v4727 = vpop.xlane.xlu0 %4726
        %v4728 = vsel %vm4574, %v618, 0.0
        %4729 = vadd.xlane.f32.xlu0 %v4728
        %v4730 = vpop.xlane.xlu0 %4729
        %v4731 = vsel %vm4574, %v619, 0.0
        %4732 = vadd.xlane.f32.xlu0 %v4731
        %v4733 = vpop.xlane.xlu0 %4732
        %v4734 = vsel %vm4574, %v620, 0.0
        %4735 = vadd.xlane.f32.xlu0 %v4734
        %v4736 = vpop.xlane.xlu0 %4735
        %v4737 = vsel %vm4574, %v621, 0.0
        %4738 = vadd.xlane.f32.xlu0 %v4737
        %v4739 = vpop.xlane.xlu0 %4738
        %v4740 = vsel %vm4574, %v622, 0.0
        %4741 = vadd.xlane.f32.xlu0 %v4740
        %v4742 = vpop.xlane.xlu0 %4741
        %v4743 = vsel %vm4574, %v623, 0.0
        %4744 = vadd.xlane.f32.xlu0 %v4743
        %v4745 = vpop.xlane.xlu0 %4744
        %v4746 = vsel %vm4574, %v624, 0.0
        %4747 = vadd.xlane.f32.xlu0 %v4746
        %v4748 = vpop.xlane.xlu0 %4747
        %v4749 = vsel %vm4574, %v625, 0.0
        %4750 = vadd.xlane.f32.xlu0 %v4749
        %v4751 = vpop.xlane.xlu0 %4750
        %v4752 = vsel %vm4574, %v626, 0.0
        %4753 = vadd.xlane.f32.xlu0 %v4752
        %v4754 = vpop.xlane.xlu0 %4753
        %v4755 = vsel %vm4574, %v627, 0.0
        %4756 = vadd.xlane.f32.xlu0 %v4755
        %v4757 = vpop.xlane.xlu0 %4756
        %v4758 = vsel %vm4574, %v628, 0.0
        %4759 = vadd.xlane.f32.xlu0 %v4758
        %v4760 = vpop.xlane.xlu0 %4759
        %v4761 = vsel %vm4574, %v629, 0.0
        %4762 = vadd.xlane.f32.xlu0 %v4761
        %v4763 = vpop.xlane.xlu0 %4762
        %v4764 = vsel %vm4574, %v630, 0.0
        %4765 = vadd.xlane.f32.xlu0 %v4764
        %v4766 = vpop.xlane.xlu0 %4765
        %v4767 = vsel %vm4574, %v631, 0.0
        %4768 = vadd.xlane.f32.xlu0 %v4767
        %v4769 = vpop.xlane.xlu0 %4768
        %v4770 = vsel %vm4574, %v632, 0.0
        %4771 = vadd.xlane.f32.xlu0 %v4770
        %v4772 = vpop.xlane.xlu0 %4771
        %v4773 = vsel %vm4574, %v633, 0.0
        %4774 = vadd.xlane.f32.xlu0 %v4773
        %v4775 = vpop.xlane.xlu0 %4774
        %v4776 = vsel %vm4574, %v634, 0.0
        %4777 = vadd.xlane.f32.xlu0 %v4776
        %v4778 = vpop.xlane.xlu0 %4777
        %v4779 = vsel %vm4574, %v635, 0.0
        %4780 = vadd.xlane.f32.xlu0 %v4779
        %v4781 = vpop.xlane.xlu0 %4780
        %v4782 = vsel %vm4574, %v636, 0.0
        %4783 = vadd.xlane.f32.xlu0 %v4782
        %v4784 = vpop.xlane.xlu0 %4783
        %v4785 = vsel %vm4574, %v637, 0.0
        %4786 = vadd.xlane.f32.xlu0 %v4785
        %v4787 = vpop.xlane.xlu0 %4786
        %v4788 = vsel %vm4574, %v638, 0.0
        %4789 = vadd.xlane.f32.xlu0 %v4788
        %v4790 = vpop.xlane.xlu0 %4789
        %v4791 = vsel %vm4574, %v639, 0.0
        %4792 = vadd.xlane.f32.xlu0 %v4791
        %v4793 = vpop.xlane.xlu0 %4792
        %v4794 = vsel %vm4574, %v640, 0.0
        %4795 = vadd.xlane.f32.xlu0 %v4794
        %v4796 = vpop.xlane.xlu0 %4795
        %v4797 = vsel %vm4574, %v641, 0.0
        %4798 = vadd.xlane.f32.xlu0 %v4797
        %v4799 = vpop.xlane.xlu0 %4798
        %v4800 = vsel %vm4574, %v642, 0.0
        %4801 = vadd.xlane.f32.xlu0 %v4800
        %v4802 = vpop.xlane.xlu0 %4801
        %v4803 = vsel %vm4574, %v643, 0.0
        %4804 = vadd.xlane.f32.xlu0 %v4803
        %v4805 = vpop.xlane.xlu0 %4804
        %v4806 = vsel %vm4574, %v644, 0.0
        %4807 = vadd.xlane.f32.xlu0 %v4806
        %v4808 = vpop.xlane.xlu0 %4807
        %v4809 = vsel %vm4574, %v645, 0.0
        %4810 = vadd.xlane.f32.xlu0 %v4809
        %v4811 = vpop.xlane.xlu0 %4810
        %v4812 = vsel %vm4574, %v646, 0.0
        %4813 = vadd.xlane.f32.xlu0 %v4812
        %v4814 = vpop.xlane.xlu0 %4813
        %v4815 = vmul.f32 %v615, %v4583
        %v4816 = vmul.f32 %v616, %v4583
        %v4817 = vmul.f32 %v617, %v4592
        %v4818 = vmul.f32 %v618, %v4592
        %v4819 = vmul.f32 %v619, %v4601
        %v4820 = vmul.f32 %v620, %v4601
        %v4821 = vmul.f32 %v621, %v4610
        %v4822 = vmul.f32 %v622, %v4610
        %v4823 = vmul.f32 %v623, %v4619
        %v4824 = vmul.f32 %v624, %v4619
        %v4825 = vmul.f32 %v625, %v4628
        %v4826 = vmul.f32 %v626, %v4628
        %v4827 = vmul.f32 %v627, %v4637
        %v4828 = vmul.f32 %v628, %v4637
        %v4829 = vmul.f32 %v629, %v4646
        %v4830 = vmul.f32 %v630, %v4646
        %v4831 = vmul.f32 %v631, %v4655
        %v4832 = vmul.f32 %v632, %v4655
        %v4833 = vmul.f32 %v633, %v4664
        %v4834 = vmul.f32 %v634, %v4664
        %v4835 = vmul.f32 %v635, %v4673
        %v4836 = vmul.f32 %v636, %v4673
        %v4837 = vmul.f32 %v637, %v4682
        %v4838 = vmul.f32 %v638, %v4682
        %v4839 = vmul.f32 %v639, %v4691
        %v4840 = vmul.f32 %v640, %v4691
        %v4841 = vmul.f32 %v641, %v4700
        %v4842 = vmul.f32 %v642, %v4700
        %v4843 = vmul.f32 %v643, %v4709
        %v4844 = vmul.f32 %v644, %v4709
        %v4845 = vmul.f32 %v645, %v4718
        %v4846 = vmul.f32 %v646, %v4718
        %v4847 = vsel %vm4574, %v4815, 0.0
        %4848 = vadd.xlane.f32.xlu0 %v4847
        %v4849 = vpop.xlane.xlu0 %4848
        %v4850 = vsel %vm4574, %v4816, 0.0
        %4851 = vadd.xlane.f32.xlu0 %v4850
        %v4852 = vpop.xlane.xlu0 %4851
        %v4853 = vsel %vm4574, %v4817, 0.0
        %4854 = vadd.xlane.f32.xlu0 %v4853
        %v4855 = vpop.xlane.xlu0 %4854
        %v4856 = vsel %vm4574, %v4818, 0.0
        %4857 = vadd.xlane.f32.xlu0 %v4856
        %v4858 = vpop.xlane.xlu0 %4857
        %v4859 = vsel %vm4574, %v4819, 0.0
        %4860 = vadd.xlane.f32.xlu0 %v4859
        %v4861 = vpop.xlane.xlu0 %4860
        %v4862 = vsel %vm4574, %v4820, 0.0
        %4863 = vadd.xlane.f32.xlu0 %v4862
        %v4864 = vpop.xlane.xlu0 %4863
        %v4865 = vsel %vm4574, %v4821, 0.0
        %4866 = vadd.xlane.f32.xlu0 %v4865
        %v4867 = vpop.xlane.xlu0 %4866
        %v4868 = vsel %vm4574, %v4822, 0.0
        %4869 = vadd.xlane.f32.xlu0 %v4868
        %v4870 = vpop.xlane.xlu0 %4869
        %v4871 = vsel %vm4574, %v4823, 0.0
        %4872 = vadd.xlane.f32.xlu0 %v4871
        %v4873 = vpop.xlane.xlu0 %4872
        %v4874 = vsel %vm4574, %v4824, 0.0
        %4875 = vadd.xlane.f32.xlu0 %v4874
        %v4876 = vpop.xlane.xlu0 %4875
        %v4877 = vsel %vm4574, %v4825, 0.0
        %4878 = vadd.xlane.f32.xlu0 %v4877
        %v4879 = vpop.xlane.xlu0 %4878
        %v4880 = vsel %vm4574, %v4826, 0.0
        %4881 = vadd.xlane.f32.xlu0 %v4880
        %v4882 = vpop.xlane.xlu0 %4881
        %v4883 = vsel %vm4574, %v4827, 0.0
        %4884 = vadd.xlane.f32.xlu0 %v4883
        %v4885 = vpop.xlane.xlu0 %4884
        %v4886 = vsel %vm4574, %v4828, 0.0
        %4887 = vadd.xlane.f32.xlu0 %v4886
        %v4888 = vpop.xlane.xlu0 %4887
        %v4889 = vsel %vm4574, %v4829, 0.0
        %4890 = vadd.xlane.f32.xlu0 %v4889
        %v4891 = vpop.xlane.xlu0 %4890
        %v4892 = vsel %vm4574, %v4830, 0.0
        %4893 = vadd.xlane.f32.xlu0 %v4892
        %v4894 = vpop.xlane.xlu0 %4893
        %v4895 = vsel %vm4574, %v4831, 0.0
        %4896 = vadd.xlane.f32.xlu0 %v4895
        %v4897 = vpop.xlane.xlu0 %4896
        %v4898 = vsel %vm4574, %v4832, 0.0
        %4899 = vadd.xlane.f32.xlu0 %v4898
        %v4900 = vpop.xlane.xlu0 %4899
        %v4901 = vsel %vm4574, %v4833, 0.0
        %4902 = vadd.xlane.f32.xlu0 %v4901
        %v4903 = vpop.xlane.xlu0 %4902
        %v4904 = vsel %vm4574, %v4834, 0.0
        %4905 = vadd.xlane.f32.xlu0 %v4904
        %v4906 = vpop.xlane.xlu0 %4905
        %v4907 = vsel %vm4574, %v4835, 0.0
        %4908 = vadd.xlane.f32.xlu0 %v4907
        %v4909 = vpop.xlane.xlu0 %4908
        %v4910 = vsel %vm4574, %v4836, 0.0
        %4911 = vadd.xlane.f32.xlu0 %v4910
        %v4912 = vpop.xlane.xlu0 %4911
        %v4913 = vsel %vm4574, %v4837, 0.0
        %4914 = vadd.xlane.f32.xlu0 %v4913
        %v4915 = vpop.xlane.xlu0 %4914
        %v4916 = vsel %vm4574, %v4838, 0.0
        %4917 = vadd.xlane.f32.xlu0 %v4916
        %v4918 = vpop.xlane.xlu0 %4917
        %v4919 = vsel %vm4574, %v4839, 0.0
        %4920 = vadd.xlane.f32.xlu0 %v4919
        %v4921 = vpop.xlane.xlu0 %4920
        %v4922 = vsel %vm4574, %v4840, 0.0
        %4923 = vadd.xlane.f32.xlu0 %v4922
        %v4924 = vpop.xlane.xlu0 %4923
        %v4925 = vsel %vm4574, %v4841, 0.0
        %4926 = vadd.xlane.f32.xlu0 %v4925
        %v4927 = vpop.xlane.xlu0 %4926
        %v4928 = vsel %vm4574, %v4842, 0.0
        %4929 = vadd.xlane.f32.xlu0 %v4928
        %v4930 = vpop.xlane.xlu0 %4929
        %v4931 = vsel %vm4574, %v4843, 0.0
        %4932 = vadd.xlane.f32.xlu0 %v4931
        %v4933 = vpop.xlane.xlu0 %4932
        %v4934 = vsel %vm4574, %v4844, 0.0
        %4935 = vadd.xlane.f32.xlu0 %v4934
        %v4936 = vpop.xlane.xlu0 %4935
        %v4937 = vsel %vm4574, %v4845, 0.0
        %4938 = vadd.xlane.f32.xlu0 %v4937
        %v4939 = vpop.xlane.xlu0 %4938
        %v4940 = vsel %vm4574, %v4846, 0.0
        %4941 = vadd.xlane.f32.xlu0 %v4940
        %v4942 = vpop.xlane.xlu0 %4941
        %v4943 = vsub.f32 %v4721, %v4849
        %v4944 = vsub.f32 %v4724, %v4852
        %v4945 = vsub.f32 %v4727, %v4855
        %v4946 = vsub.f32 %v4730, %v4858
        %v4947 = vsub.f32 %v4733, %v4861
        %v4948 = vsub.f32 %v4736, %v4864
        %v4949 = vsub.f32 %v4739, %v4867
        %v4950 = vsub.f32 %v4742, %v4870
        %v4951 = vsub.f32 %v4745, %v4873
        %v4952 = vsub.f32 %v4748, %v4876
        %v4953 = vsub.f32 %v4751, %v4879
        %v4954 = vsub.f32 %v4754, %v4882
        %v4955 = vsub.f32 %v4757, %v4885
        %v4956 = vsub.f32 %v4760, %v4888
        %v4957 = vsub.f32 %v4763, %v4891
        %v4958 = vsub.f32 %v4766, %v4894
        %v4959 = vsub.f32 %v4769, %v4897
        %v4960 = vsub.f32 %v4772, %v4900
        %v4961 = vsub.f32 %v4775, %v4903
        %v4962 = vsub.f32 %v4778, %v4906
        %v4963 = vsub.f32 %v4781, %v4909
        %v4964 = vsub.f32 %v4784, %v4912
        %v4965 = vsub.f32 %v4787, %v4915
        %v4966 = vsub.f32 %v4790, %v4918
        %v4967 = vsub.f32 %v4793, %v4921
        %v4968 = vsub.f32 %v4796, %v4924
        %v4969 = vsub.f32 %v4799, %v4927
        %v4970 = vsub.f32 %v4802, %v4930
        %v4971 = vsub.f32 %v4805, %v4933
        %v4972 = vsub.f32 %v4808, %v4936
        %v4973 = vsub.f32 %v4811, %v4939
        %v4974 = vsub.f32 %v4814, %v4942
        %v4975 = vmul.f32 %v2516, %v4849
        %v4976 = vmul.f32 %v2518, %v4852
        %v4977 = vmul.f32 %v2520, %v4855
        %v4978 = vmul.f32 %v2522, %v4858
        %v4979 = vmul.f32 %v2524, %v4861
        %v4980 = vmul.f32 %v2526, %v4864
        %v4981 = vmul.f32 %v2528, %v4867
        %v4982 = vmul.f32 %v2530, %v4870
        %v4983 = vmul.f32 %v2532, %v4873
        %v4984 = vmul.f32 %v2534, %v4876
        %v4985 = vmul.f32 %v2536, %v4879
        %v4986 = vmul.f32 %v2538, %v4882
        %v4987 = vmul.f32 %v2540, %v4885
        %v4988 = vmul.f32 %v2542, %v4888
        %v4989 = vmul.f32 %v2544, %v4891
        %v4990 = vmul.f32 %v2546, %v4894
        %v4991 = vmul.f32 %v2548, %v4897
        %v4992 = vmul.f32 %v2550, %v4900
        %v4993 = vmul.f32 %v2552, %v4903
        %v4994 = vmul.f32 %v2554, %v4906
        %v4995 = vmul.f32 %v2556, %v4909
        %v4996 = vmul.f32 %v2558, %v4912
        %v4997 = vmul.f32 %v2560, %v4915
        %v4998 = vmul.f32 %v2562, %v4918
        %v4999 = vmul.f32 %v2564, %v4921
        %v5000 = vmul.f32 %v2566, %v4924
        %v5001 = vmul.f32 %v2568, %v4927
        %v5002 = vmul.f32 %v2570, %v4930
        %v5003 = vmul.f32 %v2572, %v4933
        %v5004 = vmul.f32 %v2574, %v4936
        %v5005 = vmul.f32 %v2576, %v4939
        %v5006 = vmul.f32 %v2578, %v4942
        %v5007 = vsel %vm743, %v4975, 0.0
        %v5008 = vsel %vm743, %v4976, 0.0
        %v5009 = vadd.f32 %v5007, %v5008
        %v5010 = vrot.slane %v5009, 4
        %v5011 = vadd.f32 %v5009, %v5010
        %v5012 = vrot.slane %v5011, 2
        %v5013 = vadd.f32 %v5011, %v5012
        %v5014 = vrot.slane %v5013, 1
        %v5015 = vadd.f32 %v5013, %v5014
        %v5016 = vsel %vm743, %v4977, 0.0
        %v5017 = vsel %vm743, %v4978, 0.0
        %v5018 = vadd.f32 %v5016, %v5017
        %v5019 = vrot.slane %v5018, 4
        %v5020 = vadd.f32 %v5018, %v5019
        %v5021 = vrot.slane %v5020, 2
        %v5022 = vadd.f32 %v5020, %v5021
        %v5023 = vrot.slane %v5022, 1
        %v5024 = vadd.f32 %v5022, %v5023
        %v5025 = vsel %vm743, %v4979, 0.0
        %v5026 = vsel %vm743, %v4980, 0.0
        %v5027 = vadd.f32 %v5025, %v5026
        %v5028 = vrot.slane %v5027, 4
        %v5029 = vadd.f32 %v5027, %v5028
        %v5030 = vrot.slane %v5029, 2
        %v5031 = vadd.f32 %v5029, %v5030
        %v5032 = vrot.slane %v5031, 1
        %v5033 = vadd.f32 %v5031, %v5032
        %v5034 = vsel %vm743, %v4981, 0.0
        %v5035 = vsel %vm743, %v4982, 0.0
        %v5036 = vadd.f32 %v5034, %v5035
        %v5037 = vrot.slane %v5036, 4
        %v5038 = vadd.f32 %v5036, %v5037
        %v5039 = vrot.slane %v5038, 2
        %v5040 = vadd.f32 %v5038, %v5039
        %v5041 = vrot.slane %v5040, 1
        %v5042 = vadd.f32 %v5040, %v5041
        %v5043 = vsel %vm743, %v4983, 0.0
        %v5044 = vsel %vm743, %v4984, 0.0
        %v5045 = vadd.f32 %v5043, %v5044
        %v5046 = vrot.slane %v5045, 4
        %v5047 = vadd.f32 %v5045, %v5046
        %v5048 = vrot.slane %v5047, 2
        %v5049 = vadd.f32 %v5047, %v5048
        %v5050 = vrot.slane %v5049, 1
        %v5051 = vadd.f32 %v5049, %v5050
        %v5052 = vsel %vm743, %v4985, 0.0
        %v5053 = vsel %vm743, %v4986, 0.0
        %v5054 = vadd.f32 %v5052, %v5053
        %v5055 = vrot.slane %v5054, 4
        %v5056 = vadd.f32 %v5054, %v5055
        %v5057 = vrot.slane %v5056, 2
        %v5058 = vadd.f32 %v5056, %v5057
        %v5059 = vrot.slane %v5058, 1
        %v5060 = vadd.f32 %v5058, %v5059
        %v5061 = vsel %vm743, %v4987, 0.0
        %v5062 = vsel %vm743, %v4988, 0.0
        %v5063 = vadd.f32 %v5061, %v5062
        %v5064 = vrot.slane %v5063, 4
        %v5065 = vadd.f32 %v5063, %v5064
        %v5066 = vrot.slane %v5065, 2
        %v5067 = vadd.f32 %v5065, %v5066
        %v5068 = vrot.slane %v5067, 1
        %v5069 = vadd.f32 %v5067, %v5068
        %v5070 = vsel %vm743, %v4989, 0.0
        %v5071 = vsel %vm743, %v4990, 0.0
        %v5072 = vadd.f32 %v5070, %v5071
        %v5073 = vrot.slane %v5072, 4
        %v5074 = vadd.f32 %v5072, %v5073
        %v5075 = vrot.slane %v5074, 2
        %v5076 = vadd.f32 %v5074, %v5075
        %v5077 = vrot.slane %v5076, 1
        %v5078 = vadd.f32 %v5076, %v5077
        %v5079 = vsel %vm743, %v4991, 0.0
        %v5080 = vsel %vm743, %v4992, 0.0
        %v5081 = vadd.f32 %v5079, %v5080
        %v5082 = vrot.slane %v5081, 4
        %v5083 = vadd.f32 %v5081, %v5082
        %v5084 = vrot.slane %v5083, 2
        %v5085 = vadd.f32 %v5083, %v5084
        %v5086 = vrot.slane %v5085, 1
        %v5087 = vadd.f32 %v5085, %v5086
        %v5088 = vsel %vm743, %v4993, 0.0
        %v5089 = vsel %vm743, %v4994, 0.0
        %v5090 = vadd.f32 %v5088, %v5089
        %v5091 = vrot.slane %v5090, 4
        %v5092 = vadd.f32 %v5090, %v5091
        %v5093 = vrot.slane %v5092, 2
        %v5094 = vadd.f32 %v5092, %v5093
        %v5095 = vrot.slane %v5094, 1
        %v5096 = vadd.f32 %v5094, %v5095
        %v5097 = vsel %vm743, %v4995, 0.0
        %v5098 = vsel %vm743, %v4996, 0.0
        %v5099 = vadd.f32 %v5097, %v5098
        %v5100 = vrot.slane %v5099, 4
        %v5101 = vadd.f32 %v5099, %v5100
        %v5102 = vrot.slane %v5101, 2
        %v5103 = vadd.f32 %v5101, %v5102
        %v5104 = vrot.slane %v5103, 1
        %v5105 = vadd.f32 %v5103, %v5104
        %v5106 = vsel %vm743, %v4997, 0.0
        %v5107 = vsel %vm743, %v4998, 0.0
        %v5108 = vadd.f32 %v5106, %v5107
        %v5109 = vrot.slane %v5108, 4
        %v5110 = vadd.f32 %v5108, %v5109
        %v5111 = vrot.slane %v5110, 2
        %v5112 = vadd.f32 %v5110, %v5111
        %v5113 = vrot.slane %v5112, 1
        %v5114 = vadd.f32 %v5112, %v5113
        %v5115 = vsel %vm743, %v4999, 0.0
        %v5116 = vsel %vm743, %v5000, 0.0
        %v5117 = vadd.f32 %v5115, %v5116
        %v5118 = vrot.slane %v5117, 4
        %v5119 = vadd.f32 %v5117, %v5118
        %v5120 = vrot.slane %v5119, 2
        %v5121 = vadd.f32 %v5119, %v5120
        %v5122 = vrot.slane %v5121, 1
        %v5123 = vadd.f32 %v5121, %v5122
        %v5124 = vsel %vm743, %v5001, 0.0
        %v5125 = vsel %vm743, %v5002, 0.0
        %v5126 = vadd.f32 %v5124, %v5125
        %v5127 = vrot.slane %v5126, 4
        %v5128 = vadd.f32 %v5126, %v5127
        %v5129 = vrot.slane %v5128, 2
        %v5130 = vadd.f32 %v5128, %v5129
        %v5131 = vrot.slane %v5130, 1
        %v5132 = vadd.f32 %v5130, %v5131
        %v5133 = vsel %vm743, %v5003, 0.0
        %v5134 = vsel %vm743, %v5004, 0.0
        %v5135 = vadd.f32 %v5133, %v5134
        %v5136 = vrot.slane %v5135, 4
        %v5137 = vadd.f32 %v5135, %v5136
        %v5138 = vrot.slane %v5137, 2
        %v5139 = vadd.f32 %v5137, %v5138
        %v5140 = vrot.slane %v5139, 1
        %v5141 = vadd.f32 %v5139, %v5140
        %v5142 = vsel %vm743, %v5005, 0.0
        %v5143 = vsel %vm743, %v5006, 0.0
        %v5144 = vadd.f32 %v5142, %v5143
        %v5145 = vrot.slane %v5144, 4
        %v5146 = vadd.f32 %v5144, %v5145
        %v5147 = vrot.slane %v5146, 2
        %v5148 = vadd.f32 %v5146, %v5147
        %v5149 = vrot.slane %v5148, 1
        %v5150 = vadd.f32 %v5148, %v5149
        %v5151 = vmul.f32 %v2516, %v4943
        %v5152 = vmul.f32 %v2518, %v4944
        %v5153 = vmul.f32 %v2520, %v4945
        %v5154 = vmul.f32 %v2522, %v4946
        %v5155 = vmul.f32 %v2524, %v4947
        %v5156 = vmul.f32 %v2526, %v4948
        %v5157 = vmul.f32 %v2528, %v4949
        %v5158 = vmul.f32 %v2530, %v4950
        %v5159 = vmul.f32 %v2532, %v4951
        %v5160 = vmul.f32 %v2534, %v4952
        %v5161 = vmul.f32 %v2536, %v4953
        %v5162 = vmul.f32 %v2538, %v4954
        %v5163 = vmul.f32 %v2540, %v4955
        %v5164 = vmul.f32 %v2542, %v4956
        %v5165 = vmul.f32 %v2544, %v4957
        %v5166 = vmul.f32 %v2546, %v4958
        %v5167 = vmul.f32 %v2548, %v4959
        %v5168 = vmul.f32 %v2550, %v4960
        %v5169 = vmul.f32 %v2552, %v4961
        %v5170 = vmul.f32 %v2554, %v4962
        %v5171 = vmul.f32 %v2556, %v4963
        %v5172 = vmul.f32 %v2558, %v4964
        %v5173 = vmul.f32 %v2560, %v4965
        %v5174 = vmul.f32 %v2562, %v4966
        %v5175 = vmul.f32 %v2564, %v4967
        %v5176 = vmul.f32 %v2566, %v4968
        %v5177 = vmul.f32 %v2568, %v4969
        %v5178 = vmul.f32 %v2570, %v4970
        %v5179 = vmul.f32 %v2572, %v4971
        %v5180 = vmul.f32 %v2574, %v4972
        %v5181 = vmul.f32 %v2576, %v4973
        %v5182 = vmul.f32 %v2578, %v4974
        %v5183 = vsel %vm743, %v5151, 0.0
        %v5184 = vsel %vm743, %v5152, 0.0
        %v5185 = vadd.f32 %v5183, %v5184
        %v5186 = vrot.slane %v5185, 4
        %v5187 = vadd.f32 %v5185, %v5186
        %v5188 = vrot.slane %v5187, 2
        %v5189 = vadd.f32 %v5187, %v5188
        %v5190 = vrot.slane %v5189, 1
        %v5191 = vadd.f32 %v5189, %v5190
        %v5192 = vsel %vm743, %v5153, 0.0
        %v5193 = vsel %vm743, %v5154, 0.0
        %v5194 = vadd.f32 %v5192, %v5193
        %v5195 = vrot.slane %v5194, 4
        %v5196 = vadd.f32 %v5194, %v5195
        %v5197 = vrot.slane %v5196, 2
        %v5198 = vadd.f32 %v5196, %v5197
        %v5199 = vrot.slane %v5198, 1
        %v5200 = vadd.f32 %v5198, %v5199
        %v5201 = vsel %vm743, %v5155, 0.0
        %v5202 = vsel %vm743, %v5156, 0.0
        %v5203 = vadd.f32 %v5201, %v5202
        %v5204 = vrot.slane %v5203, 4
        %v5205 = vadd.f32 %v5203, %v5204
        %v5206 = vrot.slane %v5205, 2
        %v5207 = vadd.f32 %v5205, %v5206
        %v5208 = vrot.slane %v5207, 1
        %v5209 = vadd.f32 %v5207, %v5208
        %v5210 = vsel %vm743, %v5157, 0.0
        %v5211 = vsel %vm743, %v5158, 0.0
        %v5212 = vadd.f32 %v5210, %v5211
        %v5213 = vrot.slane %v5212, 4
        %v5214 = vadd.f32 %v5212, %v5213
        %v5215 = vrot.slane %v5214, 2
        %v5216 = vadd.f32 %v5214, %v5215
        %v5217 = vrot.slane %v5216, 1
        %v5218 = vadd.f32 %v5216, %v5217
        %v5219 = vsel %vm743, %v5159, 0.0
        %v5220 = vsel %vm743, %v5160, 0.0
        %v5221 = vadd.f32 %v5219, %v5220
        %v5222 = vrot.slane %v5221, 4
        %v5223 = vadd.f32 %v5221, %v5222
        %v5224 = vrot.slane %v5223, 2
        %v5225 = vadd.f32 %v5223, %v5224
        %v5226 = vrot.slane %v5225, 1
        %v5227 = vadd.f32 %v5225, %v5226
        %v5228 = vsel %vm743, %v5161, 0.0
        %v5229 = vsel %vm743, %v5162, 0.0
        %v5230 = vadd.f32 %v5228, %v5229
        %v5231 = vrot.slane %v5230, 4
        %v5232 = vadd.f32 %v5230, %v5231
        %v5233 = vrot.slane %v5232, 2
        %v5234 = vadd.f32 %v5232, %v5233
        %v5235 = vrot.slane %v5234, 1
        %v5236 = vadd.f32 %v5234, %v5235
        %v5237 = vsel %vm743, %v5163, 0.0
        %v5238 = vsel %vm743, %v5164, 0.0
        %v5239 = vadd.f32 %v5237, %v5238
        %v5240 = vrot.slane %v5239, 4
        %v5241 = vadd.f32 %v5239, %v5240
        %v5242 = vrot.slane %v5241, 2
        %v5243 = vadd.f32 %v5241, %v5242
        %v5244 = vrot.slane %v5243, 1
        %v5245 = vadd.f32 %v5243, %v5244
        %v5246 = vsel %vm743, %v5165, 0.0
        %v5247 = vsel %vm743, %v5166, 0.0
        %v5248 = vadd.f32 %v5246, %v5247
        %v5249 = vrot.slane %v5248, 4
        %v5250 = vadd.f32 %v5248, %v5249
        %v5251 = vrot.slane %v5250, 2
        %v5252 = vadd.f32 %v5250, %v5251
        %v5253 = vrot.slane %v5252, 1
        %v5254 = vadd.f32 %v5252, %v5253
        %v5255 = vsel %vm743, %v5167, 0.0
        %v5256 = vsel %vm743, %v5168, 0.0
        %v5257 = vadd.f32 %v5255, %v5256
        %v5258 = vrot.slane %v5257, 4
        %v5259 = vadd.f32 %v5257, %v5258
        %v5260 = vrot.slane %v5259, 2
        %v5261 = vadd.f32 %v5259, %v5260
        %v5262 = vrot.slane %v5261, 1
        %v5263 = vadd.f32 %v5261, %v5262
        %v5264 = vsel %vm743, %v5169, 0.0
        %v5265 = vsel %vm743, %v5170, 0.0
        %v5266 = vadd.f32 %v5264, %v5265
        %v5267 = vrot.slane %v5266, 4
        %v5268 = vadd.f32 %v5266, %v5267
        %v5269 = vrot.slane %v5268, 2
        %v5270 = vadd.f32 %v5268, %v5269
        %v5271 = vrot.slane %v5270, 1
        %v5272 = vadd.f32 %v5270, %v5271
        %v5273 = vsel %vm743, %v5171, 0.0
        %v5274 = vsel %vm743, %v5172, 0.0
        %v5275 = vadd.f32 %v5273, %v5274
        %v5276 = vrot.slane %v5275, 4
        %v5277 = vadd.f32 %v5275, %v5276
        %v5278 = vrot.slane %v5277, 2
        %v5279 = vadd.f32 %v5277, %v5278
        %v5280 = vrot.slane %v5279, 1
        %v5281 = vadd.f32 %v5279, %v5280
        %v5282 = vsel %vm743, %v5173, 0.0
        %v5283 = vsel %vm743, %v5174, 0.0
        %v5284 = vadd.f32 %v5282, %v5283
        %v5285 = vrot.slane %v5284, 4
        %v5286 = vadd.f32 %v5284, %v5285
        %v5287 = vrot.slane %v5286, 2
        %v5288 = vadd.f32 %v5286, %v5287
        %v5289 = vrot.slane %v5288, 1
        %v5290 = vadd.f32 %v5288, %v5289
        %v5291 = vsel %vm743, %v5175, 0.0
        %v5292 = vsel %vm743, %v5176, 0.0
        %v5293 = vadd.f32 %v5291, %v5292
        %v5294 = vrot.slane %v5293, 4
        %v5295 = vadd.f32 %v5293, %v5294
        %v5296 = vrot.slane %v5295, 2
        %v5297 = vadd.f32 %v5295, %v5296
        %v5298 = vrot.slane %v5297, 1
        %v5299 = vadd.f32 %v5297, %v5298
        %v5300 = vsel %vm743, %v5177, 0.0
        %v5301 = vsel %vm743, %v5178, 0.0
        %v5302 = vadd.f32 %v5300, %v5301
        %v5303 = vrot.slane %v5302, 4
        %v5304 = vadd.f32 %v5302, %v5303
        %v5305 = vrot.slane %v5304, 2
        %v5306 = vadd.f32 %v5304, %v5305
        %v5307 = vrot.slane %v5306, 1
        %v5308 = vadd.f32 %v5306, %v5307
        %v5309 = vsel %vm743, %v5179, 0.0
        %v5310 = vsel %vm743, %v5180, 0.0
        %v5311 = vadd.f32 %v5309, %v5310
        %v5312 = vrot.slane %v5311, 4
        %v5313 = vadd.f32 %v5311, %v5312
        %v5314 = vrot.slane %v5313, 2
        %v5315 = vadd.f32 %v5313, %v5314
        %v5316 = vrot.slane %v5315, 1
        %v5317 = vadd.f32 %v5315, %v5316
        %v5318 = vsel %vm743, %v5181, 0.0
        %v5319 = vsel %vm743, %v5182, 0.0
        %v5320 = vadd.f32 %v5318, %v5319
        %v5321 = vrot.slane %v5320, 4
        %v5322 = vadd.f32 %v5320, %v5321
        %v5323 = vrot.slane %v5322, 2
        %v5324 = vadd.f32 %v5322, %v5323
        %v5325 = vrot.slane %v5324, 1
        %v5326 = vadd.f32 %v5324, %v5325
        %v5327 = vmul.f32 %v2579, %v4849
        %v5328 = vmul.f32 %v2580, %v4852
        %v5329 = vmul.f32 %v2581, %v4855
        %v5330 = vmul.f32 %v2582, %v4858
        %v5331 = vmul.f32 %v2583, %v4861
        %v5332 = vmul.f32 %v2584, %v4864
        %v5333 = vmul.f32 %v2585, %v4867
        %v5334 = vmul.f32 %v2586, %v4870
        %v5335 = vmul.f32 %v2587, %v4873
        %v5336 = vmul.f32 %v2588, %v4876
        %v5337 = vmul.f32 %v2589, %v4879
        %v5338 = vmul.f32 %v2590, %v4882
        %v5339 = vmul.f32 %v2591, %v4885
        %v5340 = vmul.f32 %v2592, %v4888
        %v5341 = vmul.f32 %v2593, %v4891
        %v5342 = vmul.f32 %v2594, %v4894
        %v5343 = vmul.f32 %v2595, %v4897
        %v5344 = vmul.f32 %v2596, %v4900
        %v5345 = vmul.f32 %v2597, %v4903
        %v5346 = vmul.f32 %v2598, %v4906
        %v5347 = vmul.f32 %v2599, %v4909
        %v5348 = vmul.f32 %v2600, %v4912
        %v5349 = vmul.f32 %v2601, %v4915
        %v5350 = vmul.f32 %v2602, %v4918
        %v5351 = vmul.f32 %v2603, %v4921
        %v5352 = vmul.f32 %v2604, %v4924
        %v5353 = vmul.f32 %v2605, %v4927
        %v5354 = vmul.f32 %v2606, %v4930
        %v5355 = vmul.f32 %v2607, %v4933
        %v5356 = vmul.f32 %v2608, %v4936
        %v5357 = vmul.f32 %v2609, %v4939
        %v5358 = vmul.f32 %v2610, %v4942
        %v5359 = vsel %vm743, %v5327, 0.0
        %v5360 = vsel %vm743, %v5328, 0.0
        %v5361 = vadd.f32 %v5359, %v5360
        %v5362 = vrot.slane %v5361, 4
        %v5363 = vadd.f32 %v5361, %v5362
        %v5364 = vrot.slane %v5363, 2
        %v5365 = vadd.f32 %v5363, %v5364
        %v5366 = vrot.slane %v5365, 1
        %v5367 = vadd.f32 %v5365, %v5366
        %v5368 = vsel %vm743, %v5329, 0.0
        %v5369 = vsel %vm743, %v5330, 0.0
        %v5370 = vadd.f32 %v5368, %v5369
        %v5371 = vrot.slane %v5370, 4
        %v5372 = vadd.f32 %v5370, %v5371
        %v5373 = vrot.slane %v5372, 2
        %v5374 = vadd.f32 %v5372, %v5373
        %v5375 = vrot.slane %v5374, 1
        %v5376 = vadd.f32 %v5374, %v5375
        %v5377 = vsel %vm743, %v5331, 0.0
        %v5378 = vsel %vm743, %v5332, 0.0
        %v5379 = vadd.f32 %v5377, %v5378
        %v5380 = vrot.slane %v5379, 4
        %v5381 = vadd.f32 %v5379, %v5380
        %v5382 = vrot.slane %v5381, 2
        %v5383 = vadd.f32 %v5381, %v5382
        %v5384 = vrot.slane %v5383, 1
        %v5385 = vadd.f32 %v5383, %v5384
        %v5386 = vsel %vm743, %v5333, 0.0
        %v5387 = vsel %vm743, %v5334, 0.0
        %v5388 = vadd.f32 %v5386, %v5387
        %v5389 = vrot.slane %v5388, 4
        %v5390 = vadd.f32 %v5388, %v5389
        %v5391 = vrot.slane %v5390, 2
        %v5392 = vadd.f32 %v5390, %v5391
        %v5393 = vrot.slane %v5392, 1
        %v5394 = vadd.f32 %v5392, %v5393
        %v5395 = vsel %vm743, %v5335, 0.0
        %v5396 = vsel %vm743, %v5336, 0.0
        %v5397 = vadd.f32 %v5395, %v5396
        %v5398 = vrot.slane %v5397, 4
        %v5399 = vadd.f32 %v5397, %v5398
        %v5400 = vrot.slane %v5399, 2
        %v5401 = vadd.f32 %v5399, %v5400
        %v5402 = vrot.slane %v5401, 1
        %v5403 = vadd.f32 %v5401, %v5402
        %v5404 = vsel %vm743, %v5337, 0.0
        %v5405 = vsel %vm743, %v5338, 0.0
        %v5406 = vadd.f32 %v5404, %v5405
        %v5407 = vrot.slane %v5406, 4
        %v5408 = vadd.f32 %v5406, %v5407
        %v5409 = vrot.slane %v5408, 2
        %v5410 = vadd.f32 %v5408, %v5409
        %v5411 = vrot.slane %v5410, 1
        %v5412 = vadd.f32 %v5410, %v5411
        %v5413 = vsel %vm743, %v5339, 0.0
        %v5414 = vsel %vm743, %v5340, 0.0
        %v5415 = vadd.f32 %v5413, %v5414
        %v5416 = vrot.slane %v5415, 4
        %v5417 = vadd.f32 %v5415, %v5416
        %v5418 = vrot.slane %v5417, 2
        %v5419 = vadd.f32 %v5417, %v5418
        %v5420 = vrot.slane %v5419, 1
        %v5421 = vadd.f32 %v5419, %v5420
        %v5422 = vsel %vm743, %v5341, 0.0
        %v5423 = vsel %vm743, %v5342, 0.0
        %v5424 = vadd.f32 %v5422, %v5423
        %v5425 = vrot.slane %v5424, 4
        %v5426 = vadd.f32 %v5424, %v5425
        %v5427 = vrot.slane %v5426, 2
        %v5428 = vadd.f32 %v5426, %v5427
        %v5429 = vrot.slane %v5428, 1
        %v5430 = vadd.f32 %v5428, %v5429
        %v5431 = vsel %vm743, %v5343, 0.0
        %v5432 = vsel %vm743, %v5344, 0.0
        %v5433 = vadd.f32 %v5431, %v5432
        %v5434 = vrot.slane %v5433, 4
        %v5435 = vadd.f32 %v5433, %v5434
        %v5436 = vrot.slane %v5435, 2
        %v5437 = vadd.f32 %v5435, %v5436
        %v5438 = vrot.slane %v5437, 1
        %v5439 = vadd.f32 %v5437, %v5438
        %v5440 = vsel %vm743, %v5345, 0.0
        %v5441 = vsel %vm743, %v5346, 0.0
        %v5442 = vadd.f32 %v5440, %v5441
        %v5443 = vrot.slane %v5442, 4
        %v5444 = vadd.f32 %v5442, %v5443
        %v5445 = vrot.slane %v5444, 2
        %v5446 = vadd.f32 %v5444, %v5445
        %v5447 = vrot.slane %v5446, 1
        %v5448 = vadd.f32 %v5446, %v5447
        %v5449 = vsel %vm743, %v5347, 0.0
        %v5450 = vsel %vm743, %v5348, 0.0
        %v5451 = vadd.f32 %v5449, %v5450
        %v5452 = vrot.slane %v5451, 4
        %v5453 = vadd.f32 %v5451, %v5452
        %v5454 = vrot.slane %v5453, 2
        %v5455 = vadd.f32 %v5453, %v5454
        %v5456 = vrot.slane %v5455, 1
        %v5457 = vadd.f32 %v5455, %v5456
        %v5458 = vsel %vm743, %v5349, 0.0
        %v5459 = vsel %vm743, %v5350, 0.0
        %v5460 = vadd.f32 %v5458, %v5459
        %v5461 = vrot.slane %v5460, 4
        %v5462 = vadd.f32 %v5460, %v5461
        %v5463 = vrot.slane %v5462, 2
        %v5464 = vadd.f32 %v5462, %v5463
        %v5465 = vrot.slane %v5464, 1
        %v5466 = vadd.f32 %v5464, %v5465
        %v5467 = vsel %vm743, %v5351, 0.0
        %v5468 = vsel %vm743, %v5352, 0.0
        %v5469 = vadd.f32 %v5467, %v5468
        %v5470 = vrot.slane %v5469, 4
        %v5471 = vadd.f32 %v5469, %v5470
        %v5472 = vrot.slane %v5471, 2
        %v5473 = vadd.f32 %v5471, %v5472
        %v5474 = vrot.slane %v5473, 1
        %v5475 = vadd.f32 %v5473, %v5474
        %v5476 = vsel %vm743, %v5353, 0.0
        %v5477 = vsel %vm743, %v5354, 0.0
        %v5478 = vadd.f32 %v5476, %v5477
        %v5479 = vrot.slane %v5478, 4
        %v5480 = vadd.f32 %v5478, %v5479
        %v5481 = vrot.slane %v5480, 2
        %v5482 = vadd.f32 %v5480, %v5481
        %v5483 = vrot.slane %v5482, 1
        %v5484 = vadd.f32 %v5482, %v5483
        %v5485 = vsel %vm743, %v5355, 0.0
        %v5486 = vsel %vm743, %v5356, 0.0
        %v5487 = vadd.f32 %v5485, %v5486
        %v5488 = vrot.slane %v5487, 4
        %v5489 = vadd.f32 %v5487, %v5488
        %v5490 = vrot.slane %v5489, 2
        %v5491 = vadd.f32 %v5489, %v5490
        %v5492 = vrot.slane %v5491, 1
        %v5493 = vadd.f32 %v5491, %v5492
        %v5494 = vsel %vm743, %v5357, 0.0
        %v5495 = vsel %vm743, %v5358, 0.0
        %v5496 = vadd.f32 %v5494, %v5495
        %v5497 = vrot.slane %v5496, 4
        %v5498 = vadd.f32 %v5496, %v5497
        %v5499 = vrot.slane %v5498, 2
        %v5500 = vadd.f32 %v5498, %v5499
        %v5501 = vrot.slane %v5500, 1
        %v5502 = vadd.f32 %v5500, %v5501
        %v5503 = vmul.f32 %v2579, %v4943
        %v5504 = vmul.f32 %v2580, %v4944
        %v5505 = vmul.f32 %v2581, %v4945
        %v5506 = vmul.f32 %v2582, %v4946
        %v5507 = vmul.f32 %v2583, %v4947
        %v5508 = vmul.f32 %v2584, %v4948
        %v5509 = vmul.f32 %v2585, %v4949
        %v5510 = vmul.f32 %v2586, %v4950
        %v5511 = vmul.f32 %v2587, %v4951
        %v5512 = vmul.f32 %v2588, %v4952
        %v5513 = vmul.f32 %v2589, %v4953
        %v5514 = vmul.f32 %v2590, %v4954
        %v5515 = vmul.f32 %v2591, %v4955
        %v5516 = vmul.f32 %v2592, %v4956
        %v5517 = vmul.f32 %v2593, %v4957
        %v5518 = vmul.f32 %v2594, %v4958
        %v5519 = vmul.f32 %v2595, %v4959
        %v5520 = vmul.f32 %v2596, %v4960
        %v5521 = vmul.f32 %v2597, %v4961
        %v5522 = vmul.f32 %v2598, %v4962
        %v5523 = vmul.f32 %v2599, %v4963
        %v5524 = vmul.f32 %v2600, %v4964
        %v5525 = vmul.f32 %v2601, %v4965
        %v5526 = vmul.f32 %v2602, %v4966
        %v5527 = vmul.f32 %v2603, %v4967
        %v5528 = vmul.f32 %v2604, %v4968
        %v5529 = vmul.f32 %v2605, %v4969
        %v5530 = vmul.f32 %v2606, %v4970
        %v5531 = vmul.f32 %v2607, %v4971
        %v5532 = vmul.f32 %v2608, %v4972
        %v5533 = vmul.f32 %v2609, %v4973
        %v5534 = vmul.f32 %v2610, %v4974
        %v5535 = vsel %vm743, %v5503, 0.0
        %v5536 = vsel %vm743, %v5504, 0.0
        %v5537 = vadd.f32 %v5535, %v5536
        %v5538 = vrot.slane %v5537, 4
        %v5539 = vadd.f32 %v5537, %v5538
        %v5540 = vrot.slane %v5539, 2
        %v5541 = vadd.f32 %v5539, %v5540
        %v5542 = vrot.slane %v5541, 1
        %v5543 = vadd.f32 %v5541, %v5542
        %v5544 = vsel %vm743, %v5505, 0.0
        %v5545 = vsel %vm743, %v5506, 0.0
        %v5546 = vadd.f32 %v5544, %v5545
        %v5547 = vrot.slane %v5546, 4
        %v5548 = vadd.f32 %v5546, %v5547
        %v5549 = vrot.slane %v5548, 2
        %v5550 = vadd.f32 %v5548, %v5549
        %v5551 = vrot.slane %v5550, 1
        %v5552 = vadd.f32 %v5550, %v5551
        %v5553 = vsel %vm743, %v5507, 0.0
        %v5554 = vsel %vm743, %v5508, 0.0
        %v5555 = vadd.f32 %v5553, %v5554
        %v5556 = vrot.slane %v5555, 4
        %v5557 = vadd.f32 %v5555, %v5556
        %v5558 = vrot.slane %v5557, 2
        %v5559 = vadd.f32 %v5557, %v5558
        %v5560 = vrot.slane %v5559, 1
        %v5561 = vadd.f32 %v5559, %v5560
        %v5562 = vsel %vm743, %v5509, 0.0
        %v5563 = vsel %vm743, %v5510, 0.0
        %v5564 = vadd.f32 %v5562, %v5563
        %v5565 = vrot.slane %v5564, 4
        %v5566 = vadd.f32 %v5564, %v5565
        %v5567 = vrot.slane %v5566, 2
        %v5568 = vadd.f32 %v5566, %v5567
        %v5569 = vrot.slane %v5568, 1
        %v5570 = vadd.f32 %v5568, %v5569
        %v5571 = vsel %vm743, %v5511, 0.0
        %v5572 = vsel %vm743, %v5512, 0.0
        %v5573 = vadd.f32 %v5571, %v5572
        %v5574 = vrot.slane %v5573, 4
        %v5575 = vadd.f32 %v5573, %v5574
        %v5576 = vrot.slane %v5575, 2
        %v5577 = vadd.f32 %v5575, %v5576
        %v5578 = vrot.slane %v5577, 1
        %v5579 = vadd.f32 %v5577, %v5578
        %v5580 = vsel %vm743, %v5513, 0.0
        %v5581 = vsel %vm743, %v5514, 0.0
        %v5582 = vadd.f32 %v5580, %v5581
        %v5583 = vrot.slane %v5582, 4
        %v5584 = vadd.f32 %v5582, %v5583
        %v5585 = vrot.slane %v5584, 2
        %v5586 = vadd.f32 %v5584, %v5585
        %v5587 = vrot.slane %v5586, 1
        %v5588 = vadd.f32 %v5586, %v5587
        %v5589 = vsel %vm743, %v5515, 0.0
        %v5590 = vsel %vm743, %v5516, 0.0
        %v5591 = vadd.f32 %v5589, %v5590
        %v5592 = vrot.slane %v5591, 4
        %v5593 = vadd.f32 %v5591, %v5592
        %v5594 = vrot.slane %v5593, 2
        %v5595 = vadd.f32 %v5593, %v5594
        %v5596 = vrot.slane %v5595, 1
        %v5597 = vadd.f32 %v5595, %v5596
        %v5598 = vsel %vm743, %v5517, 0.0
        %v5599 = vsel %vm743, %v5518, 0.0
        %v5600 = vadd.f32 %v5598, %v5599
        %v5601 = vrot.slane %v5600, 4
        %v5602 = vadd.f32 %v5600, %v5601
        %v5603 = vrot.slane %v5602, 2
        %v5604 = vadd.f32 %v5602, %v5603
        %v5605 = vrot.slane %v5604, 1
        %v5606 = vadd.f32 %v5604, %v5605
        %v5607 = vsel %vm743, %v5519, 0.0
        %v5608 = vsel %vm743, %v5520, 0.0
        %v5609 = vadd.f32 %v5607, %v5608
        %v5610 = vrot.slane %v5609, 4
        %v5611 = vadd.f32 %v5609, %v5610
        %v5612 = vrot.slane %v5611, 2
        %v5613 = vadd.f32 %v5611, %v5612
        %v5614 = vrot.slane %v5613, 1
        %v5615 = vadd.f32 %v5613, %v5614
        %v5616 = vsel %vm743, %v5521, 0.0
        %v5617 = vsel %vm743, %v5522, 0.0
        %v5618 = vadd.f32 %v5616, %v5617
        %v5619 = vrot.slane %v5618, 4
        %v5620 = vadd.f32 %v5618, %v5619
        %v5621 = vrot.slane %v5620, 2
        %v5622 = vadd.f32 %v5620, %v5621
        %v5623 = vrot.slane %v5622, 1
        %v5624 = vadd.f32 %v5622, %v5623
        %v5625 = vsel %vm743, %v5523, 0.0
        %v5626 = vsel %vm743, %v5524, 0.0
        %v5627 = vadd.f32 %v5625, %v5626
        %v5628 = vrot.slane %v5627, 4
        %v5629 = vadd.f32 %v5627, %v5628
        %v5630 = vrot.slane %v5629, 2
        %v5631 = vadd.f32 %v5629, %v5630
        %v5632 = vrot.slane %v5631, 1
        %v5633 = vadd.f32 %v5631, %v5632
        %v5634 = vsel %vm743, %v5525, 0.0
        %v5635 = vsel %vm743, %v5526, 0.0
        %v5636 = vadd.f32 %v5634, %v5635
        %v5637 = vrot.slane %v5636, 4
        %v5638 = vadd.f32 %v5636, %v5637
        %v5639 = vrot.slane %v5638, 2
        %v5640 = vadd.f32 %v5638, %v5639
        %v5641 = vrot.slane %v5640, 1
        %v5642 = vadd.f32 %v5640, %v5641
        %v5643 = vsel %vm743, %v5527, 0.0
        %v5644 = vsel %vm743, %v5528, 0.0
        %v5645 = vadd.f32 %v5643, %v5644
        %v5646 = vrot.slane %v5645, 4
        %v5647 = vadd.f32 %v5645, %v5646
        %v5648 = vrot.slane %v5647, 2
        %v5649 = vadd.f32 %v5647, %v5648
        %v5650 = vrot.slane %v5649, 1
        %v5651 = vadd.f32 %v5649, %v5650
        %v5652 = vsel %vm743, %v5529, 0.0
        %v5653 = vsel %vm743, %v5530, 0.0
        %v5654 = vadd.f32 %v5652, %v5653
        %v5655 = vrot.slane %v5654, 4
        %v5656 = vadd.f32 %v5654, %v5655
        %v5657 = vrot.slane %v5656, 2
        %v5658 = vadd.f32 %v5656, %v5657
        %v5659 = vrot.slane %v5658, 1
        %v5660 = vadd.f32 %v5658, %v5659
        %v5661 = vsel %vm743, %v5531, 0.0
        %v5662 = vsel %vm743, %v5532, 0.0
        %v5663 = vadd.f32 %v5661, %v5662
        %v5664 = vrot.slane %v5663, 4
        %v5665 = vadd.f32 %v5663, %v5664
        %v5666 = vrot.slane %v5665, 2
        %v5667 = vadd.f32 %v5665, %v5666
        %v5668 = vrot.slane %v5667, 1
        %v5669 = vadd.f32 %v5667, %v5668
        %v5670 = vsel %vm743, %v5533, 0.0
        %v5671 = vsel %vm743, %v5534, 0.0
        %v5672 = vadd.f32 %v5670, %v5671
        %v5673 = vrot.slane %v5672, 4
        %v5674 = vadd.f32 %v5672, %v5673
        %v5675 = vrot.slane %v5674, 2
        %v5676 = vadd.f32 %v5674, %v5675
        %v5677 = vrot.slane %v5676, 1
        %v5678 = vadd.f32 %v5676, %v5677
        %v5679 = vand.u32 2147483647, %v5015
        %v5680 = vand.u32 2147483647, %v5024
        %v5681 = vand.u32 2147483647, %v5033
        %v5682 = vand.u32 2147483647, %v5042
        %v5683 = vand.u32 2147483647, %v5051
        %v5684 = vand.u32 2147483647, %v5060
        %v5685 = vand.u32 2147483647, %v5069
        %v5686 = vand.u32 2147483647, %v5078
        %v5687 = vand.u32 2147483647, %v5087
        %v5688 = vand.u32 2147483647, %v5096
        %v5689 = vand.u32 2147483647, %v5105
        %v5690 = vand.u32 2147483647, %v5114
        %v5691 = vand.u32 2147483647, %v5123
        %v5692 = vand.u32 2147483647, %v5132
        %v5693 = vand.u32 2147483647, %v5141
        %v5694 = vand.u32 2147483647, %v5150
        %v5695 = vand.u32 2147483647, %v5191
        %v5696 = vand.u32 2147483647, %v5200
        %v5697 = vand.u32 2147483647, %v5209
        %v5698 = vand.u32 2147483647, %v5218
        %v5699 = vand.u32 2147483647, %v5227
        %v5700 = vand.u32 2147483647, %v5236
        %v5701 = vand.u32 2147483647, %v5245
        %v5702 = vand.u32 2147483647, %v5254
        %v5703 = vand.u32 2147483647, %v5263
        %v5704 = vand.u32 2147483647, %v5272
        %v5705 = vand.u32 2147483647, %v5281
        %v5706 = vand.u32 2147483647, %v5290
        %v5707 = vand.u32 2147483647, %v5299
        %v5708 = vand.u32 2147483647, %v5308
        %v5709 = vand.u32 2147483647, %v5317
        %v5710 = vand.u32 2147483647, %v5326
        %v5711 = vadd.f32 %v5679, %v5695
        %v5712 = vadd.f32 %v5680, %v5696
        %v5713 = vadd.f32 %v5681, %v5697
        %v5714 = vadd.f32 %v5682, %v5698
        %v5715 = vadd.f32 %v5683, %v5699
        %v5716 = vadd.f32 %v5684, %v5700
        %v5717 = vadd.f32 %v5685, %v5701
        %v5718 = vadd.f32 %v5686, %v5702
        %v5719 = vadd.f32 %v5687, %v5703
        %v5720 = vadd.f32 %v5688, %v5704
        %v5721 = vadd.f32 %v5689, %v5705
        %v5722 = vadd.f32 %v5690, %v5706
        %v5723 = vadd.f32 %v5691, %v5707
        %v5724 = vadd.f32 %v5692, %v5708
        %v5725 = vadd.f32 %v5693, %v5709
        %v5726 = vadd.f32 %v5694, %v5710
        %v5727 = vmax.f32 %v5711, 1e-12
        %v5728 = vmax.f32 %v5712, 1e-12
        %v5729 = vmax.f32 %v5713, 1e-12
        %v5730 = vmax.f32 %v5714, 1e-12
        %v5731 = vmax.f32 %v5715, 1e-12
        %v5732 = vmax.f32 %v5716, 1e-12
        %v5733 = vmax.f32 %v5717, 1e-12
        %v5734 = vmax.f32 %v5718, 1e-12
        %v5735 = vmax.f32 %v5719, 1e-12
        %v5736 = vmax.f32 %v5720, 1e-12
        %v5737 = vmax.f32 %v5721, 1e-12
        %v5738 = vmax.f32 %v5722, 1e-12
        %v5739 = vmax.f32 %v5723, 1e-12
        %v5740 = vmax.f32 %v5724, 1e-12
        %v5741 = vmax.f32 %v5725, 1e-12
        %v5742 = vmax.f32 %v5726, 1e-12
        %v5743 = vand.u32 2147483647, %v5367
        %v5744 = vand.u32 2147483647, %v5376
        %v5745 = vand.u32 2147483647, %v5385
        %v5746 = vand.u32 2147483647, %v5394
        %v5747 = vand.u32 2147483647, %v5403
        %v5748 = vand.u32 2147483647, %v5412
        %v5749 = vand.u32 2147483647, %v5421
        %v5750 = vand.u32 2147483647, %v5430
        %v5751 = vand.u32 2147483647, %v5439
        %v5752 = vand.u32 2147483647, %v5448
        %v5753 = vand.u32 2147483647, %v5457
        %v5754 = vand.u32 2147483647, %v5466
        %v5755 = vand.u32 2147483647, %v5475
        %v5756 = vand.u32 2147483647, %v5484
        %v5757 = vand.u32 2147483647, %v5493
        %v5758 = vand.u32 2147483647, %v5502
        %v5759 = vand.u32 2147483647, %v5543
        %v5760 = vand.u32 2147483647, %v5552
        %v5761 = vand.u32 2147483647, %v5561
        %v5762 = vand.u32 2147483647, %v5570
        %v5763 = vand.u32 2147483647, %v5579
        %v5764 = vand.u32 2147483647, %v5588
        %v5765 = vand.u32 2147483647, %v5597
        %v5766 = vand.u32 2147483647, %v5606
        %v5767 = vand.u32 2147483647, %v5615
        %v5768 = vand.u32 2147483647, %v5624
        %v5769 = vand.u32 2147483647, %v5633
        %v5770 = vand.u32 2147483647, %v5642
        %v5771 = vand.u32 2147483647, %v5651
        %v5772 = vand.u32 2147483647, %v5660
        %v5773 = vand.u32 2147483647, %v5669
        %v5774 = vand.u32 2147483647, %v5678
        %v5775 = vadd.f32 %v5743, %v5759
        %v5776 = vadd.f32 %v5744, %v5760
        %v5777 = vadd.f32 %v5745, %v5761
        %v5778 = vadd.f32 %v5746, %v5762
        %v5779 = vadd.f32 %v5747, %v5763
        %v5780 = vadd.f32 %v5748, %v5764
        %v5781 = vadd.f32 %v5749, %v5765
        %v5782 = vadd.f32 %v5750, %v5766
        %v5783 = vadd.f32 %v5751, %v5767
        %v5784 = vadd.f32 %v5752, %v5768
        %v5785 = vadd.f32 %v5753, %v5769
        %v5786 = vadd.f32 %v5754, %v5770
        %v5787 = vadd.f32 %v5755, %v5771
        %v5788 = vadd.f32 %v5756, %v5772
        %v5789 = vadd.f32 %v5757, %v5773
        %v5790 = vadd.f32 %v5758, %v5774
        %v5791 = vmax.f32 %v5775, 1e-12
        %v5792 = vmax.f32 %v5776, 1e-12
        %v5793 = vmax.f32 %v5777, 1e-12
        %v5794 = vmax.f32 %v5778, 1e-12
        %v5795 = vmax.f32 %v5779, 1e-12
        %v5796 = vmax.f32 %v5780, 1e-12
        %v5797 = vmax.f32 %v5781, 1e-12
        %v5798 = vmax.f32 %v5782, 1e-12
        %v5799 = vmax.f32 %v5783, 1e-12
        %v5800 = vmax.f32 %v5784, 1e-12
        %v5801 = vmax.f32 %v5785, 1e-12
        %v5802 = vmax.f32 %v5786, 1e-12
        %v5803 = vmax.f32 %v5787, 1e-12
        %v5804 = vmax.f32 %v5788, 1e-12
        %v5805 = vmax.f32 %v5789, 1e-12
        %v5806 = vmax.f32 %v5790, 1e-12
        %v5807 = vrcp.pop %v5727
        %v5808 = vmul.f32 %v5015, %v5807
        %v5809 = vrcp.pop %v5728
        %v5810 = vmul.f32 %v5024, %v5809
        %v5811 = vrcp.pop %v5729
        %v5812 = vmul.f32 %v5033, %v5811
        %v5813 = vrcp.pop %v5730
        %v5814 = vmul.f32 %v5042, %v5813
        %v5815 = vrcp.pop %v5731
        %v5816 = vmul.f32 %v5051, %v5815
        %v5817 = vrcp.pop %v5732
        %v5818 = vmul.f32 %v5060, %v5817
        %v5819 = vrcp.pop %v5733
        %v5820 = vmul.f32 %v5069, %v5819
        %v5821 = vrcp.pop %v5734
        %v5822 = vmul.f32 %v5078, %v5821
        %v5823 = vrcp.pop %v5735
        %v5824 = vmul.f32 %v5087, %v5823
        %v5825 = vrcp.pop %v5736
        %v5826 = vmul.f32 %v5096, %v5825
        %v5827 = vrcp.pop %v5737
        %v5828 = vmul.f32 %v5105, %v5827
        %v5829 = vrcp.pop %v5738
        %v5830 = vmul.f32 %v5114, %v5829
        %v5831 = vrcp.pop %v5739
        %v5832 = vmul.f32 %v5123, %v5831
        %v5833 = vrcp.pop %v5740
        %v5834 = vmul.f32 %v5132, %v5833
        %v5835 = vrcp.pop %v5741
        %v5836 = vmul.f32 %v5141, %v5835
        %v5837 = vrcp.pop %v5742
        %v5838 = vmul.f32 %v5150, %v5837
        %v5839 = vrcp.pop %v5791
        %v5840 = vmul.f32 %v5543, %v5839
        %v5841 = vrcp.pop %v5792
        %v5842 = vmul.f32 %v5552, %v5841
        %v5843 = vrcp.pop %v5793
        %v5844 = vmul.f32 %v5561, %v5843
        %v5845 = vrcp.pop %v5794
        %v5846 = vmul.f32 %v5570, %v5845
        %v5847 = vrcp.pop %v5795
        %v5848 = vmul.f32 %v5579, %v5847
        %v5849 = vrcp.pop %v5796
        %v5850 = vmul.f32 %v5588, %v5849
        %v5851 = vrcp.pop %v5797
        %v5852 = vmul.f32 %v5597, %v5851
        %v5853 = vrcp.pop %v5798
        %v5854 = vmul.f32 %v5606, %v5853
        %v5855 = vrcp.pop %v5799
        %v5856 = vmul.f32 %v5615, %v5855
        %v5857 = vrcp.pop %v5800
        %v5858 = vmul.f32 %v5624, %v5857
        %v5859 = vrcp.pop %v5801
        %v5860 = vmul.f32 %v5633, %v5859
        %v5861 = vrcp.pop %v5802
        %v5862 = vmul.f32 %v5642, %v5861
        %v5863 = vrcp.pop %v5803
        %v5864 = vmul.f32 %v5651, %v5863
        %v5865 = vrcp.pop %v5804
        %v5866 = vmul.f32 %v5660, %v5865
        %v5867 = vrcp.pop %v5805
        %v5868 = vmul.f32 %v5669, %v5867
        %v5869 = vrcp.pop %v5806
        %v5870 = vmul.f32 %v5678, %v5869
        %v5871 = vsub.f32 %v5808, 1.0
        %v5872 = vsub.f32 %v5810, 1.0
        %v5873 = vsub.f32 %v5812, 1.0
        %v5874 = vsub.f32 %v5814, 1.0
        %v5875 = vsub.f32 %v5816, 1.0
        %v5876 = vsub.f32 %v5818, 1.0
        %v5877 = vsub.f32 %v5820, 1.0
        %v5878 = vsub.f32 %v5822, 1.0
        %v5879 = vsub.f32 %v5824, 1.0
        %v5880 = vsub.f32 %v5826, 1.0
        %v5881 = vsub.f32 %v5828, 1.0
        %v5882 = vsub.f32 %v5830, 1.0
        %v5883 = vsub.f32 %v5832, 1.0
        %v5884 = vsub.f32 %v5834, 1.0
        %v5885 = vsub.f32 %v5836, 1.0
        %v5886 = vsub.f32 %v5838, 1.0
        %v5887 = vmul.f32 %v5871, %v5871
        %v5888 = vmul.f32 %v5872, %v5872
        %v5889 = vmul.f32 %v5873, %v5873
        %v5890 = vmul.f32 %v5874, %v5874
        %v5891 = vmul.f32 %v5875, %v5875
        %v5892 = vmul.f32 %v5876, %v5876
        %v5893 = vmul.f32 %v5877, %v5877
        %v5894 = vmul.f32 %v5878, %v5878
        %v5895 = vmul.f32 %v5879, %v5879
        %v5896 = vmul.f32 %v5880, %v5880
        %v5897 = vmul.f32 %v5881, %v5881
        %v5898 = vmul.f32 %v5882, %v5882
        %v5899 = vmul.f32 %v5883, %v5883
        %v5900 = vmul.f32 %v5884, %v5884
        %v5901 = vmul.f32 %v5885, %v5885
        %v5902 = vmul.f32 %v5886, %v5886
        %v5903 = vsub.f32 %v5840, 1.0
        %v5904 = vsub.f32 %v5842, 1.0
        %v5905 = vsub.f32 %v5844, 1.0
        %v5906 = vsub.f32 %v5846, 1.0
        %v5907 = vsub.f32 %v5848, 1.0
        %v5908 = vsub.f32 %v5850, 1.0
        %v5909 = vsub.f32 %v5852, 1.0
        %v5910 = vsub.f32 %v5854, 1.0
        %v5911 = vsub.f32 %v5856, 1.0
        %v5912 = vsub.f32 %v5858, 1.0
        %v5913 = vsub.f32 %v5860, 1.0
        %v5914 = vsub.f32 %v5862, 1.0
        %v5915 = vsub.f32 %v5864, 1.0
        %v5916 = vsub.f32 %v5866, 1.0
        %v5917 = vsub.f32 %v5868, 1.0
        %v5918 = vsub.f32 %v5870, 1.0
        %v5919 = vmul.f32 %v5903, %v5903
        %v5920 = vmul.f32 %v5904, %v5904
        %v5921 = vmul.f32 %v5905, %v5905
        %v5922 = vmul.f32 %v5906, %v5906
        %v5923 = vmul.f32 %v5907, %v5907
        %v5924 = vmul.f32 %v5908, %v5908
        %v5925 = vmul.f32 %v5909, %v5909
        %v5926 = vmul.f32 %v5910, %v5910
        %v5927 = vmul.f32 %v5911, %v5911
        %v5928 = vmul.f32 %v5912, %v5912
        %v5929 = vmul.f32 %v5913, %v5913
        %v5930 = vmul.f32 %v5914, %v5914
        %v5931 = vmul.f32 %v5915, %v5915
        %v5932 = vmul.f32 %v5916, %v5916
        %v5933 = vmul.f32 %v5917, %v5917
        %v5934 = vmul.f32 %v5918, %v5918
        %v5935 = vadd.f32 %v5887, %v5919
        %v5936 = vadd.f32 %v5888, %v5920
        %v5937 = vadd.f32 %v5889, %v5921
        %v5938 = vadd.f32 %v5890, %v5922
        %v5939 = vadd.f32 %v5891, %v5923
        %v5940 = vadd.f32 %v5892, %v5924
        %v5941 = vadd.f32 %v5893, %v5925
        %v5942 = vadd.f32 %v5894, %v5926
        %v5943 = vadd.f32 %v5895, %v5927
        %v5944 = vadd.f32 %v5896, %v5928
        %v5945 = vadd.f32 %v5897, %v5929
        %v5946 = vadd.f32 %v5898, %v5930
        %v5947 = vadd.f32 %v5899, %v5931
        %v5948 = vadd.f32 %v5900, %v5932
        %v5949 = vadd.f32 %v5901, %v5933
        %v5950 = vadd.f32 %v5902, %v5934
        %v5951 = vmul.f32 %v5935, 0.5
        %v5952 = vmul.f32 %v5936, 0.5
        %v5953 = vmul.f32 %v5937, 0.5
        %v5954 = vmul.f32 %v5938, 0.5
        %v5955 = vmul.f32 %v5939, 0.5
        %v5956 = vmul.f32 %v5940, 0.5
        %v5957 = vmul.f32 %v5941, 0.5
        %v5958 = vmul.f32 %v5942, 0.5
        %v5959 = vmul.f32 %v5943, 0.5
        %v5960 = vmul.f32 %v5944, 0.5
        %v5961 = vmul.f32 %v5945, 0.5
        %v5962 = vmul.f32 %v5946, 0.5
        %v5963 = vmul.f32 %v5947, 0.5
        %v5964 = vmul.f32 %v5948, 0.5
        %v5965 = vmul.f32 %v5949, 0.5
        %v5966 = vmul.f32 %v5950, 0.5
        %vm5967 = vcmp.gt.f32.partialorder %v647, 0.0
        %vm5968 = vcmp.gt.f32.partialorder %v648, 0.0
        %vm5969 = vcmp.gt.f32.partialorder %v649, 0.0
        %vm5970 = vcmp.gt.f32.partialorder %v650, 0.0
        %vm5971 = vcmp.gt.f32.partialorder %v651, 0.0
        %vm5972 = vcmp.gt.f32.partialorder %v652, 0.0
        %vm5973 = vcmp.gt.f32.partialorder %v653, 0.0
        %vm5974 = vcmp.gt.f32.partialorder %v654, 0.0
        %vm5975 = vcmp.gt.f32.partialorder %v655, 0.0
        %vm5976 = vcmp.gt.f32.partialorder %v656, 0.0
        %vm5977 = vcmp.gt.f32.partialorder %v657, 0.0
        %vm5978 = vcmp.gt.f32.partialorder %v658, 0.0
        %vm5979 = vcmp.gt.f32.partialorder %v659, 0.0
        %vm5980 = vcmp.gt.f32.partialorder %v660, 0.0
        %vm5981 = vcmp.gt.f32.partialorder %v661, 0.0
        %vm5982 = vcmp.gt.f32.partialorder %v662, 0.0
        %vm5983 = vcmp.gt.f32.partialorder %v663, 0.0
        %vm5984 = vcmp.gt.f32.partialorder %v664, 0.0
        %vm5985 = vcmp.gt.f32.partialorder %v665, 0.0
        %vm5986 = vcmp.gt.f32.partialorder %v666, 0.0
        %vm5987 = vcmp.gt.f32.partialorder %v667, 0.0
        %vm5988 = vcmp.gt.f32.partialorder %v668, 0.0
        %vm5989 = vcmp.gt.f32.partialorder %v669, 0.0
        %vm5990 = vcmp.gt.f32.partialorder %v670, 0.0
        %vm5991 = vcmp.gt.f32.partialorder %v671, 0.0
        %vm5992 = vcmp.gt.f32.partialorder %v672, 0.0
        %vm5993 = vcmp.gt.f32.partialorder %v673, 0.0
        %vm5994 = vcmp.gt.f32.partialorder %v674, 0.0
        %vm5995 = vcmp.gt.f32.partialorder %v675, 0.0
        %vm5996 = vcmp.gt.f32.partialorder %v676, 0.0
        %vm5997 = vcmp.gt.f32.partialorder %v677, 0.0
        %vm5998 = vcmp.gt.f32.partialorder %v678, 0.0
        %vm5999 = vcmp.gt.f32.partialorder %v2516, 0.5
        %vm6000 = vcmp.gt.f32.partialorder %v2518, 0.5
        %vm6001 = vcmp.gt.f32.partialorder %v2520, 0.5
        %vm6002 = vcmp.gt.f32.partialorder %v2522, 0.5
        %vm6003 = vcmp.gt.f32.partialorder %v2524, 0.5
        %vm6004 = vcmp.gt.f32.partialorder %v2526, 0.5
        %vm6005 = vcmp.gt.f32.partialorder %v2528, 0.5
        %vm6006 = vcmp.gt.f32.partialorder %v2530, 0.5
        %vm6007 = vcmp.gt.f32.partialorder %v2532, 0.5
        %vm6008 = vcmp.gt.f32.partialorder %v2534, 0.5
        %vm6009 = vcmp.gt.f32.partialorder %v2536, 0.5
        %vm6010 = vcmp.gt.f32.partialorder %v2538, 0.5
        %vm6011 = vcmp.gt.f32.partialorder %v2540, 0.5
        %vm6012 = vcmp.gt.f32.partialorder %v2542, 0.5
        %vm6013 = vcmp.gt.f32.partialorder %v2544, 0.5
        %vm6014 = vcmp.gt.f32.partialorder %v2546, 0.5
        %vm6015 = vcmp.gt.f32.partialorder %v2548, 0.5
        %vm6016 = vcmp.gt.f32.partialorder %v2550, 0.5
        %vm6017 = vcmp.gt.f32.partialorder %v2552, 0.5
        %vm6018 = vcmp.gt.f32.partialorder %v2554, 0.5
        %vm6019 = vcmp.gt.f32.partialorder %v2556, 0.5
        %vm6020 = vcmp.gt.f32.partialorder %v2558, 0.5
        %vm6021 = vcmp.gt.f32.partialorder %v2560, 0.5
        %vm6022 = vcmp.gt.f32.partialorder %v2562, 0.5
        %vm6023 = vcmp.gt.f32.partialorder %v2564, 0.5
        %vm6024 = vcmp.gt.f32.partialorder %v2566, 0.5
        %vm6025 = vcmp.gt.f32.partialorder %v2568, 0.5
        %vm6026 = vcmp.gt.f32.partialorder %v2570, 0.5
        %vm6027 = vcmp.gt.f32.partialorder %v2572, 0.5
        %vm6028 = vcmp.gt.f32.partialorder %v2574, 0.5
        %vm6029 = vcmp.gt.f32.partialorder %v2576, 0.5
        %vm6030 = vcmp.gt.f32.partialorder %v2578, 0.5
        %vm6031 = vmand %vm5999, %vm5967
        %vm6032 = vmand %vm6000, %vm5968
        %vm6033 = vmand %vm6001, %vm5969
        %vm6034 = vmand %vm6002, %vm5970
        %vm6035 = vmand %vm6003, %vm5971
        %vm6036 = vmand %vm6004, %vm5972
        %vm6037 = vmand %vm6005, %vm5973
        %vm6038 = vmand %vm6006, %vm5974
        %vm6039 = vmand %vm6007, %vm5975
        %vm6040 = vmand %vm6008, %vm5976
        %vm6041 = vmand %vm6009, %vm5977
        %vm6042 = vmand %vm6010, %vm5978
        %vm6043 = vmand %vm6011, %vm5979
        %vm6044 = vmand %vm6012, %vm5980
        %vm6045 = vmand %vm6013, %vm5981
        %vm6046 = vmand %vm6014, %vm5982
        %vm6047 = vmand %vm6015, %vm5983
        %vm6048 = vmand %vm6016, %vm5984
        %vm6049 = vmand %vm6017, %vm5985
        %vm6050 = vmand %vm6018, %vm5986
        %vm6051 = vmand %vm6019, %vm5987
        %vm6052 = vmand %vm6020, %vm5988
        %vm6053 = vmand %vm6021, %vm5989
        %vm6054 = vmand %vm6022, %vm5990
        %vm6055 = vmand %vm6023, %vm5991
        %vm6056 = vmand %vm6024, %vm5992
        %vm6057 = vmand %vm6025, %vm5993
        %vm6058 = vmand %vm6026, %vm5994
        %vm6059 = vmand %vm6027, %vm5995
        %vm6060 = vmand %vm6028, %vm5996
        %vm6061 = vmand %vm6029, %vm5997
        %vm6062 = vmand %vm6030, %vm5998
        %v6063 = vsel %vm6031, 1.0, 0.0
        %v6064 = vsel %vm6032, 1.0, 0.0
        %v6065 = vsel %vm6033, 1.0, 0.0
        %v6066 = vsel %vm6034, 1.0, 0.0
        %v6067 = vsel %vm6035, 1.0, 0.0
        %v6068 = vsel %vm6036, 1.0, 0.0
        %v6069 = vsel %vm6037, 1.0, 0.0
        %v6070 = vsel %vm6038, 1.0, 0.0
        %v6071 = vsel %vm6039, 1.0, 0.0
        %v6072 = vsel %vm6040, 1.0, 0.0
        %v6073 = vsel %vm6041, 1.0, 0.0
        %v6074 = vsel %vm6042, 1.0, 0.0
        %v6075 = vsel %vm6043, 1.0, 0.0
        %v6076 = vsel %vm6044, 1.0, 0.0
        %v6077 = vsel %vm6045, 1.0, 0.0
        %v6078 = vsel %vm6046, 1.0, 0.0
        %v6079 = vsel %vm6047, 1.0, 0.0
        %v6080 = vsel %vm6048, 1.0, 0.0
        %v6081 = vsel %vm6049, 1.0, 0.0
        %v6082 = vsel %vm6050, 1.0, 0.0
        %v6083 = vsel %vm6051, 1.0, 0.0
        %v6084 = vsel %vm6052, 1.0, 0.0
        %v6085 = vsel %vm6053, 1.0, 0.0
        %v6086 = vsel %vm6054, 1.0, 0.0
        %v6087 = vsel %vm6055, 1.0, 0.0
        %v6088 = vsel %vm6056, 1.0, 0.0
        %v6089 = vsel %vm6057, 1.0, 0.0
        %v6090 = vsel %vm6058, 1.0, 0.0
        %v6091 = vsel %vm6059, 1.0, 0.0
        %v6092 = vsel %vm6060, 1.0, 0.0
        %v6093 = vsel %vm6061, 1.0, 0.0
        %v6094 = vsel %vm6062, 1.0, 0.0
        %v6095 = vsel %vm743, %v6063, 0.0
        %v6096 = vsel %vm743, %v6064, 0.0
        %v6097 = vadd.f32 %v6095, %v6096
        %v6098 = vrot.slane %v6097, 4
        %v6099 = vadd.f32 %v6097, %v6098
        %v6100 = vrot.slane %v6099, 2
        %v6101 = vadd.f32 %v6099, %v6100
        %v6102 = vrot.slane %v6101, 1
        %v6103 = vadd.f32 %v6101, %v6102
        %v6104 = vsel %vm743, %v6065, 0.0
        %v6105 = vsel %vm743, %v6066, 0.0
        %v6106 = vadd.f32 %v6104, %v6105
        %v6107 = vrot.slane %v6106, 4
        %v6108 = vadd.f32 %v6106, %v6107
        %v6109 = vrot.slane %v6108, 2
        %v6110 = vadd.f32 %v6108, %v6109
        %v6111 = vrot.slane %v6110, 1
        %v6112 = vadd.f32 %v6110, %v6111
        %v6113 = vsel %vm743, %v6067, 0.0
        %v6114 = vsel %vm743, %v6068, 0.0
        %v6115 = vadd.f32 %v6113, %v6114
        %v6116 = vrot.slane %v6115, 4
        %v6117 = vadd.f32 %v6115, %v6116
        %v6118 = vrot.slane %v6117, 2
        %v6119 = vadd.f32 %v6117, %v6118
        %v6120 = vrot.slane %v6119, 1
        %v6121 = vadd.f32 %v6119, %v6120
        %v6122 = vsel %vm743, %v6069, 0.0
        %v6123 = vsel %vm743, %v6070, 0.0
        %v6124 = vadd.f32 %v6122, %v6123
        %v6125 = vrot.slane %v6124, 4
        %v6126 = vadd.f32 %v6124, %v6125
        %v6127 = vrot.slane %v6126, 2
        %v6128 = vadd.f32 %v6126, %v6127
        %v6129 = vrot.slane %v6128, 1
        %v6130 = vadd.f32 %v6128, %v6129
        %v6131 = vsel %vm743, %v6071, 0.0
        %v6132 = vsel %vm743, %v6072, 0.0
        %v6133 = vadd.f32 %v6131, %v6132
        %v6134 = vrot.slane %v6133, 4
        %v6135 = vadd.f32 %v6133, %v6134
        %v6136 = vrot.slane %v6135, 2
        %v6137 = vadd.f32 %v6135, %v6136
        %v6138 = vrot.slane %v6137, 1
        %v6139 = vadd.f32 %v6137, %v6138
        %v6140 = vsel %vm743, %v6073, 0.0
        %v6141 = vsel %vm743, %v6074, 0.0
        %v6142 = vadd.f32 %v6140, %v6141
        %v6143 = vrot.slane %v6142, 4
        %v6144 = vadd.f32 %v6142, %v6143
        %v6145 = vrot.slane %v6144, 2
        %v6146 = vadd.f32 %v6144, %v6145
        %v6147 = vrot.slane %v6146, 1
        %v6148 = vadd.f32 %v6146, %v6147
        %v6149 = vsel %vm743, %v6075, 0.0
        %v6150 = vsel %vm743, %v6076, 0.0
        %v6151 = vadd.f32 %v6149, %v6150
        %v6152 = vrot.slane %v6151, 4
        %v6153 = vadd.f32 %v6151, %v6152
        %v6154 = vrot.slane %v6153, 2
        %v6155 = vadd.f32 %v6153, %v6154
        %v6156 = vrot.slane %v6155, 1
        %v6157 = vadd.f32 %v6155, %v6156
        %v6158 = vsel %vm743, %v6077, 0.0
        %v6159 = vsel %vm743, %v6078, 0.0
        %v6160 = vadd.f32 %v6158, %v6159
        %v6161 = vrot.slane %v6160, 4
        %v6162 = vadd.f32 %v6160, %v6161
        %v6163 = vrot.slane %v6162, 2
        %v6164 = vadd.f32 %v6162, %v6163
        %v6165 = vrot.slane %v6164, 1
        %v6166 = vadd.f32 %v6164, %v6165
        %v6167 = vsel %vm743, %v6079, 0.0
        %v6168 = vsel %vm743, %v6080, 0.0
        %v6169 = vadd.f32 %v6167, %v6168
        %v6170 = vrot.slane %v6169, 4
        %v6171 = vadd.f32 %v6169, %v6170
        %v6172 = vrot.slane %v6171, 2
        %v6173 = vadd.f32 %v6171, %v6172
        %v6174 = vrot.slane %v6173, 1
        %v6175 = vadd.f32 %v6173, %v6174
        %v6176 = vsel %vm743, %v6081, 0.0
        %v6177 = vsel %vm743, %v6082, 0.0
        %v6178 = vadd.f32 %v6176, %v6177
        %v6179 = vrot.slane %v6178, 4
        %v6180 = vadd.f32 %v6178, %v6179
        %v6181 = vrot.slane %v6180, 2
        %v6182 = vadd.f32 %v6180, %v6181
        %v6183 = vrot.slane %v6182, 1
        %v6184 = vadd.f32 %v6182, %v6183
        %v6185 = vsel %vm743, %v6083, 0.0
        %v6186 = vsel %vm743, %v6084, 0.0
        %v6187 = vadd.f32 %v6185, %v6186
        %v6188 = vrot.slane %v6187, 4
        %v6189 = vadd.f32 %v6187, %v6188
        %v6190 = vrot.slane %v6189, 2
        %v6191 = vadd.f32 %v6189, %v6190
        %v6192 = vrot.slane %v6191, 1
        %v6193 = vadd.f32 %v6191, %v6192
        %v6194 = vsel %vm743, %v6085, 0.0
        %v6195 = vsel %vm743, %v6086, 0.0
        %v6196 = vadd.f32 %v6194, %v6195
        %v6197 = vrot.slane %v6196, 4
        %v6198 = vadd.f32 %v6196, %v6197
        %v6199 = vrot.slane %v6198, 2
        %v6200 = vadd.f32 %v6198, %v6199
        %v6201 = vrot.slane %v6200, 1
        %v6202 = vadd.f32 %v6200, %v6201
        %v6203 = vsel %vm743, %v6087, 0.0
        %v6204 = vsel %vm743, %v6088, 0.0
        %v6205 = vadd.f32 %v6203, %v6204
        %v6206 = vrot.slane %v6205, 4
        %v6207 = vadd.f32 %v6205, %v6206
        %v6208 = vrot.slane %v6207, 2
        %v6209 = vadd.f32 %v6207, %v6208
        %v6210 = vrot.slane %v6209, 1
        %v6211 = vadd.f32 %v6209, %v6210
        %v6212 = vsel %vm743, %v6089, 0.0
        %v6213 = vsel %vm743, %v6090, 0.0
        %v6214 = vadd.f32 %v6212, %v6213
        %v6215 = vrot.slane %v6214, 4
        %v6216 = vadd.f32 %v6214, %v6215
        %v6217 = vrot.slane %v6216, 2
        %v6218 = vadd.f32 %v6216, %v6217
        %v6219 = vrot.slane %v6218, 1
        %v6220 = vadd.f32 %v6218, %v6219
        %v6221 = vsel %vm743, %v6091, 0.0
        %v6222 = vsel %vm743, %v6092, 0.0
        %v6223 = vadd.f32 %v6221, %v6222
        %v6224 = vrot.slane %v6223, 4
        %v6225 = vadd.f32 %v6223, %v6224
        %v6226 = vrot.slane %v6225, 2
        %v6227 = vadd.f32 %v6225, %v6226
        %v6228 = vrot.slane %v6227, 1
        %v6229 = vadd.f32 %v6227, %v6228
        %v6230 = vsel %vm743, %v6093, 0.0
        %v6231 = vsel %vm743, %v6094, 0.0
        %v6232 = vadd.f32 %v6230, %v6231
        %v6233 = vrot.slane %v6232, 4
        %v6234 = vadd.f32 %v6232, %v6233
        %v6235 = vrot.slane %v6234, 2
        %v6236 = vadd.f32 %v6234, %v6235
        %v6237 = vrot.slane %v6236, 1
        %v6238 = vadd.f32 %v6236, %v6237
        %v6239 = vrcp.pop %v888
        %v6240 = vmul.f32 %v6103, %v6239
        %v6241 = vrcp.pop %v889
        %v6242 = vmul.f32 %v6112, %v6241
        %v6243 = vrcp.pop %v890
        %v6244 = vmul.f32 %v6121, %v6243
        %v6245 = vrcp.pop %v891
        %v6246 = vmul.f32 %v6130, %v6245
        %v6247 = vrcp.pop %v892
        %v6248 = vmul.f32 %v6139, %v6247
        %v6249 = vrcp.pop %v893
        %v6250 = vmul.f32 %v6148, %v6249
        %v6251 = vrcp.pop %v894
        %v6252 = vmul.f32 %v6157, %v6251
        %v6253 = vrcp.pop %v895
        %v6254 = vmul.f32 %v6166, %v6253
        %v6255 = vrcp.pop %v896
        %v6256 = vmul.f32 %v6175, %v6255
        %v6257 = vrcp.pop %v897
        %v6258 = vmul.f32 %v6184, %v6257
        %v6259 = vrcp.pop %v898
        %v6260 = vmul.f32 %v6193, %v6259
        %v6261 = vrcp.pop %v899
        %v6262 = vmul.f32 %v6202, %v6261
        %v6263 = vrcp.pop %v900
        %v6264 = vmul.f32 %v6211, %v6263
        %v6265 = vrcp.pop %v901
        %v6266 = vmul.f32 %v6220, %v6265
        %v6267 = vrcp.pop %v902
        %v6268 = vmul.f32 %v6229, %v6267
        %v6269 = vrcp.pop %v903
        %v6270 = vmul.f32 %v6238, %v6269
        %vm6271 = vcmp.gt.f32.partialorder %v2836, 0.5
        %vm6272 = vcmp.gt.f32.partialorder %v2838, 0.5
        %vm6273 = vcmp.gt.f32.partialorder %v2840, 0.5
        %vm6274 = vcmp.gt.f32.partialorder %v2842, 0.5
        %vm6275 = vcmp.gt.f32.partialorder %v2844, 0.5
        %vm6276 = vcmp.gt.f32.partialorder %v2846, 0.5
        %vm6277 = vcmp.gt.f32.partialorder %v2848, 0.5
        %vm6278 = vcmp.gt.f32.partialorder %v2850, 0.5
        %vm6279 = vcmp.gt.f32.partialorder %v2852, 0.5
        %vm6280 = vcmp.gt.f32.partialorder %v2854, 0.5
        %vm6281 = vcmp.gt.f32.partialorder %v2856, 0.5
        %vm6282 = vcmp.gt.f32.partialorder %v2858, 0.5
        %vm6283 = vcmp.gt.f32.partialorder %v2860, 0.5
        %vm6284 = vcmp.gt.f32.partialorder %v2862, 0.5
        %vm6285 = vcmp.gt.f32.partialorder %v2864, 0.5
        %vm6286 = vcmp.gt.f32.partialorder %v2866, 0.5
        %vm6287 = vcmp.gt.f32.partialorder %v2868, 0.5
        %vm6288 = vcmp.gt.f32.partialorder %v2870, 0.5
        %vm6289 = vcmp.gt.f32.partialorder %v2872, 0.5
        %vm6290 = vcmp.gt.f32.partialorder %v2874, 0.5
        %vm6291 = vcmp.gt.f32.partialorder %v2876, 0.5
        %vm6292 = vcmp.gt.f32.partialorder %v2878, 0.5
        %vm6293 = vcmp.gt.f32.partialorder %v2880, 0.5
        %vm6294 = vcmp.gt.f32.partialorder %v2882, 0.5
        %vm6295 = vcmp.gt.f32.partialorder %v2884, 0.5
        %vm6296 = vcmp.gt.f32.partialorder %v2886, 0.5
        %vm6297 = vcmp.gt.f32.partialorder %v2888, 0.5
        %vm6298 = vcmp.gt.f32.partialorder %v2890, 0.5
        %vm6299 = vcmp.gt.f32.partialorder %v2892, 0.5
        %vm6300 = vcmp.gt.f32.partialorder %v2894, 0.5
        %vm6301 = vcmp.gt.f32.partialorder %v2896, 0.5
        %vm6302 = vcmp.gt.f32.partialorder %v2898, 0.5
        %vm6303 = vmand %vm6271, %vm5967
        %vm6304 = vmand %vm6272, %vm5968
        %vm6305 = vmand %vm6273, %vm5969
        %vm6306 = vmand %vm6274, %vm5970
        %vm6307 = vmand %vm6275, %vm5971
        %vm6308 = vmand %vm6276, %vm5972
        %vm6309 = vmand %vm6277, %vm5973
        %vm6310 = vmand %vm6278, %vm5974
        %vm6311 = vmand %vm6279, %vm5975
        %vm6312 = vmand %vm6280, %vm5976
        %vm6313 = vmand %vm6281, %vm5977
        %vm6314 = vmand %vm6282, %vm5978
        %vm6315 = vmand %vm6283, %vm5979
        %vm6316 = vmand %vm6284, %vm5980
        %vm6317 = vmand %vm6285, %vm5981
        %vm6318 = vmand %vm6286, %vm5982
        %vm6319 = vmand %vm6287, %vm5983
        %vm6320 = vmand %vm6288, %vm5984
        %vm6321 = vmand %vm6289, %vm5985
        %vm6322 = vmand %vm6290, %vm5986
        %vm6323 = vmand %vm6291, %vm5987
        %vm6324 = vmand %vm6292, %vm5988
        %vm6325 = vmand %vm6293, %vm5989
        %vm6326 = vmand %vm6294, %vm5990
        %vm6327 = vmand %vm6295, %vm5991
        %vm6328 = vmand %vm6296, %vm5992
        %vm6329 = vmand %vm6297, %vm5993
        %vm6330 = vmand %vm6298, %vm5994
        %vm6331 = vmand %vm6299, %vm5995
        %vm6332 = vmand %vm6300, %vm5996
        %vm6333 = vmand %vm6301, %vm5997
        %vm6334 = vmand %vm6302, %vm5998
        %v6335 = vsel %vm6303, 1.0, 0.0
        %v6336 = vsel %vm6304, 1.0, 0.0
        %v6337 = vsel %vm6305, 1.0, 0.0
        %v6338 = vsel %vm6306, 1.0, 0.0
        %v6339 = vsel %vm6307, 1.0, 0.0
        %v6340 = vsel %vm6308, 1.0, 0.0
        %v6341 = vsel %vm6309, 1.0, 0.0
        %v6342 = vsel %vm6310, 1.0, 0.0
        %v6343 = vsel %vm6311, 1.0, 0.0
        %v6344 = vsel %vm6312, 1.0, 0.0
        %v6345 = vsel %vm6313, 1.0, 0.0
        %v6346 = vsel %vm6314, 1.0, 0.0
        %v6347 = vsel %vm6315, 1.0, 0.0
        %v6348 = vsel %vm6316, 1.0, 0.0
        %v6349 = vsel %vm6317, 1.0, 0.0
        %v6350 = vsel %vm6318, 1.0, 0.0
        %v6351 = vsel %vm6319, 1.0, 0.0
        %v6352 = vsel %vm6320, 1.0, 0.0
        %v6353 = vsel %vm6321, 1.0, 0.0
        %v6354 = vsel %vm6322, 1.0, 0.0
        %v6355 = vsel %vm6323, 1.0, 0.0
        %v6356 = vsel %vm6324, 1.0, 0.0
        %v6357 = vsel %vm6325, 1.0, 0.0
        %v6358 = vsel %vm6326, 1.0, 0.0
        %v6359 = vsel %vm6327, 1.0, 0.0
        %v6360 = vsel %vm6328, 1.0, 0.0
        %v6361 = vsel %vm6329, 1.0, 0.0
        %v6362 = vsel %vm6330, 1.0, 0.0
        %v6363 = vsel %vm6331, 1.0, 0.0
        %v6364 = vsel %vm6332, 1.0, 0.0
        %v6365 = vsel %vm6333, 1.0, 0.0
        %v6366 = vsel %vm6334, 1.0, 0.0
        %6368 = vset.pattern.permute.xlu0 0
        %6369 = vperm.xlu0 %6368, %v6335
        %v6370 = vpop.permute.xlu0 %6369
        %6373 = vset.pattern.permute.xlu0 0
        %6374 = vperm.xlu0 %6373, %v6336
        %v6375 = vpop.permute.xlu0 %6374
        %6378 = vset.pattern.permute.xlu0 0
        %6379 = vperm.xlu0 %6378, %v6337
        %v6380 = vpop.permute.xlu0 %6379
        %6383 = vset.pattern.permute.xlu0 0
        %6384 = vperm.xlu0 %6383, %v6338
        %v6385 = vpop.permute.xlu0 %6384
        %6388 = vset.pattern.permute.xlu0 0
        %6389 = vperm.xlu0 %6388, %v6339
        %v6390 = vpop.permute.xlu0 %6389
        %6393 = vset.pattern.permute.xlu0 0
        %6394 = vperm.xlu0 %6393, %v6340
        %v6395 = vpop.permute.xlu0 %6394
        %6398 = vset.pattern.permute.xlu0 0
        %6399 = vperm.xlu0 %6398, %v6341
        %v6400 = vpop.permute.xlu0 %6399
        %6403 = vset.pattern.permute.xlu0 0
        %6404 = vperm.xlu0 %6403, %v6342
        %v6405 = vpop.permute.xlu0 %6404
        %6408 = vset.pattern.permute.xlu0 0
        %6409 = vperm.xlu0 %6408, %v6343
        %v6410 = vpop.permute.xlu0 %6409
        %6413 = vset.pattern.permute.xlu0 0
        %6414 = vperm.xlu0 %6413, %v6344
        %v6415 = vpop.permute.xlu0 %6414
        %6418 = vset.pattern.permute.xlu0 0
        %6419 = vperm.xlu0 %6418, %v6345
        %v6420 = vpop.permute.xlu0 %6419
        %6423 = vset.pattern.permute.xlu0 0
        %6424 = vperm.xlu0 %6423, %v6346
        %v6425 = vpop.permute.xlu0 %6424
        %6428 = vset.pattern.permute.xlu0 0
        %6429 = vperm.xlu0 %6428, %v6347
        %v6430 = vpop.permute.xlu0 %6429
        %6433 = vset.pattern.permute.xlu0 0
        %6434 = vperm.xlu0 %6433, %v6348
        %v6435 = vpop.permute.xlu0 %6434
        %6438 = vset.pattern.permute.xlu0 0
        %6439 = vperm.xlu0 %6438, %v6349
        %v6440 = vpop.permute.xlu0 %6439
        %6443 = vset.pattern.permute.xlu0 0
        %6444 = vperm.xlu0 %6443, %v6350
        %v6445 = vpop.permute.xlu0 %6444
        %6448 = vset.pattern.permute.xlu0 0
        %6449 = vperm.xlu0 %6448, %v6351
        %v6450 = vpop.permute.xlu0 %6449
        %6453 = vset.pattern.permute.xlu0 0
        %6454 = vperm.xlu0 %6453, %v6352
        %v6455 = vpop.permute.xlu0 %6454
        %6458 = vset.pattern.permute.xlu0 0
        %6459 = vperm.xlu0 %6458, %v6353
        %v6460 = vpop.permute.xlu0 %6459
        %6463 = vset.pattern.permute.xlu0 0
        %6464 = vperm.xlu0 %6463, %v6354
        %v6465 = vpop.permute.xlu0 %6464
        %6468 = vset.pattern.permute.xlu0 0
        %6469 = vperm.xlu0 %6468, %v6355
        %v6470 = vpop.permute.xlu0 %6469
        %6473 = vset.pattern.permute.xlu0 0
        %6474 = vperm.xlu0 %6473, %v6356
        %v6475 = vpop.permute.xlu0 %6474
        %6478 = vset.pattern.permute.xlu0 0
        %6479 = vperm.xlu0 %6478, %v6357
        %v6480 = vpop.permute.xlu0 %6479
        %6483 = vset.pattern.permute.xlu0 0
        %6484 = vperm.xlu0 %6483, %v6358
        %v6485 = vpop.permute.xlu0 %6484
        %6488 = vset.pattern.permute.xlu0 0
        %6489 = vperm.xlu0 %6488, %v6359
        %v6490 = vpop.permute.xlu0 %6489
        %6493 = vset.pattern.permute.xlu0 0
        %6494 = vperm.xlu0 %6493, %v6360
        %v6495 = vpop.permute.xlu0 %6494
        %6498 = vset.pattern.permute.xlu0 0
        %6499 = vperm.xlu0 %6498, %v6361
        %v6500 = vpop.permute.xlu0 %6499
        %6503 = vset.pattern.permute.xlu0 0
        %6504 = vperm.xlu0 %6503, %v6362
        %v6505 = vpop.permute.xlu0 %6504
        %6508 = vset.pattern.permute.xlu0 0
        %6509 = vperm.xlu0 %6508, %v6363
        %v6510 = vpop.permute.xlu0 %6509
        %6513 = vset.pattern.permute.xlu0 0
        %6514 = vperm.xlu0 %6513, %v6364
        %v6515 = vpop.permute.xlu0 %6514
        %6518 = vset.pattern.permute.xlu0 0
        %6519 = vperm.xlu0 %6518, %v6365
        %v6520 = vpop.permute.xlu0 %6519
        %6523 = vset.pattern.permute.xlu0 0
        %6524 = vperm.xlu0 %6523, %v6366
        %v6525 = vpop.permute.xlu0 %6524
        %v6527 = vmul.f32 %v6370, %v4380
        %v6528 = vmul.f32 %v6375, %v4381
        %v6529 = vmul.f32 %v6380, %v4380
        %v6530 = vmul.f32 %v6385, %v4381
        %v6531 = vmul.f32 %v6390, %v4380
        %v6532 = vmul.f32 %v6395, %v4381
        %v6533 = vmul.f32 %v6400, %v4380
        %v6534 = vmul.f32 %v6405, %v4381
        %v6535 = vmul.f32 %v6410, %v4380
        %v6536 = vmul.f32 %v6415, %v4381
        %v6537 = vmul.f32 %v6420, %v4380
        %v6538 = vmul.f32 %v6425, %v4381
        %v6539 = vmul.f32 %v6430, %v4380
        %v6540 = vmul.f32 %v6435, %v4381
        %v6541 = vmul.f32 %v6440, %v4380
        %v6542 = vmul.f32 %v6445, %v4381
        %v6543 = vmul.f32 %v6450, %v4380
        %v6544 = vmul.f32 %v6455, %v4381
        %v6545 = vmul.f32 %v6460, %v4380
        %v6546 = vmul.f32 %v6465, %v4381
        %v6547 = vmul.f32 %v6470, %v4380
        %v6548 = vmul.f32 %v6475, %v4381
        %v6549 = vmul.f32 %v6480, %v4380
        %v6550 = vmul.f32 %v6485, %v4381
        %v6551 = vmul.f32 %v6490, %v4380
        %v6552 = vmul.f32 %v6495, %v4381
        %v6553 = vmul.f32 %v6500, %v4380
        %v6554 = vmul.f32 %v6505, %v4381
        %v6555 = vmul.f32 %v6510, %v4380
        %v6556 = vmul.f32 %v6515, %v4381
        %v6557 = vmul.f32 %v6520, %v4380
        %v6558 = vmul.f32 %v6525, %v4381
        %v6559 = vsel %vm4574, %v6527, 0.0
        %v6560 = vsel %vm4574, %v6528, 0.0
        %v6561 = vadd.f32 %v6559, %v6560
        %v6562 = vrot.slane %v6561, 4
        %v6563 = vadd.f32 %v6561, %v6562
        %v6564 = vrot.slane %v6563, 2
        %v6565 = vadd.f32 %v6563, %v6564
        %v6566 = vrot.slane %v6565, 1
        %v6567 = vadd.f32 %v6565, %v6566
        %v6568 = vsel %vm4574, %v6529, 0.0
        %v6569 = vsel %vm4574, %v6530, 0.0
        %v6570 = vadd.f32 %v6568, %v6569
        %v6571 = vrot.slane %v6570, 4
        %v6572 = vadd.f32 %v6570, %v6571
        %v6573 = vrot.slane %v6572, 2
        %v6574 = vadd.f32 %v6572, %v6573
        %v6575 = vrot.slane %v6574, 1
        %v6576 = vadd.f32 %v6574, %v6575
        %v6577 = vsel %vm4574, %v6531, 0.0
        %v6578 = vsel %vm4574, %v6532, 0.0
        %v6579 = vadd.f32 %v6577, %v6578
        %v6580 = vrot.slane %v6579, 4
        %v6581 = vadd.f32 %v6579, %v6580
        %v6582 = vrot.slane %v6581, 2
        %v6583 = vadd.f32 %v6581, %v6582
        %v6584 = vrot.slane %v6583, 1
        %v6585 = vadd.f32 %v6583, %v6584
        %v6586 = vsel %vm4574, %v6533, 0.0
        %v6587 = vsel %vm4574, %v6534, 0.0
        %v6588 = vadd.f32 %v6586, %v6587
        %v6589 = vrot.slane %v6588, 4
        %v6590 = vadd.f32 %v6588, %v6589
        %v6591 = vrot.slane %v6590, 2
        %v6592 = vadd.f32 %v6590, %v6591
        %v6593 = vrot.slane %v6592, 1
        %v6594 = vadd.f32 %v6592, %v6593
        %v6595 = vsel %vm4574, %v6535, 0.0
        %v6596 = vsel %vm4574, %v6536, 0.0
        %v6597 = vadd.f32 %v6595, %v6596
        %v6598 = vrot.slane %v6597, 4
        %v6599 = vadd.f32 %v6597, %v6598
        %v6600 = vrot.slane %v6599, 2
        %v6601 = vadd.f32 %v6599, %v6600
        %v6602 = vrot.slane %v6601, 1
        %v6603 = vadd.f32 %v6601, %v6602
        %v6604 = vsel %vm4574, %v6537, 0.0
        %v6605 = vsel %vm4574, %v6538, 0.0
        %v6606 = vadd.f32 %v6604, %v6605
        %v6607 = vrot.slane %v6606, 4
        %v6608 = vadd.f32 %v6606, %v6607
        %v6609 = vrot.slane %v6608, 2
        %v6610 = vadd.f32 %v6608, %v6609
        %v6611 = vrot.slane %v6610, 1
        %v6612 = vadd.f32 %v6610, %v6611
        %v6613 = vsel %vm4574, %v6539, 0.0
        %v6614 = vsel %vm4574, %v6540, 0.0
        %v6615 = vadd.f32 %v6613, %v6614
        %v6616 = vrot.slane %v6615, 4
        %v6617 = vadd.f32 %v6615, %v6616
        %v6618 = vrot.slane %v6617, 2
        %v6619 = vadd.f32 %v6617, %v6618
        %v6620 = vrot.slane %v6619, 1
        %v6621 = vadd.f32 %v6619, %v6620
        %v6622 = vsel %vm4574, %v6541, 0.0
        %v6623 = vsel %vm4574, %v6542, 0.0
        %v6624 = vadd.f32 %v6622, %v6623
        %v6625 = vrot.slane %v6624, 4
        %v6626 = vadd.f32 %v6624, %v6625
        %v6627 = vrot.slane %v6626, 2
        %v6628 = vadd.f32 %v6626, %v6627
        %v6629 = vrot.slane %v6628, 1
        %v6630 = vadd.f32 %v6628, %v6629
        %v6631 = vsel %vm4574, %v6543, 0.0
        %v6632 = vsel %vm4574, %v6544, 0.0
        %v6633 = vadd.f32 %v6631, %v6632
        %v6634 = vrot.slane %v6633, 4
        %v6635 = vadd.f32 %v6633, %v6634
        %v6636 = vrot.slane %v6635, 2
        %v6637 = vadd.f32 %v6635, %v6636
        %v6638 = vrot.slane %v6637, 1
        %v6639 = vadd.f32 %v6637, %v6638
        %v6640 = vsel %vm4574, %v6545, 0.0
        %v6641 = vsel %vm4574, %v6546, 0.0
        %v6642 = vadd.f32 %v6640, %v6641
        %v6643 = vrot.slane %v6642, 4
        %v6644 = vadd.f32 %v6642, %v6643
        %v6645 = vrot.slane %v6644, 2
        %v6646 = vadd.f32 %v6644, %v6645
        %v6647 = vrot.slane %v6646, 1
        %v6648 = vadd.f32 %v6646, %v6647
        %v6649 = vsel %vm4574, %v6547, 0.0
        %v6650 = vsel %vm4574, %v6548, 0.0
        %v6651 = vadd.f32 %v6649, %v6650
        %v6652 = vrot.slane %v6651, 4
        %v6653 = vadd.f32 %v6651, %v6652
        %v6654 = vrot.slane %v6653, 2
        %v6655 = vadd.f32 %v6653, %v6654
        %v6656 = vrot.slane %v6655, 1
        %v6657 = vadd.f32 %v6655, %v6656
        %v6658 = vsel %vm4574, %v6549, 0.0
        %v6659 = vsel %vm4574, %v6550, 0.0
        %v6660 = vadd.f32 %v6658, %v6659
        %v6661 = vrot.slane %v6660, 4
        %v6662 = vadd.f32 %v6660, %v6661
        %v6663 = vrot.slane %v6662, 2
        %v6664 = vadd.f32 %v6662, %v6663
        %v6665 = vrot.slane %v6664, 1
        %v6666 = vadd.f32 %v6664, %v6665
        %v6667 = vsel %vm4574, %v6551, 0.0
        %v6668 = vsel %vm4574, %v6552, 0.0
        %v6669 = vadd.f32 %v6667, %v6668
        %v6670 = vrot.slane %v6669, 4
        %v6671 = vadd.f32 %v6669, %v6670
        %v6672 = vrot.slane %v6671, 2
        %v6673 = vadd.f32 %v6671, %v6672
        %v6674 = vrot.slane %v6673, 1
        %v6675 = vadd.f32 %v6673, %v6674
        %v6676 = vsel %vm4574, %v6553, 0.0
        %v6677 = vsel %vm4574, %v6554, 0.0
        %v6678 = vadd.f32 %v6676, %v6677
        %v6679 = vrot.slane %v6678, 4
        %v6680 = vadd.f32 %v6678, %v6679
        %v6681 = vrot.slane %v6680, 2
        %v6682 = vadd.f32 %v6680, %v6681
        %v6683 = vrot.slane %v6682, 1
        %v6684 = vadd.f32 %v6682, %v6683
        %v6685 = vsel %vm4574, %v6555, 0.0
        %v6686 = vsel %vm4574, %v6556, 0.0
        %v6687 = vadd.f32 %v6685, %v6686
        %v6688 = vrot.slane %v6687, 4
        %v6689 = vadd.f32 %v6687, %v6688
        %v6690 = vrot.slane %v6689, 2
        %v6691 = vadd.f32 %v6689, %v6690
        %v6692 = vrot.slane %v6691, 1
        %v6693 = vadd.f32 %v6691, %v6692
        %v6694 = vsel %vm4574, %v6557, 0.0
        %v6695 = vsel %vm4574, %v6558, 0.0
        %v6696 = vadd.f32 %v6694, %v6695
        %v6697 = vrot.slane %v6696, 4
        %v6698 = vadd.f32 %v6696, %v6697
        %v6699 = vrot.slane %v6698, 2
        %v6700 = vadd.f32 %v6698, %v6699
        %v6701 = vrot.slane %v6700, 1
        %v6702 = vadd.f32 %v6700, %v6701
        %vm6703 = vcmask 253952
        %6704 = vst.msk [vmem:[%s487] sm:$0x1] %vm6703, %v1105
        %6705 = vst.msk [vmem:[%s487 + $0x1] sm:$0x1] %vm6703, %v1114
        %6706 = vst.msk [vmem:[%s487 + $0x2] sm:$0x1] %vm6703, %v1123
        %6707 = vst.msk [vmem:[%s487 + $0x3] sm:$0x1] %vm6703, %v1132
        %6708 = vst.msk [vmem:[%s487 + $0x4] sm:$0x1] %vm6703, %v1141
        %6709 = vst.msk [vmem:[%s487 + $0x5] sm:$0x1] %vm6703, %v1150
        %6710 = vst.msk [vmem:[%s487 + $0x6] sm:$0x1] %vm6703, %v1159
        %6711 = vst.msk [vmem:[%s487 + $0x7] sm:$0x1] %vm6703, %v1168
        %6712 = vst.msk [vmem:[%s487 + $0x8] sm:$0x1] %vm6703, %v1177
        %6713 = vst.msk [vmem:[%s487 + $0x9] sm:$0x1] %vm6703, %v1186
        %6714 = vst.msk [vmem:[%s487 + $0xa] sm:$0x1] %vm6703, %v1195
        %6715 = vst.msk [vmem:[%s487 + $0xb] sm:$0x1] %vm6703, %v1204
        %6716 = vst.msk [vmem:[%s487 + $0xc] sm:$0x1] %vm6703, %v1213
        %6717 = vst.msk [vmem:[%s487 + $0xd] sm:$0x1] %vm6703, %v1222
        %6718 = vst.msk [vmem:[%s487 + $0xe] sm:$0x1] %vm6703, %v1231
        %6719 = vst.msk [vmem:[%s487 + $0xf] sm:$0x1] %vm6703, %v1240
        %6720 = vst.msk [vmem:[%s494] sm:$0x1] %vm6703, %v3483
        %6721 = vst.msk [vmem:[%s494 + $0x1] sm:$0x1] %vm6703, %v3492
        %6722 = vst.msk [vmem:[%s494 + $0x2] sm:$0x1] %vm6703, %v3501
        %6723 = vst.msk [vmem:[%s494 + $0x3] sm:$0x1] %vm6703, %v3510
        %6724 = vst.msk [vmem:[%s494 + $0x4] sm:$0x1] %vm6703, %v3519
        %6725 = vst.msk [vmem:[%s494 + $0x5] sm:$0x1] %vm6703, %v3528
        %6726 = vst.msk [vmem:[%s494 + $0x6] sm:$0x1] %vm6703, %v3537
        %6727 = vst.msk [vmem:[%s494 + $0x7] sm:$0x1] %vm6703, %v3546
        %6728 = vst.msk [vmem:[%s494 + $0x8] sm:$0x1] %vm6703, %v3555
        %6729 = vst.msk [vmem:[%s494 + $0x9] sm:$0x1] %vm6703, %v3564
        %6730 = vst.msk [vmem:[%s494 + $0xa] sm:$0x1] %vm6703, %v3573
        %6731 = vst.msk [vmem:[%s494 + $0xb] sm:$0x1] %vm6703, %v3582
        %6732 = vst.msk [vmem:[%s494 + $0xc] sm:$0x1] %vm6703, %v3591
        %6733 = vst.msk [vmem:[%s494 + $0xd] sm:$0x1] %vm6703, %v3600
        %6734 = vst.msk [vmem:[%s494 + $0xe] sm:$0x1] %vm6703, %v3609
        %6735 = vst.msk [vmem:[%s494 + $0xf] sm:$0x1] %vm6703, %v3618
        %vm6736 = vcmp.eq.s32.totalorder %v4375, 0
        %6738 = vset.pattern.permute.xlu0 0
        %6739 = vperm.xlu0 %6738, %v4340
        %v6740 = vpop.permute.xlu0 %6739
        %6743 = vset.pattern.permute.xlu0 0
        %6744 = vperm.xlu0 %6743, %v4342
        %v6745 = vpop.permute.xlu0 %6744
        %6748 = vset.pattern.permute.xlu0 0
        %6749 = vperm.xlu0 %6748, %v4344
        %v6750 = vpop.permute.xlu0 %6749
        %6753 = vset.pattern.permute.xlu0 0
        %6754 = vperm.xlu0 %6753, %v4346
        %v6755 = vpop.permute.xlu0 %6754
        %6758 = vset.pattern.permute.xlu0 0
        %6759 = vperm.xlu0 %6758, %v4348
        %v6760 = vpop.permute.xlu0 %6759
        %6763 = vset.pattern.permute.xlu0 0
        %6764 = vperm.xlu0 %6763, %v4350
        %v6765 = vpop.permute.xlu0 %6764
        %6768 = vset.pattern.permute.xlu0 0
        %6769 = vperm.xlu0 %6768, %v4352
        %v6770 = vpop.permute.xlu0 %6769
        %6773 = vset.pattern.permute.xlu0 0
        %6774 = vperm.xlu0 %6773, %v4354
        %v6775 = vpop.permute.xlu0 %6774
        %6778 = vset.pattern.permute.xlu0 0
        %6779 = vperm.xlu0 %6778, %v4356
        %v6780 = vpop.permute.xlu0 %6779
        %6783 = vset.pattern.permute.xlu0 0
        %6784 = vperm.xlu0 %6783, %v4358
        %v6785 = vpop.permute.xlu0 %6784
        %6788 = vset.pattern.permute.xlu0 0
        %6789 = vperm.xlu0 %6788, %v4360
        %v6790 = vpop.permute.xlu0 %6789
        %6793 = vset.pattern.permute.xlu0 0
        %6794 = vperm.xlu0 %6793, %v4362
        %v6795 = vpop.permute.xlu0 %6794
        %6798 = vset.pattern.permute.xlu0 0
        %6799 = vperm.xlu0 %6798, %v4364
        %v6800 = vpop.permute.xlu0 %6799
        %6803 = vset.pattern.permute.xlu0 0
        %6804 = vperm.xlu0 %6803, %v4366
        %v6805 = vpop.permute.xlu0 %6804
        %6808 = vset.pattern.permute.xlu0 0
        %6809 = vperm.xlu0 %6808, %v4368
        %v6810 = vpop.permute.xlu0 %6809
        %6813 = vset.pattern.permute.xlu0 0
        %6814 = vperm.xlu0 %6813, %v4370
        %v6815 = vpop.permute.xlu0 %6814
        %v6817 = vsel %vm6736, %v6740, 0.0
        %v6818 = vsel %vm6736, %v6745, 0.0
        %v6819 = vsel %vm6736, %v6750, 0.0
        %v6820 = vsel %vm6736, %v6755, 0.0
        %v6821 = vsel %vm6736, %v6760, 0.0
        %v6822 = vsel %vm6736, %v6765, 0.0
        %v6823 = vsel %vm6736, %v6770, 0.0
        %v6824 = vsel %vm6736, %v6775, 0.0
        %v6825 = vsel %vm6736, %v6780, 0.0
        %v6826 = vsel %vm6736, %v6785, 0.0
        %v6827 = vsel %vm6736, %v6790, 0.0
        %v6828 = vsel %vm6736, %v6795, 0.0
        %v6829 = vsel %vm6736, %v6800, 0.0
        %v6830 = vsel %vm6736, %v6805, 0.0
        %v6831 = vsel %vm6736, %v6810, 0.0
        %v6832 = vsel %vm6736, %v6815, 0.0
        %vm6833 = vcmp.eq.s32.totalorder %v4375, 1
        %6835 = vset.pattern.permute.xlu0 0
        %6836 = vperm.xlu0 %6835, %v5951
        %v6837 = vpop.permute.xlu0 %6836
        %6840 = vset.pattern.permute.xlu0 0
        %6841 = vperm.xlu0 %6840, %v5952
        %v6842 = vpop.permute.xlu0 %6841
        %6845 = vset.pattern.permute.xlu0 0
        %6846 = vperm.xlu0 %6845, %v5953
        %v6847 = vpop.permute.xlu0 %6846
        %6850 = vset.pattern.permute.xlu0 0
        %6851 = vperm.xlu0 %6850, %v5954
        %v6852 = vpop.permute.xlu0 %6851
        %6855 = vset.pattern.permute.xlu0 0
        %6856 = vperm.xlu0 %6855, %v5955
        %v6857 = vpop.permute.xlu0 %6856
        %6860 = vset.pattern.permute.xlu0 0
        %6861 = vperm.xlu0 %6860, %v5956
        %v6862 = vpop.permute.xlu0 %6861
        %6865 = vset.pattern.permute.xlu0 0
        %6866 = vperm.xlu0 %6865, %v5957
        %v6867 = vpop.permute.xlu0 %6866
        %6870 = vset.pattern.permute.xlu0 0
        %6871 = vperm.xlu0 %6870, %v5958
        %v6872 = vpop.permute.xlu0 %6871
        %6875 = vset.pattern.permute.xlu0 0
        %6876 = vperm.xlu0 %6875, %v5959
        %v6877 = vpop.permute.xlu0 %6876
        %6880 = vset.pattern.permute.xlu0 0
        %6881 = vperm.xlu0 %6880, %v5960
        %v6882 = vpop.permute.xlu0 %6881
        %6885 = vset.pattern.permute.xlu0 0
        %6886 = vperm.xlu0 %6885, %v5961
        %v6887 = vpop.permute.xlu0 %6886
        %6890 = vset.pattern.permute.xlu0 0
        %6891 = vperm.xlu0 %6890, %v5962
        %v6892 = vpop.permute.xlu0 %6891
        %6895 = vset.pattern.permute.xlu0 0
        %6896 = vperm.xlu0 %6895, %v5963
        %v6897 = vpop.permute.xlu0 %6896
        %6900 = vset.pattern.permute.xlu0 0
        %6901 = vperm.xlu0 %6900, %v5964
        %v6902 = vpop.permute.xlu0 %6901
        %6905 = vset.pattern.permute.xlu0 0
        %6906 = vperm.xlu0 %6905, %v5965
        %v6907 = vpop.permute.xlu0 %6906
        %6910 = vset.pattern.permute.xlu0 0
        %6911 = vperm.xlu0 %6910, %v5966
        %v6912 = vpop.permute.xlu0 %6911
        %v6914 = vsel %vm6833, %v6837, 0.0
        %v6915 = vsel %vm6833, %v6842, 0.0
        %v6916 = vsel %vm6833, %v6847, 0.0
        %v6917 = vsel %vm6833, %v6852, 0.0
        %v6918 = vsel %vm6833, %v6857, 0.0
        %v6919 = vsel %vm6833, %v6862, 0.0
        %v6920 = vsel %vm6833, %v6867, 0.0
        %v6921 = vsel %vm6833, %v6872, 0.0
        %v6922 = vsel %vm6833, %v6877, 0.0
        %v6923 = vsel %vm6833, %v6882, 0.0
        %v6924 = vsel %vm6833, %v6887, 0.0
        %v6925 = vsel %vm6833, %v6892, 0.0
        %v6926 = vsel %vm6833, %v6897, 0.0
        %v6927 = vsel %vm6833, %v6902, 0.0
        %v6928 = vsel %vm6833, %v6907, 0.0
        %v6929 = vsel %vm6833, %v6912, 0.0
        %v6930 = vadd.f32 %v6817, %v6914
        %v6931 = vadd.f32 %v6818, %v6915
        %v6932 = vadd.f32 %v6819, %v6916
        %v6933 = vadd.f32 %v6820, %v6917
        %v6934 = vadd.f32 %v6821, %v6918
        %v6935 = vadd.f32 %v6822, %v6919
        %v6936 = vadd.f32 %v6823, %v6920
        %v6937 = vadd.f32 %v6824, %v6921
        %v6938 = vadd.f32 %v6825, %v6922
        %v6939 = vadd.f32 %v6826, %v6923
        %v6940 = vadd.f32 %v6827, %v6924
        %v6941 = vadd.f32 %v6828, %v6925
        %v6942 = vadd.f32 %v6829, %v6926
        %v6943 = vadd.f32 %v6830, %v6927
        %v6944 = vadd.f32 %v6831, %v6928
        %v6945 = vadd.f32 %v6832, %v6929
        %vm6946 = vcmp.eq.s32.totalorder %v4375, 2
        %6948 = vset.pattern.permute.xlu0 0
        %6949 = vperm.xlu0 %6948, %v6240
        %v6950 = vpop.permute.xlu0 %6949
        %6953 = vset.pattern.permute.xlu0 0
        %6954 = vperm.xlu0 %6953, %v6242
        %v6955 = vpop.permute.xlu0 %6954
        %6958 = vset.pattern.permute.xlu0 0
        %6959 = vperm.xlu0 %6958, %v6244
        %v6960 = vpop.permute.xlu0 %6959
        %6963 = vset.pattern.permute.xlu0 0
        %6964 = vperm.xlu0 %6963, %v6246
        %v6965 = vpop.permute.xlu0 %6964
        %6968 = vset.pattern.permute.xlu0 0
        %6969 = vperm.xlu0 %6968, %v6248
        %v6970 = vpop.permute.xlu0 %6969
        %6973 = vset.pattern.permute.xlu0 0
        %6974 = vperm.xlu0 %6973, %v6250
        %v6975 = vpop.permute.xlu0 %6974
        %6978 = vset.pattern.permute.xlu0 0
        %6979 = vperm.xlu0 %6978, %v6252
        %v6980 = vpop.permute.xlu0 %6979
        %6983 = vset.pattern.permute.xlu0 0
        %6984 = vperm.xlu0 %6983, %v6254
        %v6985 = vpop.permute.xlu0 %6984
        %6988 = vset.pattern.permute.xlu0 0
        %6989 = vperm.xlu0 %6988, %v6256
        %v6990 = vpop.permute.xlu0 %6989
        %6993 = vset.pattern.permute.xlu0 0
        %6994 = vperm.xlu0 %6993, %v6258
        %v6995 = vpop.permute.xlu0 %6994
        %6998 = vset.pattern.permute.xlu0 0
        %6999 = vperm.xlu0 %6998, %v6260
        %v7000 = vpop.permute.xlu0 %6999
        %7003 = vset.pattern.permute.xlu0 0
        %7004 = vperm.xlu0 %7003, %v6262
        %v7005 = vpop.permute.xlu0 %7004
        %7008 = vset.pattern.permute.xlu0 0
        %7009 = vperm.xlu0 %7008, %v6264
        %v7010 = vpop.permute.xlu0 %7009
        %7013 = vset.pattern.permute.xlu0 0
        %7014 = vperm.xlu0 %7013, %v6266
        %v7015 = vpop.permute.xlu0 %7014
        %7018 = vset.pattern.permute.xlu0 0
        %7019 = vperm.xlu0 %7018, %v6268
        %v7020 = vpop.permute.xlu0 %7019
        %7023 = vset.pattern.permute.xlu0 0
        %7024 = vperm.xlu0 %7023, %v6270
        %v7025 = vpop.permute.xlu0 %7024
        %v7027 = vsel %vm6946, %v6950, 0.0
        %v7028 = vsel %vm6946, %v6955, 0.0
        %v7029 = vsel %vm6946, %v6960, 0.0
        %v7030 = vsel %vm6946, %v6965, 0.0
        %v7031 = vsel %vm6946, %v6970, 0.0
        %v7032 = vsel %vm6946, %v6975, 0.0
        %v7033 = vsel %vm6946, %v6980, 0.0
        %v7034 = vsel %vm6946, %v6985, 0.0
        %v7035 = vsel %vm6946, %v6990, 0.0
        %v7036 = vsel %vm6946, %v6995, 0.0
        %v7037 = vsel %vm6946, %v7000, 0.0
        %v7038 = vsel %vm6946, %v7005, 0.0
        %v7039 = vsel %vm6946, %v7010, 0.0
        %v7040 = vsel %vm6946, %v7015, 0.0
        %v7041 = vsel %vm6946, %v7020, 0.0
        %v7042 = vsel %vm6946, %v7025, 0.0
        %v7043 = vadd.f32 %v6930, %v7027
        %v7044 = vadd.f32 %v6931, %v7028
        %v7045 = vadd.f32 %v6932, %v7029
        %v7046 = vadd.f32 %v6933, %v7030
        %v7047 = vadd.f32 %v6934, %v7031
        %v7048 = vadd.f32 %v6935, %v7032
        %v7049 = vadd.f32 %v6936, %v7033
        %v7050 = vadd.f32 %v6937, %v7034
        %v7051 = vadd.f32 %v6938, %v7035
        %v7052 = vadd.f32 %v6939, %v7036
        %v7053 = vadd.f32 %v6940, %v7037
        %v7054 = vadd.f32 %v6941, %v7038
        %v7055 = vadd.f32 %v6942, %v7039
        %v7056 = vadd.f32 %v6943, %v7040
        %v7057 = vadd.f32 %v6944, %v7041
        %v7058 = vadd.f32 %v6945, %v7042
        %7059 = vst [vmem:[%s501] sm:$0x1] %v7043
        %7060 = vst [vmem:[%s501 + $0x1] sm:$0x1] %v7044
        %7061 = vst [vmem:[%s501 + $0x2] sm:$0x1] %v7045
        %7062 = vst [vmem:[%s501 + $0x3] sm:$0x1] %v7046
        %7063 = vst [vmem:[%s501 + $0x4] sm:$0x1] %v7047
        %7064 = vst [vmem:[%s501 + $0x5] sm:$0x1] %v7048
        %7065 = vst [vmem:[%s501 + $0x6] sm:$0x1] %v7049
        %7066 = vst [vmem:[%s501 + $0x7] sm:$0x1] %v7050
        %7067 = vst [vmem:[%s501 + $0x8] sm:$0x1] %v7051
        %7068 = vst [vmem:[%s501 + $0x9] sm:$0x1] %v7052
        %7069 = vst [vmem:[%s501 + $0xa] sm:$0x1] %v7053
        %7070 = vst [vmem:[%s501 + $0xb] sm:$0x1] %v7054
        %7071 = vst [vmem:[%s501 + $0xc] sm:$0x1] %v7055
        %7072 = vst [vmem:[%s501 + $0xd] sm:$0x1] %v7056
        %7073 = vst [vmem:[%s501 + $0xe] sm:$0x1] %v7057
        %7074 = vst [vmem:[%s501 + $0xf] sm:$0x1] %v7058
        %vm7075 = vcmp.gt.f32.partialorder %v6567, 0.5
        %vm7076 = vcmp.gt.f32.partialorder %v6576, 0.5
        %vm7077 = vcmp.gt.f32.partialorder %v6585, 0.5
        %vm7078 = vcmp.gt.f32.partialorder %v6594, 0.5
        %vm7079 = vcmp.gt.f32.partialorder %v6603, 0.5
        %vm7080 = vcmp.gt.f32.partialorder %v6612, 0.5
        %vm7081 = vcmp.gt.f32.partialorder %v6621, 0.5
        %vm7082 = vcmp.gt.f32.partialorder %v6630, 0.5
        %vm7083 = vcmp.gt.f32.partialorder %v6639, 0.5
        %vm7084 = vcmp.gt.f32.partialorder %v6648, 0.5
        %vm7085 = vcmp.gt.f32.partialorder %v6657, 0.5
        %vm7086 = vcmp.gt.f32.partialorder %v6666, 0.5
        %vm7087 = vcmp.gt.f32.partialorder %v6675, 0.5
        %vm7088 = vcmp.gt.f32.partialorder %v6684, 0.5
        %vm7089 = vcmp.gt.f32.partialorder %v6693, 0.5
        %vm7090 = vcmp.gt.f32.partialorder %v6702, 0.5
        %v7091 = vsel %vm7075, 1, 0
        %v7092 = vsel %vm7076, 1, 0
        %v7093 = vsel %vm7077, 1, 0
        %v7094 = vsel %vm7078, 1, 0
        %v7095 = vsel %vm7079, 1, 0
        %v7096 = vsel %vm7080, 1, 0
        %v7097 = vsel %vm7081, 1, 0
        %v7098 = vsel %vm7082, 1, 0
        %v7099 = vsel %vm7083, 1, 0
        %v7100 = vsel %vm7084, 1, 0
        %v7101 = vsel %vm7085, 1, 0
        %v7102 = vsel %vm7086, 1, 0
        %v7103 = vsel %vm7087, 1, 0
        %v7104 = vsel %vm7088, 1, 0
        %v7105 = vsel %vm7089, 1, 0
        %v7106 = vsel %vm7090, 1, 0
        %vm7107 = vcmask 122880
        %7108 = vst.msk [vmem:[%s549] sm:$0x1] %vm7107, %v7091
        %7109 = vst.msk [vmem:[%s549 + $0x1] sm:$0x1] %vm7107, %v7092
        %7110 = vst.msk [vmem:[%s549 + $0x2] sm:$0x1] %vm7107, %v7093
        %7111 = vst.msk [vmem:[%s549 + $0x3] sm:$0x1] %vm7107, %v7094
        %7112 = vst.msk [vmem:[%s549 + $0x4] sm:$0x1] %vm7107, %v7095
        %7113 = vst.msk [vmem:[%s549 + $0x5] sm:$0x1] %vm7107, %v7096
        %7114 = vst.msk [vmem:[%s549 + $0x6] sm:$0x1] %vm7107, %v7097
        %7115 = vst.msk [vmem:[%s549 + $0x7] sm:$0x1] %vm7107, %v7098
        %7116 = vst.msk [vmem:[%s549 + $0x8] sm:$0x1] %vm7107, %v7099
        %7117 = vst.msk [vmem:[%s549 + $0x9] sm:$0x1] %vm7107, %v7100
        %7118 = vst.msk [vmem:[%s549 + $0xa] sm:$0x1] %vm7107, %v7101
        %7119 = vst.msk [vmem:[%s549 + $0xb] sm:$0x1] %vm7107, %v7102
        %7120 = vst.msk [vmem:[%s549 + $0xc] sm:$0x1] %vm7107, %v7103
        %7121 = vst.msk [vmem:[%s549 + $0xd] sm:$0x1] %vm7107, %v7104
        %7122 = vst.msk [vmem:[%s549 + $0xe] sm:$0x1] %vm7107, %v7105
        %7123 = vst.msk [vmem:[%s549 + $0xf] sm:$0x1] %vm7107, %v7106
        %s7124 = sand.u32 %s254, 1
        %s7125 = scalar_lea.sflag [#allocation4], %s7124
        %s7126 = sand.u32 %s254, 1
        %s7127 = smul.addr %s7126, 16
        %s7128 = scalar_lea.vmem [#allocation3], %s7127
        %s7129 = sand.u32 %s32, 1
        %s7130 = scalar_lea.sflag [#allocation6], %s7129
        %s7131 = sand.u32 %s280, 1
        %s7132 = smul.addr %s7131, 16
        %s7133 = scalar_lea.vmem [#allocation5], %s7132
        %s7134 = sand.u32 %s32, 1
        %s7135 = scalar_lea.sflag [#allocation6], %s7134
        %s7136 = sand.u32 %s306, 1
        %s7137 = smul.addr %s7136, 16
        %s7138 = scalar_lea.vmem [#allocation7], %s7137
        %s7139 = smul.u32 16, %s32
        %p7140 = scmp.lt.s32.totalorder %s7139, 31
        %s7141 = scalar_select %p7140, %s7139, 31
        %s7142 = scalar_lea.vmem %s12, %s7141
        // Predicated region
        $region57: #{tpu_custom_call.1} parent=55 // pred_check
          %p7143 = pneg %p264
        $region58: #{tpu_custom_call.1} parent=55 // pred_check_branch
          %7145 = sbr.rel (%p7143) target = $region60
        $region59: #{tpu_custom_call.1} parent=55 // pred_region
          %s7146 = smul.u32 16, %s32
          %s7148 = ssub.s32 256, 256
          %7149 = vsyncadd %s7125, %s7148
          %s7150 = smul.addr %s7146, 16
          %s7151 = scalar_lea.hbm %s9, %s7150
          %s7152 = sshll.u32 %s7128, 4
          %s7153 = int_to_ptr.vmem [resolvable:$true] %s7152
          %7158 = dma.vmem_to_hbm [thread:$0]  %s7153, 256, %s7151, %s7125, 16, 16, 1
        $region60: #{tpu_custom_call.1} parent=55 // pred_fallthru
          _
        // Predicated region
        $region61: #{tpu_custom_call.1} parent=55 // pred_check
          %p7159 = pneg %p290
        $region62: #{tpu_custom_call.1} parent=55 // pred_check_branch
          %7161 = sbr.rel (%p7159) target = $region64
        $region63: #{tpu_custom_call.1} parent=55 // pred_region
          %s7162 = smul.u32 16, %s32
          %s7164 = ssub.s32 256, 256
          %7165 = vsyncadd %s7130, %s7164
          %s7166 = smul.addr %s7162, 16
          %s7167 = scalar_lea.hbm %s10, %s7166
          %s7168 = sshll.u32 %s7133, 4
          %s7169 = int_to_ptr.vmem [resolvable:$true] %s7168
          %7174 = dma.vmem_to_hbm [thread:$0]  %s7169, 256, %s7167, %s7130, 16, 16, 1
        $region64: #{tpu_custom_call.1} parent=55 // pred_fallthru
          _
        // Predicated region
        $region65: #{tpu_custom_call.1} parent=55 // pred_check
          %p7175 = pneg %p316
        $region66: #{tpu_custom_call.1} parent=55 // pred_check_branch
          %7177 = sbr.rel (%p7175) target = $region68
        $region67: #{tpu_custom_call.1} parent=55 // pred_region
          %s7178 = smul.u32 16, %s32
          %s7180 = ssub.s32 256, 256
          %7181 = vsyncadd %s7135, %s7180
          %s7182 = smul.addr %s7178, 16
          %s7183 = scalar_lea.hbm %s11, %s7182
          %s7184 = sshll.u32 %s7138, 4
          %s7185 = int_to_ptr.vmem [resolvable:$true] %s7184
          %7190 = dma.vmem_to_hbm [thread:$0]  %s7185, 256, %s7183, %s7135, 16, 16, 1
        $region68: #{tpu_custom_call.1} parent=55 // pred_fallthru
          _
        // Predicated region
        $region69: #{tpu_custom_call.1} parent=55 // pred_check
          %p7191 = pneg %p342
        $region70: #{tpu_custom_call.1} parent=55 // pred_check_branch
          %7193 = sbr.rel (%p7191) target = $region72
        $region71: #{tpu_custom_call.1} parent=55 // pred_region
          %s7194 = smul.u32 16, %s32
        $region72: #{tpu_custom_call.1} parent=55 // pred_fallthru
          _
      $region56: #{tpu_custom_call.1} parent=5 // pred_fallthru
        _
      %p7195 = scmp.le.s32.totalorder 2, %s27
      // Predicated region
      $region73: #{tpu_custom_call.1} parent=5 // pred_check
        %p7196 = pneg %p7195
      $region74: #{tpu_custom_call.1} parent=5 // pred_check_branch
        %7198 = sbr.rel (%p7196) target = $region76
      $region75: #{tpu_custom_call.1} parent=5 // pred_region
        %s7199 = ssub.s32 %s27, 2
        // Predicated region
        $region77: #{tpu_custom_call.1} parent=75 // pred_check
          %p7200 = pneg %p270
        $region78: #{tpu_custom_call.1} parent=75 // pred_check_branch
          %7202 = sbr.rel (%p7200) target = $region80
        $region79: #{tpu_custom_call.1} parent=75 // pred_region
          %s7203 = sand.u32 %s255, 1
          %s7204 = scalar_lea.sflag [#allocation4], %s7203
          %s7205 = sand.u32 %s255, 1
          %s7206 = smul.addr %s7205, 16
          %s7207 = scalar_lea.vmem [#allocation3], %s7206
          %7208 = dma.done %s7204, 256
        $region80: #{tpu_custom_call.1} parent=75 // pred_fallthru
          _
        // Predicated region
        $region81: #{tpu_custom_call.1} parent=75 // pred_check
          %p7209 = pneg %p296
        $region82: #{tpu_custom_call.1} parent=75 // pred_check_branch
          %7211 = sbr.rel (%p7209) target = $region84
        $region83: #{tpu_custom_call.1} parent=75 // pred_region
          %s7212 = sand.u32 %s33, 1
          %s7213 = scalar_lea.sflag [#allocation6], %s7212
          %s7214 = sand.u32 %s281, 1
          %s7215 = smul.addr %s7214, 16
          %s7216 = scalar_lea.vmem [#allocation5], %s7215
          %7217 = dma.done %s7213, 256
        $region84: #{tpu_custom_call.1} parent=75 // pred_fallthru
          _
        // Predicated region
        $region85: #{tpu_custom_call.1} parent=75 // pred_check
          %p7218 = pneg %p322
        $region86: #{tpu_custom_call.1} parent=75 // pred_check_branch
          %7220 = sbr.rel (%p7218) target = $region88
        $region87: #{tpu_custom_call.1} parent=75 // pred_region
          %s7221 = sand.u32 %s33, 1
          %s7222 = scalar_lea.sflag [#allocation6], %s7221
          %s7223 = sand.u32 %s307, 1
          %s7224 = smul.addr %s7223, 16
          %s7225 = scalar_lea.vmem [#allocation7], %s7224
          %7226 = dma.done %s7222, 256
        $region88: #{tpu_custom_call.1} parent=75 // pred_fallthru
          _
        // Predicated region
        $region89: #{tpu_custom_call.1} parent=75 // pred_check
          %p7227 = pneg %p348
        $region90: #{tpu_custom_call.1} parent=75 // pred_check_branch
          %7229 = sbr.rel (%p7227) target = $region92
        $region91: #{tpu_custom_call.1} parent=75 // pred_region
          %s7230 = smul.u32 16, %s33
          %p7231 = scmp.lt.s32.totalorder %s7230, 31
          %s7232 = scalar_select %p7231, %s7230, 31
          %s7233 = scalar_lea.vmem %s12, %s7232
        $region92: #{tpu_custom_call.1} parent=75 // pred_fallthru
          _
      $region76: #{tpu_custom_call.1} parent=5 // pred_fallthru
        _
    $region6: #{tpu_custom_call.1} parent=1 // loop_footer
      %s31 = sadd.s32 1, %s27
    $region7: #{tpu_custom_call.1} parent=1 // loop_footer_branch
      %26 = sbr.rel target = $region3
    $region8: #{tpu_custom_call.1} parent=1 // loop_exit
      _
    %7234 = vsyncpa [#allocation4], 1
    %s7235 = scalar_lea.sflag [#allocation4], 1
    %7236 = vsyncpa %s7235, 1
    %7237 = vsyncpa [#allocation6], 1
    %s7238 = scalar_lea.sflag [#allocation6], 1
    %7239 = vsyncpa %s7238, 1

</llo_original>
